<compile_context>
chip_gen: v6e
topology: v6e:2x2x1
jax: 0.10.0
libtpu: 0.0.40
codegen_flags: <defaults>
</compile_context>

<pallas_src>
import numpy as np

import jax
import jax.numpy as jnp
from jax.experimental import pallas as pl
from jax.experimental.pallas import tpu as pltpu

NEG_SLOPE = 0.2   # LeakyReLU(0.2)
BN_EPS = 1e-5     # nn.BatchNorm2d default eps


def _vmem_spec():
    # Whole-array block resident in VMEM (everything here is tiny, < 3 MiB total).
    return pl.BlockSpec(memory_space=pltpu.MemorySpace.VMEM)


# ---------------------------------------------------------------------------
# Fused whole-network Pallas kernel
# ---------------------------------------------------------------------------
def _make_fused_kernel(meta):
    """Build a kernel that runs the entire discriminator in one pallas_call.

    Activation layout throughout: 2-D (batch*H, W*C) float32, lane-dense.
    Each conv layer:  Y = sum_i  A_i @ X @ B_i  (bf16 MXU operands, f32 accum)
    followed in-register by bias / BatchNorm(batch statistics) and LeakyReLU.
    """
    def kernel(*refs):
        x_ref = refs[0]
        out_ref = refs[-1]
        x = x_ref[...]                                   # f32 (rows, lanes)
        idx = 1
        for m in meta:
            if m["kind"] == "bias":
                a_ref, b_ref, bias_ref = refs[idx:idx + 3]
                idx += 3
            else:  # "bn"
                a_ref, b_ref, g_ref, be_ref, s_ref, st_ref = refs[idx:idx + 6]
                idx += 6

            xb = x.astype(jnp.bfloat16)
            acc = None
            for i in range(m["kh"]):                     # static unroll (kh = 4)
                # Row selection (vertical tap + stride + zero pad): exact 0/1 mix.
                rows_i = jnp.dot(a_ref[i], xb,
                                 preferred_element_type=jnp.float32)
                # Horizontal taps + channel mixing via block-structured weights.
                term = jnp.dot(rows_i.astype(jnp.bfloat16), b_ref[i],
                               preferred_element_type=jnp.float32)
                acc = term if acc is None else acc + term

            if m["kind"] == "bias":
                y = acc + bias_ref[...]
                if m["lrelu"]:
                    y = jnp.where(y >= 0.0, y, y * NEG_SLOPE)
            else:
                # Training-mode BatchNorm2d: batch statistics, biased variance.
                rsum = jnp.sum(acc, axis=0, keepdims=True)           # (1, Wout*C)
                rsq = jnp.sum(acc * acc, axis=0, keepdims=True)
                csum = jnp.dot(rsum, s_ref[...],
                               preferred_element_type=jnp.float32)   # (1, C)
                csq = jnp.dot(rsq, s_ref[...],
                              preferred_element_type=jnp.float32)
                inv_cnt = 1.0 / m["count"]
                mean = csum * inv_cnt
                var = jnp.maximum(csq * inv_cnt - mean * mean, 0.0)  # clamp >= 0
                scale_c = g_ref[...] * jax.lax.rsqrt(var + BN_EPS)
                shift_c = be_ref[...] - mean * scale_c
                # Broadcast per-channel scale/shift back to the lane layout.
                scale_l = jnp.dot(scale_c, st_ref[...],
                                  preferred_element_type=jnp.float32)
                shift_l = jnp.dot(shift_c, st_ref[...],
                                  preferred_element_type=jnp.float32)
                y = acc * scale_l + shift_l
                y = jnp.where(y >= 0.0, y, y * NEG_SLOPE)
            x = y
        out_ref[...] = x.astype(out_ref.dtype)
    return kernel


# ---------------------------------------------------------------------------
# Init-time construction of the structured conv matrices (plain numpy)
# ---------------------------------------------------------------------------
def _build_conv_mats(w_oihw, stride, pad, h_in, w_in, batch):
    """Return (A, B, Hout, Wout) such that conv(x) == sum_i A[i] @ X @ B[i]."""
    c_out, c_in, kh, kw = w_oihw.shape
    h_out = (h_in + 2 * pad - kh) // stride + 1
    w_out = (w_in + 2 * pad - kw) // stride + 1

    # Vertical-tap row selection (per image), then block-diagonal over batch.
    a_single = np.zeros((kh, h_out, h_in), np.float32)
    for i in range(kh):
        for ho in range(h_out):
            h = stride * ho + i - pad
            if 0 <= h < h_in:                            # rows outside -> zero pad
                a_single[i, ho, h] = 1.0
    eye_b = np.eye(batch, dtype=np.float32)
    a_full = np.stack([np.kron(eye_b, a_single[i]) for i in range(kh)], axis=0)

    # Horizontal taps + channels: (Win*Cin, Wout*Cout) block-structured weights.
    b_full = np.zeros((kh, w_in * c_in, w_out * c_out), np.float32)
    for i in range(kh):
        for j in range(kw):
            for wo in range(w_out):
                wi = stride * wo + j - pad
                if 0 <= wi < w_in:                       # cols outside -> zero pad
                    b_full[i, wi * c_in:(wi + 1) * c_in,
                           wo * c_out:(wo + 1) * c_out] = w_oihw[:, :, i, j].T
    return a_full, b_full, h_out, w_out


def build_fused_network(params, batch, h_in, w_in):
    """Flatten all per-layer constants into pallas_call inputs + static metadata."""
    flat, meta = [], []
    h, w = h_in, w_in
    for p in params:
        w_np = np.asarray(p["w"], np.float32)
        c_out = int(w_np.shape[0])
        a, b, h_out, w_out = _build_conv_mats(w_np, p["stride"], p["pad"],
                                              h, w, batch)
        n_out = w_out * c_out
        flat += [jnp.asarray(a, jnp.bfloat16), jnp.asarray(b, jnp.bfloat16)]
        m = dict(kh=int(a.shape[0]), rows=batch * h_out, nout=n_out,
                 count=float(batch * h_out * w_out))
        if p["kind"] in ("conv_lrelu", "conv"):
            bias_lane = np.tile(np.asarray(p["b"], np.float32),
                                w_out).reshape(1, n_out)
            flat.append(jnp.asarray(bias_lane, jnp.float32))
            m.update(kind="bias", lrelu=(p["kind"] == "conv_lrelu"))
        else:  # conv_bn_lrelu
            s = np.zeros((n_out, c_out), np.float32)
            for wo in range(w_out):
                s[wo * c_out:(wo + 1) * c_out, :] = np.eye(c_out, dtype=np.float32)
            flat += [jnp.asarray(np.asarray(p["gamma"], np.float32).reshape(1, c_out)),
                     jnp.asarray(np.asarray(p["beta"], np.float32).reshape(1, c_out)),
                     jnp.asarray(s, jnp.float32),
                     jnp.asarray(np.ascontiguousarray(s.T), jnp.float32)]
            m.update(kind="bn", lrelu=True)
        meta.append(m)
        h, w = h_out, w_out
    out_info = dict(h=h, w=w, c=int(np.asarray(params[-1]["w"]).shape[0]))
    return flat, meta, out_info


def make_forward(params, batch, h_in, w_in, c_in):
    flat, meta, out_info = build_fused_network(params, batch, h_in, w_in)
    kernel = _make_fused_kernel(meta)
    n_inputs = 1 + len(flat)
    out_rows = batch * out_info["h"]
    out_cols = out_info["w"] * out_info["c"]

    def forward(x_nchw):
        # NCHW -> lane-dense (batch*H, W*C) layout.
        x0 = jnp.transpose(x_nchw, (0, 2, 3, 1)).reshape(
            batch * h_in, w_in * c_in).astype(jnp.float32)
        y = pl.pallas_call(
            kernel,
            out_shape=jax.ShapeDtypeStruct((out_rows, out_cols), jnp.float32),
            in_specs=[_vmem_spec()] * n_inputs,
            out_specs=_vmem_spec(),
        )(x0, *flat)
        y = y.reshape(batch, out_info["h"], out_info["w"], out_info["c"])
        return jnp.transpose(y, (0, 3, 1, 2))            # back to NCHW
    return forward


# ---------------------------------------------------------------------------
# Parameter init (deterministic, mirrors __init__ shapes + taming weights_init)
# ---------------------------------------------------------------------------
def init_params(key, input_nc=3, ndf=16, out_nc=1, n_layers=3):
    keys = iter(jax.random.split(key, 4 * n_layers + 8))

    def conv_w(co, ci, kh, kw):
        return 0.02 * jax.random.normal(next(keys), (co, ci, kh, kw), jnp.float32)

    params = []
    kw_ = 4
    # First block: Conv(input_nc, ndf, k=4, s=2, p=1, bias=True) + LeakyReLU.
    params.append(dict(kind="conv_lrelu",
                       w=conv_w(ndf, input_nc, kw_, kw_),
                       b=jnp.zeros((ndf,), jnp.float32), stride=2, pad=1))
    nf_mult = 1
    for n in range(1, n_layers):
        nf_prev, nf_mult = nf_mult, min(2 ** n, 8)
        co, ci = ndf * nf_mult, ndf * nf_prev
        params.append(dict(
            kind="conv_bn_lrelu",
            w=conv_w(co, ci, kw_, kw_),
            gamma=1.0 + 0.02 * jax.random.normal(next(keys), (co,), jnp.float32),
            beta=jnp.zeros((co,), jnp.float32),
            stride=2, pad=1))
    # Stride-1 block (keep_shape=False -> k=4).
    nf_prev, nf_mult = nf_mult, min(2 ** n_layers, 8)
    co, ci = ndf * nf_mult, ndf * nf_prev
    params.append(dict(
        kind="conv_bn_lrelu",
        w=conv_w(co, ci, kw_, kw_),
        gamma=1.0 + 0.02 * jax.random.normal(next(keys), (co,), jnp.float32),
        beta=jnp.zeros((co,), jnp.float32),
        stride=1, pad=1))
    # Output conv: Conv(ndf*nf_mult, out_nc, k=4, s=1, p=1, bias=True), no act.
    params.append(dict(kind="conv",
                       w=conv_w(out_nc, co, kw_, kw_),
                       b=jnp.zeros((out_nc,), jnp.float32), stride=1, pad=1))
    return params


# ---------------------------------------------------------------------------
# Pure-JAX reference (f32, lax.conv) for a loose numerical cross-check
# ---------------------------------------------------------------------------
def _reference_forward(x_nchw, params):
    x = jnp.transpose(x_nchw, (0, 2, 3, 1)).astype(jnp.float32)
    for p in params:
        w = jnp.transpose(p["w"], (2, 3, 1, 0))          # OIHW -> HWIO
        y = jax.lax.conv_general_dilated(
            x, w, window_strides=(p["stride"], p["stride"]),
            padding=[(p["pad"], p["pad"])] * 2,
            dimension_numbers=("NHWC", "HWIO", "NHWC"),
            precision=jax.lax.Precision.HIGHEST)
        if p["kind"] == "conv_lrelu":
            y = y + p["b"]
            y = jnp.where(y >= 0, y, NEG_SLOPE * y)
        elif p["kind"] == "conv_bn_lrelu":
            mean = jnp.mean(y, axis=(0, 1, 2))
            var = jnp.mean((y - mean) ** 2, axis=(0, 1, 2))   # biased variance
            y = (y - mean) * jax.lax.rsqrt(var + BN_EPS) * p["gamma"] + p["beta"]
            y = jnp.where(y >= 0, y, NEG_SLOPE * y)
        else:  # final conv
            y = y + p["b"]
        x = y
    return jnp.transpose(x, (0, 3, 1, 2))


if __name__ == "__main__":
    key = jax.random.PRNGKey(0)
    kx, kp = jax.random.split(key)
    # Small input consistent with the module: 3-channel 32x32 images, batch 2.
    batch, c_in, hw = 2, 3, 32
    x = jax.random.normal(kx, (batch, c_in, hw, hw), jnp.float32)
    params = init_params(kp, input_nc=c_in, ndf=16, out_nc=1, n_layers=3)

    fwd = jax.jit(make_forward(params, batch, hw, hw, c_in))
    y = fwd(x)
    jax.block_until_ready(y)

    # PatchGAN map: 32 -> 16 -> 8 -> 4 -> 3 -> 2 spatially, 1 output channel.
    assert y.shape == (2, 1, 2, 2), y.shape
    assert bool(jnp.all(jnp.isfinite(y)))

    # Loose cross-check vs. an f32 plain-JAX reference (kernel uses bf16 MXU
    # operands, so allow a generous tolerance).
    y_ref = _reference_forward(x, params)
    err = float(jnp.max(jnp.abs(y - y_ref)))
    assert err < 0.2, f"max abs error vs reference: {err}"

    print("KERNEL_OK")
</pallas_src>

<mosaic_0001>
module attributes {stable_mosaic.version = 11 : i64} {
  func.func @kernel(%arg0: memref<64x96xf32, #tpu.memory_space<vmem>>, %arg1: memref<4x32x64xbf16, #tpu.memory_space<vmem>>, %arg2: memref<4x96x256xbf16, #tpu.memory_space<vmem>>, %arg3: memref<1x256xf32, #tpu.memory_space<vmem>>, %arg4: memref<4x16x32xbf16, #tpu.memory_space<vmem>>, %arg5: memref<4x256x256xbf16, #tpu.memory_space<vmem>>, %arg6: memref<1x32xf32, #tpu.memory_space<vmem>>, %arg7: memref<1x32xf32, #tpu.memory_space<vmem>>, %arg8: memref<256x32xf32, #tpu.memory_space<vmem>>, %arg9: memref<32x256xf32, #tpu.memory_space<vmem>>, %arg10: memref<4x8x16xbf16, #tpu.memory_space<vmem>>, %arg11: memref<4x256x256xbf16, #tpu.memory_space<vmem>>, %arg12: memref<1x64xf32, #tpu.memory_space<vmem>>, %arg13: memref<1x64xf32, #tpu.memory_space<vmem>>, %arg14: memref<256x64xf32, #tpu.memory_space<vmem>>, %arg15: memref<64x256xf32, #tpu.memory_space<vmem>>, %arg16: memref<4x6x8xbf16, #tpu.memory_space<vmem>>, %arg17: memref<4x256x384xbf16, #tpu.memory_space<vmem>>, %arg18: memref<1x128xf32, #tpu.memory_space<vmem>>, %arg19: memref<1x128xf32, #tpu.memory_space<vmem>>, %arg20: memref<384x128xf32, #tpu.memory_space<vmem>>, %arg21: memref<128x384xf32, #tpu.memory_space<vmem>>, %arg22: memref<4x4x6xbf16, #tpu.memory_space<vmem>>, %arg23: memref<4x384x2xbf16, #tpu.memory_space<vmem>>, %arg24: memref<1x2xf32, #tpu.memory_space<vmem>>, %arg25: memref<4x2xf32, #tpu.memory_space<vmem>>) attributes {dimension_semantics = [], scalar_prefetch = 0 : i64, scratch_operands = 0 : i64, tpu.core_type = #tpu.core_type<tc>} {
    %c0 = arith.constant 0 : index
    %c0_0 = arith.constant 0 : index
    %0 = vector.load %arg0[%c0, %c0_0] : memref<64x96xf32, #tpu.memory_space<vmem>>, vector<64x96xf32>
    %1 = arith.truncf %0 : vector<64x96xf32> to vector<64x96xbf16>
    %c0_1 = arith.constant 0 : index
    %c0_2 = arith.constant 0 : index
    %c0_3 = arith.constant 0 : index
    %2 = vector.load %arg1[%c0_1, %c0_2, %c0_3] : memref<4x32x64xbf16, #tpu.memory_space<vmem>>, vector<1x32x64xbf16>
    %3 = vector.shape_cast %2 : vector<1x32x64xbf16> to vector<32x64xbf16>
    %cst = arith.constant dense<0.000000e+00> : vector<32x96xf32>
    %4 = tpu.matmul %3, %1, %cst {dimension_numbers = #tpu.dot_dimension_numbers<[1], [0], [0], [1], [0, 0, 1, 1], [], []>} : vector<32x64xbf16>, vector<64x96xbf16>, vector<32x96xf32> -> vector<32x96xf32>
    %5 = arith.truncf %4 : vector<32x96xf32> to vector<32x96xbf16>
    %c0_4 = arith.constant 0 : index
    %c0_5 = arith.constant 0 : index
    %c0_6 = arith.constant 0 : index
    %6 = vector.load %arg2[%c0_4, %c0_5, %c0_6] : memref<4x96x256xbf16, #tpu.memory_space<vmem>>, vector<1x96x256xbf16>
    %7 = vector.shape_cast %6 : vector<1x96x256xbf16> to vector<96x256xbf16>
    %cst_7 = arith.constant dense<0.000000e+00> : vector<32x256xf32>
    %8 = tpu.matmul %5, %7, %cst_7 {dimension_numbers = #tpu.dot_dimension_numbers<[1], [0], [0], [1], [0, 0, 1, 1], [], []>} : vector<32x96xbf16>, vector<96x256xbf16>, vector<32x256xf32> -> vector<32x256xf32>
    %c1 = arith.constant 1 : index
    %c0_8 = arith.constant 0 : index
    %c0_9 = arith.constant 0 : index
    %9 = vector.load %arg1[%c1, %c0_8, %c0_9] : memref<4x32x64xbf16, #tpu.memory_space<vmem>>, vector<1x32x64xbf16>
    %10 = vector.shape_cast %9 : vector<1x32x64xbf16> to vector<32x64xbf16>
    %cst_10 = arith.constant dense<0.000000e+00> : vector<32x96xf32>
    %11 = tpu.matmul %10, %1, %cst_10 {dimension_numbers = #tpu.dot_dimension_numbers<[1], [0], [0], [1], [0, 0, 1, 1], [], []>} : vector<32x64xbf16>, vector<64x96xbf16>, vector<32x96xf32> -> vector<32x96xf32>
    %12 = arith.truncf %11 : vector<32x96xf32> to vector<32x96xbf16>
    %c1_11 = arith.constant 1 : index
    %c0_12 = arith.constant 0 : index
    %c0_13 = arith.constant 0 : index
    %13 = vector.load %arg2[%c1_11, %c0_12, %c0_13] : memref<4x96x256xbf16, #tpu.memory_space<vmem>>, vector<1x96x256xbf16>
    %14 = vector.shape_cast %13 : vector<1x96x256xbf16> to vector<96x256xbf16>
    %cst_14 = arith.constant dense<0.000000e+00> : vector<32x256xf32>
    %15 = tpu.matmul %12, %14, %cst_14 {dimension_numbers = #tpu.dot_dimension_numbers<[1], [0], [0], [1], [0, 0, 1, 1], [], []>} : vector<32x96xbf16>, vector<96x256xbf16>, vector<32x256xf32> -> vector<32x256xf32>
    %16 = arith.addf %8, %15 : vector<32x256xf32>
    %c2 = arith.constant 2 : index
    %c0_15 = arith.constant 0 : index
    %c0_16 = arith.constant 0 : index
    %17 = vector.load %arg1[%c2, %c0_15, %c0_16] : memref<4x32x64xbf16, #tpu.memory_space<vmem>>, vector<1x32x64xbf16>
    %18 = vector.shape_cast %17 : vector<1x32x64xbf16> to vector<32x64xbf16>
    %cst_17 = arith.constant dense<0.000000e+00> : vector<32x96xf32>
    %19 = tpu.matmul %18, %1, %cst_17 {dimension_numbers = #tpu.dot_dimension_numbers<[1], [0], [0], [1], [0, 0, 1, 1], [], []>} : vector<32x64xbf16>, vector<64x96xbf16>, vector<32x96xf32> -> vector<32x96xf32>
    %20 = arith.truncf %19 : vector<32x96xf32> to vector<32x96xbf16>
    %c2_18 = arith.constant 2 : index
    %c0_19 = arith.constant 0 : index
    %c0_20 = arith.constant 0 : index
    %21 = vector.load %arg2[%c2_18, %c0_19, %c0_20] : memref<4x96x256xbf16, #tpu.memory_space<vmem>>, vector<1x96x256xbf16>
    %22 = vector.shape_cast %21 : vector<1x96x256xbf16> to vector<96x256xbf16>
    %cst_21 = arith.constant dense<0.000000e+00> : vector<32x256xf32>
    %23 = tpu.matmul %20, %22, %cst_21 {dimension_numbers = #tpu.dot_dimension_numbers<[1], [0], [0], [1], [0, 0, 1, 1], [], []>} : vector<32x96xbf16>, vector<96x256xbf16>, vector<32x256xf32> -> vector<32x256xf32>
    %24 = arith.addf %16, %23 : vector<32x256xf32>
    %c3 = arith.constant 3 : index
    %c0_22 = arith.constant 0 : index
    %c0_23 = arith.constant 0 : index
    %25 = vector.load %arg1[%c3, %c0_22, %c0_23] : memref<4x32x64xbf16, #tpu.memory_space<vmem>>, vector<1x32x64xbf16>
    %26 = vector.shape_cast %25 : vector<1x32x64xbf16> to vector<32x64xbf16>
    %cst_24 = arith.constant dense<0.000000e+00> : vector<32x96xf32>
    %27 = tpu.matmul %26, %1, %cst_24 {dimension_numbers = #tpu.dot_dimension_numbers<[1], [0], [0], [1], [0, 0, 1, 1], [], []>} : vector<32x64xbf16>, vector<64x96xbf16>, vector<32x96xf32> -> vector<32x96xf32>
    %28 = arith.truncf %27 : vector<32x96xf32> to vector<32x96xbf16>
    %c3_25 = arith.constant 3 : index
    %c0_26 = arith.constant 0 : index
    %c0_27 = arith.constant 0 : index
    %29 = vector.load %arg2[%c3_25, %c0_26, %c0_27] : memref<4x96x256xbf16, #tpu.memory_space<vmem>>, vector<1x96x256xbf16>
    %30 = vector.shape_cast %29 : vector<1x96x256xbf16> to vector<96x256xbf16>
    %cst_28 = arith.constant dense<0.000000e+00> : vector<32x256xf32>
    %31 = tpu.matmul %28, %30, %cst_28 {dimension_numbers = #tpu.dot_dimension_numbers<[1], [0], [0], [1], [0, 0, 1, 1], [], []>} : vector<32x96xbf16>, vector<96x256xbf16>, vector<32x256xf32> -> vector<32x256xf32>
    %32 = arith.addf %24, %31 : vector<32x256xf32>
    %c0_29 = arith.constant 0 : index
    %c0_30 = arith.constant 0 : index
    %33 = vector.load %arg3[%c0_29, %c0_30] : memref<1x256xf32, #tpu.memory_space<vmem>>, vector<1x256xf32>
    %34 = vector.broadcast %33 : vector<1x256xf32> to vector<32x256xf32>
    %35 = arith.addf %32, %34 : vector<32x256xf32>
    %cst_31 = arith.constant 0.000000e+00 : f32
    %36 = vector.broadcast %cst_31 : f32 to vector<32x256xf32>
    %37 = arith.cmpf oge, %35, %36 : vector<32x256xf32>
    %cst_32 = arith.constant 2.000000e-01 : f32
    %38 = vector.broadcast %cst_32 : f32 to vector<32x256xf32>
    %39 = arith.mulf %35, %38 : vector<32x256xf32>
    %40 = arith.select %37, %35, %39 : vector<32x256xi1>, vector<32x256xf32>
    %41 = arith.truncf %40 : vector<32x256xf32> to vector<32x256xbf16>
    %c0_33 = arith.constant 0 : index
    %c0_34 = arith.constant 0 : index
    %c0_35 = arith.constant 0 : index
    %42 = vector.load %arg4[%c0_33, %c0_34, %c0_35] : memref<4x16x32xbf16, #tpu.memory_space<vmem>>, vector<1x16x32xbf16>
    %43 = vector.shape_cast %42 : vector<1x16x32xbf16> to vector<16x32xbf16>
    %cst_36 = arith.constant dense<0.000000e+00> : vector<16x256xf32>
    %44 = tpu.matmul %43, %41, %cst_36 {dimension_numbers = #tpu.dot_dimension_numbers<[1], [0], [0], [1], [0, 0, 1, 1], [], []>} : vector<16x32xbf16>, vector<32x256xbf16>, vector<16x256xf32> -> vector<16x256xf32>
    %45 = arith.truncf %44 : vector<16x256xf32> to vector<16x256xbf16>
    %c0_37 = arith.constant 0 : index
    %c0_38 = arith.constant 0 : index
    %c0_39 = arith.constant 0 : index
    %46 = vector.load %arg5[%c0_37, %c0_38, %c0_39] : memref<4x256x256xbf16, #tpu.memory_space<vmem>>, vector<1x256x256xbf16>
    %47 = vector.shape_cast %46 : vector<1x256x256xbf16> to vector<256x256xbf16>
    %cst_40 = arith.constant dense<0.000000e+00> : vector<16x256xf32>
    %48 = tpu.matmul %45, %47, %cst_40 {dimension_numbers = #tpu.dot_dimension_numbers<[1], [0], [0], [1], [0, 0, 1, 1], [], []>} : vector<16x256xbf16>, vector<256x256xbf16>, vector<16x256xf32> -> vector<16x256xf32>
    %c1_41 = arith.constant 1 : index
    %c0_42 = arith.constant 0 : index
    %c0_43 = arith.constant 0 : index
    %49 = vector.load %arg4[%c1_41, %c0_42, %c0_43] : memref<4x16x32xbf16, #tpu.memory_space<vmem>>, vector<1x16x32xbf16>
    %50 = vector.shape_cast %49 : vector<1x16x32xbf16> to vector<16x32xbf16>
    %cst_44 = arith.constant dense<0.000000e+00> : vector<16x256xf32>
    %51 = tpu.matmul %50, %41, %cst_44 {dimension_numbers = #tpu.dot_dimension_numbers<[1], [0], [0], [1], [0, 0, 1, 1], [], []>} : vector<16x32xbf16>, vector<32x256xbf16>, vector<16x256xf32> -> vector<16x256xf32>
    %52 = arith.truncf %51 : vector<16x256xf32> to vector<16x256xbf16>
    %c1_45 = arith.constant 1 : index
    %c0_46 = arith.constant 0 : index
    %c0_47 = arith.constant 0 : index
    %53 = vector.load %arg5[%c1_45, %c0_46, %c0_47] : memref<4x256x256xbf16, #tpu.memory_space<vmem>>, vector<1x256x256xbf16>
    %54 = vector.shape_cast %53 : vector<1x256x256xbf16> to vector<256x256xbf16>
    %cst_48 = arith.constant dense<0.000000e+00> : vector<16x256xf32>
    %55 = tpu.matmul %52, %54, %cst_48 {dimension_numbers = #tpu.dot_dimension_numbers<[1], [0], [0], [1], [0, 0, 1, 1], [], []>} : vector<16x256xbf16>, vector<256x256xbf16>, vector<16x256xf32> -> vector<16x256xf32>
    %56 = arith.addf %48, %55 : vector<16x256xf32>
    %c2_49 = arith.constant 2 : index
    %c0_50 = arith.constant 0 : index
    %c0_51 = arith.constant 0 : index
    %57 = vector.load %arg4[%c2_49, %c0_50, %c0_51] : memref<4x16x32xbf16, #tpu.memory_space<vmem>>, vector<1x16x32xbf16>
    %58 = vector.shape_cast %57 : vector<1x16x32xbf16> to vector<16x32xbf16>
    %cst_52 = arith.constant dense<0.000000e+00> : vector<16x256xf32>
    %59 = tpu.matmul %58, %41, %cst_52 {dimension_numbers = #tpu.dot_dimension_numbers<[1], [0], [0], [1], [0, 0, 1, 1], [], []>} : vector<16x32xbf16>, vector<32x256xbf16>, vector<16x256xf32> -> vector<16x256xf32>
    %60 = arith.truncf %59 : vector<16x256xf32> to vector<16x256xbf16>
    %c2_53 = arith.constant 2 : index
    %c0_54 = arith.constant 0 : index
    %c0_55 = arith.constant 0 : index
    %61 = vector.load %arg5[%c2_53, %c0_54, %c0_55] : memref<4x256x256xbf16, #tpu.memory_space<vmem>>, vector<1x256x256xbf16>
    %62 = vector.shape_cast %61 : vector<1x256x256xbf16> to vector<256x256xbf16>
    %cst_56 = arith.constant dense<0.000000e+00> : vector<16x256xf32>
    %63 = tpu.matmul %60, %62, %cst_56 {dimension_numbers = #tpu.dot_dimension_numbers<[1], [0], [0], [1], [0, 0, 1, 1], [], []>} : vector<16x256xbf16>, vector<256x256xbf16>, vector<16x256xf32> -> vector<16x256xf32>
    %64 = arith.addf %56, %63 : vector<16x256xf32>
    %c3_57 = arith.constant 3 : index
    %c0_58 = arith.constant 0 : index
    %c0_59 = arith.constant 0 : index
    %65 = vector.load %arg4[%c3_57, %c0_58, %c0_59] : memref<4x16x32xbf16, #tpu.memory_space<vmem>>, vector<1x16x32xbf16>
    %66 = vector.shape_cast %65 : vector<1x16x32xbf16> to vector<16x32xbf16>
    %cst_60 = arith.constant dense<0.000000e+00> : vector<16x256xf32>
    %67 = tpu.matmul %66, %41, %cst_60 {dimension_numbers = #tpu.dot_dimension_numbers<[1], [0], [0], [1], [0, 0, 1, 1], [], []>} : vector<16x32xbf16>, vector<32x256xbf16>, vector<16x256xf32> -> vector<16x256xf32>
    %68 = arith.truncf %67 : vector<16x256xf32> to vector<16x256xbf16>
    %c3_61 = arith.constant 3 : index
    %c0_62 = arith.constant 0 : index
    %c0_63 = arith.constant 0 : index
    %69 = vector.load %arg5[%c3_61, %c0_62, %c0_63] : memref<4x256x256xbf16, #tpu.memory_space<vmem>>, vector<1x256x256xbf16>
    %70 = vector.shape_cast %69 : vector<1x256x256xbf16> to vector<256x256xbf16>
    %cst_64 = arith.constant dense<0.000000e+00> : vector<16x256xf32>
    %71 = tpu.matmul %68, %70, %cst_64 {dimension_numbers = #tpu.dot_dimension_numbers<[1], [0], [0], [1], [0, 0, 1, 1], [], []>} : vector<16x256xbf16>, vector<256x256xbf16>, vector<16x256xf32> -> vector<16x256xf32>
    %72 = arith.addf %64, %71 : vector<16x256xf32>
    %cst_65 = arith.constant dense<0.000000e+00> : vector<256xf32>
    %73 = vector.multi_reduction <add>, %72, %cst_65 [0] : vector<16x256xf32> to vector<256xf32>
    %74 = vector.shape_cast %73 : vector<256xf32> to vector<1x256xf32>
    %75 = arith.mulf %72, %72 : vector<16x256xf32>
    %cst_66 = arith.constant dense<0.000000e+00> : vector<256xf32>
    %76 = vector.multi_reduction <add>, %75, %cst_66 [0] : vector<16x256xf32> to vector<256xf32>
    %77 = vector.shape_cast %76 : vector<256xf32> to vector<1x256xf32>
    %c0_67 = arith.constant 0 : index
    %c0_68 = arith.constant 0 : index
    %78 = vector.load %arg8[%c0_67, %c0_68] : memref<256x32xf32, #tpu.memory_space<vmem>>, vector<256x32xf32>
    %cst_69 = arith.constant dense<0.000000e+00> : vector<1x32xf32>
    %79 = tpu.matmul %74, %78, %cst_69 {dimension_numbers = #tpu.dot_dimension_numbers<[1], [0], [0], [1], [0, 0, 1, 1], [], []>} : vector<1x256xf32>, vector<256x32xf32>, vector<1x32xf32> -> vector<1x32xf32>
    %c0_70 = arith.constant 0 : index
    %c0_71 = arith.constant 0 : index
    %80 = vector.load %arg8[%c0_70, %c0_71] : memref<256x32xf32, #tpu.memory_space<vmem>>, vector<256x32xf32>
    %cst_72 = arith.constant dense<0.000000e+00> : vector<1x32xf32>
    %81 = tpu.matmul %77, %80, %cst_72 {dimension_numbers = #tpu.dot_dimension_numbers<[1], [0], [0], [1], [0, 0, 1, 1], [], []>} : vector<1x256xf32>, vector<256x32xf32>, vector<1x32xf32> -> vector<1x32xf32>
    %cst_73 = arith.constant 7.812500e-03 : f32
    %82 = vector.broadcast %cst_73 : f32 to vector<1x32xf32>
    %83 = arith.mulf %79, %82 : vector<1x32xf32>
    %cst_74 = arith.constant 7.812500e-03 : f32
    %84 = vector.broadcast %cst_74 : f32 to vector<1x32xf32>
    %85 = arith.mulf %81, %84 : vector<1x32xf32>
    %86 = arith.mulf %83, %83 : vector<1x32xf32>
    %87 = arith.subf %85, %86 : vector<1x32xf32>
    %cst_75 = arith.constant 0.000000e+00 : f32
    %88 = vector.broadcast %cst_75 : f32 to vector<1x32xf32>
    %89 = arith.maximumf %87, %88 : vector<1x32xf32>
    %c0_76 = arith.constant 0 : index
    %c0_77 = arith.constant 0 : index
    %90 = vector.load %arg6[%c0_76, %c0_77] : memref<1x32xf32, #tpu.memory_space<vmem>>, vector<1x32xf32>
    %cst_78 = arith.constant 9.99999974E-6 : f32
    %91 = vector.broadcast %cst_78 : f32 to vector<1x32xf32>
    %92 = arith.addf %89, %91 : vector<1x32xf32>
    %93 = math.rsqrt %92 : vector<1x32xf32>
    %94 = arith.mulf %90, %93 : vector<1x32xf32>
    %c0_79 = arith.constant 0 : index
    %c0_80 = arith.constant 0 : index
    %95 = vector.load %arg7[%c0_79, %c0_80] : memref<1x32xf32, #tpu.memory_space<vmem>>, vector<1x32xf32>
    %96 = arith.mulf %83, %94 : vector<1x32xf32>
    %97 = arith.subf %95, %96 : vector<1x32xf32>
    %c0_81 = arith.constant 0 : index
    %c0_82 = arith.constant 0 : index
    %98 = vector.load %arg9[%c0_81, %c0_82] : memref<32x256xf32, #tpu.memory_space<vmem>>, vector<32x256xf32>
    %cst_83 = arith.constant dense<0.000000e+00> : vector<1x256xf32>
    %99 = tpu.matmul %94, %98, %cst_83 {dimension_numbers = #tpu.dot_dimension_numbers<[1], [0], [0], [1], [0, 0, 1, 1], [], []>} : vector<1x32xf32>, vector<32x256xf32>, vector<1x256xf32> -> vector<1x256xf32>
    %c0_84 = arith.constant 0 : index
    %c0_85 = arith.constant 0 : index
    %100 = vector.load %arg9[%c0_84, %c0_85] : memref<32x256xf32, #tpu.memory_space<vmem>>, vector<32x256xf32>
    %cst_86 = arith.constant dense<0.000000e+00> : vector<1x256xf32>
    %101 = tpu.matmul %97, %100, %cst_86 {dimension_numbers = #tpu.dot_dimension_numbers<[1], [0], [0], [1], [0, 0, 1, 1], [], []>} : vector<1x32xf32>, vector<32x256xf32>, vector<1x256xf32> -> vector<1x256xf32>
    %102 = vector.broadcast %99 : vector<1x256xf32> to vector<16x256xf32>
    %103 = arith.mulf %72, %102 : vector<16x256xf32>
    %104 = vector.broadcast %101 : vector<1x256xf32> to vector<16x256xf32>
    %105 = arith.addf %103, %104 : vector<16x256xf32>
    %cst_87 = arith.constant 0.000000e+00 : f32
    %106 = vector.broadcast %cst_87 : f32 to vector<16x256xf32>
    %107 = arith.cmpf oge, %105, %106 : vector<16x256xf32>
    %cst_88 = arith.constant 2.000000e-01 : f32
    %108 = vector.broadcast %cst_88 : f32 to vector<16x256xf32>
    %109 = arith.mulf %105, %108 : vector<16x256xf32>
    %110 = arith.select %107, %105, %109 : vector<16x256xi1>, vector<16x256xf32>
    %111 = arith.truncf %110 : vector<16x256xf32> to vector<16x256xbf16>
    %c0_89 = arith.constant 0 : index
    %c0_90 = arith.constant 0 : index
    %c0_91 = arith.constant 0 : index
    %112 = vector.load %arg10[%c0_89, %c0_90, %c0_91] : memref<4x8x16xbf16, #tpu.memory_space<vmem>>, vector<1x8x16xbf16>
    %113 = vector.shape_cast %112 : vector<1x8x16xbf16> to vector<8x16xbf16>
    %cst_92 = arith.constant dense<0.000000e+00> : vector<8x256xf32>
    %114 = tpu.matmul %113, %111, %cst_92 {dimension_numbers = #tpu.dot_dimension_numbers<[1], [0], [0], [1], [0, 0, 1, 1], [], []>} : vector<8x16xbf16>, vector<16x256xbf16>, vector<8x256xf32> -> vector<8x256xf32>
    %115 = arith.truncf %114 : vector<8x256xf32> to vector<8x256xbf16>
    %c0_93 = arith.constant 0 : index
    %c0_94 = arith.constant 0 : index
    %c0_95 = arith.constant 0 : index
    %116 = vector.load %arg11[%c0_93, %c0_94, %c0_95] : memref<4x256x256xbf16, #tpu.memory_space<vmem>>, vector<1x256x256xbf16>
    %117 = vector.shape_cast %116 : vector<1x256x256xbf16> to vector<256x256xbf16>
    %cst_96 = arith.constant dense<0.000000e+00> : vector<8x256xf32>
    %118 = tpu.matmul %115, %117, %cst_96 {dimension_numbers = #tpu.dot_dimension_numbers<[1], [0], [0], [1], [0, 0, 1, 1], [], []>} : vector<8x256xbf16>, vector<256x256xbf16>, vector<8x256xf32> -> vector<8x256xf32>
    %c1_97 = arith.constant 1 : index
    %c0_98 = arith.constant 0 : index
    %c0_99 = arith.constant 0 : index
    %119 = vector.load %arg10[%c1_97, %c0_98, %c0_99] : memref<4x8x16xbf16, #tpu.memory_space<vmem>>, vector<1x8x16xbf16>
    %120 = vector.shape_cast %119 : vector<1x8x16xbf16> to vector<8x16xbf16>
    %cst_100 = arith.constant dense<0.000000e+00> : vector<8x256xf32>
    %121 = tpu.matmul %120, %111, %cst_100 {dimension_numbers = #tpu.dot_dimension_numbers<[1], [0], [0], [1], [0, 0, 1, 1], [], []>} : vector<8x16xbf16>, vector<16x256xbf16>, vector<8x256xf32> -> vector<8x256xf32>
    %122 = arith.truncf %121 : vector<8x256xf32> to vector<8x256xbf16>
    %c1_101 = arith.constant 1 : index
    %c0_102 = arith.constant 0 : index
    %c0_103 = arith.constant 0 : index
    %123 = vector.load %arg11[%c1_101, %c0_102, %c0_103] : memref<4x256x256xbf16, #tpu.memory_space<vmem>>, vector<1x256x256xbf16>
    %124 = vector.shape_cast %123 : vector<1x256x256xbf16> to vector<256x256xbf16>
    %cst_104 = arith.constant dense<0.000000e+00> : vector<8x256xf32>
    %125 = tpu.matmul %122, %124, %cst_104 {dimension_numbers = #tpu.dot_dimension_numbers<[1], [0], [0], [1], [0, 0, 1, 1], [], []>} : vector<8x256xbf16>, vector<256x256xbf16>, vector<8x256xf32> -> vector<8x256xf32>
    %126 = arith.addf %118, %125 : vector<8x256xf32>
    %c2_105 = arith.constant 2 : index
    %c0_106 = arith.constant 0 : index
    %c0_107 = arith.constant 0 : index
    %127 = vector.load %arg10[%c2_105, %c0_106, %c0_107] : memref<4x8x16xbf16, #tpu.memory_space<vmem>>, vector<1x8x16xbf16>
    %128 = vector.shape_cast %127 : vector<1x8x16xbf16> to vector<8x16xbf16>
    %cst_108 = arith.constant dense<0.000000e+00> : vector<8x256xf32>
    %129 = tpu.matmul %128, %111, %cst_108 {dimension_numbers = #tpu.dot_dimension_numbers<[1], [0], [0], [1], [0, 0, 1, 1], [], []>} : vector<8x16xbf16>, vector<16x256xbf16>, vector<8x256xf32> -> vector<8x256xf32>
    %130 = arith.truncf %129 : vector<8x256xf32> to vector<8x256xbf16>
    %c2_109 = arith.constant 2 : index
    %c0_110 = arith.constant 0 : index
    %c0_111 = arith.constant 0 : index
    %131 = vector.load %arg11[%c2_109, %c0_110, %c0_111] : memref<4x256x256xbf16, #tpu.memory_space<vmem>>, vector<1x256x256xbf16>
    %132 = vector.shape_cast %131 : vector<1x256x256xbf16> to vector<256x256xbf16>
    %cst_112 = arith.constant dense<0.000000e+00> : vector<8x256xf32>
    %133 = tpu.matmul %130, %132, %cst_112 {dimension_numbers = #tpu.dot_dimension_numbers<[1], [0], [0], [1], [0, 0, 1, 1], [], []>} : vector<8x256xbf16>, vector<256x256xbf16>, vector<8x256xf32> -> vector<8x256xf32>
    %134 = arith.addf %126, %133 : vector<8x256xf32>
    %c3_113 = arith.constant 3 : index
    %c0_114 = arith.constant 0 : index
    %c0_115 = arith.constant 0 : index
    %135 = vector.load %arg10[%c3_113, %c0_114, %c0_115] : memref<4x8x16xbf16, #tpu.memory_space<vmem>>, vector<1x8x16xbf16>
    %136 = vector.shape_cast %135 : vector<1x8x16xbf16> to vector<8x16xbf16>
    %cst_116 = arith.constant dense<0.000000e+00> : vector<8x256xf32>
    %137 = tpu.matmul %136, %111, %cst_116 {dimension_numbers = #tpu.dot_dimension_numbers<[1], [0], [0], [1], [0, 0, 1, 1], [], []>} : vector<8x16xbf16>, vector<16x256xbf16>, vector<8x256xf32> -> vector<8x256xf32>
    %138 = arith.truncf %137 : vector<8x256xf32> to vector<8x256xbf16>
    %c3_117 = arith.constant 3 : index
    %c0_118 = arith.constant 0 : index
    %c0_119 = arith.constant 0 : index
    %139 = vector.load %arg11[%c3_117, %c0_118, %c0_119] : memref<4x256x256xbf16, #tpu.memory_space<vmem>>, vector<1x256x256xbf16>
    %140 = vector.shape_cast %139 : vector<1x256x256xbf16> to vector<256x256xbf16>
    %cst_120 = arith.constant dense<0.000000e+00> : vector<8x256xf32>
    %141 = tpu.matmul %138, %140, %cst_120 {dimension_numbers = #tpu.dot_dimension_numbers<[1], [0], [0], [1], [0, 0, 1, 1], [], []>} : vector<8x256xbf16>, vector<256x256xbf16>, vector<8x256xf32> -> vector<8x256xf32>
    %142 = arith.addf %134, %141 : vector<8x256xf32>
    %cst_121 = arith.constant dense<0.000000e+00> : vector<256xf32>
    %143 = vector.multi_reduction <add>, %142, %cst_121 [0] : vector<8x256xf32> to vector<256xf32>
    %144 = vector.shape_cast %143 : vector<256xf32> to vector<1x256xf32>
    %145 = arith.mulf %142, %142 : vector<8x256xf32>
    %cst_122 = arith.constant dense<0.000000e+00> : vector<256xf32>
    %146 = vector.multi_reduction <add>, %145, %cst_122 [0] : vector<8x256xf32> to vector<256xf32>
    %147 = vector.shape_cast %146 : vector<256xf32> to vector<1x256xf32>
    %c0_123 = arith.constant 0 : index
    %c0_124 = arith.constant 0 : index
    %148 = vector.load %arg14[%c0_123, %c0_124] : memref<256x64xf32, #tpu.memory_space<vmem>>, vector<256x64xf32>
    %cst_125 = arith.constant dense<0.000000e+00> : vector<1x64xf32>
    %149 = tpu.matmul %144, %148, %cst_125 {dimension_numbers = #tpu.dot_dimension_numbers<[1], [0], [0], [1], [0, 0, 1, 1], [], []>} : vector<1x256xf32>, vector<256x64xf32>, vector<1x64xf32> -> vector<1x64xf32>
    %c0_126 = arith.constant 0 : index
    %c0_127 = arith.constant 0 : index
    %150 = vector.load %arg14[%c0_126, %c0_127] : memref<256x64xf32, #tpu.memory_space<vmem>>, vector<256x64xf32>
    %cst_128 = arith.constant dense<0.000000e+00> : vector<1x64xf32>
    %151 = tpu.matmul %147, %150, %cst_128 {dimension_numbers = #tpu.dot_dimension_numbers<[1], [0], [0], [1], [0, 0, 1, 1], [], []>} : vector<1x256xf32>, vector<256x64xf32>, vector<1x64xf32> -> vector<1x64xf32>
    %cst_129 = arith.constant 3.125000e-02 : f32
    %152 = vector.broadcast %cst_129 : f32 to vector<1x64xf32>
    %153 = arith.mulf %149, %152 : vector<1x64xf32>
    %cst_130 = arith.constant 3.125000e-02 : f32
    %154 = vector.broadcast %cst_130 : f32 to vector<1x64xf32>
    %155 = arith.mulf %151, %154 : vector<1x64xf32>
    %156 = arith.mulf %153, %153 : vector<1x64xf32>
    %157 = arith.subf %155, %156 : vector<1x64xf32>
    %cst_131 = arith.constant 0.000000e+00 : f32
    %158 = vector.broadcast %cst_131 : f32 to vector<1x64xf32>
    %159 = arith.maximumf %157, %158 : vector<1x64xf32>
    %c0_132 = arith.constant 0 : index
    %c0_133 = arith.constant 0 : index
    %160 = vector.load %arg12[%c0_132, %c0_133] : memref<1x64xf32, #tpu.memory_space<vmem>>, vector<1x64xf32>
    %cst_134 = arith.constant 9.99999974E-6 : f32
    %161 = vector.broadcast %cst_134 : f32 to vector<1x64xf32>
    %162 = arith.addf %159, %161 : vector<1x64xf32>
    %163 = math.rsqrt %162 : vector<1x64xf32>
    %164 = arith.mulf %160, %163 : vector<1x64xf32>
    %c0_135 = arith.constant 0 : index
    %c0_136 = arith.constant 0 : index
    %165 = vector.load %arg13[%c0_135, %c0_136] : memref<1x64xf32, #tpu.memory_space<vmem>>, vector<1x64xf32>
    %166 = arith.mulf %153, %164 : vector<1x64xf32>
    %167 = arith.subf %165, %166 : vector<1x64xf32>
    %c0_137 = arith.constant 0 : index
    %c0_138 = arith.constant 0 : index
    %168 = vector.load %arg15[%c0_137, %c0_138] : memref<64x256xf32, #tpu.memory_space<vmem>>, vector<64x256xf32>
    %cst_139 = arith.constant dense<0.000000e+00> : vector<1x256xf32>
    %169 = tpu.matmul %164, %168, %cst_139 {dimension_numbers = #tpu.dot_dimension_numbers<[1], [0], [0], [1], [0, 0, 1, 1], [], []>} : vector<1x64xf32>, vector<64x256xf32>, vector<1x256xf32> -> vector<1x256xf32>
    %c0_140 = arith.constant 0 : index
    %c0_141 = arith.constant 0 : index
    %170 = vector.load %arg15[%c0_140, %c0_141] : memref<64x256xf32, #tpu.memory_space<vmem>>, vector<64x256xf32>
    %cst_142 = arith.constant dense<0.000000e+00> : vector<1x256xf32>
    %171 = tpu.matmul %167, %170, %cst_142 {dimension_numbers = #tpu.dot_dimension_numbers<[1], [0], [0], [1], [0, 0, 1, 1], [], []>} : vector<1x64xf32>, vector<64x256xf32>, vector<1x256xf32> -> vector<1x256xf32>
    %172 = vector.broadcast %169 : vector<1x256xf32> to vector<8x256xf32>
    %173 = arith.mulf %142, %172 : vector<8x256xf32>
    %174 = vector.broadcast %171 : vector<1x256xf32> to vector<8x256xf32>
    %175 = arith.addf %173, %174 : vector<8x256xf32>
    %cst_143 = arith.constant 0.000000e+00 : f32
    %176 = vector.broadcast %cst_143 : f32 to vector<8x256xf32>
    %177 = arith.cmpf oge, %175, %176 : vector<8x256xf32>
    %cst_144 = arith.constant 2.000000e-01 : f32
    %178 = vector.broadcast %cst_144 : f32 to vector<8x256xf32>
    %179 = arith.mulf %175, %178 : vector<8x256xf32>
    %180 = arith.select %177, %175, %179 : vector<8x256xi1>, vector<8x256xf32>
    %181 = arith.truncf %180 : vector<8x256xf32> to vector<8x256xbf16>
    %c0_145 = arith.constant 0 : index
    %c0_146 = arith.constant 0 : index
    %c0_147 = arith.constant 0 : index
    %182 = vector.load %arg16[%c0_145, %c0_146, %c0_147] : memref<4x6x8xbf16, #tpu.memory_space<vmem>>, vector<1x6x8xbf16>
    %183 = vector.shape_cast %182 : vector<1x6x8xbf16> to vector<6x8xbf16>
    %cst_148 = arith.constant dense<0.000000e+00> : vector<6x256xf32>
    %184 = tpu.matmul %183, %181, %cst_148 {dimension_numbers = #tpu.dot_dimension_numbers<[1], [0], [0], [1], [0, 0, 1, 1], [], []>} : vector<6x8xbf16>, vector<8x256xbf16>, vector<6x256xf32> -> vector<6x256xf32>
    %185 = arith.truncf %184 : vector<6x256xf32> to vector<6x256xbf16>
    %c0_149 = arith.constant 0 : index
    %c0_150 = arith.constant 0 : index
    %c0_151 = arith.constant 0 : index
    %186 = vector.load %arg17[%c0_149, %c0_150, %c0_151] : memref<4x256x384xbf16, #tpu.memory_space<vmem>>, vector<1x256x384xbf16>
    %187 = vector.shape_cast %186 : vector<1x256x384xbf16> to vector<256x384xbf16>
    %cst_152 = arith.constant dense<0.000000e+00> : vector<6x384xf32>
    %188 = tpu.matmul %185, %187, %cst_152 {dimension_numbers = #tpu.dot_dimension_numbers<[1], [0], [0], [1], [0, 0, 1, 1], [], []>} : vector<6x256xbf16>, vector<256x384xbf16>, vector<6x384xf32> -> vector<6x384xf32>
    %c1_153 = arith.constant 1 : index
    %c0_154 = arith.constant 0 : index
    %c0_155 = arith.constant 0 : index
    %189 = vector.load %arg16[%c1_153, %c0_154, %c0_155] : memref<4x6x8xbf16, #tpu.memory_space<vmem>>, vector<1x6x8xbf16>
    %190 = vector.shape_cast %189 : vector<1x6x8xbf16> to vector<6x8xbf16>
    %cst_156 = arith.constant dense<0.000000e+00> : vector<6x256xf32>
    %191 = tpu.matmul %190, %181, %cst_156 {dimension_numbers = #tpu.dot_dimension_numbers<[1], [0], [0], [1], [0, 0, 1, 1], [], []>} : vector<6x8xbf16>, vector<8x256xbf16>, vector<6x256xf32> -> vector<6x256xf32>
    %192 = arith.truncf %191 : vector<6x256xf32> to vector<6x256xbf16>
    %c1_157 = arith.constant 1 : index
    %c0_158 = arith.constant 0 : index
    %c0_159 = arith.constant 0 : index
    %193 = vector.load %arg17[%c1_157, %c0_158, %c0_159] : memref<4x256x384xbf16, #tpu.memory_space<vmem>>, vector<1x256x384xbf16>
    %194 = vector.shape_cast %193 : vector<1x256x384xbf16> to vector<256x384xbf16>
    %cst_160 = arith.constant dense<0.000000e+00> : vector<6x384xf32>
    %195 = tpu.matmul %192, %194, %cst_160 {dimension_numbers = #tpu.dot_dimension_numbers<[1], [0], [0], [1], [0, 0, 1, 1], [], []>} : vector<6x256xbf16>, vector<256x384xbf16>, vector<6x384xf32> -> vector<6x384xf32>
    %196 = arith.addf %188, %195 : vector<6x384xf32>
    %c2_161 = arith.constant 2 : index
    %c0_162 = arith.constant 0 : index
    %c0_163 = arith.constant 0 : index
    %197 = vector.load %arg16[%c2_161, %c0_162, %c0_163] : memref<4x6x8xbf16, #tpu.memory_space<vmem>>, vector<1x6x8xbf16>
    %198 = vector.shape_cast %197 : vector<1x6x8xbf16> to vector<6x8xbf16>
    %cst_164 = arith.constant dense<0.000000e+00> : vector<6x256xf32>
    %199 = tpu.matmul %198, %181, %cst_164 {dimension_numbers = #tpu.dot_dimension_numbers<[1], [0], [0], [1], [0, 0, 1, 1], [], []>} : vector<6x8xbf16>, vector<8x256xbf16>, vector<6x256xf32> -> vector<6x256xf32>
    %200 = arith.truncf %199 : vector<6x256xf32> to vector<6x256xbf16>
    %c2_165 = arith.constant 2 : index
    %c0_166 = arith.constant 0 : index
    %c0_167 = arith.constant 0 : index
    %201 = vector.load %arg17[%c2_165, %c0_166, %c0_167] : memref<4x256x384xbf16, #tpu.memory_space<vmem>>, vector<1x256x384xbf16>
    %202 = vector.shape_cast %201 : vector<1x256x384xbf16> to vector<256x384xbf16>
    %cst_168 = arith.constant dense<0.000000e+00> : vector<6x384xf32>
    %203 = tpu.matmul %200, %202, %cst_168 {dimension_numbers = #tpu.dot_dimension_numbers<[1], [0], [0], [1], [0, 0, 1, 1], [], []>} : vector<6x256xbf16>, vector<256x384xbf16>, vector<6x384xf32> -> vector<6x384xf32>
    %204 = arith.addf %196, %203 : vector<6x384xf32>
    %c3_169 = arith.constant 3 : index
    %c0_170 = arith.constant 0 : index
    %c0_171 = arith.constant 0 : index
    %205 = vector.load %arg16[%c3_169, %c0_170, %c0_171] : memref<4x6x8xbf16, #tpu.memory_space<vmem>>, vector<1x6x8xbf16>
    %206 = vector.shape_cast %205 : vector<1x6x8xbf16> to vector<6x8xbf16>
    %cst_172 = arith.constant dense<0.000000e+00> : vector<6x256xf32>
    %207 = tpu.matmul %206, %181, %cst_172 {dimension_numbers = #tpu.dot_dimension_numbers<[1], [0], [0], [1], [0, 0, 1, 1], [], []>} : vector<6x8xbf16>, vector<8x256xbf16>, vector<6x256xf32> -> vector<6x256xf32>
    %208 = arith.truncf %207 : vector<6x256xf32> to vector<6x256xbf16>
    %c3_173 = arith.constant 3 : index
    %c0_174 = arith.constant 0 : index
    %c0_175 = arith.constant 0 : index
    %209 = vector.load %arg17[%c3_173, %c0_174, %c0_175] : memref<4x256x384xbf16, #tpu.memory_space<vmem>>, vector<1x256x384xbf16>
    %210 = vector.shape_cast %209 : vector<1x256x384xbf16> to vector<256x384xbf16>
    %cst_176 = arith.constant dense<0.000000e+00> : vector<6x384xf32>
    %211 = tpu.matmul %208, %210, %cst_176 {dimension_numbers = #tpu.dot_dimension_numbers<[1], [0], [0], [1], [0, 0, 1, 1], [], []>} : vector<6x256xbf16>, vector<256x384xbf16>, vector<6x384xf32> -> vector<6x384xf32>
    %212 = arith.addf %204, %211 : vector<6x384xf32>
    %cst_177 = arith.constant dense<0.000000e+00> : vector<384xf32>
    %213 = vector.multi_reduction <add>, %212, %cst_177 [0] : vector<6x384xf32> to vector<384xf32>
    %214 = vector.shape_cast %213 : vector<384xf32> to vector<1x384xf32>
    %215 = arith.mulf %212, %212 : vector<6x384xf32>
    %cst_178 = arith.constant dense<0.000000e+00> : vector<384xf32>
    %216 = vector.multi_reduction <add>, %215, %cst_178 [0] : vector<6x384xf32> to vector<384xf32>
    %217 = vector.shape_cast %216 : vector<384xf32> to vector<1x384xf32>
    %c0_179 = arith.constant 0 : index
    %c0_180 = arith.constant 0 : index
    %218 = vector.load %arg20[%c0_179, %c0_180] : memref<384x128xf32, #tpu.memory_space<vmem>>, vector<384x128xf32>
    %cst_181 = arith.constant dense<0.000000e+00> : vector<1x128xf32>
    %219 = tpu.matmul %214, %218, %cst_181 {dimension_numbers = #tpu.dot_dimension_numbers<[1], [0], [0], [1], [0, 0, 1, 1], [], []>} : vector<1x384xf32>, vector<384x128xf32>, vector<1x128xf32> -> vector<1x128xf32>
    %c0_182 = arith.constant 0 : index
    %c0_183 = arith.constant 0 : index
    %220 = vector.load %arg20[%c0_182, %c0_183] : memref<384x128xf32, #tpu.memory_space<vmem>>, vector<384x128xf32>
    %cst_184 = arith.constant dense<0.000000e+00> : vector<1x128xf32>
    %221 = tpu.matmul %217, %220, %cst_184 {dimension_numbers = #tpu.dot_dimension_numbers<[1], [0], [0], [1], [0, 0, 1, 1], [], []>} : vector<1x384xf32>, vector<384x128xf32>, vector<1x128xf32> -> vector<1x128xf32>
    %cst_185 = arith.constant 0.055555556 : f32
    %222 = vector.broadcast %cst_185 : f32 to vector<1x128xf32>
    %223 = arith.mulf %219, %222 : vector<1x128xf32>
    %cst_186 = arith.constant 0.055555556 : f32
    %224 = vector.broadcast %cst_186 : f32 to vector<1x128xf32>
    %225 = arith.mulf %221, %224 : vector<1x128xf32>
    %226 = arith.mulf %223, %223 : vector<1x128xf32>
    %227 = arith.subf %225, %226 : vector<1x128xf32>
    %cst_187 = arith.constant 0.000000e+00 : f32
    %228 = vector.broadcast %cst_187 : f32 to vector<1x128xf32>
    %229 = arith.maximumf %227, %228 : vector<1x128xf32>
    %c0_188 = arith.constant 0 : index
    %c0_189 = arith.constant 0 : index
    %230 = vector.load %arg18[%c0_188, %c0_189] : memref<1x128xf32, #tpu.memory_space<vmem>>, vector<1x128xf32>
    %cst_190 = arith.constant 9.99999974E-6 : f32
    %231 = vector.broadcast %cst_190 : f32 to vector<1x128xf32>
    %232 = arith.addf %229, %231 : vector<1x128xf32>
    %233 = math.rsqrt %232 : vector<1x128xf32>
    %234 = arith.mulf %230, %233 : vector<1x128xf32>
    %c0_191 = arith.constant 0 : index
    %c0_192 = arith.constant 0 : index
    %235 = vector.load %arg19[%c0_191, %c0_192] : memref<1x128xf32, #tpu.memory_space<vmem>>, vector<1x128xf32>
    %236 = arith.mulf %223, %234 : vector<1x128xf32>
    %237 = arith.subf %235, %236 : vector<1x128xf32>
    %c0_193 = arith.constant 0 : index
    %c0_194 = arith.constant 0 : index
    %238 = vector.load %arg21[%c0_193, %c0_194] : memref<128x384xf32, #tpu.memory_space<vmem>>, vector<128x384xf32>
    %cst_195 = arith.constant dense<0.000000e+00> : vector<1x384xf32>
    %239 = tpu.matmul %234, %238, %cst_195 {dimension_numbers = #tpu.dot_dimension_numbers<[1], [0], [0], [1], [0, 0, 1, 1], [], []>} : vector<1x128xf32>, vector<128x384xf32>, vector<1x384xf32> -> vector<1x384xf32>
    %c0_196 = arith.constant 0 : index
    %c0_197 = arith.constant 0 : index
    %240 = vector.load %arg21[%c0_196, %c0_197] : memref<128x384xf32, #tpu.memory_space<vmem>>, vector<128x384xf32>
    %cst_198 = arith.constant dense<0.000000e+00> : vector<1x384xf32>
    %241 = tpu.matmul %237, %240, %cst_198 {dimension_numbers = #tpu.dot_dimension_numbers<[1], [0], [0], [1], [0, 0, 1, 1], [], []>} : vector<1x128xf32>, vector<128x384xf32>, vector<1x384xf32> -> vector<1x384xf32>
    %242 = vector.broadcast %239 : vector<1x384xf32> to vector<6x384xf32>
    %243 = arith.mulf %212, %242 : vector<6x384xf32>
    %244 = vector.broadcast %241 : vector<1x384xf32> to vector<6x384xf32>
    %245 = arith.addf %243, %244 : vector<6x384xf32>
    %cst_199 = arith.constant 0.000000e+00 : f32
    %246 = vector.broadcast %cst_199 : f32 to vector<6x384xf32>
    %247 = arith.cmpf oge, %245, %246 : vector<6x384xf32>
    %cst_200 = arith.constant 2.000000e-01 : f32
    %248 = vector.broadcast %cst_200 : f32 to vector<6x384xf32>
    %249 = arith.mulf %245, %248 : vector<6x384xf32>
    %250 = arith.select %247, %245, %249 : vector<6x384xi1>, vector<6x384xf32>
    %251 = arith.truncf %250 : vector<6x384xf32> to vector<6x384xbf16>
    %c0_201 = arith.constant 0 : index
    %c0_202 = arith.constant 0 : index
    %c0_203 = arith.constant 0 : index
    %252 = vector.load %arg22[%c0_201, %c0_202, %c0_203] : memref<4x4x6xbf16, #tpu.memory_space<vmem>>, vector<1x4x6xbf16>
    %253 = vector.shape_cast %252 : vector<1x4x6xbf16> to vector<4x6xbf16>
    %cst_204 = arith.constant dense<0.000000e+00> : vector<4x384xf32>
    %254 = tpu.matmul %253, %251, %cst_204 {dimension_numbers = #tpu.dot_dimension_numbers<[1], [0], [0], [1], [0, 0, 1, 1], [], []>} : vector<4x6xbf16>, vector<6x384xbf16>, vector<4x384xf32> -> vector<4x384xf32>
    %255 = arith.truncf %254 : vector<4x384xf32> to vector<4x384xbf16>
    %c0_205 = arith.constant 0 : index
    %c0_206 = arith.constant 0 : index
    %c0_207 = arith.constant 0 : index
    %256 = vector.load %arg23[%c0_205, %c0_206, %c0_207] : memref<4x384x2xbf16, #tpu.memory_space<vmem>>, vector<1x384x2xbf16>
    %257 = vector.shape_cast %256 : vector<1x384x2xbf16> to vector<384x2xbf16>
    %cst_208 = arith.constant dense<0.000000e+00> : vector<4x2xf32>
    %258 = tpu.matmul %255, %257, %cst_208 {dimension_numbers = #tpu.dot_dimension_numbers<[1], [0], [0], [1], [0, 0, 1, 1], [], []>} : vector<4x384xbf16>, vector<384x2xbf16>, vector<4x2xf32> -> vector<4x2xf32>
    %c1_209 = arith.constant 1 : index
    %c0_210 = arith.constant 0 : index
    %c0_211 = arith.constant 0 : index
    %259 = vector.load %arg22[%c1_209, %c0_210, %c0_211] : memref<4x4x6xbf16, #tpu.memory_space<vmem>>, vector<1x4x6xbf16>
    %260 = vector.shape_cast %259 : vector<1x4x6xbf16> to vector<4x6xbf16>
    %cst_212 = arith.constant dense<0.000000e+00> : vector<4x384xf32>
    %261 = tpu.matmul %260, %251, %cst_212 {dimension_numbers = #tpu.dot_dimension_numbers<[1], [0], [0], [1], [0, 0, 1, 1], [], []>} : vector<4x6xbf16>, vector<6x384xbf16>, vector<4x384xf32> -> vector<4x384xf32>
    %262 = arith.truncf %261 : vector<4x384xf32> to vector<4x384xbf16>
    %c1_213 = arith.constant 1 : index
    %c0_214 = arith.constant 0 : index
    %c0_215 = arith.constant 0 : index
    %263 = vector.load %arg23[%c1_213, %c0_214, %c0_215] : memref<4x384x2xbf16, #tpu.memory_space<vmem>>, vector<1x384x2xbf16>
    %264 = vector.shape_cast %263 : vector<1x384x2xbf16> to vector<384x2xbf16>
    %cst_216 = arith.constant dense<0.000000e+00> : vector<4x2xf32>
    %265 = tpu.matmul %262, %264, %cst_216 {dimension_numbers = #tpu.dot_dimension_numbers<[1], [0], [0], [1], [0, 0, 1, 1], [], []>} : vector<4x384xbf16>, vector<384x2xbf16>, vector<4x2xf32> -> vector<4x2xf32>
    %266 = arith.addf %258, %265 : vector<4x2xf32>
    %c2_217 = arith.constant 2 : index
    %c0_218 = arith.constant 0 : index
    %c0_219 = arith.constant 0 : index
    %267 = vector.load %arg22[%c2_217, %c0_218, %c0_219] : memref<4x4x6xbf16, #tpu.memory_space<vmem>>, vector<1x4x6xbf16>
    %268 = vector.shape_cast %267 : vector<1x4x6xbf16> to vector<4x6xbf16>
    %cst_220 = arith.constant dense<0.000000e+00> : vector<4x384xf32>
    %269 = tpu.matmul %268, %251, %cst_220 {dimension_numbers = #tpu.dot_dimension_numbers<[1], [0], [0], [1], [0, 0, 1, 1], [], []>} : vector<4x6xbf16>, vector<6x384xbf16>, vector<4x384xf32> -> vector<4x384xf32>
    %270 = arith.truncf %269 : vector<4x384xf32> to vector<4x384xbf16>
    %c2_221 = arith.constant 2 : index
    %c0_222 = arith.constant 0 : index
    %c0_223 = arith.constant 0 : index
    %271 = vector.load %arg23[%c2_221, %c0_222, %c0_223] : memref<4x384x2xbf16, #tpu.memory_space<vmem>>, vector<1x384x2xbf16>
    %272 = vector.shape_cast %271 : vector<1x384x2xbf16> to vector<384x2xbf16>
    %cst_224 = arith.constant dense<0.000000e+00> : vector<4x2xf32>
    %273 = tpu.matmul %270, %272, %cst_224 {dimension_numbers = #tpu.dot_dimension_numbers<[1], [0], [0], [1], [0, 0, 1, 1], [], []>} : vector<4x384xbf16>, vector<384x2xbf16>, vector<4x2xf32> -> vector<4x2xf32>
    %274 = arith.addf %266, %273 : vector<4x2xf32>
    %c3_225 = arith.constant 3 : index
    %c0_226 = arith.constant 0 : index
    %c0_227 = arith.constant 0 : index
    %275 = vector.load %arg22[%c3_225, %c0_226, %c0_227] : memref<4x4x6xbf16, #tpu.memory_space<vmem>>, vector<1x4x6xbf16>
    %276 = vector.shape_cast %275 : vector<1x4x6xbf16> to vector<4x6xbf16>
    %cst_228 = arith.constant dense<0.000000e+00> : vector<4x384xf32>
    %277 = tpu.matmul %276, %251, %cst_228 {dimension_numbers = #tpu.dot_dimension_numbers<[1], [0], [0], [1], [0, 0, 1, 1], [], []>} : vector<4x6xbf16>, vector<6x384xbf16>, vector<4x384xf32> -> vector<4x384xf32>
    %278 = arith.truncf %277 : vector<4x384xf32> to vector<4x384xbf16>
    %c3_229 = arith.constant 3 : index
    %c0_230 = arith.constant 0 : index
    %c0_231 = arith.constant 0 : index
    %279 = vector.load %arg23[%c3_229, %c0_230, %c0_231] : memref<4x384x2xbf16, #tpu.memory_space<vmem>>, vector<1x384x2xbf16>
    %280 = vector.shape_cast %279 : vector<1x384x2xbf16> to vector<384x2xbf16>
    %cst_232 = arith.constant dense<0.000000e+00> : vector<4x2xf32>
    %281 = tpu.matmul %278, %280, %cst_232 {dimension_numbers = #tpu.dot_dimension_numbers<[1], [0], [0], [1], [0, 0, 1, 1], [], []>} : vector<4x384xbf16>, vector<384x2xbf16>, vector<4x2xf32> -> vector<4x2xf32>
    %282 = arith.addf %274, %281 : vector<4x2xf32>
    %c0_233 = arith.constant 0 : index
    %c0_234 = arith.constant 0 : index
    %283 = vector.load %arg24[%c0_233, %c0_234] : memref<1x2xf32, #tpu.memory_space<vmem>>, vector<1x2xf32>
    %284 = vector.broadcast %283 : vector<1x2xf32> to vector<4x2xf32>
    %285 = arith.addf %282, %284 : vector<4x2xf32>
    %c0_235 = arith.constant 0 : index
    %c0_236 = arith.constant 0 : index
    %286 = vector.load %arg25[%c0_235, %c0_236] : memref<4x2xf32, #tpu.memory_space<vmem>>, vector<4x2xf32>
    tpu.vector_store %arg25[%c0_235, %c0_236], %285 {strides = array<i32>} : memref<4x2xf32, #tpu.memory_space<vmem>>, vector<4x2xf32>,
    return
  }
}

</mosaic_0001>

<llo_original>
// kernel: forward.1
$region0: #{forward.1}
  #allocation0 [shape = 'u32[]', space=smem, size = 0x4, offset = 0x4, fixed_abs, tag = 'smem constant byte address 0x4 - core index']
  #allocation1 [shape = 'u32[144,128]{1,0:T(1,128)}', space=vmem, size = 0x12000, scoped, tag = 'internal scratch']
  %s0 = inlined_call_operand.vmem [shape: f32[64,96], index: 0, kind: input, shape index: {}]
  %s1 = inlined_call_operand.vmem [shape: bf16[4,32,64], index: 1, kind: input, shape index: {}]
  %s2 = inlined_call_operand.hbm [shape: bf16[4,96,256], index: 2, kind: input, shape index: {}]
  %s3 = inlined_call_operand.vmem [shape: f32[1,256], index: 3, kind: input, shape index: {}]
  %s4 = inlined_call_operand.vmem [shape: bf16[4,16,32], index: 4, kind: input, shape index: {}]
  %s5 = inlined_call_operand.hbm [shape: bf16[4,256,256], index: 5, kind: input, shape index: {}]
  %s6 = inlined_call_operand.vmem [shape: f32[1,32], index: 6, kind: input, shape index: {}]
  %s7 = inlined_call_operand.vmem [shape: f32[1,32], index: 7, kind: input, shape index: {}]
  %s8 = inlined_call_operand.hbm [shape: f32[256,32], index: 8, kind: input, shape index: {}]
  %s9 = inlined_call_operand.hbm [shape: f32[32,256], index: 9, kind: input, shape index: {}]
  %s10 = inlined_call_operand.hbm [shape: bf16[4,8,16], index: 10, kind: input, shape index: {}]
  %s11 = inlined_call_operand.hbm [shape: bf16[4,256,256], index: 11, kind: input, shape index: {}]
  %s12 = inlined_call_operand.vmem [shape: f32[1,64], index: 12, kind: input, shape index: {}]
  %s13 = inlined_call_operand.vmem [shape: f32[1,64], index: 13, kind: input, shape index: {}]
  %s14 = inlined_call_operand.hbm [shape: f32[256,64], index: 14, kind: input, shape index: {}]
  %s15 = inlined_call_operand.hbm [shape: f32[64,256], index: 15, kind: input, shape index: {}]
  %s16 = inlined_call_operand.hbm [shape: bf16[4,6,8], index: 16, kind: input, shape index: {}]
  %s17 = inlined_call_operand.hbm [shape: bf16[4,256,384], index: 17, kind: input, shape index: {}]
  %s18 = inlined_call_operand.vmem [shape: f32[1,128], index: 18, kind: input, shape index: {}]
  %s19 = inlined_call_operand.vmem [shape: f32[1,128], index: 19, kind: input, shape index: {}]
  %s20 = inlined_call_operand.hbm [shape: f32[384,128], index: 20, kind: input, shape index: {}]
  %s21 = inlined_call_operand.hbm [shape: f32[128,384], index: 21, kind: input, shape index: {}]
  %s22 = inlined_call_operand.hbm [shape: bf16[4,4,6], index: 22, kind: input, shape index: {}]
  %s23 = inlined_call_operand.vmem [shape: bf16[4,384,2], index: 23, kind: input, shape index: {}]
  %s24 = inlined_call_operand.vmem [shape: f32[1,2], index: 24, kind: input, shape index: {}]
  %s25 = inlined_call_operand.hbm [shape: f32[4,2], index: 25, kind: output, shape index: {}]
  %s26 = sld [smem:[#allocation0]]
  $region162: #{forward.1} parent=0
    _
  %s28 = ssub.s32 1, %s26
  %s29 = scalar_select 0, %s28, %s26
  $region1: #{forward.1} parent=0
    #allocation2 [shape = 'u8[196608]{0}', space=vmem, size = 0x30000, scoped, tag = 'input window, operand 2, single buffered']
    #allocation3 [shape = 's32[1]{0}', space=sflag, size = 0x4, scoped, tag = 'scoped memory for forward.1']
    #allocation4 [shape = 's32[1]{0}', space=sflag, size = 0x4, scoped, tag = 'scoped memory for forward.1']
    #allocation5 [shape = 'u8[524288]{0}', space=vmem, size = 0x80000, scoped, tag = 'input window, operand 5, single buffered']
    #allocation6 [shape = 's32[1]{0}', space=sflag, size = 0x4, scoped, tag = 'scoped memory for forward.1']
    #allocation7 [shape = 'u8[131072]{0}', space=vmem, size = 0x20000, scoped, tag = 'input window, operand 8, single buffered']
    #allocation8 [shape = 'u8[32768]{0}', space=vmem, size = 0x8000, scoped, tag = 'input window, operand 9, single buffered']
    #allocation9 [shape = 's32[1]{0}', space=sflag, size = 0x4, scoped, tag = 'scoped memory for forward.1']
    #allocation10 [shape = 'u8[8192]{0}', space=vmem, size = 0x2000, scoped, tag = 'input window, operand 10, single buffered']
    #allocation11 [shape = 'u8[524288]{0}', space=vmem, size = 0x80000, scoped, tag = 'input window, operand 11, single buffered']
    #allocation12 [shape = 's32[1]{0}', space=sflag, size = 0x4, scoped, tag = 'scoped memory for forward.1']
    #allocation13 [shape = 'u8[131072]{0}', space=vmem, size = 0x20000, scoped, tag = 'input window, operand 14, single buffered']
    #allocation14 [shape = 'u8[65536]{0}', space=vmem, size = 0x10000, scoped, tag = 'input window, operand 15, single buffered']
    #allocation15 [shape = 's32[1]{0}', space=sflag, size = 0x4, scoped, tag = 'scoped memory for forward.1']
    #allocation16 [shape = 'u8[8192]{0}', space=vmem, size = 0x2000, scoped, tag = 'input window, operand 16, single buffered']
    #allocation17 [shape = 'u8[786432]{0}', space=vmem, size = 0xc0000, scoped, tag = 'input window, operand 17, single buffered']
    #allocation18 [shape = 's32[1]{0}', space=sflag, size = 0x4, scoped, tag = 'scoped memory for forward.1']
    #allocation19 [shape = 'u8[196608]{0}', space=vmem, size = 0x30000, scoped, tag = 'input window, operand 20, single buffered']
    #allocation20 [shape = 'u8[196608]{0}', space=vmem, size = 0x30000, scoped, tag = 'input window, operand 21, single buffered']
    #allocation21 [shape = 's32[1]{0}', space=sflag, size = 0x4, scoped, tag = 'scoped memory for forward.1']
    #allocation22 [shape = 'u8[4096]{0}', space=vmem, size = 0x1000, scoped, tag = 'input window, operand 22, single buffered']
    #allocation23 [shape = 'u8[2048]{0}', space=vmem, size = 0x800, scoped, tag = 'output window, operand 0, single buffered']
    %30 = vsyncpa [#allocation3], 0
    %31 = vsyncpa [#allocation6], 0
    %32 = vsyncpa [#allocation9], 0
    %33 = vsyncpa [#allocation12], 0
    %34 = vsyncpa [#allocation15], 0
    %35 = vsyncpa [#allocation18], 0
    %36 = vsyncpa [#allocation21], 0
    %37 = vsyncpa [#allocation4], 0
    // Predicated region
    $region2: #{forward.1} parent=1 // pred_check
      _
    $region3: #{forward.1} parent=1 // pred_check_branch
      %39 = sbr.rel (0) target = $region5
    $region4: #{forward.1} parent=1 // pred_region
      _
    $region5: #{forward.1} parent=1 // pred_fallthru
      _
    // Predicated region
    $region6: #{forward.1} parent=1 // pred_check
      _
    $region7: #{forward.1} parent=1 // pred_check_branch
      %41 = sbr.rel (0) target = $region9
    $region8: #{forward.1} parent=1 // pred_region
      _
    $region9: #{forward.1} parent=1 // pred_fallthru
      _
    // Predicated region
    $region10: #{forward.1} parent=1 // pred_check
      _
    $region11: #{forward.1} parent=1 // pred_check_branch
      %43 = sbr.rel (0) target = $region13
    $region12: #{forward.1} parent=1 // pred_region
      %s45 = ssub.s32 6144, 6144
      %46 = vsyncadd [#allocation3], %s45
      %s47 = sshll.u32 [#allocation2], 4
      %s48 = int_to_ptr.vmem [resolvable:$true] %s47
      %53 = dma.hbm_to_vmem [thread:$0]  %s2, 6144, %s48, [#allocation3], 128, 128, 8
    $region13: #{forward.1} parent=1 // pred_fallthru
      _
    // Predicated region
    $region14: #{forward.1} parent=1 // pred_check
      _
    $region15: #{forward.1} parent=1 // pred_check_branch
      %55 = sbr.rel (0) target = $region17
    $region16: #{forward.1} parent=1 // pred_region
      _
    $region17: #{forward.1} parent=1 // pred_fallthru
      _
    // Predicated region
    $region18: #{forward.1} parent=1 // pred_check
      _
    $region19: #{forward.1} parent=1 // pred_check_branch
      %57 = sbr.rel (0) target = $region21
    $region20: #{forward.1} parent=1 // pred_region
      _
    $region21: #{forward.1} parent=1 // pred_fallthru
      _
    // Predicated region
    $region22: #{forward.1} parent=1 // pred_check
      _
    $region23: #{forward.1} parent=1 // pred_check_branch
      %59 = sbr.rel (0) target = $region25
    $region24: #{forward.1} parent=1 // pred_region
      %s61 = ssub.s32 16384, 16384
      %62 = vsyncadd [#allocation6], %s61
      %s63 = sshll.u32 [#allocation5], 4
      %s64 = int_to_ptr.vmem [resolvable:$true] %s63
      %69 = dma.hbm_to_vmem [thread:$0]  %s5, 16384, %s64, [#allocation6], 128, 128, 8
    $region25: #{forward.1} parent=1 // pred_fallthru
      _
    // Predicated region
    $region26: #{forward.1} parent=1 // pred_check
      _
    $region27: #{forward.1} parent=1 // pred_check_branch
      %71 = sbr.rel (0) target = $region29
    $region28: #{forward.1} parent=1 // pred_region
      _
    $region29: #{forward.1} parent=1 // pred_fallthru
      _
    // Predicated region
    $region30: #{forward.1} parent=1 // pred_check
      _
    $region31: #{forward.1} parent=1 // pred_check_branch
      %73 = sbr.rel (0) target = $region33
    $region32: #{forward.1} parent=1 // pred_region
      _
    $region33: #{forward.1} parent=1 // pred_fallthru
      _
    // Predicated region
    $region34: #{forward.1} parent=1 // pred_check
      _
    $region35: #{forward.1} parent=1 // pred_check_branch
      %75 = sbr.rel (0) target = $region37
    $region36: #{forward.1} parent=1 // pred_region
      %s77 = ssub.s32 4096, 4096
      %78 = vsyncadd [#allocation6], %s77
      %s79 = sshll.u32 [#allocation7], 4
      %s80 = int_to_ptr.vmem [resolvable:$true] %s79
      %85 = dma.hbm_to_vmem [thread:$0]  %s8, 4096, %s80, [#allocation6], 128, 128, 8
    $region37: #{forward.1} parent=1 // pred_fallthru
      _
    // Predicated region
    $region38: #{forward.1} parent=1 // pred_check
      _
    $region39: #{forward.1} parent=1 // pred_check_branch
      %87 = sbr.rel (0) target = $region41
    $region40: #{forward.1} parent=1 // pred_region
      %s89 = ssub.s32 1024, 1024
      %90 = vsyncadd [#allocation9], %s89
      %s91 = sshll.u32 [#allocation8], 4
      %s92 = int_to_ptr.vmem [resolvable:$true] %s91
      %97 = dma.hbm_to_vmem [thread:$0]  %s9, 1024, %s92, [#allocation9], 256, 256, 16
    $region41: #{forward.1} parent=1 // pred_fallthru
      _
    // Predicated region
    $region42: #{forward.1} parent=1 // pred_check
      _
    $region43: #{forward.1} parent=1 // pred_check_branch
      %99 = sbr.rel (0) target = $region45
    $region44: #{forward.1} parent=1 // pred_region
      %s101 = ssub.s32 256, 256
      %102 = vsyncadd [#allocation9], %s101
      %s103 = sshll.u32 [#allocation10], 4
      %s104 = int_to_ptr.vmem [resolvable:$true] %s103
      %109 = dma.hbm_to_vmem [thread:$0]  %s10, 256, %s104, [#allocation9], 64, 64, 4
    $region45: #{forward.1} parent=1 // pred_fallthru
      _
    // Predicated region
    $region46: #{forward.1} parent=1 // pred_check
      _
    $region47: #{forward.1} parent=1 // pred_check_branch
      %111 = sbr.rel (0) target = $region49
    $region48: #{forward.1} parent=1 // pred_region
      %s113 = ssub.s32 16384, 16384
      %114 = vsyncadd [#allocation12], %s113
      %s115 = sshll.u32 [#allocation11], 4
      %s116 = int_to_ptr.vmem [resolvable:$true] %s115
      %121 = dma.hbm_to_vmem [thread:$0]  %s11, 16384, %s116, [#allocation12], 128, 128, 8
    $region49: #{forward.1} parent=1 // pred_fallthru
      _
    // Predicated region
    $region50: #{forward.1} parent=1 // pred_check
      _
    $region51: #{forward.1} parent=1 // pred_check_branch
      %123 = sbr.rel (0) target = $region53
    $region52: #{forward.1} parent=1 // pred_region
      _
    $region53: #{forward.1} parent=1 // pred_fallthru
      _
    // Predicated region
    $region54: #{forward.1} parent=1 // pred_check
      _
    $region55: #{forward.1} parent=1 // pred_check_branch
      %125 = sbr.rel (0) target = $region57
    $region56: #{forward.1} parent=1 // pred_region
      _
    $region57: #{forward.1} parent=1 // pred_fallthru
      _
    // Predicated region
    $region58: #{forward.1} parent=1 // pred_check
      _
    $region59: #{forward.1} parent=1 // pred_check_branch
      %127 = sbr.rel (0) target = $region61
    $region60: #{forward.1} parent=1 // pred_region
      %s129 = ssub.s32 4096, 4096
      %130 = vsyncadd [#allocation12], %s129
      %s131 = sshll.u32 [#allocation13], 4
      %s132 = int_to_ptr.vmem [resolvable:$true] %s131
      %137 = dma.hbm_to_vmem [thread:$0]  %s14, 4096, %s132, [#allocation12], 128, 128, 8
    $region61: #{forward.1} parent=1 // pred_fallthru
      _
    // Predicated region
    $region62: #{forward.1} parent=1 // pred_check
      _
    $region63: #{forward.1} parent=1 // pred_check_branch
      %139 = sbr.rel (0) target = $region65
    $region64: #{forward.1} parent=1 // pred_region
      %s141 = ssub.s32 2048, 2048
      %142 = vsyncadd [#allocation15], %s141
      %s143 = sshll.u32 [#allocation14], 4
      %s144 = int_to_ptr.vmem [resolvable:$true] %s143
      %149 = dma.hbm_to_vmem [thread:$0]  %s15, 2048, %s144, [#allocation15], 256, 256, 16
    $region65: #{forward.1} parent=1 // pred_fallthru
      _
    // Predicated region
    $region66: #{forward.1} parent=1 // pred_check
      _
    $region67: #{forward.1} parent=1 // pred_check_branch
      %151 = sbr.rel (0) target = $region69
    $region68: #{forward.1} parent=1 // pred_region
      %s153 = ssub.s32 256, 256
      %154 = vsyncadd [#allocation15], %s153
      %s155 = sshll.u32 [#allocation16], 4
      %s156 = int_to_ptr.vmem [resolvable:$true] %s155
      %161 = dma.hbm_to_vmem [thread:$0]  %s16, 256, %s156, [#allocation15], 64, 64, 4
    $region69: #{forward.1} parent=1 // pred_fallthru
      _
    // Predicated region
    $region70: #{forward.1} parent=1 // pred_check
      _
    $region71: #{forward.1} parent=1 // pred_check_branch
      %163 = sbr.rel (0) target = $region73
    $region72: #{forward.1} parent=1 // pred_region
      %s165 = ssub.s32 24576, 24576
      %166 = vsyncadd [#allocation18], %s165
      %s167 = sshll.u32 [#allocation17], 4
      %s168 = int_to_ptr.vmem [resolvable:$true] %s167
      %173 = dma.hbm_to_vmem [thread:$0]  %s17, 24576, %s168, [#allocation18], 192, 192, 12
    $region73: #{forward.1} parent=1 // pred_fallthru
      _
    // Predicated region
    $region74: #{forward.1} parent=1 // pred_check
      _
    $region75: #{forward.1} parent=1 // pred_check_branch
      %175 = sbr.rel (0) target = $region77
    $region76: #{forward.1} parent=1 // pred_region
      _
    $region77: #{forward.1} parent=1 // pred_fallthru
      _
    // Predicated region
    $region78: #{forward.1} parent=1 // pred_check
      _
    $region79: #{forward.1} parent=1 // pred_check_branch
      %177 = sbr.rel (0) target = $region81
    $region80: #{forward.1} parent=1 // pred_region
      _
    $region81: #{forward.1} parent=1 // pred_fallthru
      _
    // Predicated region
    $region82: #{forward.1} parent=1 // pred_check
      _
    $region83: #{forward.1} parent=1 // pred_check_branch
      %179 = sbr.rel (0) target = $region85
    $region84: #{forward.1} parent=1 // pred_region
      %s181 = ssub.s32 6144, 6144
      %182 = vsyncadd [#allocation18], %s181
      %s183 = sshll.u32 [#allocation19], 4
      %s184 = int_to_ptr.vmem [resolvable:$true] %s183
      %189 = dma.hbm_to_vmem [thread:$0]  %s20, 6144, %s184, [#allocation18], 128, 128, 8
    $region85: #{forward.1} parent=1 // pred_fallthru
      _
    // Predicated region
    $region86: #{forward.1} parent=1 // pred_check
      _
    $region87: #{forward.1} parent=1 // pred_check_branch
      %191 = sbr.rel (0) target = $region89
    $region88: #{forward.1} parent=1 // pred_region
      %s193 = ssub.s32 6144, 6144
      %194 = vsyncadd [#allocation21], %s193
      %s195 = sshll.u32 [#allocation20], 4
      %s196 = int_to_ptr.vmem [resolvable:$true] %s195
      %201 = dma.hbm_to_vmem [thread:$0]  %s21, 6144, %s196, [#allocation21], 384, 384, 24
    $region89: #{forward.1} parent=1 // pred_fallthru
      _
    // Predicated region
    $region90: #{forward.1} parent=1 // pred_check
      _
    $region91: #{forward.1} parent=1 // pred_check_branch
      %203 = sbr.rel (0) target = $region93
    $region92: #{forward.1} parent=1 // pred_region
      %s205 = ssub.s32 128, 128
      %206 = vsyncadd [#allocation21], %s205
      %s207 = sshll.u32 [#allocation22], 4
      %s208 = int_to_ptr.vmem [resolvable:$true] %s207
      %213 = dma.hbm_to_vmem [thread:$0]  %s22, 128, %s208, [#allocation21], 32, 32, 2
    $region93: #{forward.1} parent=1 // pred_fallthru
      _
    // Predicated region
    $region94: #{forward.1} parent=1 // pred_check
      _
    $region95: #{forward.1} parent=1 // pred_check_branch
      %215 = sbr.rel (0) target = $region97
    $region96: #{forward.1} parent=1 // pred_region
      _
    $region97: #{forward.1} parent=1 // pred_fallthru
      _
    // Predicated region
    $region98: #{forward.1} parent=1 // pred_check
      _
    $region99: #{forward.1} parent=1 // pred_check_branch
      %217 = sbr.rel (0) target = $region101
    $region100: #{forward.1} parent=1 // pred_region
      _
    $region101: #{forward.1} parent=1 // pred_fallthru
      _
    // Predicated region
    $region102: #{forward.1} parent=1 // pred_check
      _
    $region103: #{forward.1} parent=1 // pred_check_branch
      %219 = sbr.rel (0) target = $region105
    $region104: #{forward.1} parent=1 // pred_region
      %220 = dma.done [#allocation3], 6144
    $region105: #{forward.1} parent=1 // pred_fallthru
      _
    // Predicated region
    $region106: #{forward.1} parent=1 // pred_check
      _
    $region107: #{forward.1} parent=1 // pred_check_branch
      %222 = sbr.rel (0) target = $region109
    $region108: #{forward.1} parent=1 // pred_region
      %223 = dma.done [#allocation6], 16384
    $region109: #{forward.1} parent=1 // pred_fallthru
      _
    // Predicated region
    $region110: #{forward.1} parent=1 // pred_check
      _
    $region111: #{forward.1} parent=1 // pred_check_branch
      %225 = sbr.rel (0) target = $region113
    $region112: #{forward.1} parent=1 // pred_region
      %226 = dma.done [#allocation6], 4096
    $region113: #{forward.1} parent=1 // pred_fallthru
      _
    // Predicated region
    $region114: #{forward.1} parent=1 // pred_check
      _
    $region115: #{forward.1} parent=1 // pred_check_branch
      %228 = sbr.rel (0) target = $region117
    $region116: #{forward.1} parent=1 // pred_region
      %229 = dma.done [#allocation9], 1024
    $region117: #{forward.1} parent=1 // pred_fallthru
      _
    // Predicated region
    $region118: #{forward.1} parent=1 // pred_check
      _
    $region119: #{forward.1} parent=1 // pred_check_branch
      %231 = sbr.rel (0) target = $region121
    $region120: #{forward.1} parent=1 // pred_region
      %232 = dma.done [#allocation9], 256
    $region121: #{forward.1} parent=1 // pred_fallthru
      _
    // Predicated region
    $region122: #{forward.1} parent=1 // pred_check
      _
    $region123: #{forward.1} parent=1 // pred_check_branch
      %234 = sbr.rel (0) target = $region125
    $region124: #{forward.1} parent=1 // pred_region
      %235 = dma.done [#allocation12], 16384
    $region125: #{forward.1} parent=1 // pred_fallthru
      _
    // Predicated region
    $region126: #{forward.1} parent=1 // pred_check
      _
    $region127: #{forward.1} parent=1 // pred_check_branch
      %237 = sbr.rel (0) target = $region129
    $region128: #{forward.1} parent=1 // pred_region
      %238 = dma.done [#allocation12], 4096
    $region129: #{forward.1} parent=1 // pred_fallthru
      _
    // Predicated region
    $region130: #{forward.1} parent=1 // pred_check
      _
    $region131: #{forward.1} parent=1 // pred_check_branch
      %240 = sbr.rel (0) target = $region133
    $region132: #{forward.1} parent=1 // pred_region
      %241 = dma.done [#allocation15], 2048
    $region133: #{forward.1} parent=1 // pred_fallthru
      _
    // Predicated region
    $region134: #{forward.1} parent=1 // pred_check
      _
    $region135: #{forward.1} parent=1 // pred_check_branch
      %243 = sbr.rel (0) target = $region137
    $region136: #{forward.1} parent=1 // pred_region
      %244 = dma.done [#allocation15], 256
    $region137: #{forward.1} parent=1 // pred_fallthru
      _
    // Predicated region
    $region138: #{forward.1} parent=1 // pred_check
      _
    $region139: #{forward.1} parent=1 // pred_check_branch
      %246 = sbr.rel (0) target = $region141
    $region140: #{forward.1} parent=1 // pred_region
      %247 = dma.done [#allocation18], 24576
    $region141: #{forward.1} parent=1 // pred_fallthru
      _
    // Predicated region
    $region142: #{forward.1} parent=1 // pred_check
      _
    $region143: #{forward.1} parent=1 // pred_check_branch
      %249 = sbr.rel (0) target = $region145
    $region144: #{forward.1} parent=1 // pred_region
      %250 = dma.done [#allocation18], 6144
    $region145: #{forward.1} parent=1 // pred_fallthru
      _
    // Predicated region
    $region146: #{forward.1} parent=1 // pred_check
      _
    $region147: #{forward.1} parent=1 // pred_check_branch
      %252 = sbr.rel (0) target = $region149
    $region148: #{forward.1} parent=1 // pred_region
      %253 = dma.done [#allocation21], 6144
    $region149: #{forward.1} parent=1 // pred_fallthru
      _
    // Predicated region
    $region150: #{forward.1} parent=1 // pred_check
      _
    $region151: #{forward.1} parent=1 // pred_check_branch
      %255 = sbr.rel (0) target = $region153
    $region152: #{forward.1} parent=1 // pred_region
      %256 = dma.done [#allocation21], 128
    $region153: #{forward.1} parent=1 // pred_fallthru
      _
    %v258 = vld [vmem:[%s0] sm:$0xff]
    %v259 = vld [vmem:[%s0 + $0x8] sm:$0xff]
    %v260 = vld [vmem:[%s0 + $0x10] sm:$0xff]
    %v261 = vld [vmem:[%s0 + $0x18] sm:$0xff]
    %v262 = vld [vmem:[%s0 + $0x20] sm:$0xff]
    %v263 = vld [vmem:[%s0 + $0x28] sm:$0xff]
    %v264 = vld [vmem:[%s0 + $0x30] sm:$0xff]
    %v265 = vld [vmem:[%s0 + $0x38] sm:$0xff]
    %v266 = vpack.c.bf16 %v259, %v258
    %v267 = vpack.c.bf16 %v261, %v260
    %v268 = vpack.c.bf16 %v263, %v262
    %v269 = vpack.c.bf16 %v265, %v264
    %v270 = vld [vmem:[%s1] sm:$0xf]
    %v271 = vld [vmem:[%s1 + $0x4] sm:$0xf]
    %v272 = vld [vmem:[%s1 + $0x8] sm:$0xf]
    %v273 = vld [vmem:[%s1 + $0xc] sm:$0xf]
    %v278 = vunpack.c.l.b16 %v270
    %v279 = vunpack.c.l.b16 %v271
    %v280 = vunpack.c.l.b16 %v272
    %v281 = vunpack.c.l.b16 %v273
    %v282 = vpack.c.b16 %v279, %v278
    %v283 = vpack.c.b16 %v281, %v280
    %vm284 = vcmask 523264
    %v286 = vsel %vm284, %v282, 0
    %v289 = vsel %vm284, %v283, 0
    %291 = vmatprep.subr.bf16.mxu0 0
    %292 = vmatpush1.bf16.msra.mxu0 0
    %293 = vmatprep.subr.bf16.mxu0 0
    %294 = vmatpush1.bf16.msra.mxu0 0
    %295 = vmatprep.subr.bf16.mxu0 0
    %296 = vmatpush1.bf16.msra.mxu0 0
    %297 = vmatprep.subr.bf16.mxu0 0
    %298 = vmatpush1.bf16.msra.mxu0 0
    %299 = vmatprep.subr.bf16.mxu0 0
    %300 = vmatpush1.bf16.msra.mxu0 %v269
    %301 = vmatprep.subr.bf16.mxu0 0
    %302 = vmatpush1.bf16.msra.mxu0 %v268
    %303 = vmatprep.subr.bf16.mxu0 0
    %304 = vmatpush1.bf16.msra.mxu0 %v267
    %305 = vmatprep.subr.bf16.mxu0 0
    %306 = vmatpush1.bf16.msra.mxu0 %v266
    %307 = vmatprep.subr.bf16.mxu0 0
    %308 = vmatpush2.bf16.msra.mxu0 0
    %309 = vmatprep.subr.bf16.mxu0 0
    %310 = vmatpush2.bf16.msra.mxu0 0
    %311 = vmatprep.subr.bf16.mxu0 0
    %312 = vmatpush2.bf16.msra.mxu0 0
    %313 = vmatprep.subr.bf16.mxu0 0
    %314 = vmatpush2.bf16.msra.mxu0 0
    %315 = vmatprep.subr.bf16.mxu0 0
    %316 = vmatpush2.bf16.msra.mxu0 0
    %317 = vmatprep.subr.bf16.mxu0 0
    %318 = vmatpush2.bf16.msra.mxu0 0
    %319 = vmatprep.subr.bf16.mxu0 0
    %320 = vmatpush2.bf16.msra.mxu0 0
    %321 = vmatprep.subr.bf16.mxu0 0
    %322 = vmatpush2.bf16.msra.mxu0 0
    %323 = vmatprep.mubr.bf16.mxu0 0
    %324 = vmatmul.mubr.bf16.gmra.mxu0 %v286
    %v325 = vpop.f32.mrf.mxu0
    %v326 = vadd.f32 0.0, %v325
    %v327 = vpop.f32.mrf.mxu0
    %v328 = vpop.f32.mrf.mxu0
    %v329 = vadd.f32 0.0, %v328
    %v330 = vpop.f32.mrf.mxu0
    %331 = vmatprep.mubr.bf16.mxu0 0
    %332 = vmatmul.mubr.bf16.gmra.mxu0 %v289
    %v333 = vpop.f32.mrf.mxu0
    %v334 = vadd.f32 0.0, %v333
    %v335 = vpop.f32.mrf.mxu0
    %v336 = vpop.f32.mrf.mxu0
    %v337 = vadd.f32 0.0, %v336
    %v338 = vpop.f32.mrf.mxu0
    %339 = vdwg.mxu0
    %v340 = vpack.c.bf16 %v329, %v326
    %v341 = vpack.c.bf16 %v337, %v334
    %v342 = vld [vmem:[#allocation2] sm:$0xff]
    %v343 = vld [vmem:[#allocation2 + $0x8] sm:$0xff]
    %v344 = vld [vmem:[#allocation2 + $0x10] sm:$0xff]
    %v345 = vld [vmem:[#allocation2 + $0x18] sm:$0xff]
    %v346 = vld [vmem:[#allocation2 + $0x20] sm:$0xff]
    %v347 = vld [vmem:[#allocation2 + $0x28] sm:$0xff]
    %v348 = vld [vmem:[#allocation2 + $0x30] sm:$0xff]
    %v349 = vld [vmem:[#allocation2 + $0x38] sm:$0xff]
    %v350 = vld [vmem:[#allocation2 + $0x40] sm:$0xff]
    %v351 = vld [vmem:[#allocation2 + $0x48] sm:$0xff]
    %v352 = vld [vmem:[#allocation2 + $0x50] sm:$0xff]
    %v353 = vld [vmem:[#allocation2 + $0x58] sm:$0xff]
    %s354 = scalar_lea.vmem %s1, 16
    %v355 = vld [vmem:[%s354] sm:$0xf]
    %v356 = vld [vmem:[%s354 + $0x4] sm:$0xf]
    %v357 = vld [vmem:[%s354 + $0x8] sm:$0xf]
    %v358 = vld [vmem:[%s354 + $0xc] sm:$0xf]
    %v363 = vunpack.c.l.b16 %v355
    %v364 = vunpack.c.l.b16 %v356
    %v365 = vunpack.c.l.b16 %v357
    %v366 = vunpack.c.l.b16 %v358
    %v367 = vpack.c.b16 %v364, %v363
    %v368 = vpack.c.b16 %v366, %v365
    %v370 = vsel %vm284, %v367, 0
    %v373 = vsel %vm284, %v368, 0
    %375 = vmatprep.subr.bf16.mxu0 0
    %376 = vmatpush1.bf16.msra.mxu0 0
    %377 = vmatprep.subr.bf16.mxu0 0
    %378 = vmatpush1.bf16.msra.mxu0 0
    %379 = vmatprep.subr.bf16.mxu0 0
    %380 = vmatpush1.bf16.msra.mxu0 0
    %381 = vmatprep.subr.bf16.mxu0 0
    %382 = vmatpush1.bf16.msra.mxu0 0
    %383 = vmatprep.subr.bf16.mxu0 0
    %384 = vmatpush1.bf16.msra.mxu0 %v269
    %385 = vmatprep.subr.bf16.mxu0 0
    %386 = vmatpush1.bf16.msra.mxu0 %v268
    %387 = vmatprep.subr.bf16.mxu0 0
    %388 = vmatpush1.bf16.msra.mxu0 %v267
    %389 = vmatprep.subr.bf16.mxu0 0
    %390 = vmatpush1.bf16.msra.mxu0 %v266
    %391 = vmatprep.subr.bf16.mxu0 0
    %392 = vmatpush2.bf16.msra.mxu0 0
    %393 = vmatprep.subr.bf16.mxu0 0
    %394 = vmatpush2.bf16.msra.mxu0 0
    %395 = vmatprep.subr.bf16.mxu0 0
    %396 = vmatpush2.bf16.msra.mxu0 0
    %397 = vmatprep.subr.bf16.mxu0 0
    %398 = vmatpush2.bf16.msra.mxu0 0
    %399 = vmatprep.subr.bf16.mxu0 0
    %400 = vmatpush2.bf16.msra.mxu0 0
    %401 = vmatprep.subr.bf16.mxu0 0
    %402 = vmatpush2.bf16.msra.mxu0 0
    %403 = vmatprep.subr.bf16.mxu0 0
    %404 = vmatpush2.bf16.msra.mxu0 0
    %405 = vmatprep.subr.bf16.mxu0 0
    %406 = vmatpush2.bf16.msra.mxu0 0
    %407 = vmatprep.mubr.bf16.mxu0 0
    %408 = vmatmul.mubr.bf16.gmra.mxu0 %v370
    %v409 = vpop.f32.mrf.mxu0
    %v410 = vadd.f32 0.0, %v409
    %v411 = vpop.f32.mrf.mxu0
    %v412 = vpop.f32.mrf.mxu0
    %v413 = vadd.f32 0.0, %v412
    %v414 = vpop.f32.mrf.mxu0
    %415 = vmatprep.mubr.bf16.mxu0 0
    %416 = vmatmul.mubr.bf16.gmra.mxu0 %v373
    %v417 = vpop.f32.mrf.mxu0
    %v418 = vadd.f32 0.0, %v417
    %v419 = vpop.f32.mrf.mxu0
    %v420 = vpop.f32.mrf.mxu0
    %v421 = vadd.f32 0.0, %v420
    %v422 = vpop.f32.mrf.mxu0
    %423 = vdwg.mxu0
    %v424 = vpack.c.bf16 %v413, %v410
    %v425 = vpack.c.bf16 %v421, %v418
    %s426 = scalar_lea.vmem [#allocation2], 96
    %v427 = vld [vmem:[%s426] sm:$0xff]
    %v428 = vld [vmem:[%s426 + $0x8] sm:$0xff]
    %v429 = vld [vmem:[%s426 + $0x10] sm:$0xff]
    %v430 = vld [vmem:[%s426 + $0x18] sm:$0xff]
    %v431 = vld [vmem:[%s426 + $0x20] sm:$0xff]
    %v432 = vld [vmem:[%s426 + $0x28] sm:$0xff]
    %v433 = vld [vmem:[%s426 + $0x30] sm:$0xff]
    %v434 = vld [vmem:[%s426 + $0x38] sm:$0xff]
    %v435 = vld [vmem:[%s426 + $0x40] sm:$0xff]
    %v436 = vld [vmem:[%s426 + $0x48] sm:$0xff]
    %v437 = vld [vmem:[%s426 + $0x50] sm:$0xff]
    %v438 = vld [vmem:[%s426 + $0x58] sm:$0xff]
    %v451 = vunpack.c.l.b16 %v427
    %v452 = vunpack.c.h.b16 %v427
    %v453 = vunpack.c.l.b16 %v428
    %v454 = vunpack.c.h.b16 %v428
    %v455 = vunpack.c.l.b16 %v429
    %v456 = vunpack.c.h.b16 %v429
    %v457 = vunpack.c.l.b16 %v430
    %v458 = vunpack.c.h.b16 %v430
    %v459 = vunpack.c.l.b16 %v431
    %v460 = vunpack.c.h.b16 %v431
    %v461 = vunpack.c.l.b16 %v432
    %v462 = vunpack.c.h.b16 %v432
    %v463 = vunpack.c.l.b16 %v433
    %v464 = vunpack.c.h.b16 %v433
    %v465 = vunpack.c.l.b16 %v434
    %v466 = vunpack.c.h.b16 %v434
    %v467 = vunpack.c.l.b16 %v435
    %v468 = vunpack.c.h.b16 %v435
    %v469 = vunpack.c.l.b16 %v436
    %v470 = vunpack.c.h.b16 %v436
    %v471 = vunpack.c.l.b16 %v437
    %v472 = vunpack.c.h.b16 %v437
    %v473 = vunpack.c.l.b16 %v438
    %v474 = vunpack.c.h.b16 %v438
    %v475 = vpack.c.b16 %v453, %v451
    %v476 = vpack.c.b16 %v454, %v452
    %v477 = vpack.c.b16 %v457, %v455
    %v478 = vpack.c.b16 %v458, %v456
    %v479 = vpack.c.b16 %v461, %v459
    %v480 = vpack.c.b16 %v462, %v460
    %v481 = vpack.c.b16 %v465, %v463
    %v482 = vpack.c.b16 %v466, %v464
    %v483 = vpack.c.b16 %v469, %v467
    %v484 = vpack.c.b16 %v470, %v468
    %v485 = vpack.c.b16 %v473, %v471
    %v486 = vpack.c.b16 %v474, %v472
    %vm499 = vcmask 785408
    %v501 = vsel %vm499, %v424, 0
    %v504 = vsel %vm499, %v425, 0
    %506 = vmatprep.subr.bf16.mxu0 0
    %507 = vmatpush1.bf16.msra.mxu0 0
    %508 = vmatprep.subr.bf16.mxu0 0
    %509 = vmatpush1.bf16.msra.mxu0 0
    %510 = vmatprep.subr.bf16.mxu0 %v486
    %511 = vmatpush1.bf16.msra.mxu0 %v485
    %512 = vmatprep.subr.bf16.mxu0 %v484
    %513 = vmatpush1.bf16.msra.mxu0 %v483
    %514 = vmatprep.subr.bf16.mxu0 %v482
    %515 = vmatpush1.bf16.msra.mxu0 %v481
    %516 = vmatprep.subr.bf16.mxu0 %v480
    %517 = vmatpush1.bf16.msra.mxu0 %v479
    %518 = vmatprep.subr.bf16.mxu0 %v478
    %519 = vmatpush1.bf16.msra.mxu0 %v477
    %520 = vmatprep.subr.bf16.mxu0 %v476
    %521 = vmatpush1.bf16.msra.mxu0 %v475
    %522 = vmatprep.subr.bf16.mxu0 0
    %523 = vmatpush2.bf16.msra.mxu0 0
    %524 = vmatprep.subr.bf16.mxu0 0
    %525 = vmatpush2.bf16.msra.mxu0 0
    %526 = vmatprep.subr.bf16.mxu0 0
    %527 = vmatpush2.bf16.msra.mxu0 0
    %528 = vmatprep.subr.bf16.mxu0 0
    %529 = vmatpush2.bf16.msra.mxu0 0
    %530 = vmatprep.subr.bf16.mxu0 0
    %531 = vmatpush2.bf16.msra.mxu0 0
    %532 = vmatprep.subr.bf16.mxu0 0
    %533 = vmatpush2.bf16.msra.mxu0 0
    %534 = vmatprep.subr.bf16.mxu0 0
    %535 = vmatpush2.bf16.msra.mxu0 0
    %536 = vmatprep.subr.bf16.mxu0 0
    %537 = vmatpush2.bf16.msra.mxu0 0
    %538 = vmatprep.mubr.bf16.mxu0 0
    %539 = vmatmul.mubr.bf16.gmra.mxu0 %v501
    %v540 = vpop.f32.mrf.mxu0
    %v541 = vadd.f32 0.0, %v540
    %v542 = vpop.f32.mrf.mxu0
    %v543 = vadd.f32 0.0, %v542
    %v544 = vpop.f32.mrf.mxu0
    %v545 = vadd.f32 0.0, %v544
    %v546 = vpop.f32.mrf.mxu0
    %v547 = vadd.f32 0.0, %v546
    %548 = vmatprep.mubr.bf16.mxu0 0
    %549 = vmatmul.mubr.bf16.gmra.mxu0 %v504
    %v550 = vpop.f32.mrf.mxu0
    %v551 = vadd.f32 0.0, %v550
    %v552 = vpop.f32.mrf.mxu0
    %v553 = vadd.f32 0.0, %v552
    %v554 = vpop.f32.mrf.mxu0
    %v555 = vadd.f32 0.0, %v554
    %v556 = vpop.f32.mrf.mxu0
    %v557 = vadd.f32 0.0, %v556
    %558 = vdwg.mxu0
    %v571 = vunpack.c.l.b16 %v342
    %v572 = vunpack.c.h.b16 %v342
    %v573 = vunpack.c.l.b16 %v343
    %v574 = vunpack.c.h.b16 %v343
    %v575 = vunpack.c.l.b16 %v344
    %v576 = vunpack.c.h.b16 %v344
    %v577 = vunpack.c.l.b16 %v345
    %v578 = vunpack.c.h.b16 %v345
    %v579 = vunpack.c.l.b16 %v346
    %v580 = vunpack.c.h.b16 %v346
    %v581 = vunpack.c.l.b16 %v347
    %v582 = vunpack.c.h.b16 %v347
    %v583 = vunpack.c.l.b16 %v348
    %v584 = vunpack.c.h.b16 %v348
    %v585 = vunpack.c.l.b16 %v349
    %v586 = vunpack.c.h.b16 %v349
    %v587 = vunpack.c.l.b16 %v350
    %v588 = vunpack.c.h.b16 %v350
    %v589 = vunpack.c.l.b16 %v351
    %v590 = vunpack.c.h.b16 %v351
    %v591 = vunpack.c.l.b16 %v352
    %v592 = vunpack.c.h.b16 %v352
    %v593 = vunpack.c.l.b16 %v353
    %v594 = vunpack.c.h.b16 %v353
    %v595 = vpack.c.b16 %v573, %v571
    %v596 = vpack.c.b16 %v574, %v572
    %v597 = vpack.c.b16 %v577, %v575
    %v598 = vpack.c.b16 %v578, %v576
    %v599 = vpack.c.b16 %v581, %v579
    %v600 = vpack.c.b16 %v582, %v580
    %v601 = vpack.c.b16 %v585, %v583
    %v602 = vpack.c.b16 %v586, %v584
    %v603 = vpack.c.b16 %v589, %v587
    %v604 = vpack.c.b16 %v590, %v588
    %v605 = vpack.c.b16 %v593, %v591
    %v606 = vpack.c.b16 %v594, %v592
    %v620 = vsel %vm499, %v340, 0
    %v623 = vsel %vm499, %v341, 0
    %625 = vmatprep.subr.bf16.mxu0 0
    %626 = vmatpush1.bf16.msra.mxu0 0
    %627 = vmatprep.subr.bf16.mxu0 0
    %628 = vmatpush1.bf16.msra.mxu0 0
    %629 = vmatprep.subr.bf16.mxu0 %v606
    %630 = vmatpush1.bf16.msra.mxu0 %v605
    %631 = vmatprep.subr.bf16.mxu0 %v604
    %632 = vmatpush1.bf16.msra.mxu0 %v603
    %633 = vmatprep.subr.bf16.mxu0 %v602
    %634 = vmatpush1.bf16.msra.mxu0 %v601
    %635 = vmatprep.subr.bf16.mxu0 %v600
    %636 = vmatpush1.bf16.msra.mxu0 %v599
    %637 = vmatprep.subr.bf16.mxu0 %v598
    %638 = vmatpush1.bf16.msra.mxu0 %v597
    %639 = vmatprep.subr.bf16.mxu0 %v596
    %640 = vmatpush1.bf16.msra.mxu0 %v595
    %641 = vmatprep.subr.bf16.mxu0 0
    %642 = vmatpush2.bf16.msra.mxu0 0
    %643 = vmatprep.subr.bf16.mxu0 0
    %644 = vmatpush2.bf16.msra.mxu0 0
    %645 = vmatprep.subr.bf16.mxu0 0
    %646 = vmatpush2.bf16.msra.mxu0 0
    %647 = vmatprep.subr.bf16.mxu0 0
    %648 = vmatpush2.bf16.msra.mxu0 0
    %649 = vmatprep.subr.bf16.mxu0 0
    %650 = vmatpush2.bf16.msra.mxu0 0
    %651 = vmatprep.subr.bf16.mxu0 0
    %652 = vmatpush2.bf16.msra.mxu0 0
    %653 = vmatprep.subr.bf16.mxu0 0
    %654 = vmatpush2.bf16.msra.mxu0 0
    %655 = vmatprep.subr.bf16.mxu0 0
    %656 = vmatpush2.bf16.msra.mxu0 0
    %657 = vmatprep.mubr.bf16.mxu0 0
    %658 = vmatmul.mubr.bf16.gmra.mxu0 %v620
    %v659 = vpop.f32.mrf.mxu0
    %v660 = vadd.f32 %v541, %v659
    %v661 = vpop.f32.mrf.mxu0
    %v662 = vadd.f32 %v543, %v661
    %v663 = vpop.f32.mrf.mxu0
    %v664 = vadd.f32 %v545, %v663
    %v665 = vpop.f32.mrf.mxu0
    %v666 = vadd.f32 %v547, %v665
    %667 = vmatprep.mubr.bf16.mxu0 0
    %668 = vmatmul.mubr.bf16.gmra.mxu0 %v623
    %v669 = vpop.f32.mrf.mxu0
    %v670 = vadd.f32 %v551, %v669
    %v671 = vpop.f32.mrf.mxu0
    %v672 = vadd.f32 %v553, %v671
    %v673 = vpop.f32.mrf.mxu0
    %v674 = vadd.f32 %v555, %v673
    %v675 = vpop.f32.mrf.mxu0
    %v676 = vadd.f32 %v557, %v675
    %677 = vdwg.mxu0
    %s678 = scalar_lea.vmem %s1, 32
    %v679 = vld [vmem:[%s678] sm:$0xf]
    %v680 = vld [vmem:[%s678 + $0x4] sm:$0xf]
    %v681 = vld [vmem:[%s678 + $0x8] sm:$0xf]
    %v682 = vld [vmem:[%s678 + $0xc] sm:$0xf]
    %v687 = vunpack.c.l.b16 %v679
    %v688 = vunpack.c.l.b16 %v680
    %v689 = vunpack.c.l.b16 %v681
    %v690 = vunpack.c.l.b16 %v682
    %v691 = vpack.c.b16 %v688, %v687
    %v692 = vpack.c.b16 %v690, %v689
    %v694 = vsel %vm284, %v691, 0
    %v697 = vsel %vm284, %v692, 0
    %699 = vmatprep.subr.bf16.mxu0 0
    %700 = vmatpush1.bf16.msra.mxu0 0
    %701 = vmatprep.subr.bf16.mxu0 0
    %702 = vmatpush1.bf16.msra.mxu0 0
    %703 = vmatprep.subr.bf16.mxu0 0
    %704 = vmatpush1.bf16.msra.mxu0 0
    %705 = vmatprep.subr.bf16.mxu0 0
    %706 = vmatpush1.bf16.msra.mxu0 0
    %707 = vmatprep.subr.bf16.mxu0 0
    %708 = vmatpush1.bf16.msra.mxu0 %v269
    %709 = vmatprep.subr.bf16.mxu0 0
    %710 = vmatpush1.bf16.msra.mxu0 %v268
    %711 = vmatprep.subr.bf16.mxu0 0
    %712 = vmatpush1.bf16.msra.mxu0 %v267
    %713 = vmatprep.subr.bf16.mxu0 0
    %714 = vmatpush1.bf16.msra.mxu0 %v266
    %715 = vmatprep.subr.bf16.mxu0 0
    %716 = vmatpush2.bf16.msra.mxu0 0
    %717 = vmatprep.subr.bf16.mxu0 0
    %718 = vmatpush2.bf16.msra.mxu0 0
    %719 = vmatprep.subr.bf16.mxu0 0
    %720 = vmatpush2.bf16.msra.mxu0 0
    %721 = vmatprep.subr.bf16.mxu0 0
    %722 = vmatpush2.bf16.msra.mxu0 0
    %723 = vmatprep.subr.bf16.mxu0 0
    %724 = vmatpush2.bf16.msra.mxu0 0
    %725 = vmatprep.subr.bf16.mxu0 0
    %726 = vmatpush2.bf16.msra.mxu0 0
    %727 = vmatprep.subr.bf16.mxu0 0
    %728 = vmatpush2.bf16.msra.mxu0 0
    %729 = vmatprep.subr.bf16.mxu0 0
    %730 = vmatpush2.bf16.msra.mxu0 0
    %731 = vmatprep.mubr.bf16.mxu0 0
    %732 = vmatmul.mubr.bf16.gmra.mxu0 %v694
    %v733 = vpop.f32.mrf.mxu0
    %v734 = vadd.f32 0.0, %v733
    %v735 = vpop.f32.mrf.mxu0
    %v736 = vpop.f32.mrf.mxu0
    %v737 = vadd.f32 0.0, %v736
    %v738 = vpop.f32.mrf.mxu0
    %739 = vmatprep.mubr.bf16.mxu0 0
    %740 = vmatmul.mubr.bf16.gmra.mxu0 %v697
    %v741 = vpop.f32.mrf.mxu0
    %v742 = vadd.f32 0.0, %v741
    %v743 = vpop.f32.mrf.mxu0
    %v744 = vpop.f32.mrf.mxu0
    %v745 = vadd.f32 0.0, %v744
    %v746 = vpop.f32.mrf.mxu0
    %747 = vdwg.mxu0
    %v748 = vpack.c.bf16 %v737, %v734
    %v749 = vpack.c.bf16 %v745, %v742
    %s750 = scalar_lea.vmem [#allocation2], 192
    %v751 = vld [vmem:[%s750] sm:$0xff]
    %v752 = vld [vmem:[%s750 + $0x8] sm:$0xff]
    %v753 = vld [vmem:[%s750 + $0x10] sm:$0xff]
    %v754 = vld [vmem:[%s750 + $0x18] sm:$0xff]
    %v755 = vld [vmem:[%s750 + $0x20] sm:$0xff]
    %v756 = vld [vmem:[%s750 + $0x28] sm:$0xff]
    %v757 = vld [vmem:[%s750 + $0x30] sm:$0xff]
    %v758 = vld [vmem:[%s750 + $0x38] sm:$0xff]
    %v759 = vld [vmem:[%s750 + $0x40] sm:$0xff]
    %v760 = vld [vmem:[%s750 + $0x48] sm:$0xff]
    %v761 = vld [vmem:[%s750 + $0x50] sm:$0xff]
    %v762 = vld [vmem:[%s750 + $0x58] sm:$0xff]
    %v775 = vunpack.c.l.b16 %v751
    %v776 = vunpack.c.h.b16 %v751
    %v777 = vunpack.c.l.b16 %v752
    %v778 = vunpack.c.h.b16 %v752
    %v779 = vunpack.c.l.b16 %v753
    %v780 = vunpack.c.h.b16 %v753
    %v781 = vunpack.c.l.b16 %v754
    %v782 = vunpack.c.h.b16 %v754
    %v783 = vunpack.c.l.b16 %v755
    %v784 = vunpack.c.h.b16 %v755
    %v785 = vunpack.c.l.b16 %v756
    %v786 = vunpack.c.h.b16 %v756
    %v787 = vunpack.c.l.b16 %v757
    %v788 = vunpack.c.h.b16 %v757
    %v789 = vunpack.c.l.b16 %v758
    %v790 = vunpack.c.h.b16 %v758
    %v791 = vunpack.c.l.b16 %v759
    %v792 = vunpack.c.h.b16 %v759
    %v793 = vunpack.c.l.b16 %v760
    %v794 = vunpack.c.h.b16 %v760
    %v795 = vunpack.c.l.b16 %v761
    %v796 = vunpack.c.h.b16 %v761
    %v797 = vunpack.c.l.b16 %v762
    %v798 = vunpack.c.h.b16 %v762
    %v799 = vpack.c.b16 %v777, %v775
    %v800 = vpack.c.b16 %v778, %v776
    %v801 = vpack.c.b16 %v781, %v779
    %v802 = vpack.c.b16 %v782, %v780
    %v803 = vpack.c.b16 %v785, %v783
    %v804 = vpack.c.b16 %v786, %v784
    %v805 = vpack.c.b16 %v789, %v787
    %v806 = vpack.c.b16 %v790, %v788
    %v807 = vpack.c.b16 %v793, %v791
    %v808 = vpack.c.b16 %v794, %v792
    %v809 = vpack.c.b16 %v797, %v795
    %v810 = vpack.c.b16 %v798, %v796
    %v824 = vsel %vm499, %v748, 0
    %v827 = vsel %vm499, %v749, 0
    %829 = vmatprep.subr.bf16.mxu0 0
    %830 = vmatpush1.bf16.msra.mxu0 0
    %831 = vmatprep.subr.bf16.mxu0 0
    %832 = vmatpush1.bf16.msra.mxu0 0
    %833 = vmatprep.subr.bf16.mxu0 %v810
    %834 = vmatpush1.bf16.msra.mxu0 %v809
    %835 = vmatprep.subr.bf16.mxu0 %v808
    %836 = vmatpush1.bf16.msra.mxu0 %v807
    %837 = vmatprep.subr.bf16.mxu0 %v806
    %838 = vmatpush1.bf16.msra.mxu0 %v805
    %839 = vmatprep.subr.bf16.mxu0 %v804
    %840 = vmatpush1.bf16.msra.mxu0 %v803
    %841 = vmatprep.subr.bf16.mxu0 %v802
    %842 = vmatpush1.bf16.msra.mxu0 %v801
    %843 = vmatprep.subr.bf16.mxu0 %v800
    %844 = vmatpush1.bf16.msra.mxu0 %v799
    %845 = vmatprep.subr.bf16.mxu0 0
    %846 = vmatpush2.bf16.msra.mxu0 0
    %847 = vmatprep.subr.bf16.mxu0 0
    %848 = vmatpush2.bf16.msra.mxu0 0
    %849 = vmatprep.subr.bf16.mxu0 0
    %850 = vmatpush2.bf16.msra.mxu0 0
    %851 = vmatprep.subr.bf16.mxu0 0
    %852 = vmatpush2.bf16.msra.mxu0 0
    %853 = vmatprep.subr.bf16.mxu0 0
    %854 = vmatpush2.bf16.msra.mxu0 0
    %855 = vmatprep.subr.bf16.mxu0 0
    %856 = vmatpush2.bf16.msra.mxu0 0
    %857 = vmatprep.subr.bf16.mxu0 0
    %858 = vmatpush2.bf16.msra.mxu0 0
    %859 = vmatprep.subr.bf16.mxu0 0
    %860 = vmatpush2.bf16.msra.mxu0 0
    %861 = vmatprep.mubr.bf16.mxu0 0
    %862 = vmatmul.mubr.bf16.gmra.mxu0 %v824
    %v863 = vpop.f32.mrf.mxu0
    %v864 = vadd.f32 0.0, %v863
    %v865 = vpop.f32.mrf.mxu0
    %v866 = vadd.f32 0.0, %v865
    %v867 = vpop.f32.mrf.mxu0
    %v868 = vadd.f32 0.0, %v867
    %v869 = vpop.f32.mrf.mxu0
    %v870 = vadd.f32 0.0, %v869
    %871 = vmatprep.mubr.bf16.mxu0 0
    %872 = vmatmul.mubr.bf16.gmra.mxu0 %v827
    %v873 = vpop.f32.mrf.mxu0
    %v874 = vadd.f32 0.0, %v873
    %v875 = vpop.f32.mrf.mxu0
    %v876 = vadd.f32 0.0, %v875
    %v877 = vpop.f32.mrf.mxu0
    %v878 = vadd.f32 0.0, %v877
    %v879 = vpop.f32.mrf.mxu0
    %v880 = vadd.f32 0.0, %v879
    %881 = vdwg.mxu0
    %v882 = vadd.f32 %v660, %v864
    %v883 = vadd.f32 %v662, %v866
    %v884 = vadd.f32 %v664, %v868
    %v885 = vadd.f32 %v666, %v870
    %v886 = vadd.f32 %v670, %v874
    %v887 = vadd.f32 %v672, %v876
    %v888 = vadd.f32 %v674, %v878
    %v889 = vadd.f32 %v676, %v880
    %s890 = scalar_lea.vmem %s1, 48
    %v891 = vld [vmem:[%s890] sm:$0xf]
    %v892 = vld [vmem:[%s890 + $0x4] sm:$0xf]
    %v893 = vld [vmem:[%s890 + $0x8] sm:$0xf]
    %v894 = vld [vmem:[%s890 + $0xc] sm:$0xf]
    %v899 = vunpack.c.l.b16 %v891
    %v900 = vunpack.c.l.b16 %v892
    %v901 = vunpack.c.l.b16 %v893
    %v902 = vunpack.c.l.b16 %v894
    %v903 = vpack.c.b16 %v900, %v899
    %v904 = vpack.c.b16 %v902, %v901
    %v906 = vsel %vm284, %v903, 0
    %v909 = vsel %vm284, %v904, 0
    %911 = vmatprep.subr.bf16.mxu0 0
    %912 = vmatpush1.bf16.msra.mxu0 0
    %913 = vmatprep.subr.bf16.mxu0 0
    %914 = vmatpush1.bf16.msra.mxu0 0
    %915 = vmatprep.subr.bf16.mxu0 0
    %916 = vmatpush1.bf16.msra.mxu0 0
    %917 = vmatprep.subr.bf16.mxu0 0
    %918 = vmatpush1.bf16.msra.mxu0 0
    %919 = vmatprep.subr.bf16.mxu0 0
    %920 = vmatpush1.bf16.msra.mxu0 %v269
    %921 = vmatprep.subr.bf16.mxu0 0
    %922 = vmatpush1.bf16.msra.mxu0 %v268
    %923 = vmatprep.subr.bf16.mxu0 0
    %924 = vmatpush1.bf16.msra.mxu0 %v267
    %925 = vmatprep.subr.bf16.mxu0 0
    %926 = vmatpush1.bf16.msra.mxu0 %v266
    %927 = vmatprep.subr.bf16.mxu0 0
    %928 = vmatpush2.bf16.msra.mxu0 0
    %929 = vmatprep.subr.bf16.mxu0 0
    %930 = vmatpush2.bf16.msra.mxu0 0
    %931 = vmatprep.subr.bf16.mxu0 0
    %932 = vmatpush2.bf16.msra.mxu0 0
    %933 = vmatprep.subr.bf16.mxu0 0
    %934 = vmatpush2.bf16.msra.mxu0 0
    %935 = vmatprep.subr.bf16.mxu0 0
    %936 = vmatpush2.bf16.msra.mxu0 0
    %937 = vmatprep.subr.bf16.mxu0 0
    %938 = vmatpush2.bf16.msra.mxu0 0
    %939 = vmatprep.subr.bf16.mxu0 0
    %940 = vmatpush2.bf16.msra.mxu0 0
    %941 = vmatprep.subr.bf16.mxu0 0
    %942 = vmatpush2.bf16.msra.mxu0 0
    %943 = vmatprep.mubr.bf16.mxu0 0
    %944 = vmatmul.mubr.bf16.gmra.mxu0 %v906
    %v945 = vpop.f32.mrf.mxu0
    %v946 = vadd.f32 0.0, %v945
    %v947 = vpop.f32.mrf.mxu0
    %v948 = vpop.f32.mrf.mxu0
    %v949 = vadd.f32 0.0, %v948
    %v950 = vpop.f32.mrf.mxu0
    %951 = vmatprep.mubr.bf16.mxu0 0
    %952 = vmatmul.mubr.bf16.gmra.mxu0 %v909
    %v953 = vpop.f32.mrf.mxu0
    %v954 = vadd.f32 0.0, %v953
    %v955 = vpop.f32.mrf.mxu0
    %v956 = vpop.f32.mrf.mxu0
    %v957 = vadd.f32 0.0, %v956
    %v958 = vpop.f32.mrf.mxu0
    %959 = vdwg.mxu0
    %v960 = vpack.c.bf16 %v949, %v946
    %v961 = vpack.c.bf16 %v957, %v954
    %s962 = scalar_lea.vmem [#allocation2], 288
    %v963 = vld [vmem:[%s962] sm:$0xff]
    %v964 = vld [vmem:[%s962 + $0x8] sm:$0xff]
    %v965 = vld [vmem:[%s962 + $0x10] sm:$0xff]
    %v966 = vld [vmem:[%s962 + $0x18] sm:$0xff]
    %v967 = vld [vmem:[%s962 + $0x20] sm:$0xff]
    %v968 = vld [vmem:[%s962 + $0x28] sm:$0xff]
    %v969 = vld [vmem:[%s962 + $0x30] sm:$0xff]
    %v970 = vld [vmem:[%s962 + $0x38] sm:$0xff]
    %v971 = vld [vmem:[%s962 + $0x40] sm:$0xff]
    %v972 = vld [vmem:[%s962 + $0x48] sm:$0xff]
    %v973 = vld [vmem:[%s962 + $0x50] sm:$0xff]
    %v974 = vld [vmem:[%s962 + $0x58] sm:$0xff]
    %v987 = vunpack.c.l.b16 %v963
    %v988 = vunpack.c.h.b16 %v963
    %v989 = vunpack.c.l.b16 %v964
    %v990 = vunpack.c.h.b16 %v964
    %v991 = vunpack.c.l.b16 %v965
    %v992 = vunpack.c.h.b16 %v965
    %v993 = vunpack.c.l.b16 %v966
    %v994 = vunpack.c.h.b16 %v966
    %v995 = vunpack.c.l.b16 %v967
    %v996 = vunpack.c.h.b16 %v967
    %v997 = vunpack.c.l.b16 %v968
    %v998 = vunpack.c.h.b16 %v968
    %v999 = vunpack.c.l.b16 %v969
    %v1000 = vunpack.c.h.b16 %v969
    %v1001 = vunpack.c.l.b16 %v970
    %v1002 = vunpack.c.h.b16 %v970
    %v1003 = vunpack.c.l.b16 %v971
    %v1004 = vunpack.c.h.b16 %v971
    %v1005 = vunpack.c.l.b16 %v972
    %v1006 = vunpack.c.h.b16 %v972
    %v1007 = vunpack.c.l.b16 %v973
    %v1008 = vunpack.c.h.b16 %v973
    %v1009 = vunpack.c.l.b16 %v974
    %v1010 = vunpack.c.h.b16 %v974
    %v1011 = vpack.c.b16 %v989, %v987
    %v1012 = vpack.c.b16 %v990, %v988
    %v1013 = vpack.c.b16 %v993, %v991
    %v1014 = vpack.c.b16 %v994, %v992
    %v1015 = vpack.c.b16 %v997, %v995
    %v1016 = vpack.c.b16 %v998, %v996
    %v1017 = vpack.c.b16 %v1001, %v999
    %v1018 = vpack.c.b16 %v1002, %v1000
    %v1019 = vpack.c.b16 %v1005, %v1003
    %v1020 = vpack.c.b16 %v1006, %v1004
    %v1021 = vpack.c.b16 %v1009, %v1007
    %v1022 = vpack.c.b16 %v1010, %v1008
    %v1036 = vsel %vm499, %v960, 0
    %v1039 = vsel %vm499, %v961, 0
    %1041 = vmatprep.subr.bf16.mxu0 0
    %1042 = vmatpush1.bf16.msra.mxu0 0
    %1043 = vmatprep.subr.bf16.mxu0 0
    %1044 = vmatpush1.bf16.msra.mxu0 0
    %1045 = vmatprep.subr.bf16.mxu0 %v1022
    %1046 = vmatpush1.bf16.msra.mxu0 %v1021
    %1047 = vmatprep.subr.bf16.mxu0 %v1020
    %1048 = vmatpush1.bf16.msra.mxu0 %v1019
    %1049 = vmatprep.subr.bf16.mxu0 %v1018
    %1050 = vmatpush1.bf16.msra.mxu0 %v1017
    %1051 = vmatprep.subr.bf16.mxu0 %v1016
    %1052 = vmatpush1.bf16.msra.mxu0 %v1015
    %1053 = vmatprep.subr.bf16.mxu0 %v1014
    %1054 = vmatpush1.bf16.msra.mxu0 %v1013
    %1055 = vmatprep.subr.bf16.mxu0 %v1012
    %1056 = vmatpush1.bf16.msra.mxu0 %v1011
    %1057 = vmatprep.subr.bf16.mxu0 0
    %1058 = vmatpush2.bf16.msra.mxu0 0
    %1059 = vmatprep.subr.bf16.mxu0 0
    %1060 = vmatpush2.bf16.msra.mxu0 0
    %1061 = vmatprep.subr.bf16.mxu0 0
    %1062 = vmatpush2.bf16.msra.mxu0 0
    %1063 = vmatprep.subr.bf16.mxu0 0
    %1064 = vmatpush2.bf16.msra.mxu0 0
    %1065 = vmatprep.subr.bf16.mxu0 0
    %1066 = vmatpush2.bf16.msra.mxu0 0
    %1067 = vmatprep.subr.bf16.mxu0 0
    %1068 = vmatpush2.bf16.msra.mxu0 0
    %1069 = vmatprep.subr.bf16.mxu0 0
    %1070 = vmatpush2.bf16.msra.mxu0 0
    %1071 = vmatprep.subr.bf16.mxu0 0
    %1072 = vmatpush2.bf16.msra.mxu0 0
    %1073 = vmatprep.mubr.bf16.mxu0 0
    %1074 = vmatmul.mubr.bf16.gmra.mxu0 %v1036
    %v1075 = vpop.f32.mrf.mxu0
    %v1076 = vadd.f32 0.0, %v1075
    %v1077 = vpop.f32.mrf.mxu0
    %v1078 = vadd.f32 0.0, %v1077
    %v1079 = vpop.f32.mrf.mxu0
    %v1080 = vadd.f32 0.0, %v1079
    %v1081 = vpop.f32.mrf.mxu0
    %v1082 = vadd.f32 0.0, %v1081
    %1083 = vmatprep.mubr.bf16.mxu0 0
    %1084 = vmatmul.mubr.bf16.gmra.mxu0 %v1039
    %v1085 = vpop.f32.mrf.mxu0
    %v1086 = vadd.f32 0.0, %v1085
    %v1087 = vpop.f32.mrf.mxu0
    %v1088 = vadd.f32 0.0, %v1087
    %v1089 = vpop.f32.mrf.mxu0
    %v1090 = vadd.f32 0.0, %v1089
    %v1091 = vpop.f32.mrf.mxu0
    %v1092 = vadd.f32 0.0, %v1091
    %1093 = vdwg.mxu0
    %v1094 = vadd.f32 %v882, %v1076
    %v1095 = vadd.f32 %v883, %v1078
    %v1096 = vadd.f32 %v884, %v1080
    %v1097 = vadd.f32 %v885, %v1082
    %v1098 = vadd.f32 %v886, %v1086
    %v1099 = vadd.f32 %v887, %v1088
    %v1100 = vadd.f32 %v888, %v1090
    %v1101 = vadd.f32 %v889, %v1092
    %v1102 = vld [vmem:[%s3] sm:$0x3]
    %v1104 = vlaneseq
    %v1105 = vshrl.u32 %v1104, 7
    %v1106 = vsub.s32 0, %v1105
    %v1107 = vrot.slane %v1102, %v1106
    %v1108 = vlaneseq
    %v1109 = vshrl.u32 %v1108, 7
    %v1110 = vsub.s32 1, %v1109
    %v1111 = vrot.slane %v1102, %v1110
    %v1114 = vadd.f32 %v1094, %v1107
    %v1115 = vadd.f32 %v1095, %v1111
    %v1116 = vadd.f32 %v1096, %v1107
    %v1117 = vadd.f32 %v1097, %v1111
    %v1118 = vadd.f32 %v1098, %v1107
    %v1119 = vadd.f32 %v1099, %v1111
    %v1120 = vadd.f32 %v1100, %v1107
    %v1121 = vadd.f32 %v1101, %v1111
    %vm1122 = vcmp.ge.f32.partialorder %v1114, 0.0
    %vm1123 = vcmp.ge.f32.partialorder %v1115, 0.0
    %vm1124 = vcmp.ge.f32.partialorder %v1116, 0.0
    %vm1125 = vcmp.ge.f32.partialorder %v1117, 0.0
    %vm1126 = vcmp.ge.f32.partialorder %v1118, 0.0
    %vm1127 = vcmp.ge.f32.partialorder %v1119, 0.0
    %vm1128 = vcmp.ge.f32.partialorder %v1120, 0.0
    %vm1129 = vcmp.ge.f32.partialorder %v1121, 0.0
    %v1130 = vmul.f32 %v1114, 0.2
    %v1131 = vmul.f32 %v1115, 0.2
    %v1132 = vmul.f32 %v1116, 0.2
    %v1133 = vmul.f32 %v1117, 0.2
    %v1134 = vmul.f32 %v1118, 0.2
    %v1135 = vmul.f32 %v1119, 0.2
    %v1136 = vmul.f32 %v1120, 0.2
    %v1137 = vmul.f32 %v1121, 0.2
    %v1138 = vsel %vm1122, %v1114, %v1130
    %v1139 = vsel %vm1123, %v1115, %v1131
    %v1140 = vsel %vm1124, %v1116, %v1132
    %v1141 = vsel %vm1125, %v1117, %v1133
    %v1142 = vsel %vm1126, %v1118, %v1134
    %v1143 = vsel %vm1127, %v1119, %v1135
    %v1144 = vsel %vm1128, %v1120, %v1136
    %v1145 = vsel %vm1129, %v1121, %v1137
    %v1146 = vpack.c.bf16 %v1140, %v1138
    %v1147 = vpack.c.bf16 %v1141, %v1139
    %v1148 = vpack.c.bf16 %v1144, %v1142
    %v1149 = vpack.c.bf16 %v1145, %v1143
    %v1150 = vld [vmem:[%s4] sm:$0xf]
    %v1151 = vld [vmem:[%s4 + $0x4] sm:$0xf]
    %v1154 = vunpack.c.l.b16 %v1150
    %v1155 = vunpack.c.l.b16 %v1151
    %v1156 = vpack.c.b16 %v1155, %v1154
    %vm1157 = vcmask 261120
    %v1159 = vsel %vm1157, %v1156, 0
    %1161 = vmatprep.subr.bf16.mxu0 0
    %1162 = vmatpush1.bf16.msra.mxu0 0
    %1163 = vmatprep.subr.bf16.mxu0 0
    %1164 = vmatpush1.bf16.msra.mxu0 0
    %1165 = vmatprep.subr.bf16.mxu0 0
    %1166 = vmatpush1.bf16.msra.mxu0 0
    %1167 = vmatprep.subr.bf16.mxu0 0
    %1168 = vmatpush1.bf16.msra.mxu0 0
    %1169 = vmatprep.subr.bf16.mxu0 0
    %1170 = vmatpush1.bf16.msra.mxu0 0
    %1171 = vmatprep.subr.bf16.mxu0 0
    %1172 = vmatpush1.bf16.msra.mxu0 0
    %1173 = vmatprep.subr.bf16.mxu0 %v1149
    %1174 = vmatpush1.bf16.msra.mxu0 %v1148
    %1175 = vmatprep.subr.bf16.mxu0 %v1147
    %1176 = vmatpush1.bf16.msra.mxu0 %v1146
    %1177 = vmatprep.subr.bf16.mxu0 0
    %1178 = vmatpush2.bf16.msra.mxu0 0
    %1179 = vmatprep.subr.bf16.mxu0 0
    %1180 = vmatpush2.bf16.msra.mxu0 0
    %1181 = vmatprep.subr.bf16.mxu0 0
    %1182 = vmatpush2.bf16.msra.mxu0 0
    %1183 = vmatprep.subr.bf16.mxu0 0
    %1184 = vmatpush2.bf16.msra.mxu0 0
    %1185 = vmatprep.subr.bf16.mxu0 0
    %1186 = vmatpush2.bf16.msra.mxu0 0
    %1187 = vmatprep.subr.bf16.mxu0 0
    %1188 = vmatpush2.bf16.msra.mxu0 0
    %1189 = vmatprep.subr.bf16.mxu0 0
    %1190 = vmatpush2.bf16.msra.mxu0 0
    %1191 = vmatprep.subr.bf16.mxu0 0
    %1192 = vmatpush2.bf16.msra.mxu0 0
    %1193 = vmatprep.mubr.bf16.mxu0 0
    %1194 = vmatmul.mubr.bf16.gmra.mxu0 %v1159
    %v1195 = vpop.f32.mrf.mxu0
    %v1196 = vadd.f32 0.0, %v1195
    %v1197 = vpop.f32.mrf.mxu0
    %v1198 = vadd.f32 0.0, %v1197
    %v1199 = vpop.f32.mrf.mxu0
    %v1200 = vadd.f32 0.0, %v1199
    %v1201 = vpop.f32.mrf.mxu0
    %v1202 = vadd.f32 0.0, %v1201
    %1203 = vdwg.mxu0
    %v1204 = vpack.c.bf16 %v1200, %v1196
    %v1205 = vpack.c.bf16 %v1202, %v1198
    %v1206 = vld [vmem:[#allocation5] sm:$0xff]
    %v1207 = vld [vmem:[#allocation5 + $0x8] sm:$0xff]
    %v1208 = vld [vmem:[#allocation5 + $0x10] sm:$0xff]
    %v1209 = vld [vmem:[#allocation5 + $0x18] sm:$0xff]
    %v1210 = vld [vmem:[#allocation5 + $0x20] sm:$0xff]
    %v1211 = vld [vmem:[#allocation5 + $0x28] sm:$0xff]
    %v1212 = vld [vmem:[#allocation5 + $0x30] sm:$0xff]
    %v1213 = vld [vmem:[#allocation5 + $0x38] sm:$0xff]
    %v1214 = vld [vmem:[#allocation5 + $0x40] sm:$0xff]
    %v1215 = vld [vmem:[#allocation5 + $0x48] sm:$0xff]
    %v1216 = vld [vmem:[#allocation5 + $0x50] sm:$0xff]
    %v1217 = vld [vmem:[#allocation5 + $0x58] sm:$0xff]
    %v1218 = vld [vmem:[#allocation5 + $0x60] sm:$0xff]
    %v1219 = vld [vmem:[#allocation5 + $0x68] sm:$0xff]
    %v1220 = vld [vmem:[#allocation5 + $0x70] sm:$0xff]
    %v1221 = vld [vmem:[#allocation5 + $0x78] sm:$0xff]
    %v1222 = vld [vmem:[#allocation5 + $0x80] sm:$0xff]
    %v1223 = vld [vmem:[#allocation5 + $0x88] sm:$0xff]
    %v1224 = vld [vmem:[#allocation5 + $0x90] sm:$0xff]
    %v1225 = vld [vmem:[#allocation5 + $0x98] sm:$0xff]
    %v1226 = vld [vmem:[#allocation5 + $0xa0] sm:$0xff]
    %v1227 = vld [vmem:[#allocation5 + $0xa8] sm:$0xff]
    %v1228 = vld [vmem:[#allocation5 + $0xb0] sm:$0xff]
    %v1229 = vld [vmem:[#allocation5 + $0xb8] sm:$0xff]
    %v1230 = vld [vmem:[#allocation5 + $0xc0] sm:$0xff]
    %v1231 = vld [vmem:[#allocation5 + $0xc8] sm:$0xff]
    %v1232 = vld [vmem:[#allocation5 + $0xd0] sm:$0xff]
    %v1233 = vld [vmem:[#allocation5 + $0xd8] sm:$0xff]
    %v1234 = vld [vmem:[#allocation5 + $0xe0] sm:$0xff]
    %v1235 = vld [vmem:[#allocation5 + $0xe8] sm:$0xff]
    %v1236 = vld [vmem:[#allocation5 + $0xf0] sm:$0xff]
    %v1237 = vld [vmem:[#allocation5 + $0xf8] sm:$0xff]
    %s1238 = scalar_lea.vmem %s4, 8
    %v1239 = vld [vmem:[%s1238] sm:$0xf]
    %v1240 = vld [vmem:[%s1238 + $0x4] sm:$0xf]
    %v1243 = vunpack.c.l.b16 %v1239
    %v1244 = vunpack.c.l.b16 %v1240
    %v1245 = vpack.c.b16 %v1244, %v1243
    %v1247 = vsel %vm1157, %v1245, 0
    %1249 = vmatprep.subr.bf16.mxu0 0
    %1250 = vmatpush1.bf16.msra.mxu0 0
    %1251 = vmatprep.subr.bf16.mxu0 0
    %1252 = vmatpush1.bf16.msra.mxu0 0
    %1253 = vmatprep.subr.bf16.mxu0 0
    %1254 = vmatpush1.bf16.msra.mxu0 0
    %1255 = vmatprep.subr.bf16.mxu0 0
    %1256 = vmatpush1.bf16.msra.mxu0 0
    %1257 = vmatprep.subr.bf16.mxu0 0
    %1258 = vmatpush1.bf16.msra.mxu0 0
    %1259 = vmatprep.subr.bf16.mxu0 0
    %1260 = vmatpush1.bf16.msra.mxu0 0
    %1261 = vmatprep.subr.bf16.mxu0 %v1149
    %1262 = vmatpush1.bf16.msra.mxu0 %v1148
    %1263 = vmatprep.subr.bf16.mxu0 %v1147
    %1264 = vmatpush1.bf16.msra.mxu0 %v1146
    %1265 = vmatprep.subr.bf16.mxu0 0
    %1266 = vmatpush2.bf16.msra.mxu0 0
    %1267 = vmatprep.subr.bf16.mxu0 0
    %1268 = vmatpush2.bf16.msra.mxu0 0
    %1269 = vmatprep.subr.bf16.mxu0 0
    %1270 = vmatpush2.bf16.msra.mxu0 0
    %1271 = vmatprep.subr.bf16.mxu0 0
    %1272 = vmatpush2.bf16.msra.mxu0 0
    %1273 = vmatprep.subr.bf16.mxu0 0
    %1274 = vmatpush2.bf16.msra.mxu0 0
    %1275 = vmatprep.subr.bf16.mxu0 0
    %1276 = vmatpush2.bf16.msra.mxu0 0
    %1277 = vmatprep.subr.bf16.mxu0 0
    %1278 = vmatpush2.bf16.msra.mxu0 0
    %1279 = vmatprep.subr.bf16.mxu0 0
    %1280 = vmatpush2.bf16.msra.mxu0 0
    %1281 = vmatprep.mubr.bf16.mxu0 0
    %1282 = vmatmul.mubr.bf16.gmra.mxu0 %v1247
    %v1283 = vpop.f32.mrf.mxu0
    %v1284 = vadd.f32 0.0, %v1283
    %v1285 = vpop.f32.mrf.mxu0
    %v1286 = vadd.f32 0.0, %v1285
    %v1287 = vpop.f32.mrf.mxu0
    %v1288 = vadd.f32 0.0, %v1287
    %v1289 = vpop.f32.mrf.mxu0
    %v1290 = vadd.f32 0.0, %v1289
    %1291 = vdwg.mxu0
    %v1292 = vpack.c.bf16 %v1288, %v1284
    %v1293 = vpack.c.bf16 %v1290, %v1286
    %s1294 = scalar_lea.vmem [#allocation5], 256
    %v1295 = vld [vmem:[%s1294] sm:$0xff]
    %v1296 = vld [vmem:[%s1294 + $0x8] sm:$0xff]
    %v1297 = vld [vmem:[%s1294 + $0x10] sm:$0xff]
    %v1298 = vld [vmem:[%s1294 + $0x18] sm:$0xff]
    %v1299 = vld [vmem:[%s1294 + $0x20] sm:$0xff]
    %v1300 = vld [vmem:[%s1294 + $0x28] sm:$0xff]
    %v1301 = vld [vmem:[%s1294 + $0x30] sm:$0xff]
    %v1302 = vld [vmem:[%s1294 + $0x38] sm:$0xff]
    %v1303 = vld [vmem:[%s1294 + $0x40] sm:$0xff]
    %v1304 = vld [vmem:[%s1294 + $0x48] sm:$0xff]
    %v1305 = vld [vmem:[%s1294 + $0x50] sm:$0xff]
    %v1306 = vld [vmem:[%s1294 + $0x58] sm:$0xff]
    %v1307 = vld [vmem:[%s1294 + $0x60] sm:$0xff]
    %v1308 = vld [vmem:[%s1294 + $0x68] sm:$0xff]
    %v1309 = vld [vmem:[%s1294 + $0x70] sm:$0xff]
    %v1310 = vld [vmem:[%s1294 + $0x78] sm:$0xff]
    %v1311 = vld [vmem:[%s1294 + $0x80] sm:$0xff]
    %v1312 = vld [vmem:[%s1294 + $0x88] sm:$0xff]
    %v1313 = vld [vmem:[%s1294 + $0x90] sm:$0xff]
    %v1314 = vld [vmem:[%s1294 + $0x98] sm:$0xff]
    %v1315 = vld [vmem:[%s1294 + $0xa0] sm:$0xff]
    %v1316 = vld [vmem:[%s1294 + $0xa8] sm:$0xff]
    %v1317 = vld [vmem:[%s1294 + $0xb0] sm:$0xff]
    %v1318 = vld [vmem:[%s1294 + $0xb8] sm:$0xff]
    %v1319 = vld [vmem:[%s1294 + $0xc0] sm:$0xff]
    %v1320 = vld [vmem:[%s1294 + $0xc8] sm:$0xff]
    %v1321 = vld [vmem:[%s1294 + $0xd0] sm:$0xff]
    %v1322 = vld [vmem:[%s1294 + $0xd8] sm:$0xff]
    %v1323 = vld [vmem:[%s1294 + $0xe0] sm:$0xff]
    %v1324 = vld [vmem:[%s1294 + $0xe8] sm:$0xff]
    %v1325 = vld [vmem:[%s1294 + $0xf0] sm:$0xff]
    %v1326 = vld [vmem:[%s1294 + $0xf8] sm:$0xff]
    %v1359 = vunpack.c.l.b16 %v1295
    %v1360 = vunpack.c.h.b16 %v1295
    %v1361 = vunpack.c.l.b16 %v1296
    %v1362 = vunpack.c.h.b16 %v1296
    %v1363 = vunpack.c.l.b16 %v1297
    %v1364 = vunpack.c.h.b16 %v1297
    %v1365 = vunpack.c.l.b16 %v1298
    %v1366 = vunpack.c.h.b16 %v1298
    %v1367 = vunpack.c.l.b16 %v1299
    %v1368 = vunpack.c.h.b16 %v1299
    %v1369 = vunpack.c.l.b16 %v1300
    %v1370 = vunpack.c.h.b16 %v1300
    %v1371 = vunpack.c.l.b16 %v1301
    %v1372 = vunpack.c.h.b16 %v1301
    %v1373 = vunpack.c.l.b16 %v1302
    %v1374 = vunpack.c.h.b16 %v1302
    %v1375 = vunpack.c.l.b16 %v1303
    %v1376 = vunpack.c.h.b16 %v1303
    %v1377 = vunpack.c.l.b16 %v1304
    %v1378 = vunpack.c.h.b16 %v1304
    %v1379 = vunpack.c.l.b16 %v1305
    %v1380 = vunpack.c.h.b16 %v1305
    %v1381 = vunpack.c.l.b16 %v1306
    %v1382 = vunpack.c.h.b16 %v1306
    %v1383 = vunpack.c.l.b16 %v1307
    %v1384 = vunpack.c.h.b16 %v1307
    %v1385 = vunpack.c.l.b16 %v1308
    %v1386 = vunpack.c.h.b16 %v1308
    %v1387 = vunpack.c.l.b16 %v1309
    %v1388 = vunpack.c.h.b16 %v1309
    %v1389 = vunpack.c.l.b16 %v1310
    %v1390 = vunpack.c.h.b16 %v1310
    %v1391 = vunpack.c.l.b16 %v1311
    %v1392 = vunpack.c.h.b16 %v1311
    %v1393 = vunpack.c.l.b16 %v1312
    %v1394 = vunpack.c.h.b16 %v1312
    %v1395 = vunpack.c.l.b16 %v1313
    %v1396 = vunpack.c.h.b16 %v1313
    %v1397 = vunpack.c.l.b16 %v1314
    %v1398 = vunpack.c.h.b16 %v1314
    %v1399 = vunpack.c.l.b16 %v1315
    %v1400 = vunpack.c.h.b16 %v1315
    %v1401 = vunpack.c.l.b16 %v1316
    %v1402 = vunpack.c.h.b16 %v1316
    %v1403 = vunpack.c.l.b16 %v1317
    %v1404 = vunpack.c.h.b16 %v1317
    %v1405 = vunpack.c.l.b16 %v1318
    %v1406 = vunpack.c.h.b16 %v1318
    %v1407 = vunpack.c.l.b16 %v1319
    %v1408 = vunpack.c.h.b16 %v1319
    %v1409 = vunpack.c.l.b16 %v1320
    %v1410 = vunpack.c.h.b16 %v1320
    %v1411 = vunpack.c.l.b16 %v1321
    %v1412 = vunpack.c.h.b16 %v1321
    %v1413 = vunpack.c.l.b16 %v1322
    %v1414 = vunpack.c.h.b16 %v1322
    %v1415 = vunpack.c.l.b16 %v1323
    %v1416 = vunpack.c.h.b16 %v1323
    %v1417 = vunpack.c.l.b16 %v1324
    %v1418 = vunpack.c.h.b16 %v1324
    %v1419 = vunpack.c.l.b16 %v1325
    %v1420 = vunpack.c.h.b16 %v1325
    %v1421 = vunpack.c.l.b16 %v1326
    %v1422 = vunpack.c.h.b16 %v1326
    %v1423 = vpack.c.b16 %v1361, %v1359
    %v1424 = vpack.c.b16 %v1362, %v1360
    %v1425 = vpack.c.b16 %v1365, %v1363
    %v1426 = vpack.c.b16 %v1366, %v1364
    %v1427 = vpack.c.b16 %v1369, %v1367
    %v1428 = vpack.c.b16 %v1370, %v1368
    %v1429 = vpack.c.b16 %v1373, %v1371
    %v1430 = vpack.c.b16 %v1374, %v1372
    %v1431 = vpack.c.b16 %v1377, %v1375
    %v1432 = vpack.c.b16 %v1378, %v1376
    %v1433 = vpack.c.b16 %v1381, %v1379
    %v1434 = vpack.c.b16 %v1382, %v1380
    %v1435 = vpack.c.b16 %v1385, %v1383
    %v1436 = vpack.c.b16 %v1386, %v1384
    %v1437 = vpack.c.b16 %v1389, %v1387
    %v1438 = vpack.c.b16 %v1390, %v1388
    %v1439 = vpack.c.b16 %v1393, %v1391
    %v1440 = vpack.c.b16 %v1394, %v1392
    %v1441 = vpack.c.b16 %v1397, %v1395
    %v1442 = vpack.c.b16 %v1398, %v1396
    %v1443 = vpack.c.b16 %v1401, %v1399
    %v1444 = vpack.c.b16 %v1402, %v1400
    %v1445 = vpack.c.b16 %v1405, %v1403
    %v1446 = vpack.c.b16 %v1406, %v1404
    %v1447 = vpack.c.b16 %v1409, %v1407
    %v1448 = vpack.c.b16 %v1410, %v1408
    %v1449 = vpack.c.b16 %v1413, %v1411
    %v1450 = vpack.c.b16 %v1414, %v1412
    %v1451 = vpack.c.b16 %v1417, %v1415
    %v1452 = vpack.c.b16 %v1418, %v1416
    %v1453 = vpack.c.b16 %v1421, %v1419
    %v1454 = vpack.c.b16 %v1422, %v1420
    %1487 = vmatprep.subr.bf16.mxu0 %v1438
    %1488 = vmatpush1.bf16.msra.mxu0 %v1437
    %1489 = vmatprep.subr.bf16.mxu0 %v1436
    %1490 = vmatpush1.bf16.msra.mxu0 %v1435
    %1491 = vmatprep.subr.bf16.mxu0 %v1434
    %1492 = vmatpush1.bf16.msra.mxu0 %v1433
    %1493 = vmatprep.subr.bf16.mxu0 %v1432
    %1494 = vmatpush1.bf16.msra.mxu0 %v1431
    %1495 = vmatprep.subr.bf16.mxu0 %v1430
    %1496 = vmatpush1.bf16.msra.mxu0 %v1429
    %1497 = vmatprep.subr.bf16.mxu0 %v1428
    %1498 = vmatpush1.bf16.msra.mxu0 %v1427
    %1499 = vmatprep.subr.bf16.mxu0 %v1426
    %1500 = vmatpush1.bf16.msra.mxu0 %v1425
    %1501 = vmatprep.subr.bf16.mxu0 %v1424
    %1502 = vmatpush1.bf16.msra.mxu0 %v1423
    %1503 = vmatprep.subr.bf16.mxu0 %v1454
    %1504 = vmatpush2.bf16.msra.mxu0 %v1453
    %1505 = vmatprep.subr.bf16.mxu0 %v1452
    %1506 = vmatpush2.bf16.msra.mxu0 %v1451
    %1507 = vmatprep.subr.bf16.mxu0 %v1450
    %1508 = vmatpush2.bf16.msra.mxu0 %v1449
    %1509 = vmatprep.subr.bf16.mxu0 %v1448
    %1510 = vmatpush2.bf16.msra.mxu0 %v1447
    %1511 = vmatprep.subr.bf16.mxu0 %v1446
    %1512 = vmatpush2.bf16.msra.mxu0 %v1445
    %1513 = vmatprep.subr.bf16.mxu0 %v1444
    %1514 = vmatpush2.bf16.msra.mxu0 %v1443
    %1515 = vmatprep.subr.bf16.mxu0 %v1442
    %1516 = vmatpush2.bf16.msra.mxu0 %v1441
    %1517 = vmatprep.subr.bf16.mxu0 %v1440
    %1518 = vmatpush2.bf16.msra.mxu0 %v1439
    %1519 = vmatprep.mubr.bf16.mxu0 %v1293
    %1520 = vmatmul.mubr.bf16.gmra.mxu0 %v1292
    %v1521 = vpop.f32.mrf.mxu0
    %v1522 = vadd.f32 0.0, %v1521
    %v1523 = vpop.f32.mrf.mxu0
    %v1524 = vadd.f32 0.0, %v1523
    %v1525 = vpop.f32.mrf.mxu0
    %v1526 = vadd.f32 0.0, %v1525
    %v1527 = vpop.f32.mrf.mxu0
    %v1528 = vadd.f32 0.0, %v1527
    %1529 = vdwg.mxu0
    %v1562 = vunpack.c.l.b16 %v1206
    %v1563 = vunpack.c.h.b16 %v1206
    %v1564 = vunpack.c.l.b16 %v1207
    %v1565 = vunpack.c.h.b16 %v1207
    %v1566 = vunpack.c.l.b16 %v1208
    %v1567 = vunpack.c.h.b16 %v1208
    %v1568 = vunpack.c.l.b16 %v1209
    %v1569 = vunpack.c.h.b16 %v1209
    %v1570 = vunpack.c.l.b16 %v1210
    %v1571 = vunpack.c.h.b16 %v1210
    %v1572 = vunpack.c.l.b16 %v1211
    %v1573 = vunpack.c.h.b16 %v1211
    %v1574 = vunpack.c.l.b16 %v1212
    %v1575 = vunpack.c.h.b16 %v1212
    %v1576 = vunpack.c.l.b16 %v1213
    %v1577 = vunpack.c.h.b16 %v1213
    %v1578 = vunpack.c.l.b16 %v1214
    %v1579 = vunpack.c.h.b16 %v1214
    %v1580 = vunpack.c.l.b16 %v1215
    %v1581 = vunpack.c.h.b16 %v1215
    %v1582 = vunpack.c.l.b16 %v1216
    %v1583 = vunpack.c.h.b16 %v1216
    %v1584 = vunpack.c.l.b16 %v1217
    %v1585 = vunpack.c.h.b16 %v1217
    %v1586 = vunpack.c.l.b16 %v1218
    %v1587 = vunpack.c.h.b16 %v1218
    %v1588 = vunpack.c.l.b16 %v1219
    %v1589 = vunpack.c.h.b16 %v1219
    %v1590 = vunpack.c.l.b16 %v1220
    %v1591 = vunpack.c.h.b16 %v1220
    %v1592 = vunpack.c.l.b16 %v1221
    %v1593 = vunpack.c.h.b16 %v1221
    %v1594 = vunpack.c.l.b16 %v1222
    %v1595 = vunpack.c.h.b16 %v1222
    %v1596 = vunpack.c.l.b16 %v1223
    %v1597 = vunpack.c.h.b16 %v1223
    %v1598 = vunpack.c.l.b16 %v1224
    %v1599 = vunpack.c.h.b16 %v1224
    %v1600 = vunpack.c.l.b16 %v1225
    %v1601 = vunpack.c.h.b16 %v1225
    %v1602 = vunpack.c.l.b16 %v1226
    %v1603 = vunpack.c.h.b16 %v1226
    %v1604 = vunpack.c.l.b16 %v1227
    %v1605 = vunpack.c.h.b16 %v1227
    %v1606 = vunpack.c.l.b16 %v1228
    %v1607 = vunpack.c.h.b16 %v1228
    %v1608 = vunpack.c.l.b16 %v1229
    %v1609 = vunpack.c.h.b16 %v1229
    %v1610 = vunpack.c.l.b16 %v1230
    %v1611 = vunpack.c.h.b16 %v1230
    %v1612 = vunpack.c.l.b16 %v1231
    %v1613 = vunpack.c.h.b16 %v1231
    %v1614 = vunpack.c.l.b16 %v1232
    %v1615 = vunpack.c.h.b16 %v1232
    %v1616 = vunpack.c.l.b16 %v1233
    %v1617 = vunpack.c.h.b16 %v1233
    %v1618 = vunpack.c.l.b16 %v1234
    %v1619 = vunpack.c.h.b16 %v1234
    %v1620 = vunpack.c.l.b16 %v1235
    %v1621 = vunpack.c.h.b16 %v1235
    %v1622 = vunpack.c.l.b16 %v1236
    %v1623 = vunpack.c.h.b16 %v1236
    %v1624 = vunpack.c.l.b16 %v1237
    %v1625 = vunpack.c.h.b16 %v1237
    %v1626 = vpack.c.b16 %v1564, %v1562
    %v1627 = vpack.c.b16 %v1565, %v1563
    %v1628 = vpack.c.b16 %v1568, %v1566
    %v1629 = vpack.c.b16 %v1569, %v1567
    %v1630 = vpack.c.b16 %v1572, %v1570
    %v1631 = vpack.c.b16 %v1573, %v1571
    %v1632 = vpack.c.b16 %v1576, %v1574
    %v1633 = vpack.c.b16 %v1577, %v1575
    %v1634 = vpack.c.b16 %v1580, %v1578
    %v1635 = vpack.c.b16 %v1581, %v1579
    %v1636 = vpack.c.b16 %v1584, %v1582
    %v1637 = vpack.c.b16 %v1585, %v1583
    %v1638 = vpack.c.b16 %v1588, %v1586
    %v1639 = vpack.c.b16 %v1589, %v1587
    %v1640 = vpack.c.b16 %v1592, %v1590
    %v1641 = vpack.c.b16 %v1593, %v1591
    %v1642 = vpack.c.b16 %v1596, %v1594
    %v1643 = vpack.c.b16 %v1597, %v1595
    %v1644 = vpack.c.b16 %v1600, %v1598
    %v1645 = vpack.c.b16 %v1601, %v1599
    %v1646 = vpack.c.b16 %v1604, %v1602
    %v1647 = vpack.c.b16 %v1605, %v1603
    %v1648 = vpack.c.b16 %v1608, %v1606
    %v1649 = vpack.c.b16 %v1609, %v1607
    %v1650 = vpack.c.b16 %v1612, %v1610
    %v1651 = vpack.c.b16 %v1613, %v1611
    %v1652 = vpack.c.b16 %v1616, %v1614
    %v1653 = vpack.c.b16 %v1617, %v1615
    %v1654 = vpack.c.b16 %v1620, %v1618
    %v1655 = vpack.c.b16 %v1621, %v1619
    %v1656 = vpack.c.b16 %v1624, %v1622
    %v1657 = vpack.c.b16 %v1625, %v1623
    %1690 = vmatprep.subr.bf16.mxu0 %v1641
    %1691 = vmatpush1.bf16.msra.mxu0 %v1640
    %1692 = vmatprep.subr.bf16.mxu0 %v1639
    %1693 = vmatpush1.bf16.msra.mxu0 %v1638
    %1694 = vmatprep.subr.bf16.mxu0 %v1637
    %1695 = vmatpush1.bf16.msra.mxu0 %v1636
    %1696 = vmatprep.subr.bf16.mxu0 %v1635
    %1697 = vmatpush1.bf16.msra.mxu0 %v1634
    %1698 = vmatprep.subr.bf16.mxu0 %v1633
    %1699 = vmatpush1.bf16.msra.mxu0 %v1632
    %1700 = vmatprep.subr.bf16.mxu0 %v1631
    %1701 = vmatpush1.bf16.msra.mxu0 %v1630
    %1702 = vmatprep.subr.bf16.mxu0 %v1629
    %1703 = vmatpush1.bf16.msra.mxu0 %v1628
    %1704 = vmatprep.subr.bf16.mxu0 %v1627
    %1705 = vmatpush1.bf16.msra.mxu0 %v1626
    %1706 = vmatprep.subr.bf16.mxu0 %v1657
    %1707 = vmatpush2.bf16.msra.mxu0 %v1656
    %1708 = vmatprep.subr.bf16.mxu0 %v1655
    %1709 = vmatpush2.bf16.msra.mxu0 %v1654
    %1710 = vmatprep.subr.bf16.mxu0 %v1653
    %1711 = vmatpush2.bf16.msra.mxu0 %v1652
    %1712 = vmatprep.subr.bf16.mxu0 %v1651
    %1713 = vmatpush2.bf16.msra.mxu0 %v1650
    %1714 = vmatprep.subr.bf16.mxu0 %v1649
    %1715 = vmatpush2.bf16.msra.mxu0 %v1648
    %1716 = vmatprep.subr.bf16.mxu0 %v1647
    %1717 = vmatpush2.bf16.msra.mxu0 %v1646
    %1718 = vmatprep.subr.bf16.mxu0 %v1645
    %1719 = vmatpush2.bf16.msra.mxu0 %v1644
    %1720 = vmatprep.subr.bf16.mxu0 %v1643
    %1721 = vmatpush2.bf16.msra.mxu0 %v1642
    %1722 = vmatprep.mubr.bf16.mxu0 %v1205
    %1723 = vmatmul.mubr.bf16.gmra.mxu0 %v1204
    %v1724 = vpop.f32.mrf.mxu0
    %v1725 = vadd.f32 %v1522, %v1724
    %v1726 = vpop.f32.mrf.mxu0
    %v1727 = vadd.f32 %v1524, %v1726
    %v1728 = vpop.f32.mrf.mxu0
    %v1729 = vadd.f32 %v1526, %v1728
    %v1730 = vpop.f32.mrf.mxu0
    %v1731 = vadd.f32 %v1528, %v1730
    %1732 = vdwg.mxu0
    %s1733 = scalar_lea.vmem %s4, 16
    %v1734 = vld [vmem:[%s1733] sm:$0xf]
    %v1735 = vld [vmem:[%s1733 + $0x4] sm:$0xf]
    %v1738 = vunpack.c.l.b16 %v1734
    %v1739 = vunpack.c.l.b16 %v1735
    %v1740 = vpack.c.b16 %v1739, %v1738
    %v1742 = vsel %vm1157, %v1740, 0
    %1744 = vmatprep.subr.bf16.mxu0 0
    %1745 = vmatpush1.bf16.msra.mxu0 0
    %1746 = vmatprep.subr.bf16.mxu0 0
    %1747 = vmatpush1.bf16.msra.mxu0 0
    %1748 = vmatprep.subr.bf16.mxu0 0
    %1749 = vmatpush1.bf16.msra.mxu0 0
    %1750 = vmatprep.subr.bf16.mxu0 0
    %1751 = vmatpush1.bf16.msra.mxu0 0
    %1752 = vmatprep.subr.bf16.mxu0 0
    %1753 = vmatpush1.bf16.msra.mxu0 0
    %1754 = vmatprep.subr.bf16.mxu0 0
    %1755 = vmatpush1.bf16.msra.mxu0 0
    %1756 = vmatprep.subr.bf16.mxu0 %v1149
    %1757 = vmatpush1.bf16.msra.mxu0 %v1148
    %1758 = vmatprep.subr.bf16.mxu0 %v1147
    %1759 = vmatpush1.bf16.msra.mxu0 %v1146
    %1760 = vmatprep.subr.bf16.mxu0 0
    %1761 = vmatpush2.bf16.msra.mxu0 0
    %1762 = vmatprep.subr.bf16.mxu0 0
    %1763 = vmatpush2.bf16.msra.mxu0 0
    %1764 = vmatprep.subr.bf16.mxu0 0
    %1765 = vmatpush2.bf16.msra.mxu0 0
    %1766 = vmatprep.subr.bf16.mxu0 0
    %1767 = vmatpush2.bf16.msra.mxu0 0
    %1768 = vmatprep.subr.bf16.mxu0 0
    %1769 = vmatpush2.bf16.msra.mxu0 0
    %1770 = vmatprep.subr.bf16.mxu0 0
    %1771 = vmatpush2.bf16.msra.mxu0 0
    %1772 = vmatprep.subr.bf16.mxu0 0
    %1773 = vmatpush2.bf16.msra.mxu0 0
    %1774 = vmatprep.subr.bf16.mxu0 0
    %1775 = vmatpush2.bf16.msra.mxu0 0
    %1776 = vmatprep.mubr.bf16.mxu0 0
    %1777 = vmatmul.mubr.bf16.gmra.mxu0 %v1742
    %v1778 = vpop.f32.mrf.mxu0
    %v1779 = vadd.f32 0.0, %v1778
    %v1780 = vpop.f32.mrf.mxu0
    %v1781 = vadd.f32 0.0, %v1780
    %v1782 = vpop.f32.mrf.mxu0
    %v1783 = vadd.f32 0.0, %v1782
    %v1784 = vpop.f32.mrf.mxu0
    %v1785 = vadd.f32 0.0, %v1784
    %1786 = vdwg.mxu0
    %v1787 = vpack.c.bf16 %v1783, %v1779
    %v1788 = vpack.c.bf16 %v1785, %v1781
    %s1789 = scalar_lea.vmem [#allocation5], 512
    %v1790 = vld [vmem:[%s1789] sm:$0xff]
    %v1791 = vld [vmem:[%s1789 + $0x8] sm:$0xff]
    %v1792 = vld [vmem:[%s1789 + $0x10] sm:$0xff]
    %v1793 = vld [vmem:[%s1789 + $0x18] sm:$0xff]
    %v1794 = vld [vmem:[%s1789 + $0x20] sm:$0xff]
    %v1795 = vld [vmem:[%s1789 + $0x28] sm:$0xff]
    %v1796 = vld [vmem:[%s1789 + $0x30] sm:$0xff]
    %v1797 = vld [vmem:[%s1789 + $0x38] sm:$0xff]
    %v1798 = vld [vmem:[%s1789 + $0x40] sm:$0xff]
    %v1799 = vld [vmem:[%s1789 + $0x48] sm:$0xff]
    %v1800 = vld [vmem:[%s1789 + $0x50] sm:$0xff]
    %v1801 = vld [vmem:[%s1789 + $0x58] sm:$0xff]
    %v1802 = vld [vmem:[%s1789 + $0x60] sm:$0xff]
    %v1803 = vld [vmem:[%s1789 + $0x68] sm:$0xff]
    %v1804 = vld [vmem:[%s1789 + $0x70] sm:$0xff]
    %v1805 = vld [vmem:[%s1789 + $0x78] sm:$0xff]
    %v1806 = vld [vmem:[%s1789 + $0x80] sm:$0xff]
    %v1807 = vld [vmem:[%s1789 + $0x88] sm:$0xff]
    %v1808 = vld [vmem:[%s1789 + $0x90] sm:$0xff]
    %v1809 = vld [vmem:[%s1789 + $0x98] sm:$0xff]
    %v1810 = vld [vmem:[%s1789 + $0xa0] sm:$0xff]
    %v1811 = vld [vmem:[%s1789 + $0xa8] sm:$0xff]
    %v1812 = vld [vmem:[%s1789 + $0xb0] sm:$0xff]
    %v1813 = vld [vmem:[%s1789 + $0xb8] sm:$0xff]
    %v1814 = vld [vmem:[%s1789 + $0xc0] sm:$0xff]
    %v1815 = vld [vmem:[%s1789 + $0xc8] sm:$0xff]
    %v1816 = vld [vmem:[%s1789 + $0xd0] sm:$0xff]
    %v1817 = vld [vmem:[%s1789 + $0xd8] sm:$0xff]
    %v1818 = vld [vmem:[%s1789 + $0xe0] sm:$0xff]
    %v1819 = vld [vmem:[%s1789 + $0xe8] sm:$0xff]
    %v1820 = vld [vmem:[%s1789 + $0xf0] sm:$0xff]
    %v1821 = vld [vmem:[%s1789 + $0xf8] sm:$0xff]
    %v1854 = vunpack.c.l.b16 %v1790
    %v1855 = vunpack.c.h.b16 %v1790
    %v1856 = vunpack.c.l.b16 %v1791
    %v1857 = vunpack.c.h.b16 %v1791
    %v1858 = vunpack.c.l.b16 %v1792
    %v1859 = vunpack.c.h.b16 %v1792
    %v1860 = vunpack.c.l.b16 %v1793
    %v1861 = vunpack.c.h.b16 %v1793
    %v1862 = vunpack.c.l.b16 %v1794
    %v1863 = vunpack.c.h.b16 %v1794
    %v1864 = vunpack.c.l.b16 %v1795
    %v1865 = vunpack.c.h.b16 %v1795
    %v1866 = vunpack.c.l.b16 %v1796
    %v1867 = vunpack.c.h.b16 %v1796
    %v1868 = vunpack.c.l.b16 %v1797
    %v1869 = vunpack.c.h.b16 %v1797
    %v1870 = vunpack.c.l.b16 %v1798
    %v1871 = vunpack.c.h.b16 %v1798
    %v1872 = vunpack.c.l.b16 %v1799
    %v1873 = vunpack.c.h.b16 %v1799
    %v1874 = vunpack.c.l.b16 %v1800
    %v1875 = vunpack.c.h.b16 %v1800
    %v1876 = vunpack.c.l.b16 %v1801
    %v1877 = vunpack.c.h.b16 %v1801
    %v1878 = vunpack.c.l.b16 %v1802
    %v1879 = vunpack.c.h.b16 %v1802
    %v1880 = vunpack.c.l.b16 %v1803
    %v1881 = vunpack.c.h.b16 %v1803
    %v1882 = vunpack.c.l.b16 %v1804
    %v1883 = vunpack.c.h.b16 %v1804
    %v1884 = vunpack.c.l.b16 %v1805
    %v1885 = vunpack.c.h.b16 %v1805
    %v1886 = vunpack.c.l.b16 %v1806
    %v1887 = vunpack.c.h.b16 %v1806
    %v1888 = vunpack.c.l.b16 %v1807
    %v1889 = vunpack.c.h.b16 %v1807
    %v1890 = vunpack.c.l.b16 %v1808
    %v1891 = vunpack.c.h.b16 %v1808
    %v1892 = vunpack.c.l.b16 %v1809
    %v1893 = vunpack.c.h.b16 %v1809
    %v1894 = vunpack.c.l.b16 %v1810
    %v1895 = vunpack.c.h.b16 %v1810
    %v1896 = vunpack.c.l.b16 %v1811
    %v1897 = vunpack.c.h.b16 %v1811
    %v1898 = vunpack.c.l.b16 %v1812
    %v1899 = vunpack.c.h.b16 %v1812
    %v1900 = vunpack.c.l.b16 %v1813
    %v1901 = vunpack.c.h.b16 %v1813
    %v1902 = vunpack.c.l.b16 %v1814
    %v1903 = vunpack.c.h.b16 %v1814
    %v1904 = vunpack.c.l.b16 %v1815
    %v1905 = vunpack.c.h.b16 %v1815
    %v1906 = vunpack.c.l.b16 %v1816
    %v1907 = vunpack.c.h.b16 %v1816
    %v1908 = vunpack.c.l.b16 %v1817
    %v1909 = vunpack.c.h.b16 %v1817
    %v1910 = vunpack.c.l.b16 %v1818
    %v1911 = vunpack.c.h.b16 %v1818
    %v1912 = vunpack.c.l.b16 %v1819
    %v1913 = vunpack.c.h.b16 %v1819
    %v1914 = vunpack.c.l.b16 %v1820
    %v1915 = vunpack.c.h.b16 %v1820
    %v1916 = vunpack.c.l.b16 %v1821
    %v1917 = vunpack.c.h.b16 %v1821
    %v1918 = vpack.c.b16 %v1856, %v1854
    %v1919 = vpack.c.b16 %v1857, %v1855
    %v1920 = vpack.c.b16 %v1860, %v1858
    %v1921 = vpack.c.b16 %v1861, %v1859
    %v1922 = vpack.c.b16 %v1864, %v1862
    %v1923 = vpack.c.b16 %v1865, %v1863
    %v1924 = vpack.c.b16 %v1868, %v1866
    %v1925 = vpack.c.b16 %v1869, %v1867
    %v1926 = vpack.c.b16 %v1872, %v1870
    %v1927 = vpack.c.b16 %v1873, %v1871
    %v1928 = vpack.c.b16 %v1876, %v1874
    %v1929 = vpack.c.b16 %v1877, %v1875
    %v1930 = vpack.c.b16 %v1880, %v1878
    %v1931 = vpack.c.b16 %v1881, %v1879
    %v1932 = vpack.c.b16 %v1884, %v1882
    %v1933 = vpack.c.b16 %v1885, %v1883
    %v1934 = vpack.c.b16 %v1888, %v1886
    %v1935 = vpack.c.b16 %v1889, %v1887
    %v1936 = vpack.c.b16 %v1892, %v1890
    %v1937 = vpack.c.b16 %v1893, %v1891
    %v1938 = vpack.c.b16 %v1896, %v1894
    %v1939 = vpack.c.b16 %v1897, %v1895
    %v1940 = vpack.c.b16 %v1900, %v1898
    %v1941 = vpack.c.b16 %v1901, %v1899
    %v1942 = vpack.c.b16 %v1904, %v1902
    %v1943 = vpack.c.b16 %v1905, %v1903
    %v1944 = vpack.c.b16 %v1908, %v1906
    %v1945 = vpack.c.b16 %v1909, %v1907
    %v1946 = vpack.c.b16 %v1912, %v1910
    %v1947 = vpack.c.b16 %v1913, %v1911
    %v1948 = vpack.c.b16 %v1916, %v1914
    %v1949 = vpack.c.b16 %v1917, %v1915
    %1982 = vmatprep.subr.bf16.mxu0 %v1933
    %1983 = vmatpush1.bf16.msra.mxu0 %v1932
    %1984 = vmatprep.subr.bf16.mxu0 %v1931
    %1985 = vmatpush1.bf16.msra.mxu0 %v1930
    %1986 = vmatprep.subr.bf16.mxu0 %v1929
    %1987 = vmatpush1.bf16.msra.mxu0 %v1928
    %1988 = vmatprep.subr.bf16.mxu0 %v1927
    %1989 = vmatpush1.bf16.msra.mxu0 %v1926
    %1990 = vmatprep.subr.bf16.mxu0 %v1925
    %1991 = vmatpush1.bf16.msra.mxu0 %v1924
    %1992 = vmatprep.subr.bf16.mxu0 %v1923
    %1993 = vmatpush1.bf16.msra.mxu0 %v1922
    %1994 = vmatprep.subr.bf16.mxu0 %v1921
    %1995 = vmatpush1.bf16.msra.mxu0 %v1920
    %1996 = vmatprep.subr.bf16.mxu0 %v1919
    %1997 = vmatpush1.bf16.msra.mxu0 %v1918
    %1998 = vmatprep.subr.bf16.mxu0 %v1949
    %1999 = vmatpush2.bf16.msra.mxu0 %v1948
    %2000 = vmatprep.subr.bf16.mxu0 %v1947
    %2001 = vmatpush2.bf16.msra.mxu0 %v1946
    %2002 = vmatprep.subr.bf16.mxu0 %v1945
    %2003 = vmatpush2.bf16.msra.mxu0 %v1944
    %2004 = vmatprep.subr.bf16.mxu0 %v1943
    %2005 = vmatpush2.bf16.msra.mxu0 %v1942
    %2006 = vmatprep.subr.bf16.mxu0 %v1941
    %2007 = vmatpush2.bf16.msra.mxu0 %v1940
    %2008 = vmatprep.subr.bf16.mxu0 %v1939
    %2009 = vmatpush2.bf16.msra.mxu0 %v1938
    %2010 = vmatprep.subr.bf16.mxu0 %v1937
    %2011 = vmatpush2.bf16.msra.mxu0 %v1936
    %2012 = vmatprep.subr.bf16.mxu0 %v1935
    %2013 = vmatpush2.bf16.msra.mxu0 %v1934
    %2014 = vmatprep.mubr.bf16.mxu0 %v1788
    %2015 = vmatmul.mubr.bf16.gmra.mxu0 %v1787
    %v2016 = vpop.f32.mrf.mxu0
    %v2017 = vadd.f32 0.0, %v2016
    %v2018 = vpop.f32.mrf.mxu0
    %v2019 = vadd.f32 0.0, %v2018
    %v2020 = vpop.f32.mrf.mxu0
    %v2021 = vadd.f32 0.0, %v2020
    %v2022 = vpop.f32.mrf.mxu0
    %v2023 = vadd.f32 0.0, %v2022
    %2024 = vdwg.mxu0
    %v2025 = vadd.f32 %v1725, %v2017
    %v2026 = vadd.f32 %v1727, %v2019
    %v2027 = vadd.f32 %v1729, %v2021
    %v2028 = vadd.f32 %v1731, %v2023
    %s2029 = scalar_lea.vmem %s4, 24
    %v2030 = vld [vmem:[%s2029] sm:$0xf]
    %v2031 = vld [vmem:[%s2029 + $0x4] sm:$0xf]
    %v2034 = vunpack.c.l.b16 %v2030
    %v2035 = vunpack.c.l.b16 %v2031
    %v2036 = vpack.c.b16 %v2035, %v2034
    %v2038 = vsel %vm1157, %v2036, 0
    %2040 = vmatprep.subr.bf16.mxu0 0
    %2041 = vmatpush1.bf16.msra.mxu0 0
    %2042 = vmatprep.subr.bf16.mxu0 0
    %2043 = vmatpush1.bf16.msra.mxu0 0
    %2044 = vmatprep.subr.bf16.mxu0 0
    %2045 = vmatpush1.bf16.msra.mxu0 0
    %2046 = vmatprep.subr.bf16.mxu0 0
    %2047 = vmatpush1.bf16.msra.mxu0 0
    %2048 = vmatprep.subr.bf16.mxu0 0
    %2049 = vmatpush1.bf16.msra.mxu0 0
    %2050 = vmatprep.subr.bf16.mxu0 0
    %2051 = vmatpush1.bf16.msra.mxu0 0
    %2052 = vmatprep.subr.bf16.mxu0 %v1149
    %2053 = vmatpush1.bf16.msra.mxu0 %v1148
    %2054 = vmatprep.subr.bf16.mxu0 %v1147
    %2055 = vmatpush1.bf16.msra.mxu0 %v1146
    %2056 = vmatprep.subr.bf16.mxu0 0
    %2057 = vmatpush2.bf16.msra.mxu0 0
    %2058 = vmatprep.subr.bf16.mxu0 0
    %2059 = vmatpush2.bf16.msra.mxu0 0
    %2060 = vmatprep.subr.bf16.mxu0 0
    %2061 = vmatpush2.bf16.msra.mxu0 0
    %2062 = vmatprep.subr.bf16.mxu0 0
    %2063 = vmatpush2.bf16.msra.mxu0 0
    %2064 = vmatprep.subr.bf16.mxu0 0
    %2065 = vmatpush2.bf16.msra.mxu0 0
    %2066 = vmatprep.subr.bf16.mxu0 0
    %2067 = vmatpush2.bf16.msra.mxu0 0
    %2068 = vmatprep.subr.bf16.mxu0 0
    %2069 = vmatpush2.bf16.msra.mxu0 0
    %2070 = vmatprep.subr.bf16.mxu0 0
    %2071 = vmatpush2.bf16.msra.mxu0 0
    %2072 = vmatprep.mubr.bf16.mxu0 0
    %2073 = vmatmul.mubr.bf16.gmra.mxu0 %v2038
    %v2074 = vpop.f32.mrf.mxu0
    %v2075 = vadd.f32 0.0, %v2074
    %v2076 = vpop.f32.mrf.mxu0
    %v2077 = vadd.f32 0.0, %v2076
    %v2078 = vpop.f32.mrf.mxu0
    %v2079 = vadd.f32 0.0, %v2078
    %v2080 = vpop.f32.mrf.mxu0
    %v2081 = vadd.f32 0.0, %v2080
    %2082 = vdwg.mxu0
    %v2083 = vpack.c.bf16 %v2079, %v2075
    %v2084 = vpack.c.bf16 %v2081, %v2077
    %s2085 = scalar_lea.vmem [#allocation5], 768
    %v2086 = vld [vmem:[%s2085] sm:$0xff]
    %v2087 = vld [vmem:[%s2085 + $0x8] sm:$0xff]
    %v2088 = vld [vmem:[%s2085 + $0x10] sm:$0xff]
    %v2089 = vld [vmem:[%s2085 + $0x18] sm:$0xff]
    %v2090 = vld [vmem:[%s2085 + $0x20] sm:$0xff]
    %v2091 = vld [vmem:[%s2085 + $0x28] sm:$0xff]
    %v2092 = vld [vmem:[%s2085 + $0x30] sm:$0xff]
    %v2093 = vld [vmem:[%s2085 + $0x38] sm:$0xff]
    %v2094 = vld [vmem:[%s2085 + $0x40] sm:$0xff]
    %v2095 = vld [vmem:[%s2085 + $0x48] sm:$0xff]
    %v2096 = vld [vmem:[%s2085 + $0x50] sm:$0xff]
    %v2097 = vld [vmem:[%s2085 + $0x58] sm:$0xff]
    %v2098 = vld [vmem:[%s2085 + $0x60] sm:$0xff]
    %v2099 = vld [vmem:[%s2085 + $0x68] sm:$0xff]
    %v2100 = vld [vmem:[%s2085 + $0x70] sm:$0xff]
    %v2101 = vld [vmem:[%s2085 + $0x78] sm:$0xff]
    %v2102 = vld [vmem:[%s2085 + $0x80] sm:$0xff]
    %v2103 = vld [vmem:[%s2085 + $0x88] sm:$0xff]
    %v2104 = vld [vmem:[%s2085 + $0x90] sm:$0xff]
    %v2105 = vld [vmem:[%s2085 + $0x98] sm:$0xff]
    %v2106 = vld [vmem:[%s2085 + $0xa0] sm:$0xff]
    %v2107 = vld [vmem:[%s2085 + $0xa8] sm:$0xff]
    %v2108 = vld [vmem:[%s2085 + $0xb0] sm:$0xff]
    %v2109 = vld [vmem:[%s2085 + $0xb8] sm:$0xff]
    %v2110 = vld [vmem:[%s2085 + $0xc0] sm:$0xff]
    %v2111 = vld [vmem:[%s2085 + $0xc8] sm:$0xff]
    %v2112 = vld [vmem:[%s2085 + $0xd0] sm:$0xff]
    %v2113 = vld [vmem:[%s2085 + $0xd8] sm:$0xff]
    %v2114 = vld [vmem:[%s2085 + $0xe0] sm:$0xff]
    %v2115 = vld [vmem:[%s2085 + $0xe8] sm:$0xff]
    %v2116 = vld [vmem:[%s2085 + $0xf0] sm:$0xff]
    %v2117 = vld [vmem:[%s2085 + $0xf8] sm:$0xff]
    %v2150 = vunpack.c.l.b16 %v2086
    %v2151 = vunpack.c.h.b16 %v2086
    %v2152 = vunpack.c.l.b16 %v2087
    %v2153 = vunpack.c.h.b16 %v2087
    %v2154 = vunpack.c.l.b16 %v2088
    %v2155 = vunpack.c.h.b16 %v2088
    %v2156 = vunpack.c.l.b16 %v2089
    %v2157 = vunpack.c.h.b16 %v2089
    %v2158 = vunpack.c.l.b16 %v2090
    %v2159 = vunpack.c.h.b16 %v2090
    %v2160 = vunpack.c.l.b16 %v2091
    %v2161 = vunpack.c.h.b16 %v2091
    %v2162 = vunpack.c.l.b16 %v2092
    %v2163 = vunpack.c.h.b16 %v2092
    %v2164 = vunpack.c.l.b16 %v2093
    %v2165 = vunpack.c.h.b16 %v2093
    %v2166 = vunpack.c.l.b16 %v2094
    %v2167 = vunpack.c.h.b16 %v2094
    %v2168 = vunpack.c.l.b16 %v2095
    %v2169 = vunpack.c.h.b16 %v2095
    %v2170 = vunpack.c.l.b16 %v2096
    %v2171 = vunpack.c.h.b16 %v2096
    %v2172 = vunpack.c.l.b16 %v2097
    %v2173 = vunpack.c.h.b16 %v2097
    %v2174 = vunpack.c.l.b16 %v2098
    %v2175 = vunpack.c.h.b16 %v2098
    %v2176 = vunpack.c.l.b16 %v2099
    %v2177 = vunpack.c.h.b16 %v2099
    %v2178 = vunpack.c.l.b16 %v2100
    %v2179 = vunpack.c.h.b16 %v2100
    %v2180 = vunpack.c.l.b16 %v2101
    %v2181 = vunpack.c.h.b16 %v2101
    %v2182 = vunpack.c.l.b16 %v2102
    %v2183 = vunpack.c.h.b16 %v2102
    %v2184 = vunpack.c.l.b16 %v2103
    %v2185 = vunpack.c.h.b16 %v2103
    %v2186 = vunpack.c.l.b16 %v2104
    %v2187 = vunpack.c.h.b16 %v2104
    %v2188 = vunpack.c.l.b16 %v2105
    %v2189 = vunpack.c.h.b16 %v2105
    %v2190 = vunpack.c.l.b16 %v2106
    %v2191 = vunpack.c.h.b16 %v2106
    %v2192 = vunpack.c.l.b16 %v2107
    %v2193 = vunpack.c.h.b16 %v2107
    %v2194 = vunpack.c.l.b16 %v2108
    %v2195 = vunpack.c.h.b16 %v2108
    %v2196 = vunpack.c.l.b16 %v2109
    %v2197 = vunpack.c.h.b16 %v2109
    %v2198 = vunpack.c.l.b16 %v2110
    %v2199 = vunpack.c.h.b16 %v2110
    %v2200 = vunpack.c.l.b16 %v2111
    %v2201 = vunpack.c.h.b16 %v2111
    %v2202 = vunpack.c.l.b16 %v2112
    %v2203 = vunpack.c.h.b16 %v2112
    %v2204 = vunpack.c.l.b16 %v2113
    %v2205 = vunpack.c.h.b16 %v2113
    %v2206 = vunpack.c.l.b16 %v2114
    %v2207 = vunpack.c.h.b16 %v2114
    %v2208 = vunpack.c.l.b16 %v2115
    %v2209 = vunpack.c.h.b16 %v2115
    %v2210 = vunpack.c.l.b16 %v2116
    %v2211 = vunpack.c.h.b16 %v2116
    %v2212 = vunpack.c.l.b16 %v2117
    %v2213 = vunpack.c.h.b16 %v2117
    %v2214 = vpack.c.b16 %v2152, %v2150
    %v2215 = vpack.c.b16 %v2153, %v2151
    %v2216 = vpack.c.b16 %v2156, %v2154
    %v2217 = vpack.c.b16 %v2157, %v2155
    %v2218 = vpack.c.b16 %v2160, %v2158
    %v2219 = vpack.c.b16 %v2161, %v2159
    %v2220 = vpack.c.b16 %v2164, %v2162
    %v2221 = vpack.c.b16 %v2165, %v2163
    %v2222 = vpack.c.b16 %v2168, %v2166
    %v2223 = vpack.c.b16 %v2169, %v2167
    %v2224 = vpack.c.b16 %v2172, %v2170
    %v2225 = vpack.c.b16 %v2173, %v2171
    %v2226 = vpack.c.b16 %v2176, %v2174
    %v2227 = vpack.c.b16 %v2177, %v2175
    %v2228 = vpack.c.b16 %v2180, %v2178
    %v2229 = vpack.c.b16 %v2181, %v2179
    %v2230 = vpack.c.b16 %v2184, %v2182
    %v2231 = vpack.c.b16 %v2185, %v2183
    %v2232 = vpack.c.b16 %v2188, %v2186
    %v2233 = vpack.c.b16 %v2189, %v2187
    %v2234 = vpack.c.b16 %v2192, %v2190
    %v2235 = vpack.c.b16 %v2193, %v2191
    %v2236 = vpack.c.b16 %v2196, %v2194
    %v2237 = vpack.c.b16 %v2197, %v2195
    %v2238 = vpack.c.b16 %v2200, %v2198
    %v2239 = vpack.c.b16 %v2201, %v2199
    %v2240 = vpack.c.b16 %v2204, %v2202
    %v2241 = vpack.c.b16 %v2205, %v2203
    %v2242 = vpack.c.b16 %v2208, %v2206
    %v2243 = vpack.c.b16 %v2209, %v2207
    %v2244 = vpack.c.b16 %v2212, %v2210
    %v2245 = vpack.c.b16 %v2213, %v2211
    %2278 = vmatprep.subr.bf16.mxu0 %v2229
    %2279 = vmatpush1.bf16.msra.mxu0 %v2228
    %2280 = vmatprep.subr.bf16.mxu0 %v2227
    %2281 = vmatpush1.bf16.msra.mxu0 %v2226
    %2282 = vmatprep.subr.bf16.mxu0 %v2225
    %2283 = vmatpush1.bf16.msra.mxu0 %v2224
    %2284 = vmatprep.subr.bf16.mxu0 %v2223
    %2285 = vmatpush1.bf16.msra.mxu0 %v2222
    %2286 = vmatprep.subr.bf16.mxu0 %v2221
    %2287 = vmatpush1.bf16.msra.mxu0 %v2220
    %2288 = vmatprep.subr.bf16.mxu0 %v2219
    %2289 = vmatpush1.bf16.msra.mxu0 %v2218
    %2290 = vmatprep.subr.bf16.mxu0 %v2217
    %2291 = vmatpush1.bf16.msra.mxu0 %v2216
    %2292 = vmatprep.subr.bf16.mxu0 %v2215
    %2293 = vmatpush1.bf16.msra.mxu0 %v2214
    %2294 = vmatprep.subr.bf16.mxu0 %v2245
    %2295 = vmatpush2.bf16.msra.mxu0 %v2244
    %2296 = vmatprep.subr.bf16.mxu0 %v2243
    %2297 = vmatpush2.bf16.msra.mxu0 %v2242
    %2298 = vmatprep.subr.bf16.mxu0 %v2241
    %2299 = vmatpush2.bf16.msra.mxu0 %v2240
    %2300 = vmatprep.subr.bf16.mxu0 %v2239
    %2301 = vmatpush2.bf16.msra.mxu0 %v2238
    %2302 = vmatprep.subr.bf16.mxu0 %v2237
    %2303 = vmatpush2.bf16.msra.mxu0 %v2236
    %2304 = vmatprep.subr.bf16.mxu0 %v2235
    %2305 = vmatpush2.bf16.msra.mxu0 %v2234
    %2306 = vmatprep.subr.bf16.mxu0 %v2233
    %2307 = vmatpush2.bf16.msra.mxu0 %v2232
    %2308 = vmatprep.subr.bf16.mxu0 %v2231
    %2309 = vmatpush2.bf16.msra.mxu0 %v2230
    %2310 = vmatprep.mubr.bf16.mxu0 %v2084
    %2311 = vmatmul.mubr.bf16.gmra.mxu0 %v2083
    %v2312 = vpop.f32.mrf.mxu0
    %v2313 = vadd.f32 0.0, %v2312
    %v2314 = vpop.f32.mrf.mxu0
    %v2315 = vadd.f32 0.0, %v2314
    %v2316 = vpop.f32.mrf.mxu0
    %v2317 = vadd.f32 0.0, %v2316
    %v2318 = vpop.f32.mrf.mxu0
    %v2319 = vadd.f32 0.0, %v2318
    %2320 = vdwg.mxu0
    %v2321 = vadd.f32 %v2025, %v2313
    %v2322 = vadd.f32 %v2026, %v2315
    %v2323 = vadd.f32 %v2027, %v2317
    %v2324 = vadd.f32 %v2028, %v2319
    %v2325 = vadd.f32 %v2321, %v2323
    %v2326 = vrot.slane %v2325, 4
    %v2327 = vadd.f32 %v2325, %v2326
    %v2328 = vrot.slane %v2327, 2
    %v2329 = vadd.f32 %v2327, %v2328
    %v2330 = vrot.slane %v2329, 1
    %v2331 = vadd.f32 %v2329, %v2330
    %v2332 = vadd.f32 %v2322, %v2324
    %v2333 = vrot.slane %v2332, 4
    %v2334 = vadd.f32 %v2332, %v2333
    %v2335 = vrot.slane %v2334, 2
    %v2336 = vadd.f32 %v2334, %v2335
    %v2337 = vrot.slane %v2336, 1
    %v2338 = vadd.f32 %v2336, %v2337
    %v2339 = vmul.f32 %v2321, %v2321
    %v2340 = vmul.f32 %v2322, %v2322
    %v2341 = vmul.f32 %v2323, %v2323
    %v2342 = vmul.f32 %v2324, %v2324
    %v2343 = vadd.f32 %v2339, %v2341
    %v2344 = vrot.slane %v2343, 4
    %v2345 = vadd.f32 %v2343, %v2344
    %v2346 = vrot.slane %v2345, 2
    %v2347 = vadd.f32 %v2345, %v2346
    %v2348 = vrot.slane %v2347, 1
    %v2349 = vadd.f32 %v2347, %v2348
    %v2350 = vadd.f32 %v2340, %v2342
    %v2351 = vrot.slane %v2350, 4
    %v2352 = vadd.f32 %v2350, %v2351
    %v2353 = vrot.slane %v2352, 2
    %v2354 = vadd.f32 %v2352, %v2353
    %v2355 = vrot.slane %v2354, 1
    %v2356 = vadd.f32 %v2354, %v2355
    %v2357 = vld [vmem:[#allocation7] sm:$0xff]
    %v2358 = vld [vmem:[#allocation7 + $0x8] sm:$0xff]
    %v2359 = vld [vmem:[#allocation7 + $0x10] sm:$0xff]
    %v2360 = vld [vmem:[#allocation7 + $0x18] sm:$0xff]
    %v2361 = vld [vmem:[#allocation7 + $0x20] sm:$0xff]
    %v2362 = vld [vmem:[#allocation7 + $0x28] sm:$0xff]
    %v2363 = vld [vmem:[#allocation7 + $0x30] sm:$0xff]
    %v2364 = vld [vmem:[#allocation7 + $0x38] sm:$0xff]
    %v2365 = vld [vmem:[#allocation7 + $0x40] sm:$0xff]
    %v2366 = vld [vmem:[#allocation7 + $0x48] sm:$0xff]
    %v2367 = vld [vmem:[#allocation7 + $0x50] sm:$0xff]
    %v2368 = vld [vmem:[#allocation7 + $0x58] sm:$0xff]
    %v2369 = vld [vmem:[#allocation7 + $0x60] sm:$0xff]
    %v2370 = vld [vmem:[#allocation7 + $0x68] sm:$0xff]
    %v2371 = vld [vmem:[#allocation7 + $0x70] sm:$0xff]
    %v2372 = vld [vmem:[#allocation7 + $0x78] sm:$0xff]
    %v2373 = vld [vmem:[#allocation7 + $0x80] sm:$0xff]
    %v2374 = vld [vmem:[#allocation7 + $0x88] sm:$0xff]
    %v2375 = vld [vmem:[#allocation7 + $0x90] sm:$0xff]
    %v2376 = vld [vmem:[#allocation7 + $0x98] sm:$0xff]
    %v2377 = vld [vmem:[#allocation7 + $0xa0] sm:$0xff]
    %v2378 = vld [vmem:[#allocation7 + $0xa8] sm:$0xff]
    %v2379 = vld [vmem:[#allocation7 + $0xb0] sm:$0xff]
    %v2380 = vld [vmem:[#allocation7 + $0xb8] sm:$0xff]
    %v2381 = vld [vmem:[#allocation7 + $0xc0] sm:$0xff]
    %v2382 = vld [vmem:[#allocation7 + $0xc8] sm:$0xff]
    %v2383 = vld [vmem:[#allocation7 + $0xd0] sm:$0xff]
    %v2384 = vld [vmem:[#allocation7 + $0xd8] sm:$0xff]
    %v2385 = vld [vmem:[#allocation7 + $0xe0] sm:$0xff]
    %v2386 = vld [vmem:[#allocation7 + $0xe8] sm:$0xff]
    %v2387 = vld [vmem:[#allocation7 + $0xf0] sm:$0xff]
    %v2388 = vld [vmem:[#allocation7 + $0xf8] sm:$0xff]
    %2389 = vmatprep.subr.mxu0 0.0
    %2390 = vmatpush1.msra.mxu0 %v2372
    %2391 = vmatprep.subr.mxu0 0.0
    %2392 = vmatpush1.msra.mxu0 %v2371
    %2393 = vmatprep.subr.mxu0 0.0
    %2394 = vmatpush1.msra.mxu0 %v2370
    %2395 = vmatprep.subr.mxu0 0.0
    %2396 = vmatpush1.msra.mxu0 %v2369
    %2397 = vmatprep.subr.mxu0 0.0
    %2398 = vmatpush1.msra.mxu0 %v2368
    %2399 = vmatprep.subr.mxu0 0.0
    %2400 = vmatpush1.msra.mxu0 %v2367
    %2401 = vmatprep.subr.mxu0 0.0
    %2402 = vmatpush1.msra.mxu0 %v2366
    %2403 = vmatprep.subr.mxu0 0.0
    %2404 = vmatpush1.msra.mxu0 %v2365
    %2405 = vmatprep.subr.mxu0 0.0
    %2406 = vmatpush1.msra.mxu0 %v2364
    %2407 = vmatprep.subr.mxu0 0.0
    %2408 = vmatpush1.msra.mxu0 %v2363
    %2409 = vmatprep.subr.mxu0 0.0
    %2410 = vmatpush1.msra.mxu0 %v2362
    %2411 = vmatprep.subr.mxu0 0.0
    %2412 = vmatpush1.msra.mxu0 %v2361
    %2413 = vmatprep.subr.mxu0 0.0
    %2414 = vmatpush1.msra.mxu0 %v2360
    %2415 = vmatprep.subr.mxu0 0.0
    %2416 = vmatpush1.msra.mxu0 %v2359
    %2417 = vmatprep.subr.mxu0 0.0
    %2418 = vmatpush1.msra.mxu0 %v2358
    %2419 = vmatprep.subr.mxu0 0.0
    %2420 = vmatpush1.msra.mxu0 %v2357
    %2421 = vmatprep.subr.mxu0 0.0
    %2422 = vmatpush2.msra.mxu0 %v2388
    %2423 = vmatprep.subr.mxu0 0.0
    %2424 = vmatpush2.msra.mxu0 %v2387
    %2425 = vmatprep.subr.mxu0 0.0
    %2426 = vmatpush2.msra.mxu0 %v2386
    %2427 = vmatprep.subr.mxu0 0.0
    %2428 = vmatpush2.msra.mxu0 %v2385
    %2429 = vmatprep.subr.mxu0 0.0
    %2430 = vmatpush2.msra.mxu0 %v2384
    %2431 = vmatprep.subr.mxu0 0.0
    %2432 = vmatpush2.msra.mxu0 %v2383
    %2433 = vmatprep.subr.mxu0 0.0
    %2434 = vmatpush2.msra.mxu0 %v2382
    %2435 = vmatprep.subr.mxu0 0.0
    %2436 = vmatpush2.msra.mxu0 %v2381
    %2437 = vmatprep.subr.mxu0 0.0
    %2438 = vmatpush2.msra.mxu0 %v2380
    %2439 = vmatprep.subr.mxu0 0.0
    %2440 = vmatpush2.msra.mxu0 %v2379
    %2441 = vmatprep.subr.mxu0 0.0
    %2442 = vmatpush2.msra.mxu0 %v2378
    %2443 = vmatprep.subr.mxu0 0.0
    %2444 = vmatpush2.msra.mxu0 %v2377
    %2445 = vmatprep.subr.mxu0 0.0
    %2446 = vmatpush2.msra.mxu0 %v2376
    %2447 = vmatprep.subr.mxu0 0.0
    %2448 = vmatpush2.msra.mxu0 %v2375
    %2449 = vmatprep.subr.mxu0 0.0
    %2450 = vmatpush2.msra.mxu0 %v2374
    %2451 = vmatprep.subr.mxu0 0.0
    %2452 = vmatpush2.msra.mxu0 %v2373
    %2453 = vmatprep.mubr.f32.mxu0 %v2338
    %2454 = vmatmul.mubr.f32.gmra.mxu0 %v2331
    %v2455 = vpop.f32.mrf.mxu0
    %v2456 = vadd.f32 0.0, %v2455
    %v2457 = vpop.f32.mrf.mxu0
    %2458 = vdwg.mxu0
    %2459 = vmatprep.subr.mxu0 0.0
    %2460 = vmatpush1.msra.mxu0 %v2372
    %2461 = vmatprep.subr.mxu0 0.0
    %2462 = vmatpush1.msra.mxu0 %v2371
    %2463 = vmatprep.subr.mxu0 0.0
    %2464 = vmatpush1.msra.mxu0 %v2370
    %2465 = vmatprep.subr.mxu0 0.0
    %2466 = vmatpush1.msra.mxu0 %v2369
    %2467 = vmatprep.subr.mxu0 0.0
    %2468 = vmatpush1.msra.mxu0 %v2368
    %2469 = vmatprep.subr.mxu0 0.0
    %2470 = vmatpush1.msra.mxu0 %v2367
    %2471 = vmatprep.subr.mxu0 0.0
    %2472 = vmatpush1.msra.mxu0 %v2366
    %2473 = vmatprep.subr.mxu0 0.0
    %2474 = vmatpush1.msra.mxu0 %v2365
    %2475 = vmatprep.subr.mxu0 0.0
    %2476 = vmatpush1.msra.mxu0 %v2364
    %2477 = vmatprep.subr.mxu0 0.0
    %2478 = vmatpush1.msra.mxu0 %v2363
    %2479 = vmatprep.subr.mxu0 0.0
    %2480 = vmatpush1.msra.mxu0 %v2362
    %2481 = vmatprep.subr.mxu0 0.0
    %2482 = vmatpush1.msra.mxu0 %v2361
    %2483 = vmatprep.subr.mxu0 0.0
    %2484 = vmatpush1.msra.mxu0 %v2360
    %2485 = vmatprep.subr.mxu0 0.0
    %2486 = vmatpush1.msra.mxu0 %v2359
    %2487 = vmatprep.subr.mxu0 0.0
    %2488 = vmatpush1.msra.mxu0 %v2358
    %2489 = vmatprep.subr.mxu0 0.0
    %2490 = vmatpush1.msra.mxu0 %v2357
    %2491 = vmatprep.subr.mxu0 0.0
    %2492 = vmatpush2.msra.mxu0 %v2388
    %2493 = vmatprep.subr.mxu0 0.0
    %2494 = vmatpush2.msra.mxu0 %v2387
    %2495 = vmatprep.subr.mxu0 0.0
    %2496 = vmatpush2.msra.mxu0 %v2386
    %2497 = vmatprep.subr.mxu0 0.0
    %2498 = vmatpush2.msra.mxu0 %v2385
    %2499 = vmatprep.subr.mxu0 0.0
    %2500 = vmatpush2.msra.mxu0 %v2384
    %2501 = vmatprep.subr.mxu0 0.0
    %2502 = vmatpush2.msra.mxu0 %v2383
    %2503 = vmatprep.subr.mxu0 0.0
    %2504 = vmatpush2.msra.mxu0 %v2382
    %2505 = vmatprep.subr.mxu0 0.0
    %2506 = vmatpush2.msra.mxu0 %v2381
    %2507 = vmatprep.subr.mxu0 0.0
    %2508 = vmatpush2.msra.mxu0 %v2380
    %2509 = vmatprep.subr.mxu0 0.0
    %2510 = vmatpush2.msra.mxu0 %v2379
    %2511 = vmatprep.subr.mxu0 0.0
    %2512 = vmatpush2.msra.mxu0 %v2378
    %2513 = vmatprep.subr.mxu0 0.0
    %2514 = vmatpush2.msra.mxu0 %v2377
    %2515 = vmatprep.subr.mxu0 0.0
    %2516 = vmatpush2.msra.mxu0 %v2376
    %2517 = vmatprep.subr.mxu0 0.0
    %2518 = vmatpush2.msra.mxu0 %v2375
    %2519 = vmatprep.subr.mxu0 0.0
    %2520 = vmatpush2.msra.mxu0 %v2374
    %2521 = vmatprep.subr.mxu0 0.0
    %2522 = vmatpush2.msra.mxu0 %v2373
    %2523 = vmatprep.mubr.f32.mxu0 %v2356
    %2524 = vmatmul.mubr.f32.gmra.mxu0 %v2349
    %v2525 = vpop.f32.mrf.mxu0
    %v2526 = vadd.f32 0.0, %v2525
    %v2527 = vpop.f32.mrf.mxu0
    %2528 = vdwg.mxu0
    %v2529 = vmul.f32 %v2456, 0.0078125
    %v2530 = vmul.f32 %v2526, 0.0078125
    %v2531 = vmul.f32 %v2529, %v2529
    %v2532 = vsub.f32 %v2530, %v2531
    %v2533 = vmax.f32 %v2532, 0.0
    %v2534 = vld [vmem:[%s6] sm:$0x1]
    %v2535 = vadd.f32 %v2533, 1e-05
    %v2536 = vrsqrt.pop %v2535
    %v2537 = vmul.f32 %v2534, %v2536
    %v2538 = vld [vmem:[%s7] sm:$0x1]
    %v2539 = vmul.f32 %v2529, %v2537
    %v2540 = vsub.f32 %v2538, %v2539
    %v2541 = vld [vmem:[#allocation8] sm:$0xff]
    %v2542 = vld [vmem:[#allocation8 + $0x8] sm:$0xff]
    %v2543 = vld [vmem:[#allocation8 + $0x10] sm:$0xff]
    %v2544 = vld [vmem:[#allocation8 + $0x18] sm:$0xff]
    %v2545 = vld [vmem:[#allocation8 + $0x20] sm:$0xff]
    %v2546 = vld [vmem:[#allocation8 + $0x28] sm:$0xff]
    %v2547 = vld [vmem:[#allocation8 + $0x30] sm:$0xff]
    %v2548 = vld [vmem:[#allocation8 + $0x38] sm:$0xff]
    %v2550 = vsel %vm1157, %v2537, 0
    %2552 = vmatprep.subr.mxu0 0.0
    %2553 = vmatpush1.msra.mxu0 0.0
    %2554 = vmatprep.subr.mxu0 0.0
    %2555 = vmatpush1.msra.mxu0 0.0
    %2556 = vmatprep.subr.mxu0 0.0
    %2557 = vmatpush1.msra.mxu0 0.0
    %2558 = vmatprep.subr.mxu0 0.0
    %2559 = vmatpush1.msra.mxu0 0.0
    %2560 = vmatprep.subr.mxu0 0.0
    %2561 = vmatpush1.msra.mxu0 0.0
    %2562 = vmatprep.subr.mxu0 0.0
    %2563 = vmatpush1.msra.mxu0 0.0
    %2564 = vmatprep.subr.mxu0 0.0
    %2565 = vmatpush1.msra.mxu0 0.0
    %2566 = vmatprep.subr.mxu0 0.0
    %2567 = vmatpush1.msra.mxu0 0.0
    %2568 = vmatprep.subr.mxu0 0.0
    %2569 = vmatpush1.msra.mxu0 0.0
    %2570 = vmatprep.subr.mxu0 0.0
    %2571 = vmatpush1.msra.mxu0 0.0
    %2572 = vmatprep.subr.mxu0 0.0
    %2573 = vmatpush1.msra.mxu0 0.0
    %2574 = vmatprep.subr.mxu0 0.0
    %2575 = vmatpush1.msra.mxu0 0.0
    %2576 = vmatprep.subr.mxu0 %v2548
    %2577 = vmatpush1.msra.mxu0 %v2547
    %2578 = vmatprep.subr.mxu0 %v2546
    %2579 = vmatpush1.msra.mxu0 %v2545
    %2580 = vmatprep.subr.mxu0 %v2544
    %2581 = vmatpush1.msra.mxu0 %v2543
    %2582 = vmatprep.subr.mxu0 %v2542
    %2583 = vmatpush1.msra.mxu0 %v2541
    %2584 = vmatprep.subr.mxu0 0.0
    %2585 = vmatpush2.msra.mxu0 0.0
    %2586 = vmatprep.subr.mxu0 0.0
    %2587 = vmatpush2.msra.mxu0 0.0
    %2588 = vmatprep.subr.mxu0 0.0
    %2589 = vmatpush2.msra.mxu0 0.0
    %2590 = vmatprep.subr.mxu0 0.0
    %2591 = vmatpush2.msra.mxu0 0.0
    %2592 = vmatprep.subr.mxu0 0.0
    %2593 = vmatpush2.msra.mxu0 0.0
    %2594 = vmatprep.subr.mxu0 0.0
    %2595 = vmatpush2.msra.mxu0 0.0
    %2596 = vmatprep.subr.mxu0 0.0
    %2597 = vmatpush2.msra.mxu0 0.0
    %2598 = vmatprep.subr.mxu0 0.0
    %2599 = vmatpush2.msra.mxu0 0.0
    %2600 = vmatprep.subr.mxu0 0.0
    %2601 = vmatpush2.msra.mxu0 0.0
    %2602 = vmatprep.subr.mxu0 0.0
    %2603 = vmatpush2.msra.mxu0 0.0
    %2604 = vmatprep.subr.mxu0 0.0
    %2605 = vmatpush2.msra.mxu0 0.0
    %2606 = vmatprep.subr.mxu0 0.0
    %2607 = vmatpush2.msra.mxu0 0.0
    %2608 = vmatprep.subr.mxu0 0.0
    %2609 = vmatpush2.msra.mxu0 0.0
    %2610 = vmatprep.subr.mxu0 0.0
    %2611 = vmatpush2.msra.mxu0 0.0
    %2612 = vmatprep.subr.mxu0 0.0
    %2613 = vmatpush2.msra.mxu0 0.0
    %2614 = vmatprep.subr.mxu0 0.0
    %2615 = vmatpush2.msra.mxu0 0.0
    %2616 = vmatprep.mubr.f32.mxu0 0.0
    %2617 = vmatmul.mubr.f32.gmra.mxu0 %v2550
    %v2618 = vpop.f32.mrf.mxu0
    %v2619 = vadd.f32 0.0, %v2618
    %v2620 = vpop.f32.mrf.mxu0
    %v2621 = vadd.f32 0.0, %v2620
    %2622 = vdwg.mxu0
    %v2624 = vsel %vm1157, %v2540, 0
    %2626 = vmatprep.subr.mxu0 0.0
    %2627 = vmatpush1.msra.mxu0 0.0
    %2628 = vmatprep.subr.mxu0 0.0
    %2629 = vmatpush1.msra.mxu0 0.0
    %2630 = vmatprep.subr.mxu0 0.0
    %2631 = vmatpush1.msra.mxu0 0.0
    %2632 = vmatprep.subr.mxu0 0.0
    %2633 = vmatpush1.msra.mxu0 0.0
    %2634 = vmatprep.subr.mxu0 0.0
    %2635 = vmatpush1.msra.mxu0 0.0
    %2636 = vmatprep.subr.mxu0 0.0
    %2637 = vmatpush1.msra.mxu0 0.0
    %2638 = vmatprep.subr.mxu0 0.0
    %2639 = vmatpush1.msra.mxu0 0.0
    %2640 = vmatprep.subr.mxu0 0.0
    %2641 = vmatpush1.msra.mxu0 0.0
    %2642 = vmatprep.subr.mxu0 0.0
    %2643 = vmatpush1.msra.mxu0 0.0
    %2644 = vmatprep.subr.mxu0 0.0
    %2645 = vmatpush1.msra.mxu0 0.0
    %2646 = vmatprep.subr.mxu0 0.0
    %2647 = vmatpush1.msra.mxu0 0.0
    %2648 = vmatprep.subr.mxu0 0.0
    %2649 = vmatpush1.msra.mxu0 0.0
    %2650 = vmatprep.subr.mxu0 %v2548
    %2651 = vmatpush1.msra.mxu0 %v2547
    %2652 = vmatprep.subr.mxu0 %v2546
    %2653 = vmatpush1.msra.mxu0 %v2545
    %2654 = vmatprep.subr.mxu0 %v2544
    %2655 = vmatpush1.msra.mxu0 %v2543
    %2656 = vmatprep.subr.mxu0 %v2542
    %2657 = vmatpush1.msra.mxu0 %v2541
    %2658 = vmatprep.subr.mxu0 0.0
    %2659 = vmatpush2.msra.mxu0 0.0
    %2660 = vmatprep.subr.mxu0 0.0
    %2661 = vmatpush2.msra.mxu0 0.0
    %2662 = vmatprep.subr.mxu0 0.0
    %2663 = vmatpush2.msra.mxu0 0.0
    %2664 = vmatprep.subr.mxu0 0.0
    %2665 = vmatpush2.msra.mxu0 0.0
    %2666 = vmatprep.subr.mxu0 0.0
    %2667 = vmatpush2.msra.mxu0 0.0
    %2668 = vmatprep.subr.mxu0 0.0
    %2669 = vmatpush2.msra.mxu0 0.0
    %2670 = vmatprep.subr.mxu0 0.0
    %2671 = vmatpush2.msra.mxu0 0.0
    %2672 = vmatprep.subr.mxu0 0.0
    %2673 = vmatpush2.msra.mxu0 0.0
    %2674 = vmatprep.subr.mxu0 0.0
    %2675 = vmatpush2.msra.mxu0 0.0
    %2676 = vmatprep.subr.mxu0 0.0
    %2677 = vmatpush2.msra.mxu0 0.0
    %2678 = vmatprep.subr.mxu0 0.0
    %2679 = vmatpush2.msra.mxu0 0.0
    %2680 = vmatprep.subr.mxu0 0.0
    %2681 = vmatpush2.msra.mxu0 0.0
    %2682 = vmatprep.subr.mxu0 0.0
    %2683 = vmatpush2.msra.mxu0 0.0
    %2684 = vmatprep.subr.mxu0 0.0
    %2685 = vmatpush2.msra.mxu0 0.0
    %2686 = vmatprep.subr.mxu0 0.0
    %2687 = vmatpush2.msra.mxu0 0.0
    %2688 = vmatprep.subr.mxu0 0.0
    %2689 = vmatpush2.msra.mxu0 0.0
    %2690 = vmatprep.mubr.f32.mxu0 0.0
    %2691 = vmatmul.mubr.f32.gmra.mxu0 %v2624
    %v2692 = vpop.f32.mrf.mxu0
    %v2693 = vadd.f32 0.0, %v2692
    %v2694 = vpop.f32.mrf.mxu0
    %v2695 = vadd.f32 0.0, %v2694
    %2696 = vdwg.mxu0
    %v2697 = vlaneseq
    %v2698 = vshrl.u32 %v2697, 7
    %v2699 = vsub.s32 0, %v2698
    %v2700 = vrot.slane %v2619, %v2699
    %v2701 = vlaneseq
    %v2702 = vshrl.u32 %v2701, 7
    %v2703 = vsub.s32 0, %v2702
    %v2704 = vrot.slane %v2621, %v2703
    %v2705 = vmul.f32 %v2321, %v2700
    %v2706 = vmul.f32 %v2322, %v2704
    %v2707 = vmul.f32 %v2323, %v2700
    %v2708 = vmul.f32 %v2324, %v2704
    %v2709 = vlaneseq
    %v2710 = vshrl.u32 %v2709, 7
    %v2711 = vsub.s32 0, %v2710
    %v2712 = vrot.slane %v2693, %v2711
    %v2713 = vlaneseq
    %v2714 = vshrl.u32 %v2713, 7
    %v2715 = vsub.s32 0, %v2714
    %v2716 = vrot.slane %v2695, %v2715
    %v2717 = vadd.f32 %v2705, %v2712
    %v2718 = vadd.f32 %v2706, %v2716
    %v2719 = vadd.f32 %v2707, %v2712
    %v2720 = vadd.f32 %v2708, %v2716
    %vm2721 = vcmp.ge.f32.partialorder %v2717, 0.0
    %vm2722 = vcmp.ge.f32.partialorder %v2718, 0.0
    %vm2723 = vcmp.ge.f32.partialorder %v2719, 0.0
    %vm2724 = vcmp.ge.f32.partialorder %v2720, 0.0
    %v2725 = vmul.f32 %v2717, 0.2
    %v2726 = vmul.f32 %v2718, 0.2
    %v2727 = vmul.f32 %v2719, 0.2
    %v2728 = vmul.f32 %v2720, 0.2
    %v2729 = vsel %vm2721, %v2717, %v2725
    %v2730 = vsel %vm2722, %v2718, %v2726
    %v2731 = vsel %vm2723, %v2719, %v2727
    %v2732 = vsel %vm2724, %v2720, %v2728
    %v2733 = vpack.c.bf16 %v2731, %v2729
    %v2734 = vpack.c.bf16 %v2732, %v2730
    %v2735 = vld [vmem:[#allocation10] sm:$0xf]
    %vm2736 = vcmask 130048
    %v2738 = vsel %vm2736, %v2735, 0
    %2740 = vmatprep.subr.bf16.mxu0 0
    %2741 = vmatpush1.bf16.msra.mxu0 0
    %2742 = vmatprep.subr.bf16.mxu0 0
    %2743 = vmatpush1.bf16.msra.mxu0 0
    %2744 = vmatprep.subr.bf16.mxu0 0
    %2745 = vmatpush1.bf16.msra.mxu0 0
    %2746 = vmatprep.subr.bf16.mxu0 0
    %2747 = vmatpush1.bf16.msra.mxu0 0
    %2748 = vmatprep.subr.bf16.mxu0 0
    %2749 = vmatpush1.bf16.msra.mxu0 0
    %2750 = vmatprep.subr.bf16.mxu0 0
    %2751 = vmatpush1.bf16.msra.mxu0 0
    %2752 = vmatprep.subr.bf16.mxu0 0
    %2753 = vmatpush1.bf16.msra.mxu0 0
    %2754 = vmatprep.subr.bf16.mxu0 %v2734
    %2755 = vmatpush1.bf16.msra.mxu0 %v2733
    %2756 = vmatprep.subr.bf16.mxu0 0
    %2757 = vmatpush2.bf16.msra.mxu0 0
    %2758 = vmatprep.subr.bf16.mxu0 0
    %2759 = vmatpush2.bf16.msra.mxu0 0
    %2760 = vmatprep.subr.bf16.mxu0 0
    %2761 = vmatpush2.bf16.msra.mxu0 0
    %2762 = vmatprep.subr.bf16.mxu0 0
    %2763 = vmatpush2.bf16.msra.mxu0 0
    %2764 = vmatprep.subr.bf16.mxu0 0
    %2765 = vmatpush2.bf16.msra.mxu0 0
    %2766 = vmatprep.subr.bf16.mxu0 0
    %2767 = vmatpush2.bf16.msra.mxu0 0
    %2768 = vmatprep.subr.bf16.mxu0 0
    %2769 = vmatpush2.bf16.msra.mxu0 0
    %2770 = vmatprep.subr.bf16.mxu0 0
    %2771 = vmatpush2.bf16.msra.mxu0 0
    %2772 = vmatprep.mubr.bf16.mxu0 0
    %2773 = vmatmul.mubr.bf16.gmra.mxu0 %v2738
    %v2774 = vpop.f32.mrf.mxu0
    %v2775 = vadd.f32 0.0, %v2774
    %v2776 = vpop.f32.mrf.mxu0
    %v2777 = vadd.f32 0.0, %v2776
    %v2778 = vpop.f32.mrf.mxu0
    %v2779 = vpop.f32.mrf.mxu0
    %2780 = vdwg.mxu0
    %v2781 = vpack.c.bf16 %v2775, %v2775
    %v2782 = vpack.c.bf16 %v2777, %v2777
    %v2783 = vld [vmem:[#allocation11] sm:$0xff]
    %v2784 = vld [vmem:[#allocation11 + $0x8] sm:$0xff]
    %v2785 = vld [vmem:[#allocation11 + $0x10] sm:$0xff]
    %v2786 = vld [vmem:[#allocation11 + $0x18] sm:$0xff]
    %v2787 = vld [vmem:[#allocation11 + $0x20] sm:$0xff]
    %v2788 = vld [vmem:[#allocation11 + $0x28] sm:$0xff]
    %v2789 = vld [vmem:[#allocation11 + $0x30] sm:$0xff]
    %v2790 = vld [vmem:[#allocation11 + $0x38] sm:$0xff]
    %v2791 = vld [vmem:[#allocation11 + $0x40] sm:$0xff]
    %v2792 = vld [vmem:[#allocation11 + $0x48] sm:$0xff]
    %v2793 = vld [vmem:[#allocation11 + $0x50] sm:$0xff]
    %v2794 = vld [vmem:[#allocation11 + $0x58] sm:$0xff]
    %v2795 = vld [vmem:[#allocation11 + $0x60] sm:$0xff]
    %v2796 = vld [vmem:[#allocation11 + $0x68] sm:$0xff]
    %v2797 = vld [vmem:[#allocation11 + $0x70] sm:$0xff]
    %v2798 = vld [vmem:[#allocation11 + $0x78] sm:$0xff]
    %v2799 = vld [vmem:[#allocation11 + $0x80] sm:$0xff]
    %v2800 = vld [vmem:[#allocation11 + $0x88] sm:$0xff]
    %v2801 = vld [vmem:[#allocation11 + $0x90] sm:$0xff]
    %v2802 = vld [vmem:[#allocation11 + $0x98] sm:$0xff]
    %v2803 = vld [vmem:[#allocation11 + $0xa0] sm:$0xff]
    %v2804 = vld [vmem:[#allocation11 + $0xa8] sm:$0xff]
    %v2805 = vld [vmem:[#allocation11 + $0xb0] sm:$0xff]
    %v2806 = vld [vmem:[#allocation11 + $0xb8] sm:$0xff]
    %v2807 = vld [vmem:[#allocation11 + $0xc0] sm:$0xff]
    %v2808 = vld [vmem:[#allocation11 + $0xc8] sm:$0xff]
    %v2809 = vld [vmem:[#allocation11 + $0xd0] sm:$0xff]
    %v2810 = vld [vmem:[#allocation11 + $0xd8] sm:$0xff]
    %v2811 = vld [vmem:[#allocation11 + $0xe0] sm:$0xff]
    %v2812 = vld [vmem:[#allocation11 + $0xe8] sm:$0xff]
    %v2813 = vld [vmem:[#allocation11 + $0xf0] sm:$0xff]
    %v2814 = vld [vmem:[#allocation11 + $0xf8] sm:$0xff]
    %s2815 = scalar_lea.vmem [#allocation10], 4
    %v2816 = vld [vmem:[%s2815] sm:$0xf]
    %v2818 = vsel %vm2736, %v2816, 0
    %2820 = vmatprep.subr.bf16.mxu0 0
    %2821 = vmatpush1.bf16.msra.mxu0 0
    %2822 = vmatprep.subr.bf16.mxu0 0
    %2823 = vmatpush1.bf16.msra.mxu0 0
    %2824 = vmatprep.subr.bf16.mxu0 0
    %2825 = vmatpush1.bf16.msra.mxu0 0
    %2826 = vmatprep.subr.bf16.mxu0 0
    %2827 = vmatpush1.bf16.msra.mxu0 0
    %2828 = vmatprep.subr.bf16.mxu0 0
    %2829 = vmatpush1.bf16.msra.mxu0 0
    %2830 = vmatprep.subr.bf16.mxu0 0
    %2831 = vmatpush1.bf16.msra.mxu0 0
    %2832 = vmatprep.subr.bf16.mxu0 0
    %2833 = vmatpush1.bf16.msra.mxu0 0
    %2834 = vmatprep.subr.bf16.mxu0 %v2734
    %2835 = vmatpush1.bf16.msra.mxu0 %v2733
    %2836 = vmatprep.subr.bf16.mxu0 0
    %2837 = vmatpush2.bf16.msra.mxu0 0
    %2838 = vmatprep.subr.bf16.mxu0 0
    %2839 = vmatpush2.bf16.msra.mxu0 0
    %2840 = vmatprep.subr.bf16.mxu0 0
    %2841 = vmatpush2.bf16.msra.mxu0 0
    %2842 = vmatprep.subr.bf16.mxu0 0
    %2843 = vmatpush2.bf16.msra.mxu0 0
    %2844 = vmatprep.subr.bf16.mxu0 0
    %2845 = vmatpush2.bf16.msra.mxu0 0
    %2846 = vmatprep.subr.bf16.mxu0 0
    %2847 = vmatpush2.bf16.msra.mxu0 0
    %2848 = vmatprep.subr.bf16.mxu0 0
    %2849 = vmatpush2.bf16.msra.mxu0 0
    %2850 = vmatprep.subr.bf16.mxu0 0
    %2851 = vmatpush2.bf16.msra.mxu0 0
    %2852 = vmatprep.mubr.bf16.mxu0 0
    %2853 = vmatmul.mubr.bf16.gmra.mxu0 %v2818
    %v2854 = vpop.f32.mrf.mxu0
    %v2855 = vadd.f32 0.0, %v2854
    %v2856 = vpop.f32.mrf.mxu0
    %v2857 = vadd.f32 0.0, %v2856
    %v2858 = vpop.f32.mrf.mxu0
    %v2859 = vpop.f32.mrf.mxu0
    %2860 = vdwg.mxu0
    %v2861 = vpack.c.bf16 %v2855, %v2855
    %v2862 = vpack.c.bf16 %v2857, %v2857
    %s2863 = scalar_lea.vmem [#allocation11], 256
    %v2864 = vld [vmem:[%s2863] sm:$0xff]
    %v2865 = vld [vmem:[%s2863 + $0x8] sm:$0xff]
    %v2866 = vld [vmem:[%s2863 + $0x10] sm:$0xff]
    %v2867 = vld [vmem:[%s2863 + $0x18] sm:$0xff]
    %v2868 = vld [vmem:[%s2863 + $0x20] sm:$0xff]
    %v2869 = vld [vmem:[%s2863 + $0x28] sm:$0xff]
    %v2870 = vld [vmem:[%s2863 + $0x30] sm:$0xff]
    %v2871 = vld [vmem:[%s2863 + $0x38] sm:$0xff]
    %v2872 = vld [vmem:[%s2863 + $0x40] sm:$0xff]
    %v2873 = vld [vmem:[%s2863 + $0x48] sm:$0xff]
    %v2874 = vld [vmem:[%s2863 + $0x50] sm:$0xff]
    %v2875 = vld [vmem:[%s2863 + $0x58] sm:$0xff]
    %v2876 = vld [vmem:[%s2863 + $0x60] sm:$0xff]
    %v2877 = vld [vmem:[%s2863 + $0x68] sm:$0xff]
    %v2878 = vld [vmem:[%s2863 + $0x70] sm:$0xff]
    %v2879 = vld [vmem:[%s2863 + $0x78] sm:$0xff]
    %v2880 = vld [vmem:[%s2863 + $0x80] sm:$0xff]
    %v2881 = vld [vmem:[%s2863 + $0x88] sm:$0xff]
    %v2882 = vld [vmem:[%s2863 + $0x90] sm:$0xff]
    %v2883 = vld [vmem:[%s2863 + $0x98] sm:$0xff]
    %v2884 = vld [vmem:[%s2863 + $0xa0] sm:$0xff]
    %v2885 = vld [vmem:[%s2863 + $0xa8] sm:$0xff]
    %v2886 = vld [vmem:[%s2863 + $0xb0] sm:$0xff]
    %v2887 = vld [vmem:[%s2863 + $0xb8] sm:$0xff]
    %v2888 = vld [vmem:[%s2863 + $0xc0] sm:$0xff]
    %v2889 = vld [vmem:[%s2863 + $0xc8] sm:$0xff]
    %v2890 = vld [vmem:[%s2863 + $0xd0] sm:$0xff]
    %v2891 = vld [vmem:[%s2863 + $0xd8] sm:$0xff]
    %v2892 = vld [vmem:[%s2863 + $0xe0] sm:$0xff]
    %v2893 = vld [vmem:[%s2863 + $0xe8] sm:$0xff]
    %v2894 = vld [vmem:[%s2863 + $0xf0] sm:$0xff]
    %v2895 = vld [vmem:[%s2863 + $0xf8] sm:$0xff]
    %v2928 = vunpack.c.l.b16 %v2864
    %v2929 = vunpack.c.h.b16 %v2864
    %v2930 = vunpack.c.l.b16 %v2865
    %v2931 = vunpack.c.h.b16 %v2865
    %v2932 = vunpack.c.l.b16 %v2866
    %v2933 = vunpack.c.h.b16 %v2866
    %v2934 = vunpack.c.l.b16 %v2867
    %v2935 = vunpack.c.h.b16 %v2867
    %v2936 = vunpack.c.l.b16 %v2868
    %v2937 = vunpack.c.h.b16 %v2868
    %v2938 = vunpack.c.l.b16 %v2869
    %v2939 = vunpack.c.h.b16 %v2869
    %v2940 = vunpack.c.l.b16 %v2870
    %v2941 = vunpack.c.h.b16 %v2870
    %v2942 = vunpack.c.l.b16 %v2871
    %v2943 = vunpack.c.h.b16 %v2871
    %v2944 = vunpack.c.l.b16 %v2872
    %v2945 = vunpack.c.h.b16 %v2872
    %v2946 = vunpack.c.l.b16 %v2873
    %v2947 = vunpack.c.h.b16 %v2873
    %v2948 = vunpack.c.l.b16 %v2874
    %v2949 = vunpack.c.h.b16 %v2874
    %v2950 = vunpack.c.l.b16 %v2875
    %v2951 = vunpack.c.h.b16 %v2875
    %v2952 = vunpack.c.l.b16 %v2876
    %v2953 = vunpack.c.h.b16 %v2876
    %v2954 = vunpack.c.l.b16 %v2877
    %v2955 = vunpack.c.h.b16 %v2877
    %v2956 = vunpack.c.l.b16 %v2878
    %v2957 = vunpack.c.h.b16 %v2878
    %v2958 = vunpack.c.l.b16 %v2879
    %v2959 = vunpack.c.h.b16 %v2879
    %v2960 = vunpack.c.l.b16 %v2880
    %v2961 = vunpack.c.h.b16 %v2880
    %v2962 = vunpack.c.l.b16 %v2881
    %v2963 = vunpack.c.h.b16 %v2881
    %v2964 = vunpack.c.l.b16 %v2882
    %v2965 = vunpack.c.h.b16 %v2882
    %v2966 = vunpack.c.l.b16 %v2883
    %v2967 = vunpack.c.h.b16 %v2883
    %v2968 = vunpack.c.l.b16 %v2884
    %v2969 = vunpack.c.h.b16 %v2884
    %v2970 = vunpack.c.l.b16 %v2885
    %v2971 = vunpack.c.h.b16 %v2885
    %v2972 = vunpack.c.l.b16 %v2886
    %v2973 = vunpack.c.h.b16 %v2886
    %v2974 = vunpack.c.l.b16 %v2887
    %v2975 = vunpack.c.h.b16 %v2887
    %v2976 = vunpack.c.l.b16 %v2888
    %v2977 = vunpack.c.h.b16 %v2888
    %v2978 = vunpack.c.l.b16 %v2889
    %v2979 = vunpack.c.h.b16 %v2889
    %v2980 = vunpack.c.l.b16 %v2890
    %v2981 = vunpack.c.h.b16 %v2890
    %v2982 = vunpack.c.l.b16 %v2891
    %v2983 = vunpack.c.h.b16 %v2891
    %v2984 = vunpack.c.l.b16 %v2892
    %v2985 = vunpack.c.h.b16 %v2892
    %v2986 = vunpack.c.l.b16 %v2893
    %v2987 = vunpack.c.h.b16 %v2893
    %v2988 = vunpack.c.l.b16 %v2894
    %v2989 = vunpack.c.h.b16 %v2894
    %v2990 = vunpack.c.l.b16 %v2895
    %v2991 = vunpack.c.h.b16 %v2895
    %v2992 = vpack.c.b16 %v2930, %v2928
    %v2993 = vpack.c.b16 %v2931, %v2929
    %v2994 = vpack.c.b16 %v2934, %v2932
    %v2995 = vpack.c.b16 %v2935, %v2933
    %v2996 = vpack.c.b16 %v2938, %v2936
    %v2997 = vpack.c.b16 %v2939, %v2937
    %v2998 = vpack.c.b16 %v2942, %v2940
    %v2999 = vpack.c.b16 %v2943, %v2941
    %v3000 = vpack.c.b16 %v2946, %v2944
    %v3001 = vpack.c.b16 %v2947, %v2945
    %v3002 = vpack.c.b16 %v2950, %v2948
    %v3003 = vpack.c.b16 %v2951, %v2949
    %v3004 = vpack.c.b16 %v2954, %v2952
    %v3005 = vpack.c.b16 %v2955, %v2953
    %v3006 = vpack.c.b16 %v2958, %v2956
    %v3007 = vpack.c.b16 %v2959, %v2957
    %v3008 = vpack.c.b16 %v2962, %v2960
    %v3009 = vpack.c.b16 %v2963, %v2961
    %v3010 = vpack.c.b16 %v2966, %v2964
    %v3011 = vpack.c.b16 %v2967, %v2965
    %v3012 = vpack.c.b16 %v2970, %v2968
    %v3013 = vpack.c.b16 %v2971, %v2969
    %v3014 = vpack.c.b16 %v2974, %v2972
    %v3015 = vpack.c.b16 %v2975, %v2973
    %v3016 = vpack.c.b16 %v2978, %v2976
    %v3017 = vpack.c.b16 %v2979, %v2977
    %v3018 = vpack.c.b16 %v2982, %v2980
    %v3019 = vpack.c.b16 %v2983, %v2981
    %v3020 = vpack.c.b16 %v2986, %v2984
    %v3021 = vpack.c.b16 %v2987, %v2985
    %v3022 = vpack.c.b16 %v2990, %v2988
    %v3023 = vpack.c.b16 %v2991, %v2989
    %3056 = vmatprep.subr.bf16.mxu0 %v3007
    %3057 = vmatpush1.bf16.msra.mxu0 %v3006
    %3058 = vmatprep.subr.bf16.mxu0 %v3005
    %3059 = vmatpush1.bf16.msra.mxu0 %v3004
    %3060 = vmatprep.subr.bf16.mxu0 %v3003
    %3061 = vmatpush1.bf16.msra.mxu0 %v3002
    %3062 = vmatprep.subr.bf16.mxu0 %v3001
    %3063 = vmatpush1.bf16.msra.mxu0 %v3000
    %3064 = vmatprep.subr.bf16.mxu0 %v2999
    %3065 = vmatpush1.bf16.msra.mxu0 %v2998
    %3066 = vmatprep.subr.bf16.mxu0 %v2997
    %3067 = vmatpush1.bf16.msra.mxu0 %v2996
    %3068 = vmatprep.subr.bf16.mxu0 %v2995
    %3069 = vmatpush1.bf16.msra.mxu0 %v2994
    %3070 = vmatprep.subr.bf16.mxu0 %v2993
    %3071 = vmatpush1.bf16.msra.mxu0 %v2992
    %3072 = vmatprep.subr.bf16.mxu0 %v3023
    %3073 = vmatpush2.bf16.msra.mxu0 %v3022
    %3074 = vmatprep.subr.bf16.mxu0 %v3021
    %3075 = vmatpush2.bf16.msra.mxu0 %v3020
    %3076 = vmatprep.subr.bf16.mxu0 %v3019
    %3077 = vmatpush2.bf16.msra.mxu0 %v3018
    %3078 = vmatprep.subr.bf16.mxu0 %v3017
    %3079 = vmatpush2.bf16.msra.mxu0 %v3016
    %3080 = vmatprep.subr.bf16.mxu0 %v3015
    %3081 = vmatpush2.bf16.msra.mxu0 %v3014
    %3082 = vmatprep.subr.bf16.mxu0 %v3013
    %3083 = vmatpush2.bf16.msra.mxu0 %v3012
    %3084 = vmatprep.subr.bf16.mxu0 %v3011
    %3085 = vmatpush2.bf16.msra.mxu0 %v3010
    %3086 = vmatprep.subr.bf16.mxu0 %v3009
    %3087 = vmatpush2.bf16.msra.mxu0 %v3008
    %3088 = vmatprep.mubr.bf16.mxu0 %v2862
    %3089 = vmatmul.mubr.bf16.gmra.mxu0 %v2861
    %v3090 = vpop.f32.mrf.mxu0
    %v3091 = vadd.f32 0.0, %v3090
    %v3092 = vpop.f32.mrf.mxu0
    %v3093 = vadd.f32 0.0, %v3092
    %v3094 = vpop.f32.mrf.mxu0
    %v3095 = vpop.f32.mrf.mxu0
    %3096 = vdwg.mxu0
    %v3129 = vunpack.c.l.b16 %v2783
    %v3130 = vunpack.c.h.b16 %v2783
    %v3131 = vunpack.c.l.b16 %v2784
    %v3132 = vunpack.c.h.b16 %v2784
    %v3133 = vunpack.c.l.b16 %v2785
    %v3134 = vunpack.c.h.b16 %v2785
    %v3135 = vunpack.c.l.b16 %v2786
    %v3136 = vunpack.c.h.b16 %v2786
    %v3137 = vunpack.c.l.b16 %v2787
    %v3138 = vunpack.c.h.b16 %v2787
    %v3139 = vunpack.c.l.b16 %v2788
    %v3140 = vunpack.c.h.b16 %v2788
    %v3141 = vunpack.c.l.b16 %v2789
    %v3142 = vunpack.c.h.b16 %v2789
    %v3143 = vunpack.c.l.b16 %v2790
    %v3144 = vunpack.c.h.b16 %v2790
    %v3145 = vunpack.c.l.b16 %v2791
    %v3146 = vunpack.c.h.b16 %v2791
    %v3147 = vunpack.c.l.b16 %v2792
    %v3148 = vunpack.c.h.b16 %v2792
    %v3149 = vunpack.c.l.b16 %v2793
    %v3150 = vunpack.c.h.b16 %v2793
    %v3151 = vunpack.c.l.b16 %v2794
    %v3152 = vunpack.c.h.b16 %v2794
    %v3153 = vunpack.c.l.b16 %v2795
    %v3154 = vunpack.c.h.b16 %v2795
    %v3155 = vunpack.c.l.b16 %v2796
    %v3156 = vunpack.c.h.b16 %v2796
    %v3157 = vunpack.c.l.b16 %v2797
    %v3158 = vunpack.c.h.b16 %v2797
    %v3159 = vunpack.c.l.b16 %v2798
    %v3160 = vunpack.c.h.b16 %v2798
    %v3161 = vunpack.c.l.b16 %v2799
    %v3162 = vunpack.c.h.b16 %v2799
    %v3163 = vunpack.c.l.b16 %v2800
    %v3164 = vunpack.c.h.b16 %v2800
    %v3165 = vunpack.c.l.b16 %v2801
    %v3166 = vunpack.c.h.b16 %v2801
    %v3167 = vunpack.c.l.b16 %v2802
    %v3168 = vunpack.c.h.b16 %v2802
    %v3169 = vunpack.c.l.b16 %v2803
    %v3170 = vunpack.c.h.b16 %v2803
    %v3171 = vunpack.c.l.b16 %v2804
    %v3172 = vunpack.c.h.b16 %v2804
    %v3173 = vunpack.c.l.b16 %v2805
    %v3174 = vunpack.c.h.b16 %v2805
    %v3175 = vunpack.c.l.b16 %v2806
    %v3176 = vunpack.c.h.b16 %v2806
    %v3177 = vunpack.c.l.b16 %v2807
    %v3178 = vunpack.c.h.b16 %v2807
    %v3179 = vunpack.c.l.b16 %v2808
    %v3180 = vunpack.c.h.b16 %v2808
    %v3181 = vunpack.c.l.b16 %v2809
    %v3182 = vunpack.c.h.b16 %v2809
    %v3183 = vunpack.c.l.b16 %v2810
    %v3184 = vunpack.c.h.b16 %v2810
    %v3185 = vunpack.c.l.b16 %v2811
    %v3186 = vunpack.c.h.b16 %v2811
    %v3187 = vunpack.c.l.b16 %v2812
    %v3188 = vunpack.c.h.b16 %v2812
    %v3189 = vunpack.c.l.b16 %v2813
    %v3190 = vunpack.c.h.b16 %v2813
    %v3191 = vunpack.c.l.b16 %v2814
    %v3192 = vunpack.c.h.b16 %v2814
    %v3193 = vpack.c.b16 %v3131, %v3129
    %v3194 = vpack.c.b16 %v3132, %v3130
    %v3195 = vpack.c.b16 %v3135, %v3133
    %v3196 = vpack.c.b16 %v3136, %v3134
    %v3197 = vpack.c.b16 %v3139, %v3137
    %v3198 = vpack.c.b16 %v3140, %v3138
    %v3199 = vpack.c.b16 %v3143, %v3141
    %v3200 = vpack.c.b16 %v3144, %v3142
    %v3201 = vpack.c.b16 %v3147, %v3145
    %v3202 = vpack.c.b16 %v3148, %v3146
    %v3203 = vpack.c.b16 %v3151, %v3149
    %v3204 = vpack.c.b16 %v3152, %v3150
    %v3205 = vpack.c.b16 %v3155, %v3153
    %v3206 = vpack.c.b16 %v3156, %v3154
    %v3207 = vpack.c.b16 %v3159, %v3157
    %v3208 = vpack.c.b16 %v3160, %v3158
    %v3209 = vpack.c.b16 %v3163, %v3161
    %v3210 = vpack.c.b16 %v3164, %v3162
    %v3211 = vpack.c.b16 %v3167, %v3165
    %v3212 = vpack.c.b16 %v3168, %v3166
    %v3213 = vpack.c.b16 %v3171, %v3169
    %v3214 = vpack.c.b16 %v3172, %v3170
    %v3215 = vpack.c.b16 %v3175, %v3173
    %v3216 = vpack.c.b16 %v3176, %v3174
    %v3217 = vpack.c.b16 %v3179, %v3177
    %v3218 = vpack.c.b16 %v3180, %v3178
    %v3219 = vpack.c.b16 %v3183, %v3181
    %v3220 = vpack.c.b16 %v3184, %v3182
    %v3221 = vpack.c.b16 %v3187, %v3185
    %v3222 = vpack.c.b16 %v3188, %v3186
    %v3223 = vpack.c.b16 %v3191, %v3189
    %v3224 = vpack.c.b16 %v3192, %v3190
    %3257 = vmatprep.subr.bf16.mxu0 %v3208
    %3258 = vmatpush1.bf16.msra.mxu0 %v3207
    %3259 = vmatprep.subr.bf16.mxu0 %v3206
    %3260 = vmatpush1.bf16.msra.mxu0 %v3205
    %3261 = vmatprep.subr.bf16.mxu0 %v3204
    %3262 = vmatpush1.bf16.msra.mxu0 %v3203
    %3263 = vmatprep.subr.bf16.mxu0 %v3202
    %3264 = vmatpush1.bf16.msra.mxu0 %v3201
    %3265 = vmatprep.subr.bf16.mxu0 %v3200
    %3266 = vmatpush1.bf16.msra.mxu0 %v3199
    %3267 = vmatprep.subr.bf16.mxu0 %v3198
    %3268 = vmatpush1.bf16.msra.mxu0 %v3197
    %3269 = vmatprep.subr.bf16.mxu0 %v3196
    %3270 = vmatpush1.bf16.msra.mxu0 %v3195
    %3271 = vmatprep.subr.bf16.mxu0 %v3194
    %3272 = vmatpush1.bf16.msra.mxu0 %v3193
    %3273 = vmatprep.subr.bf16.mxu0 %v3224
    %3274 = vmatpush2.bf16.msra.mxu0 %v3223
    %3275 = vmatprep.subr.bf16.mxu0 %v3222
    %3276 = vmatpush2.bf16.msra.mxu0 %v3221
    %3277 = vmatprep.subr.bf16.mxu0 %v3220
    %3278 = vmatpush2.bf16.msra.mxu0 %v3219
    %3279 = vmatprep.subr.bf16.mxu0 %v3218
    %3280 = vmatpush2.bf16.msra.mxu0 %v3217
    %3281 = vmatprep.subr.bf16.mxu0 %v3216
    %3282 = vmatpush2.bf16.msra.mxu0 %v3215
    %3283 = vmatprep.subr.bf16.mxu0 %v3214
    %3284 = vmatpush2.bf16.msra.mxu0 %v3213
    %3285 = vmatprep.subr.bf16.mxu0 %v3212
    %3286 = vmatpush2.bf16.msra.mxu0 %v3211
    %3287 = vmatprep.subr.bf16.mxu0 %v3210
    %3288 = vmatpush2.bf16.msra.mxu0 %v3209
    %3289 = vmatprep.mubr.bf16.mxu0 %v2782
    %3290 = vmatmul.mubr.bf16.gmra.mxu0 %v2781
    %v3291 = vpop.f32.mrf.mxu0
    %v3292 = vadd.f32 %v3091, %v3291
    %v3293 = vpop.f32.mrf.mxu0
    %v3294 = vadd.f32 %v3093, %v3293
    %v3295 = vpop.f32.mrf.mxu0
    %v3296 = vpop.f32.mrf.mxu0
    %3297 = vdwg.mxu0
    %s3298 = scalar_lea.vmem [#allocation10], 8
    %v3299 = vld [vmem:[%s3298] sm:$0xf]
    %v3301 = vsel %vm2736, %v3299, 0
    %3303 = vmatprep.subr.bf16.mxu0 0
    %3304 = vmatpush1.bf16.msra.mxu0 0
    %3305 = vmatprep.subr.bf16.mxu0 0
    %3306 = vmatpush1.bf16.msra.mxu0 0
    %3307 = vmatprep.subr.bf16.mxu0 0
    %3308 = vmatpush1.bf16.msra.mxu0 0
    %3309 = vmatprep.subr.bf16.mxu0 0
    %3310 = vmatpush1.bf16.msra.mxu0 0
    %3311 = vmatprep.subr.bf16.mxu0 0
    %3312 = vmatpush1.bf16.msra.mxu0 0
    %3313 = vmatprep.subr.bf16.mxu0 0
    %3314 = vmatpush1.bf16.msra.mxu0 0
    %3315 = vmatprep.subr.bf16.mxu0 0
    %3316 = vmatpush1.bf16.msra.mxu0 0
    %3317 = vmatprep.subr.bf16.mxu0 %v2734
    %3318 = vmatpush1.bf16.msra.mxu0 %v2733
    %3319 = vmatprep.subr.bf16.mxu0 0
    %3320 = vmatpush2.bf16.msra.mxu0 0
    %3321 = vmatprep.subr.bf16.mxu0 0
    %3322 = vmatpush2.bf16.msra.mxu0 0
    %3323 = vmatprep.subr.bf16.mxu0 0
    %3324 = vmatpush2.bf16.msra.mxu0 0
    %3325 = vmatprep.subr.bf16.mxu0 0
    %3326 = vmatpush2.bf16.msra.mxu0 0
    %3327 = vmatprep.subr.bf16.mxu0 0
    %3328 = vmatpush2.bf16.msra.mxu0 0
    %3329 = vmatprep.subr.bf16.mxu0 0
    %3330 = vmatpush2.bf16.msra.mxu0 0
    %3331 = vmatprep.subr.bf16.mxu0 0
    %3332 = vmatpush2.bf16.msra.mxu0 0
    %3333 = vmatprep.subr.bf16.mxu0 0
    %3334 = vmatpush2.bf16.msra.mxu0 0
    %3335 = vmatprep.mubr.bf16.mxu0 0
    %3336 = vmatmul.mubr.bf16.gmra.mxu0 %v3301
    %v3337 = vpop.f32.mrf.mxu0
    %v3338 = vadd.f32 0.0, %v3337
    %v3339 = vpop.f32.mrf.mxu0
    %v3340 = vadd.f32 0.0, %v3339
    %v3341 = vpop.f32.mrf.mxu0
    %v3342 = vpop.f32.mrf.mxu0
    %3343 = vdwg.mxu0
    %v3344 = vpack.c.bf16 %v3338, %v3338
    %v3345 = vpack.c.bf16 %v3340, %v3340
    %s3346 = scalar_lea.vmem [#allocation11], 512
    %v3347 = vld [vmem:[%s3346] sm:$0xff]
    %v3348 = vld [vmem:[%s3346 + $0x8] sm:$0xff]
    %v3349 = vld [vmem:[%s3346 + $0x10] sm:$0xff]
    %v3350 = vld [vmem:[%s3346 + $0x18] sm:$0xff]
    %v3351 = vld [vmem:[%s3346 + $0x20] sm:$0xff]
    %v3352 = vld [vmem:[%s3346 + $0x28] sm:$0xff]
    %v3353 = vld [vmem:[%s3346 + $0x30] sm:$0xff]
    %v3354 = vld [vmem:[%s3346 + $0x38] sm:$0xff]
    %v3355 = vld [vmem:[%s3346 + $0x40] sm:$0xff]
    %v3356 = vld [vmem:[%s3346 + $0x48] sm:$0xff]
    %v3357 = vld [vmem:[%s3346 + $0x50] sm:$0xff]
    %v3358 = vld [vmem:[%s3346 + $0x58] sm:$0xff]
    %v3359 = vld [vmem:[%s3346 + $0x60] sm:$0xff]
    %v3360 = vld [vmem:[%s3346 + $0x68] sm:$0xff]
    %v3361 = vld [vmem:[%s3346 + $0x70] sm:$0xff]
    %v3362 = vld [vmem:[%s3346 + $0x78] sm:$0xff]
    %v3363 = vld [vmem:[%s3346 + $0x80] sm:$0xff]
    %v3364 = vld [vmem:[%s3346 + $0x88] sm:$0xff]
    %v3365 = vld [vmem:[%s3346 + $0x90] sm:$0xff]
    %v3366 = vld [vmem:[%s3346 + $0x98] sm:$0xff]
    %v3367 = vld [vmem:[%s3346 + $0xa0] sm:$0xff]
    %v3368 = vld [vmem:[%s3346 + $0xa8] sm:$0xff]
    %v3369 = vld [vmem:[%s3346 + $0xb0] sm:$0xff]
    %v3370 = vld [vmem:[%s3346 + $0xb8] sm:$0xff]
    %v3371 = vld [vmem:[%s3346 + $0xc0] sm:$0xff]
    %v3372 = vld [vmem:[%s3346 + $0xc8] sm:$0xff]
    %v3373 = vld [vmem:[%s3346 + $0xd0] sm:$0xff]
    %v3374 = vld [vmem:[%s3346 + $0xd8] sm:$0xff]
    %v3375 = vld [vmem:[%s3346 + $0xe0] sm:$0xff]
    %v3376 = vld [vmem:[%s3346 + $0xe8] sm:$0xff]
    %v3377 = vld [vmem:[%s3346 + $0xf0] sm:$0xff]
    %v3378 = vld [vmem:[%s3346 + $0xf8] sm:$0xff]
    %v3411 = vunpack.c.l.b16 %v3347
    %v3412 = vunpack.c.h.b16 %v3347
    %v3413 = vunpack.c.l.b16 %v3348
    %v3414 = vunpack.c.h.b16 %v3348
    %v3415 = vunpack.c.l.b16 %v3349
    %v3416 = vunpack.c.h.b16 %v3349
    %v3417 = vunpack.c.l.b16 %v3350
    %v3418 = vunpack.c.h.b16 %v3350
    %v3419 = vunpack.c.l.b16 %v3351
    %v3420 = vunpack.c.h.b16 %v3351
    %v3421 = vunpack.c.l.b16 %v3352
    %v3422 = vunpack.c.h.b16 %v3352
    %v3423 = vunpack.c.l.b16 %v3353
    %v3424 = vunpack.c.h.b16 %v3353
    %v3425 = vunpack.c.l.b16 %v3354
    %v3426 = vunpack.c.h.b16 %v3354
    %v3427 = vunpack.c.l.b16 %v3355
    %v3428 = vunpack.c.h.b16 %v3355
    %v3429 = vunpack.c.l.b16 %v3356
    %v3430 = vunpack.c.h.b16 %v3356
    %v3431 = vunpack.c.l.b16 %v3357
    %v3432 = vunpack.c.h.b16 %v3357
    %v3433 = vunpack.c.l.b16 %v3358
    %v3434 = vunpack.c.h.b16 %v3358
    %v3435 = vunpack.c.l.b16 %v3359
    %v3436 = vunpack.c.h.b16 %v3359
    %v3437 = vunpack.c.l.b16 %v3360
    %v3438 = vunpack.c.h.b16 %v3360
    %v3439 = vunpack.c.l.b16 %v3361
    %v3440 = vunpack.c.h.b16 %v3361
    %v3441 = vunpack.c.l.b16 %v3362
    %v3442 = vunpack.c.h.b16 %v3362
    %v3443 = vunpack.c.l.b16 %v3363
    %v3444 = vunpack.c.h.b16 %v3363
    %v3445 = vunpack.c.l.b16 %v3364
    %v3446 = vunpack.c.h.b16 %v3364
    %v3447 = vunpack.c.l.b16 %v3365
    %v3448 = vunpack.c.h.b16 %v3365
    %v3449 = vunpack.c.l.b16 %v3366
    %v3450 = vunpack.c.h.b16 %v3366
    %v3451 = vunpack.c.l.b16 %v3367
    %v3452 = vunpack.c.h.b16 %v3367
    %v3453 = vunpack.c.l.b16 %v3368
    %v3454 = vunpack.c.h.b16 %v3368
    %v3455 = vunpack.c.l.b16 %v3369
    %v3456 = vunpack.c.h.b16 %v3369
    %v3457 = vunpack.c.l.b16 %v3370
    %v3458 = vunpack.c.h.b16 %v3370
    %v3459 = vunpack.c.l.b16 %v3371
    %v3460 = vunpack.c.h.b16 %v3371
    %v3461 = vunpack.c.l.b16 %v3372
    %v3462 = vunpack.c.h.b16 %v3372
    %v3463 = vunpack.c.l.b16 %v3373
    %v3464 = vunpack.c.h.b16 %v3373
    %v3465 = vunpack.c.l.b16 %v3374
    %v3466 = vunpack.c.h.b16 %v3374
    %v3467 = vunpack.c.l.b16 %v3375
    %v3468 = vunpack.c.h.b16 %v3375
    %v3469 = vunpack.c.l.b16 %v3376
    %v3470 = vunpack.c.h.b16 %v3376
    %v3471 = vunpack.c.l.b16 %v3377
    %v3472 = vunpack.c.h.b16 %v3377
    %v3473 = vunpack.c.l.b16 %v3378
    %v3474 = vunpack.c.h.b16 %v3378
    %v3475 = vpack.c.b16 %v3413, %v3411
    %v3476 = vpack.c.b16 %v3414, %v3412
    %v3477 = vpack.c.b16 %v3417, %v3415
    %v3478 = vpack.c.b16 %v3418, %v3416
    %v3479 = vpack.c.b16 %v3421, %v3419
    %v3480 = vpack.c.b16 %v3422, %v3420
    %v3481 = vpack.c.b16 %v3425, %v3423
    %v3482 = vpack.c.b16 %v3426, %v3424
    %v3483 = vpack.c.b16 %v3429, %v3427
    %v3484 = vpack.c.b16 %v3430, %v3428
    %v3485 = vpack.c.b16 %v3433, %v3431
    %v3486 = vpack.c.b16 %v3434, %v3432
    %v3487 = vpack.c.b16 %v3437, %v3435
    %v3488 = vpack.c.b16 %v3438, %v3436
    %v3489 = vpack.c.b16 %v3441, %v3439
    %v3490 = vpack.c.b16 %v3442, %v3440
    %v3491 = vpack.c.b16 %v3445, %v3443
    %v3492 = vpack.c.b16 %v3446, %v3444
    %v3493 = vpack.c.b16 %v3449, %v3447
    %v3494 = vpack.c.b16 %v3450, %v3448
    %v3495 = vpack.c.b16 %v3453, %v3451
    %v3496 = vpack.c.b16 %v3454, %v3452
    %v3497 = vpack.c.b16 %v3457, %v3455
    %v3498 = vpack.c.b16 %v3458, %v3456
    %v3499 = vpack.c.b16 %v3461, %v3459
    %v3500 = vpack.c.b16 %v3462, %v3460
    %v3501 = vpack.c.b16 %v3465, %v3463
    %v3502 = vpack.c.b16 %v3466, %v3464
    %v3503 = vpack.c.b16 %v3469, %v3467
    %v3504 = vpack.c.b16 %v3470, %v3468
    %v3505 = vpack.c.b16 %v3473, %v3471
    %v3506 = vpack.c.b16 %v3474, %v3472
    %3539 = vmatprep.subr.bf16.mxu0 %v3490
    %3540 = vmatpush1.bf16.msra.mxu0 %v3489
    %3541 = vmatprep.subr.bf16.mxu0 %v3488
    %3542 = vmatpush1.bf16.msra.mxu0 %v3487
    %3543 = vmatprep.subr.bf16.mxu0 %v3486
    %3544 = vmatpush1.bf16.msra.mxu0 %v3485
    %3545 = vmatprep.subr.bf16.mxu0 %v3484
    %3546 = vmatpush1.bf16.msra.mxu0 %v3483
    %3547 = vmatprep.subr.bf16.mxu0 %v3482
    %3548 = vmatpush1.bf16.msra.mxu0 %v3481
    %3549 = vmatprep.subr.bf16.mxu0 %v3480
    %3550 = vmatpush1.bf16.msra.mxu0 %v3479
    %3551 = vmatprep.subr.bf16.mxu0 %v3478
    %3552 = vmatpush1.bf16.msra.mxu0 %v3477
    %3553 = vmatprep.subr.bf16.mxu0 %v3476
    %3554 = vmatpush1.bf16.msra.mxu0 %v3475
    %3555 = vmatprep.subr.bf16.mxu0 %v3506
    %3556 = vmatpush2.bf16.msra.mxu0 %v3505
    %3557 = vmatprep.subr.bf16.mxu0 %v3504
    %3558 = vmatpush2.bf16.msra.mxu0 %v3503
    %3559 = vmatprep.subr.bf16.mxu0 %v3502
    %3560 = vmatpush2.bf16.msra.mxu0 %v3501
    %3561 = vmatprep.subr.bf16.mxu0 %v3500
    %3562 = vmatpush2.bf16.msra.mxu0 %v3499
    %3563 = vmatprep.subr.bf16.mxu0 %v3498
    %3564 = vmatpush2.bf16.msra.mxu0 %v3497
    %3565 = vmatprep.subr.bf16.mxu0 %v3496
    %3566 = vmatpush2.bf16.msra.mxu0 %v3495
    %3567 = vmatprep.subr.bf16.mxu0 %v3494
    %3568 = vmatpush2.bf16.msra.mxu0 %v3493
    %3569 = vmatprep.subr.bf16.mxu0 %v3492
    %3570 = vmatpush2.bf16.msra.mxu0 %v3491
    %3571 = vmatprep.mubr.bf16.mxu0 %v3345
    %3572 = vmatmul.mubr.bf16.gmra.mxu0 %v3344
    %v3573 = vpop.f32.mrf.mxu0
    %v3574 = vadd.f32 0.0, %v3573
    %v3575 = vpop.f32.mrf.mxu0
    %v3576 = vadd.f32 0.0, %v3575
    %v3577 = vpop.f32.mrf.mxu0
    %v3578 = vpop.f32.mrf.mxu0
    %3579 = vdwg.mxu0
    %v3580 = vadd.f32 %v3292, %v3574
    %v3581 = vadd.f32 %v3294, %v3576
    %s3582 = scalar_lea.vmem [#allocation10], 12
    %v3583 = vld [vmem:[%s3582] sm:$0xf]
    %v3585 = vsel %vm2736, %v3583, 0
    %3587 = vmatprep.subr.bf16.mxu0 0
    %3588 = vmatpush1.bf16.msra.mxu0 0
    %3589 = vmatprep.subr.bf16.mxu0 0
    %3590 = vmatpush1.bf16.msra.mxu0 0
    %3591 = vmatprep.subr.bf16.mxu0 0
    %3592 = vmatpush1.bf16.msra.mxu0 0
    %3593 = vmatprep.subr.bf16.mxu0 0
    %3594 = vmatpush1.bf16.msra.mxu0 0
    %3595 = vmatprep.subr.bf16.mxu0 0
    %3596 = vmatpush1.bf16.msra.mxu0 0
    %3597 = vmatprep.subr.bf16.mxu0 0
    %3598 = vmatpush1.bf16.msra.mxu0 0
    %3599 = vmatprep.subr.bf16.mxu0 0
    %3600 = vmatpush1.bf16.msra.mxu0 0
    %3601 = vmatprep.subr.bf16.mxu0 %v2734
    %3602 = vmatpush1.bf16.msra.mxu0 %v2733
    %3603 = vmatprep.subr.bf16.mxu0 0
    %3604 = vmatpush2.bf16.msra.mxu0 0
    %3605 = vmatprep.subr.bf16.mxu0 0
    %3606 = vmatpush2.bf16.msra.mxu0 0
    %3607 = vmatprep.subr.bf16.mxu0 0
    %3608 = vmatpush2.bf16.msra.mxu0 0
    %3609 = vmatprep.subr.bf16.mxu0 0
    %3610 = vmatpush2.bf16.msra.mxu0 0
    %3611 = vmatprep.subr.bf16.mxu0 0
    %3612 = vmatpush2.bf16.msra.mxu0 0
    %3613 = vmatprep.subr.bf16.mxu0 0
    %3614 = vmatpush2.bf16.msra.mxu0 0
    %3615 = vmatprep.subr.bf16.mxu0 0
    %3616 = vmatpush2.bf16.msra.mxu0 0
    %3617 = vmatprep.subr.bf16.mxu0 0
    %3618 = vmatpush2.bf16.msra.mxu0 0
    %3619 = vmatprep.mubr.bf16.mxu0 0
    %3620 = vmatmul.mubr.bf16.gmra.mxu0 %v3585
    %v3621 = vpop.f32.mrf.mxu0
    %v3622 = vadd.f32 0.0, %v3621
    %v3623 = vpop.f32.mrf.mxu0
    %v3624 = vadd.f32 0.0, %v3623
    %v3625 = vpop.f32.mrf.mxu0
    %v3626 = vpop.f32.mrf.mxu0
    %3627 = vdwg.mxu0
    %v3628 = vpack.c.bf16 %v3622, %v3622
    %v3629 = vpack.c.bf16 %v3624, %v3624
    %s3630 = scalar_lea.vmem [#allocation11], 768
    %v3631 = vld [vmem:[%s3630] sm:$0xff]
    %v3632 = vld [vmem:[%s3630 + $0x8] sm:$0xff]
    %v3633 = vld [vmem:[%s3630 + $0x10] sm:$0xff]
    %v3634 = vld [vmem:[%s3630 + $0x18] sm:$0xff]
    %v3635 = vld [vmem:[%s3630 + $0x20] sm:$0xff]
    %v3636 = vld [vmem:[%s3630 + $0x28] sm:$0xff]
    %v3637 = vld [vmem:[%s3630 + $0x30] sm:$0xff]
    %v3638 = vld [vmem:[%s3630 + $0x38] sm:$0xff]
    %v3639 = vld [vmem:[%s3630 + $0x40] sm:$0xff]
    %v3640 = vld [vmem:[%s3630 + $0x48] sm:$0xff]
    %v3641 = vld [vmem:[%s3630 + $0x50] sm:$0xff]
    %v3642 = vld [vmem:[%s3630 + $0x58] sm:$0xff]
    %v3643 = vld [vmem:[%s3630 + $0x60] sm:$0xff]
    %v3644 = vld [vmem:[%s3630 + $0x68] sm:$0xff]
    %v3645 = vld [vmem:[%s3630 + $0x70] sm:$0xff]
    %v3646 = vld [vmem:[%s3630 + $0x78] sm:$0xff]
    %v3647 = vld [vmem:[%s3630 + $0x80] sm:$0xff]
    %v3648 = vld [vmem:[%s3630 + $0x88] sm:$0xff]
    %v3649 = vld [vmem:[%s3630 + $0x90] sm:$0xff]
    %v3650 = vld [vmem:[%s3630 + $0x98] sm:$0xff]
    %v3651 = vld [vmem:[%s3630 + $0xa0] sm:$0xff]
    %v3652 = vld [vmem:[%s3630 + $0xa8] sm:$0xff]
    %v3653 = vld [vmem:[%s3630 + $0xb0] sm:$0xff]
    %v3654 = vld [vmem:[%s3630 + $0xb8] sm:$0xff]
    %v3655 = vld [vmem:[%s3630 + $0xc0] sm:$0xff]
    %v3656 = vld [vmem:[%s3630 + $0xc8] sm:$0xff]
    %v3657 = vld [vmem:[%s3630 + $0xd0] sm:$0xff]
    %v3658 = vld [vmem:[%s3630 + $0xd8] sm:$0xff]
    %v3659 = vld [vmem:[%s3630 + $0xe0] sm:$0xff]
    %v3660 = vld [vmem:[%s3630 + $0xe8] sm:$0xff]
    %v3661 = vld [vmem:[%s3630 + $0xf0] sm:$0xff]
    %v3662 = vld [vmem:[%s3630 + $0xf8] sm:$0xff]
    %v3695 = vunpack.c.l.b16 %v3631
    %v3696 = vunpack.c.h.b16 %v3631
    %v3697 = vunpack.c.l.b16 %v3632
    %v3698 = vunpack.c.h.b16 %v3632
    %v3699 = vunpack.c.l.b16 %v3633
    %v3700 = vunpack.c.h.b16 %v3633
    %v3701 = vunpack.c.l.b16 %v3634
    %v3702 = vunpack.c.h.b16 %v3634
    %v3703 = vunpack.c.l.b16 %v3635
    %v3704 = vunpack.c.h.b16 %v3635
    %v3705 = vunpack.c.l.b16 %v3636
    %v3706 = vunpack.c.h.b16 %v3636
    %v3707 = vunpack.c.l.b16 %v3637
    %v3708 = vunpack.c.h.b16 %v3637
    %v3709 = vunpack.c.l.b16 %v3638
    %v3710 = vunpack.c.h.b16 %v3638
    %v3711 = vunpack.c.l.b16 %v3639
    %v3712 = vunpack.c.h.b16 %v3639
    %v3713 = vunpack.c.l.b16 %v3640
    %v3714 = vunpack.c.h.b16 %v3640
    %v3715 = vunpack.c.l.b16 %v3641
    %v3716 = vunpack.c.h.b16 %v3641
    %v3717 = vunpack.c.l.b16 %v3642
    %v3718 = vunpack.c.h.b16 %v3642
    %v3719 = vunpack.c.l.b16 %v3643
    %v3720 = vunpack.c.h.b16 %v3643
    %v3721 = vunpack.c.l.b16 %v3644
    %v3722 = vunpack.c.h.b16 %v3644
    %v3723 = vunpack.c.l.b16 %v3645
    %v3724 = vunpack.c.h.b16 %v3645
    %v3725 = vunpack.c.l.b16 %v3646
    %v3726 = vunpack.c.h.b16 %v3646
    %v3727 = vunpack.c.l.b16 %v3647
    %v3728 = vunpack.c.h.b16 %v3647
    %v3729 = vunpack.c.l.b16 %v3648
    %v3730 = vunpack.c.h.b16 %v3648
    %v3731 = vunpack.c.l.b16 %v3649
    %v3732 = vunpack.c.h.b16 %v3649
    %v3733 = vunpack.c.l.b16 %v3650
    %v3734 = vunpack.c.h.b16 %v3650
    %v3735 = vunpack.c.l.b16 %v3651
    %v3736 = vunpack.c.h.b16 %v3651
    %v3737 = vunpack.c.l.b16 %v3652
    %v3738 = vunpack.c.h.b16 %v3652
    %v3739 = vunpack.c.l.b16 %v3653
    %v3740 = vunpack.c.h.b16 %v3653
    %v3741 = vunpack.c.l.b16 %v3654
    %v3742 = vunpack.c.h.b16 %v3654
    %v3743 = vunpack.c.l.b16 %v3655
    %v3744 = vunpack.c.h.b16 %v3655
    %v3745 = vunpack.c.l.b16 %v3656
    %v3746 = vunpack.c.h.b16 %v3656
    %v3747 = vunpack.c.l.b16 %v3657
    %v3748 = vunpack.c.h.b16 %v3657
    %v3749 = vunpack.c.l.b16 %v3658
    %v3750 = vunpack.c.h.b16 %v3658
    %v3751 = vunpack.c.l.b16 %v3659
    %v3752 = vunpack.c.h.b16 %v3659
    %v3753 = vunpack.c.l.b16 %v3660
    %v3754 = vunpack.c.h.b16 %v3660
    %v3755 = vunpack.c.l.b16 %v3661
    %v3756 = vunpack.c.h.b16 %v3661
    %v3757 = vunpack.c.l.b16 %v3662
    %v3758 = vunpack.c.h.b16 %v3662
    %v3759 = vpack.c.b16 %v3697, %v3695
    %v3760 = vpack.c.b16 %v3698, %v3696
    %v3761 = vpack.c.b16 %v3701, %v3699
    %v3762 = vpack.c.b16 %v3702, %v3700
    %v3763 = vpack.c.b16 %v3705, %v3703
    %v3764 = vpack.c.b16 %v3706, %v3704
    %v3765 = vpack.c.b16 %v3709, %v3707
    %v3766 = vpack.c.b16 %v3710, %v3708
    %v3767 = vpack.c.b16 %v3713, %v3711
    %v3768 = vpack.c.b16 %v3714, %v3712
    %v3769 = vpack.c.b16 %v3717, %v3715
    %v3770 = vpack.c.b16 %v3718, %v3716
    %v3771 = vpack.c.b16 %v3721, %v3719
    %v3772 = vpack.c.b16 %v3722, %v3720
    %v3773 = vpack.c.b16 %v3725, %v3723
    %v3774 = vpack.c.b16 %v3726, %v3724
    %v3775 = vpack.c.b16 %v3729, %v3727
    %v3776 = vpack.c.b16 %v3730, %v3728
    %v3777 = vpack.c.b16 %v3733, %v3731
    %v3778 = vpack.c.b16 %v3734, %v3732
    %v3779 = vpack.c.b16 %v3737, %v3735
    %v3780 = vpack.c.b16 %v3738, %v3736
    %v3781 = vpack.c.b16 %v3741, %v3739
    %v3782 = vpack.c.b16 %v3742, %v3740
    %v3783 = vpack.c.b16 %v3745, %v3743
    %v3784 = vpack.c.b16 %v3746, %v3744
    %v3785 = vpack.c.b16 %v3749, %v3747
    %v3786 = vpack.c.b16 %v3750, %v3748
    %v3787 = vpack.c.b16 %v3753, %v3751
    %v3788 = vpack.c.b16 %v3754, %v3752
    %v3789 = vpack.c.b16 %v3757, %v3755
    %v3790 = vpack.c.b16 %v3758, %v3756
    %3823 = vmatprep.subr.bf16.mxu0 %v3774
    %3824 = vmatpush1.bf16.msra.mxu0 %v3773
    %3825 = vmatprep.subr.bf16.mxu0 %v3772
    %3826 = vmatpush1.bf16.msra.mxu0 %v3771
    %3827 = vmatprep.subr.bf16.mxu0 %v3770
    %3828 = vmatpush1.bf16.msra.mxu0 %v3769
    %3829 = vmatprep.subr.bf16.mxu0 %v3768
    %3830 = vmatpush1.bf16.msra.mxu0 %v3767
    %3831 = vmatprep.subr.bf16.mxu0 %v3766
    %3832 = vmatpush1.bf16.msra.mxu0 %v3765
    %3833 = vmatprep.subr.bf16.mxu0 %v3764
    %3834 = vmatpush1.bf16.msra.mxu0 %v3763
    %3835 = vmatprep.subr.bf16.mxu0 %v3762
    %3836 = vmatpush1.bf16.msra.mxu0 %v3761
    %3837 = vmatprep.subr.bf16.mxu0 %v3760
    %3838 = vmatpush1.bf16.msra.mxu0 %v3759
    %3839 = vmatprep.subr.bf16.mxu0 %v3790
    %3840 = vmatpush2.bf16.msra.mxu0 %v3789
    %3841 = vmatprep.subr.bf16.mxu0 %v3788
    %3842 = vmatpush2.bf16.msra.mxu0 %v3787
    %3843 = vmatprep.subr.bf16.mxu0 %v3786
    %3844 = vmatpush2.bf16.msra.mxu0 %v3785
    %3845 = vmatprep.subr.bf16.mxu0 %v3784
    %3846 = vmatpush2.bf16.msra.mxu0 %v3783
    %3847 = vmatprep.subr.bf16.mxu0 %v3782
    %3848 = vmatpush2.bf16.msra.mxu0 %v3781
    %3849 = vmatprep.subr.bf16.mxu0 %v3780
    %3850 = vmatpush2.bf16.msra.mxu0 %v3779
    %3851 = vmatprep.subr.bf16.mxu0 %v3778
    %3852 = vmatpush2.bf16.msra.mxu0 %v3777
    %3853 = vmatprep.subr.bf16.mxu0 %v3776
    %3854 = vmatpush2.bf16.msra.mxu0 %v3775
    %3855 = vmatprep.mubr.bf16.mxu0 %v3629
    %3856 = vmatmul.mubr.bf16.gmra.mxu0 %v3628
    %v3857 = vpop.f32.mrf.mxu0
    %v3858 = vadd.f32 0.0, %v3857
    %v3859 = vpop.f32.mrf.mxu0
    %v3860 = vadd.f32 0.0, %v3859
    %v3861 = vpop.f32.mrf.mxu0
    %v3862 = vpop.f32.mrf.mxu0
    %3863 = vdwg.mxu0
    %v3864 = vadd.f32 %v3580, %v3858
    %v3865 = vadd.f32 %v3581, %v3860
    %v3866 = vrot.slane %v3864, 4
    %v3867 = vadd.f32 %v3864, %v3866
    %v3868 = vrot.slane %v3867, 2
    %v3869 = vadd.f32 %v3867, %v3868
    %v3870 = vrot.slane %v3869, 1
    %v3871 = vadd.f32 %v3869, %v3870
    %v3872 = vrot.slane %v3865, 4
    %v3873 = vadd.f32 %v3865, %v3872
    %v3874 = vrot.slane %v3873, 2
    %v3875 = vadd.f32 %v3873, %v3874
    %v3876 = vrot.slane %v3875, 1
    %v3877 = vadd.f32 %v3875, %v3876
    %v3878 = vmul.f32 %v3864, %v3864
    %v3879 = vmul.f32 %v3865, %v3865
    %v3880 = vrot.slane %v3878, 4
    %v3881 = vadd.f32 %v3878, %v3880
    %v3882 = vrot.slane %v3881, 2
    %v3883 = vadd.f32 %v3881, %v3882
    %v3884 = vrot.slane %v3883, 1
    %v3885 = vadd.f32 %v3883, %v3884
    %v3886 = vrot.slane %v3879, 4
    %v3887 = vadd.f32 %v3879, %v3886
    %v3888 = vrot.slane %v3887, 2
    %v3889 = vadd.f32 %v3887, %v3888
    %v3890 = vrot.slane %v3889, 1
    %v3891 = vadd.f32 %v3889, %v3890
    %v3892 = vld [vmem:[#allocation13] sm:$0xff]
    %v3893 = vld [vmem:[#allocation13 + $0x8] sm:$0xff]
    %v3894 = vld [vmem:[#allocation13 + $0x10] sm:$0xff]
    %v3895 = vld [vmem:[#allocation13 + $0x18] sm:$0xff]
    %v3896 = vld [vmem:[#allocation13 + $0x20] sm:$0xff]
    %v3897 = vld [vmem:[#allocation13 + $0x28] sm:$0xff]
    %v3898 = vld [vmem:[#allocation13 + $0x30] sm:$0xff]
    %v3899 = vld [vmem:[#allocation13 + $0x38] sm:$0xff]
    %v3900 = vld [vmem:[#allocation13 + $0x40] sm:$0xff]
    %v3901 = vld [vmem:[#allocation13 + $0x48] sm:$0xff]
    %v3902 = vld [vmem:[#allocation13 + $0x50] sm:$0xff]
    %v3903 = vld [vmem:[#allocation13 + $0x58] sm:$0xff]
    %v3904 = vld [vmem:[#allocation13 + $0x60] sm:$0xff]
    %v3905 = vld [vmem:[#allocation13 + $0x68] sm:$0xff]
    %v3906 = vld [vmem:[#allocation13 + $0x70] sm:$0xff]
    %v3907 = vld [vmem:[#allocation13 + $0x78] sm:$0xff]
    %v3908 = vld [vmem:[#allocation13 + $0x80] sm:$0xff]
    %v3909 = vld [vmem:[#allocation13 + $0x88] sm:$0xff]
    %v3910 = vld [vmem:[#allocation13 + $0x90] sm:$0xff]
    %v3911 = vld [vmem:[#allocation13 + $0x98] sm:$0xff]
    %v3912 = vld [vmem:[#allocation13 + $0xa0] sm:$0xff]
    %v3913 = vld [vmem:[#allocation13 + $0xa8] sm:$0xff]
    %v3914 = vld [vmem:[#allocation13 + $0xb0] sm:$0xff]
    %v3915 = vld [vmem:[#allocation13 + $0xb8] sm:$0xff]
    %v3916 = vld [vmem:[#allocation13 + $0xc0] sm:$0xff]
    %v3917 = vld [vmem:[#allocation13 + $0xc8] sm:$0xff]
    %v3918 = vld [vmem:[#allocation13 + $0xd0] sm:$0xff]
    %v3919 = vld [vmem:[#allocation13 + $0xd8] sm:$0xff]
    %v3920 = vld [vmem:[#allocation13 + $0xe0] sm:$0xff]
    %v3921 = vld [vmem:[#allocation13 + $0xe8] sm:$0xff]
    %v3922 = vld [vmem:[#allocation13 + $0xf0] sm:$0xff]
    %v3923 = vld [vmem:[#allocation13 + $0xf8] sm:$0xff]
    %3924 = vmatprep.subr.mxu0 0.0
    %3925 = vmatpush1.msra.mxu0 %v3907
    %3926 = vmatprep.subr.mxu0 0.0
    %3927 = vmatpush1.msra.mxu0 %v3906
    %3928 = vmatprep.subr.mxu0 0.0
    %3929 = vmatpush1.msra.mxu0 %v3905
    %3930 = vmatprep.subr.mxu0 0.0
    %3931 = vmatpush1.msra.mxu0 %v3904
    %3932 = vmatprep.subr.mxu0 0.0
    %3933 = vmatpush1.msra.mxu0 %v3903
    %3934 = vmatprep.subr.mxu0 0.0
    %3935 = vmatpush1.msra.mxu0 %v3902
    %3936 = vmatprep.subr.mxu0 0.0
    %3937 = vmatpush1.msra.mxu0 %v3901
    %3938 = vmatprep.subr.mxu0 0.0
    %3939 = vmatpush1.msra.mxu0 %v3900
    %3940 = vmatprep.subr.mxu0 0.0
    %3941 = vmatpush1.msra.mxu0 %v3899
    %3942 = vmatprep.subr.mxu0 0.0
    %3943 = vmatpush1.msra.mxu0 %v3898
    %3944 = vmatprep.subr.mxu0 0.0
    %3945 = vmatpush1.msra.mxu0 %v3897
    %3946 = vmatprep.subr.mxu0 0.0
    %3947 = vmatpush1.msra.mxu0 %v3896
    %3948 = vmatprep.subr.mxu0 0.0
    %3949 = vmatpush1.msra.mxu0 %v3895
    %3950 = vmatprep.subr.mxu0 0.0
    %3951 = vmatpush1.msra.mxu0 %v3894
    %3952 = vmatprep.subr.mxu0 0.0
    %3953 = vmatpush1.msra.mxu0 %v3893
    %3954 = vmatprep.subr.mxu0 0.0
    %3955 = vmatpush1.msra.mxu0 %v3892
    %3956 = vmatprep.subr.mxu0 0.0
    %3957 = vmatpush2.msra.mxu0 %v3923
    %3958 = vmatprep.subr.mxu0 0.0
    %3959 = vmatpush2.msra.mxu0 %v3922
    %3960 = vmatprep.subr.mxu0 0.0
    %3961 = vmatpush2.msra.mxu0 %v3921
    %3962 = vmatprep.subr.mxu0 0.0
    %3963 = vmatpush2.msra.mxu0 %v3920
    %3964 = vmatprep.subr.mxu0 0.0
    %3965 = vmatpush2.msra.mxu0 %v3919
    %3966 = vmatprep.subr.mxu0 0.0
    %3967 = vmatpush2.msra.mxu0 %v3918
    %3968 = vmatprep.subr.mxu0 0.0
    %3969 = vmatpush2.msra.mxu0 %v3917
    %3970 = vmatprep.subr.mxu0 0.0
    %3971 = vmatpush2.msra.mxu0 %v3916
    %3972 = vmatprep.subr.mxu0 0.0
    %3973 = vmatpush2.msra.mxu0 %v3915
    %3974 = vmatprep.subr.mxu0 0.0
    %3975 = vmatpush2.msra.mxu0 %v3914
    %3976 = vmatprep.subr.mxu0 0.0
    %3977 = vmatpush2.msra.mxu0 %v3913
    %3978 = vmatprep.subr.mxu0 0.0
    %3979 = vmatpush2.msra.mxu0 %v3912
    %3980 = vmatprep.subr.mxu0 0.0
    %3981 = vmatpush2.msra.mxu0 %v3911
    %3982 = vmatprep.subr.mxu0 0.0
    %3983 = vmatpush2.msra.mxu0 %v3910
    %3984 = vmatprep.subr.mxu0 0.0
    %3985 = vmatpush2.msra.mxu0 %v3909
    %3986 = vmatprep.subr.mxu0 0.0
    %3987 = vmatpush2.msra.mxu0 %v3908
    %3988 = vmatprep.mubr.f32.mxu0 %v3877
    %3989 = vmatmul.mubr.f32.gmra.mxu0 %v3871
    %v3990 = vpop.f32.mrf.mxu0
    %v3991 = vadd.f32 0.0, %v3990
    %v3992 = vpop.f32.mrf.mxu0
    %3993 = vdwg.mxu0
    %3994 = vmatprep.subr.mxu0 0.0
    %3995 = vmatpush1.msra.mxu0 %v3907
    %3996 = vmatprep.subr.mxu0 0.0
    %3997 = vmatpush1.msra.mxu0 %v3906
    %3998 = vmatprep.subr.mxu0 0.0
    %3999 = vmatpush1.msra.mxu0 %v3905
    %4000 = vmatprep.subr.mxu0 0.0
    %4001 = vmatpush1.msra.mxu0 %v3904
    %4002 = vmatprep.subr.mxu0 0.0
    %4003 = vmatpush1.msra.mxu0 %v3903
    %4004 = vmatprep.subr.mxu0 0.0
    %4005 = vmatpush1.msra.mxu0 %v3902
    %4006 = vmatprep.subr.mxu0 0.0
    %4007 = vmatpush1.msra.mxu0 %v3901
    %4008 = vmatprep.subr.mxu0 0.0
    %4009 = vmatpush1.msra.mxu0 %v3900
    %4010 = vmatprep.subr.mxu0 0.0
    %4011 = vmatpush1.msra.mxu0 %v3899
    %4012 = vmatprep.subr.mxu0 0.0
    %4013 = vmatpush1.msra.mxu0 %v3898
    %4014 = vmatprep.subr.mxu0 0.0
    %4015 = vmatpush1.msra.mxu0 %v3897
    %4016 = vmatprep.subr.mxu0 0.0
    %4017 = vmatpush1.msra.mxu0 %v3896
    %4018 = vmatprep.subr.mxu0 0.0
    %4019 = vmatpush1.msra.mxu0 %v3895
    %4020 = vmatprep.subr.mxu0 0.0
    %4021 = vmatpush1.msra.mxu0 %v3894
    %4022 = vmatprep.subr.mxu0 0.0
    %4023 = vmatpush1.msra.mxu0 %v3893
    %4024 = vmatprep.subr.mxu0 0.0
    %4025 = vmatpush1.msra.mxu0 %v3892
    %4026 = vmatprep.subr.mxu0 0.0
    %4027 = vmatpush2.msra.mxu0 %v3923
    %4028 = vmatprep.subr.mxu0 0.0
    %4029 = vmatpush2.msra.mxu0 %v3922
    %4030 = vmatprep.subr.mxu0 0.0
    %4031 = vmatpush2.msra.mxu0 %v3921
    %4032 = vmatprep.subr.mxu0 0.0
    %4033 = vmatpush2.msra.mxu0 %v3920
    %4034 = vmatprep.subr.mxu0 0.0
    %4035 = vmatpush2.msra.mxu0 %v3919
    %4036 = vmatprep.subr.mxu0 0.0
    %4037 = vmatpush2.msra.mxu0 %v3918
    %4038 = vmatprep.subr.mxu0 0.0
    %4039 = vmatpush2.msra.mxu0 %v3917
    %4040 = vmatprep.subr.mxu0 0.0
    %4041 = vmatpush2.msra.mxu0 %v3916
    %4042 = vmatprep.subr.mxu0 0.0
    %4043 = vmatpush2.msra.mxu0 %v3915
    %4044 = vmatprep.subr.mxu0 0.0
    %4045 = vmatpush2.msra.mxu0 %v3914
    %4046 = vmatprep.subr.mxu0 0.0
    %4047 = vmatpush2.msra.mxu0 %v3913
    %4048 = vmatprep.subr.mxu0 0.0
    %4049 = vmatpush2.msra.mxu0 %v3912
    %4050 = vmatprep.subr.mxu0 0.0
    %4051 = vmatpush2.msra.mxu0 %v3911
    %4052 = vmatprep.subr.mxu0 0.0
    %4053 = vmatpush2.msra.mxu0 %v3910
    %4054 = vmatprep.subr.mxu0 0.0
    %4055 = vmatpush2.msra.mxu0 %v3909
    %4056 = vmatprep.subr.mxu0 0.0
    %4057 = vmatpush2.msra.mxu0 %v3908
    %4058 = vmatprep.mubr.f32.mxu0 %v3891
    %4059 = vmatmul.mubr.f32.gmra.mxu0 %v3885
    %v4060 = vpop.f32.mrf.mxu0
    %v4061 = vadd.f32 0.0, %v4060
    %v4062 = vpop.f32.mrf.mxu0
    %4063 = vdwg.mxu0
    %v4064 = vmul.f32 %v3991, 0.03125
    %v4065 = vmul.f32 %v4061, 0.03125
    %v4066 = vmul.f32 %v4064, %v4064
    %v4067 = vsub.f32 %v4065, %v4066
    %v4068 = vmax.f32 %v4067, 0.0
    %v4069 = vld [vmem:[%s12] sm:$0x1]
    %v4070 = vadd.f32 %v4068, 1e-05
    %v4071 = vrsqrt.pop %v4070
    %v4072 = vmul.f32 %v4069, %v4071
    %v4073 = vld [vmem:[%s13] sm:$0x1]
    %v4074 = vmul.f32 %v4064, %v4072
    %v4075 = vsub.f32 %v4073, %v4074
    %v4076 = vld [vmem:[#allocation14] sm:$0xff]
    %v4077 = vld [vmem:[#allocation14 + $0x8] sm:$0xff]
    %v4078 = vld [vmem:[#allocation14 + $0x10] sm:$0xff]
    %v4079 = vld [vmem:[#allocation14 + $0x18] sm:$0xff]
    %v4080 = vld [vmem:[#allocation14 + $0x20] sm:$0xff]
    %v4081 = vld [vmem:[#allocation14 + $0x28] sm:$0xff]
    %v4082 = vld [vmem:[#allocation14 + $0x30] sm:$0xff]
    %v4083 = vld [vmem:[#allocation14 + $0x38] sm:$0xff]
    %v4084 = vld [vmem:[#allocation14 + $0x40] sm:$0xff]
    %v4085 = vld [vmem:[#allocation14 + $0x48] sm:$0xff]
    %v4086 = vld [vmem:[#allocation14 + $0x50] sm:$0xff]
    %v4087 = vld [vmem:[#allocation14 + $0x58] sm:$0xff]
    %v4088 = vld [vmem:[#allocation14 + $0x60] sm:$0xff]
    %v4089 = vld [vmem:[#allocation14 + $0x68] sm:$0xff]
    %v4090 = vld [vmem:[#allocation14 + $0x70] sm:$0xff]
    %v4091 = vld [vmem:[#allocation14 + $0x78] sm:$0xff]
    %v4093 = vsel %vm284, %v4072, 0
    %4095 = vmatprep.subr.mxu0 0.0
    %4096 = vmatpush1.msra.mxu0 0.0
    %4097 = vmatprep.subr.mxu0 0.0
    %4098 = vmatpush1.msra.mxu0 0.0
    %4099 = vmatprep.subr.mxu0 0.0
    %4100 = vmatpush1.msra.mxu0 0.0
    %4101 = vmatprep.subr.mxu0 0.0
    %4102 = vmatpush1.msra.mxu0 0.0
    %4103 = vmatprep.subr.mxu0 0.0
    %4104 = vmatpush1.msra.mxu0 0.0
    %4105 = vmatprep.subr.mxu0 0.0
    %4106 = vmatpush1.msra.mxu0 0.0
    %4107 = vmatprep.subr.mxu0 0.0
    %4108 = vmatpush1.msra.mxu0 0.0
    %4109 = vmatprep.subr.mxu0 0.0
    %4110 = vmatpush1.msra.mxu0 0.0
    %4111 = vmatprep.subr.mxu0 %v4091
    %4112 = vmatpush1.msra.mxu0 %v4090
    %4113 = vmatprep.subr.mxu0 %v4089
    %4114 = vmatpush1.msra.mxu0 %v4088
    %4115 = vmatprep.subr.mxu0 %v4087
    %4116 = vmatpush1.msra.mxu0 %v4086
    %4117 = vmatprep.subr.mxu0 %v4085
    %4118 = vmatpush1.msra.mxu0 %v4084
    %4119 = vmatprep.subr.mxu0 %v4083
    %4120 = vmatpush1.msra.mxu0 %v4082
    %4121 = vmatprep.subr.mxu0 %v4081
    %4122 = vmatpush1.msra.mxu0 %v4080
    %4123 = vmatprep.subr.mxu0 %v4079
    %4124 = vmatpush1.msra.mxu0 %v4078
    %4125 = vmatprep.subr.mxu0 %v4077
    %4126 = vmatpush1.msra.mxu0 %v4076
    %4127 = vmatprep.subr.mxu0 0.0
    %4128 = vmatpush2.msra.mxu0 0.0
    %4129 = vmatprep.subr.mxu0 0.0
    %4130 = vmatpush2.msra.mxu0 0.0
    %4131 = vmatprep.subr.mxu0 0.0
    %4132 = vmatpush2.msra.mxu0 0.0
    %4133 = vmatprep.subr.mxu0 0.0
    %4134 = vmatpush2.msra.mxu0 0.0
    %4135 = vmatprep.subr.mxu0 0.0
    %4136 = vmatpush2.msra.mxu0 0.0
    %4137 = vmatprep.subr.mxu0 0.0
    %4138 = vmatpush2.msra.mxu0 0.0
    %4139 = vmatprep.subr.mxu0 0.0
    %4140 = vmatpush2.msra.mxu0 0.0
    %4141 = vmatprep.subr.mxu0 0.0
    %4142 = vmatpush2.msra.mxu0 0.0
    %4143 = vmatprep.subr.mxu0 0.0
    %4144 = vmatpush2.msra.mxu0 0.0
    %4145 = vmatprep.subr.mxu0 0.0
    %4146 = vmatpush2.msra.mxu0 0.0
    %4147 = vmatprep.subr.mxu0 0.0
    %4148 = vmatpush2.msra.mxu0 0.0
    %4149 = vmatprep.subr.mxu0 0.0
    %4150 = vmatpush2.msra.mxu0 0.0
    %4151 = vmatprep.subr.mxu0 0.0
    %4152 = vmatpush2.msra.mxu0 0.0
    %4153 = vmatprep.subr.mxu0 0.0
    %4154 = vmatpush2.msra.mxu0 0.0
    %4155 = vmatprep.subr.mxu0 0.0
    %4156 = vmatpush2.msra.mxu0 0.0
    %4157 = vmatprep.subr.mxu0 0.0
    %4158 = vmatpush2.msra.mxu0 0.0
    %4159 = vmatprep.mubr.f32.mxu0 0.0
    %4160 = vmatmul.mubr.f32.gmra.mxu0 %v4093
    %v4161 = vpop.f32.mrf.mxu0
    %v4162 = vadd.f32 0.0, %v4161
    %v4163 = vpop.f32.mrf.mxu0
    %v4164 = vadd.f32 0.0, %v4163
    %4165 = vdwg.mxu0
    %v4167 = vsel %vm284, %v4075, 0
    %4169 = vmatprep.subr.mxu0 0.0
    %4170 = vmatpush1.msra.mxu0 0.0
    %4171 = vmatprep.subr.mxu0 0.0
    %4172 = vmatpush1.msra.mxu0 0.0
    %4173 = vmatprep.subr.mxu0 0.0
    %4174 = vmatpush1.msra.mxu0 0.0
    %4175 = vmatprep.subr.mxu0 0.0
    %4176 = vmatpush1.msra.mxu0 0.0
    %4177 = vmatprep.subr.mxu0 0.0
    %4178 = vmatpush1.msra.mxu0 0.0
    %4179 = vmatprep.subr.mxu0 0.0
    %4180 = vmatpush1.msra.mxu0 0.0
    %4181 = vmatprep.subr.mxu0 0.0
    %4182 = vmatpush1.msra.mxu0 0.0
    %4183 = vmatprep.subr.mxu0 0.0
    %4184 = vmatpush1.msra.mxu0 0.0
    %4185 = vmatprep.subr.mxu0 %v4091
    %4186 = vmatpush1.msra.mxu0 %v4090
    %4187 = vmatprep.subr.mxu0 %v4089
    %4188 = vmatpush1.msra.mxu0 %v4088
    %4189 = vmatprep.subr.mxu0 %v4087
    %4190 = vmatpush1.msra.mxu0 %v4086
    %4191 = vmatprep.subr.mxu0 %v4085
    %4192 = vmatpush1.msra.mxu0 %v4084
    %4193 = vmatprep.subr.mxu0 %v4083
    %4194 = vmatpush1.msra.mxu0 %v4082
    %4195 = vmatprep.subr.mxu0 %v4081
    %4196 = vmatpush1.msra.mxu0 %v4080
    %4197 = vmatprep.subr.mxu0 %v4079
    %4198 = vmatpush1.msra.mxu0 %v4078
    %4199 = vmatprep.subr.mxu0 %v4077
    %4200 = vmatpush1.msra.mxu0 %v4076
    %4201 = vmatprep.subr.mxu0 0.0
    %4202 = vmatpush2.msra.mxu0 0.0
    %4203 = vmatprep.subr.mxu0 0.0
    %4204 = vmatpush2.msra.mxu0 0.0
    %4205 = vmatprep.subr.mxu0 0.0
    %4206 = vmatpush2.msra.mxu0 0.0
    %4207 = vmatprep.subr.mxu0 0.0
    %4208 = vmatpush2.msra.mxu0 0.0
    %4209 = vmatprep.subr.mxu0 0.0
    %4210 = vmatpush2.msra.mxu0 0.0
    %4211 = vmatprep.subr.mxu0 0.0
    %4212 = vmatpush2.msra.mxu0 0.0
    %4213 = vmatprep.subr.mxu0 0.0
    %4214 = vmatpush2.msra.mxu0 0.0
    %4215 = vmatprep.subr.mxu0 0.0
    %4216 = vmatpush2.msra.mxu0 0.0
    %4217 = vmatprep.subr.mxu0 0.0
    %4218 = vmatpush2.msra.mxu0 0.0
    %4219 = vmatprep.subr.mxu0 0.0
    %4220 = vmatpush2.msra.mxu0 0.0
    %4221 = vmatprep.subr.mxu0 0.0
    %4222 = vmatpush2.msra.mxu0 0.0
    %4223 = vmatprep.subr.mxu0 0.0
    %4224 = vmatpush2.msra.mxu0 0.0
    %4225 = vmatprep.subr.mxu0 0.0
    %4226 = vmatpush2.msra.mxu0 0.0
    %4227 = vmatprep.subr.mxu0 0.0
    %4228 = vmatpush2.msra.mxu0 0.0
    %4229 = vmatprep.subr.mxu0 0.0
    %4230 = vmatpush2.msra.mxu0 0.0
    %4231 = vmatprep.subr.mxu0 0.0
    %4232 = vmatpush2.msra.mxu0 0.0
    %4233 = vmatprep.mubr.f32.mxu0 0.0
    %4234 = vmatmul.mubr.f32.gmra.mxu0 %v4167
    %v4235 = vpop.f32.mrf.mxu0
    %v4236 = vadd.f32 0.0, %v4235
    %v4237 = vpop.f32.mrf.mxu0
    %v4238 = vadd.f32 0.0, %v4237
    %4239 = vdwg.mxu0
    %v4240 = vlaneseq
    %v4241 = vshrl.u32 %v4240, 7
    %v4242 = vsub.s32 0, %v4241
    %v4243 = vrot.slane %v4162, %v4242
    %v4244 = vlaneseq
    %v4245 = vshrl.u32 %v4244, 7
    %v4246 = vsub.s32 0, %v4245
    %v4247 = vrot.slane %v4164, %v4246
    %v4248 = vmul.f32 %v3864, %v4243
    %v4249 = vmul.f32 %v3865, %v4247
    %v4250 = vlaneseq
    %v4251 = vshrl.u32 %v4250, 7
    %v4252 = vsub.s32 0, %v4251
    %v4253 = vrot.slane %v4236, %v4252
    %v4254 = vlaneseq
    %v4255 = vshrl.u32 %v4254, 7
    %v4256 = vsub.s32 0, %v4255
    %v4257 = vrot.slane %v4238, %v4256
    %v4258 = vadd.f32 %v4248, %v4253
    %v4259 = vadd.f32 %v4249, %v4257
    %vm4260 = vcmp.ge.f32.partialorder %v4258, 0.0
    %vm4261 = vcmp.ge.f32.partialorder %v4259, 0.0
    %v4262 = vmul.f32 %v4258, 0.2
    %v4263 = vmul.f32 %v4259, 0.2
    %v4264 = vsel %vm4260, %v4258, %v4262
    %v4265 = vsel %vm4261, %v4259, %v4263
    %v4266 = vpack.c.bf16 %v4264, %v4264
    %v4267 = vpack.c.bf16 %v4265, %v4265
    %v4268 = vld [vmem:[#allocation16] sm:$0x7]
    %vm4269 = vcmask 64512
    %v4271 = vsel %vm4269, %v4268, 0
    %vm4273 = vcmask 1043456
    %v4275 = vsel %vm4273, %v4266, 0
    %v4278 = vsel %vm4273, %v4267, 0
    %4280 = vmatprep.subr.bf16.mxu0 0
    %4281 = vmatpush1.bf16.msra.mxu0 0
    %4282 = vmatprep.subr.bf16.mxu0 0
    %4283 = vmatpush1.bf16.msra.mxu0 0
    %4284 = vmatprep.subr.bf16.mxu0 0
    %4285 = vmatpush1.bf16.msra.mxu0 0
    %4286 = vmatprep.subr.bf16.mxu0 0
    %4287 = vmatpush1.bf16.msra.mxu0 0
    %4288 = vmatprep.subr.bf16.mxu0 0
    %4289 = vmatpush1.bf16.msra.mxu0 0
    %4290 = vmatprep.subr.bf16.mxu0 0
    %4291 = vmatpush1.bf16.msra.mxu0 0
    %4292 = vmatprep.subr.bf16.mxu0 0
    %4293 = vmatpush1.bf16.msra.mxu0 0
    %4294 = vmatprep.subr.bf16.mxu0 %v4278
    %4295 = vmatpush1.bf16.msra.mxu0 %v4275
    %4296 = vmatprep.subr.bf16.mxu0 0
    %4297 = vmatpush2.bf16.msra.mxu0 0
    %4298 = vmatprep.subr.bf16.mxu0 0
    %4299 = vmatpush2.bf16.msra.mxu0 0
    %4300 = vmatprep.subr.bf16.mxu0 0
    %4301 = vmatpush2.bf16.msra.mxu0 0
    %4302 = vmatprep.subr.bf16.mxu0 0
    %4303 = vmatpush2.bf16.msra.mxu0 0
    %4304 = vmatprep.subr.bf16.mxu0 0
    %4305 = vmatpush2.bf16.msra.mxu0 0
    %4306 = vmatprep.subr.bf16.mxu0 0
    %4307 = vmatpush2.bf16.msra.mxu0 0
    %4308 = vmatprep.subr.bf16.mxu0 0
    %4309 = vmatpush2.bf16.msra.mxu0 0
    %4310 = vmatprep.subr.bf16.mxu0 0
    %4311 = vmatpush2.bf16.msra.mxu0 0
    %4312 = vmatprep.mubr.bf16.mxu0 0
    %4313 = vmatmul.mubr.bf16.gmra.mxu0 %v4271
    %v4314 = vpop.f32.mrf.mxu0
    %v4315 = vadd.f32 0.0, %v4314
    %v4316 = vpop.f32.mrf.mxu0
    %v4317 = vadd.f32 0.0, %v4316
    %v4318 = vpop.f32.mrf.mxu0
    %v4319 = vpop.f32.mrf.mxu0
    %4320 = vdwg.mxu0
    %v4321 = vpack.c.bf16 %v4315, %v4315
    %v4322 = vpack.c.bf16 %v4317, %v4317
    %v4323 = vld [vmem:[#allocation17] sm:$0xff]
    %v4324 = vld [vmem:[#allocation17 + $0x8] sm:$0xf]
    %v4325 = vld [vmem:[#allocation17 + $0xc] sm:$0xff]
    %v4326 = vld [vmem:[#allocation17 + $0x14] sm:$0xf]
    %v4327 = vld [vmem:[#allocation17 + $0x18] sm:$0xff]
    %v4328 = vld [vmem:[#allocation17 + $0x20] sm:$0xf]
    %v4329 = vld [vmem:[#allocation17 + $0x24] sm:$0xff]
    %v4330 = vld [vmem:[#allocation17 + $0x2c] sm:$0xf]
    %v4331 = vld [vmem:[#allocation17 + $0x30] sm:$0xff]
    %v4332 = vld [vmem:[#allocation17 + $0x38] sm:$0xf]
    %v4333 = vld [vmem:[#allocation17 + $0x3c] sm:$0xff]
    %v4334 = vld [vmem:[#allocation17 + $0x44] sm:$0xf]
    %v4335 = vld [vmem:[#allocation17 + $0x48] sm:$0xff]
    %v4336 = vld [vmem:[#allocation17 + $0x50] sm:$0xf]
    %v4337 = vld [vmem:[#allocation17 + $0x54] sm:$0xff]
    %v4338 = vld [vmem:[#allocation17 + $0x5c] sm:$0xf]
    %v4339 = vld [vmem:[#allocation17 + $0x60] sm:$0xff]
    %v4340 = vld [vmem:[#allocation17 + $0x68] sm:$0xf]
    %v4341 = vld [vmem:[#allocation17 + $0x6c] sm:$0xff]
    %v4342 = vld [vmem:[#allocation17 + $0x74] sm:$0xf]
    %v4343 = vld [vmem:[#allocation17 + $0x78] sm:$0xff]
    %v4344 = vld [vmem:[#allocation17 + $0x80] sm:$0xf]
    %v4345 = vld [vmem:[#allocation17 + $0x84] sm:$0xff]
    %v4346 = vld [vmem:[#allocation17 + $0x8c] sm:$0xf]
    %v4347 = vld [vmem:[#allocation17 + $0x90] sm:$0xff]
    %v4348 = vld [vmem:[#allocation17 + $0x98] sm:$0xf]
    %v4349 = vld [vmem:[#allocation17 + $0x9c] sm:$0xff]
    %v4350 = vld [vmem:[#allocation17 + $0xa4] sm:$0xf]
    %v4351 = vld [vmem:[#allocation17 + $0xa8] sm:$0xff]
    %v4352 = vld [vmem:[#allocation17 + $0xb0] sm:$0xf]
    %v4353 = vld [vmem:[#allocation17 + $0xb4] sm:$0xff]
    %v4354 = vld [vmem:[#allocation17 + $0xbc] sm:$0xf]
    %v4355 = vld [vmem:[#allocation17 + $0xc0] sm:$0xff]
    %v4356 = vld [vmem:[#allocation17 + $0xc8] sm:$0xf]
    %v4357 = vld [vmem:[#allocation17 + $0xcc] sm:$0xff]
    %v4358 = vld [vmem:[#allocation17 + $0xd4] sm:$0xf]
    %v4359 = vld [vmem:[#allocation17 + $0xd8] sm:$0xff]
    %v4360 = vld [vmem:[#allocation17 + $0xe0] sm:$0xf]
    %v4361 = vld [vmem:[#allocation17 + $0xe4] sm:$0xff]
    %v4362 = vld [vmem:[#allocation17 + $0xec] sm:$0xf]
    %v4363 = vld [vmem:[#allocation17 + $0xf0] sm:$0xff]
    %v4364 = vld [vmem:[#allocation17 + $0xf8] sm:$0xf]
    %v4365 = vld [vmem:[#allocation17 + $0xfc] sm:$0xff]
    %v4366 = vld [vmem:[#allocation17 + $0x104] sm:$0xf]
    %v4367 = vld [vmem:[#allocation17 + $0x108] sm:$0xff]
    %v4368 = vld [vmem:[#allocation17 + $0x110] sm:$0xf]
    %v4369 = vld [vmem:[#allocation17 + $0x114] sm:$0xff]
    %v4370 = vld [vmem:[#allocation17 + $0x11c] sm:$0xf]
    %v4371 = vld [vmem:[#allocation17 + $0x120] sm:$0xff]
    %v4372 = vld [vmem:[#allocation17 + $0x128] sm:$0xf]
    %v4373 = vld [vmem:[#allocation17 + $0x12c] sm:$0xff]
    %v4374 = vld [vmem:[#allocation17 + $0x134] sm:$0xf]
    %v4375 = vld [vmem:[#allocation17 + $0x138] sm:$0xff]
    %v4376 = vld [vmem:[#allocation17 + $0x140] sm:$0xf]
    %v4377 = vld [vmem:[#allocation17 + $0x144] sm:$0xff]
    %v4378 = vld [vmem:[#allocation17 + $0x14c] sm:$0xf]
    %v4379 = vld [vmem:[#allocation17 + $0x150] sm:$0xff]
    %v4380 = vld [vmem:[#allocation17 + $0x158] sm:$0xf]
    %v4381 = vld [vmem:[#allocation17 + $0x15c] sm:$0xff]
    %v4382 = vld [vmem:[#allocation17 + $0x164] sm:$0xf]
    %v4383 = vld [vmem:[#allocation17 + $0x168] sm:$0xff]
    %v4384 = vld [vmem:[#allocation17 + $0x170] sm:$0xf]
    %v4385 = vld [vmem:[#allocation17 + $0x174] sm:$0xff]
    %v4386 = vld [vmem:[#allocation17 + $0x17c] sm:$0xf]
    %s4387 = scalar_lea.vmem [#allocation16], 4
    %v4388 = vld [vmem:[%s4387] sm:$0x7]
    %v4390 = vsel %vm4269, %v4388, 0
    %4392 = vmatprep.subr.bf16.mxu0 0
    %4393 = vmatpush1.bf16.msra.mxu0 0
    %4394 = vmatprep.subr.bf16.mxu0 0
    %4395 = vmatpush1.bf16.msra.mxu0 0
    %4396 = vmatprep.subr.bf16.mxu0 0
    %4397 = vmatpush1.bf16.msra.mxu0 0
    %4398 = vmatprep.subr.bf16.mxu0 0
    %4399 = vmatpush1.bf16.msra.mxu0 0
    %4400 = vmatprep.subr.bf16.mxu0 0
    %4401 = vmatpush1.bf16.msra.mxu0 0
    %4402 = vmatprep.subr.bf16.mxu0 0
    %4403 = vmatpush1.bf16.msra.mxu0 0
    %4404 = vmatprep.subr.bf16.mxu0 0
    %4405 = vmatpush1.bf16.msra.mxu0 0
    %4406 = vmatprep.subr.bf16.mxu0 %v4278
    %4407 = vmatpush1.bf16.msra.mxu0 %v4275
    %4408 = vmatprep.subr.bf16.mxu0 0
    %4409 = vmatpush2.bf16.msra.mxu0 0
    %4410 = vmatprep.subr.bf16.mxu0 0
    %4411 = vmatpush2.bf16.msra.mxu0 0
    %4412 = vmatprep.subr.bf16.mxu0 0
    %4413 = vmatpush2.bf16.msra.mxu0 0
    %4414 = vmatprep.subr.bf16.mxu0 0
    %4415 = vmatpush2.bf16.msra.mxu0 0
    %4416 = vmatprep.subr.bf16.mxu0 0
    %4417 = vmatpush2.bf16.msra.mxu0 0
    %4418 = vmatprep.subr.bf16.mxu0 0
    %4419 = vmatpush2.bf16.msra.mxu0 0
    %4420 = vmatprep.subr.bf16.mxu0 0
    %4421 = vmatpush2.bf16.msra.mxu0 0
    %4422 = vmatprep.subr.bf16.mxu0 0
    %4423 = vmatpush2.bf16.msra.mxu0 0
    %4424 = vmatprep.mubr.bf16.mxu0 0
    %4425 = vmatmul.mubr.bf16.gmra.mxu0 %v4390
    %v4426 = vpop.f32.mrf.mxu0
    %v4427 = vadd.f32 0.0, %v4426
    %v4428 = vpop.f32.mrf.mxu0
    %v4429 = vadd.f32 0.0, %v4428
    %v4430 = vpop.f32.mrf.mxu0
    %v4431 = vpop.f32.mrf.mxu0
    %4432 = vdwg.mxu0
    %v4433 = vpack.c.bf16 %v4427, %v4427
    %v4434 = vpack.c.bf16 %v4429, %v4429
    %s4435 = scalar_lea.vmem [#allocation17], 384
    %v4436 = vld [vmem:[%s4435] sm:$0xff]
    %v4437 = vld [vmem:[%s4435 + $0x8] sm:$0xf]
    %v4438 = vld [vmem:[%s4435 + $0xc] sm:$0xff]
    %v4439 = vld [vmem:[%s4435 + $0x14] sm:$0xf]
    %v4440 = vld [vmem:[%s4435 + $0x18] sm:$0xff]
    %v4441 = vld [vmem:[%s4435 + $0x20] sm:$0xf]
    %v4442 = vld [vmem:[%s4435 + $0x24] sm:$0xff]
    %v4443 = vld [vmem:[%s4435 + $0x2c] sm:$0xf]
    %v4444 = vld [vmem:[%s4435 + $0x30] sm:$0xff]
    %v4445 = vld [vmem:[%s4435 + $0x38] sm:$0xf]
    %v4446 = vld [vmem:[%s4435 + $0x3c] sm:$0xff]
    %v4447 = vld [vmem:[%s4435 + $0x44] sm:$0xf]
    %v4448 = vld [vmem:[%s4435 + $0x48] sm:$0xff]
    %v4449 = vld [vmem:[%s4435 + $0x50] sm:$0xf]
    %v4450 = vld [vmem:[%s4435 + $0x54] sm:$0xff]
    %v4451 = vld [vmem:[%s4435 + $0x5c] sm:$0xf]
    %v4452 = vld [vmem:[%s4435 + $0x60] sm:$0xff]
    %v4453 = vld [vmem:[%s4435 + $0x68] sm:$0xf]
    %v4454 = vld [vmem:[%s4435 + $0x6c] sm:$0xff]
    %v4455 = vld [vmem:[%s4435 + $0x74] sm:$0xf]
    %v4456 = vld [vmem:[%s4435 + $0x78] sm:$0xff]
    %v4457 = vld [vmem:[%s4435 + $0x80] sm:$0xf]
    %v4458 = vld [vmem:[%s4435 + $0x84] sm:$0xff]
    %v4459 = vld [vmem:[%s4435 + $0x8c] sm:$0xf]
    %v4460 = vld [vmem:[%s4435 + $0x90] sm:$0xff]
    %v4461 = vld [vmem:[%s4435 + $0x98] sm:$0xf]
    %v4462 = vld [vmem:[%s4435 + $0x9c] sm:$0xff]
    %v4463 = vld [vmem:[%s4435 + $0xa4] sm:$0xf]
    %v4464 = vld [vmem:[%s4435 + $0xa8] sm:$0xff]
    %v4465 = vld [vmem:[%s4435 + $0xb0] sm:$0xf]
    %v4466 = vld [vmem:[%s4435 + $0xb4] sm:$0xff]
    %v4467 = vld [vmem:[%s4435 + $0xbc] sm:$0xf]
    %v4468 = vld [vmem:[%s4435 + $0xc0] sm:$0xff]
    %v4469 = vld [vmem:[%s4435 + $0xc8] sm:$0xf]
    %v4470 = vld [vmem:[%s4435 + $0xcc] sm:$0xff]
    %v4471 = vld [vmem:[%s4435 + $0xd4] sm:$0xf]
    %v4472 = vld [vmem:[%s4435 + $0xd8] sm:$0xff]
    %v4473 = vld [vmem:[%s4435 + $0xe0] sm:$0xf]
    %v4474 = vld [vmem:[%s4435 + $0xe4] sm:$0xff]
    %v4475 = vld [vmem:[%s4435 + $0xec] sm:$0xf]
    %v4476 = vld [vmem:[%s4435 + $0xf0] sm:$0xff]
    %v4477 = vld [vmem:[%s4435 + $0xf8] sm:$0xf]
    %v4478 = vld [vmem:[%s4435 + $0xfc] sm:$0xff]
    %v4479 = vld [vmem:[%s4435 + $0x104] sm:$0xf]
    %v4480 = vld [vmem:[%s4435 + $0x108] sm:$0xff]
    %v4481 = vld [vmem:[%s4435 + $0x110] sm:$0xf]
    %v4482 = vld [vmem:[%s4435 + $0x114] sm:$0xff]
    %v4483 = vld [vmem:[%s4435 + $0x11c] sm:$0xf]
    %v4484 = vld [vmem:[%s4435 + $0x120] sm:$0xff]
    %v4485 = vld [vmem:[%s4435 + $0x128] sm:$0xf]
    %v4486 = vld [vmem:[%s4435 + $0x12c] sm:$0xff]
    %v4487 = vld [vmem:[%s4435 + $0x134] sm:$0xf]
    %v4488 = vld [vmem:[%s4435 + $0x138] sm:$0xff]
    %v4489 = vld [vmem:[%s4435 + $0x140] sm:$0xf]
    %v4490 = vld [vmem:[%s4435 + $0x144] sm:$0xff]
    %v4491 = vld [vmem:[%s4435 + $0x14c] sm:$0xf]
    %v4492 = vld [vmem:[%s4435 + $0x150] sm:$0xff]
    %v4493 = vld [vmem:[%s4435 + $0x158] sm:$0xf]
    %v4494 = vld [vmem:[%s4435 + $0x15c] sm:$0xff]
    %v4495 = vld [vmem:[%s4435 + $0x164] sm:$0xf]
    %v4496 = vld [vmem:[%s4435 + $0x168] sm:$0xff]
    %v4497 = vld [vmem:[%s4435 + $0x170] sm:$0xf]
    %v4498 = vld [vmem:[%s4435 + $0x174] sm:$0xff]
    %v4499 = vld [vmem:[%s4435 + $0x17c] sm:$0xf]
    %v4564 = vunpack.c.l.b16 %v4436
    %v4565 = vunpack.c.h.b16 %v4436
    %v4566 = vunpack.c.l.b16 %v4437
    %v4567 = vunpack.c.l.b16 %v4438
    %v4568 = vunpack.c.h.b16 %v4438
    %v4569 = vunpack.c.l.b16 %v4439
    %v4570 = vunpack.c.l.b16 %v4440
    %v4571 = vunpack.c.h.b16 %v4440
    %v4572 = vunpack.c.l.b16 %v4441
    %v4573 = vunpack.c.l.b16 %v4442
    %v4574 = vunpack.c.h.b16 %v4442
    %v4575 = vunpack.c.l.b16 %v4443
    %v4576 = vunpack.c.l.b16 %v4444
    %v4577 = vunpack.c.h.b16 %v4444
    %v4578 = vunpack.c.l.b16 %v4445
    %v4579 = vunpack.c.l.b16 %v4446
    %v4580 = vunpack.c.h.b16 %v4446
    %v4581 = vunpack.c.l.b16 %v4447
    %v4582 = vunpack.c.l.b16 %v4448
    %v4583 = vunpack.c.h.b16 %v4448
    %v4584 = vunpack.c.l.b16 %v4449
    %v4585 = vunpack.c.l.b16 %v4450
    %v4586 = vunpack.c.h.b16 %v4450
    %v4587 = vunpack.c.l.b16 %v4451
    %v4588 = vunpack.c.l.b16 %v4452
    %v4589 = vunpack.c.h.b16 %v4452
    %v4590 = vunpack.c.l.b16 %v4453
    %v4591 = vunpack.c.l.b16 %v4454
    %v4592 = vunpack.c.h.b16 %v4454
    %v4593 = vunpack.c.l.b16 %v4455
    %v4594 = vunpack.c.l.b16 %v4456
    %v4595 = vunpack.c.h.b16 %v4456
    %v4596 = vunpack.c.l.b16 %v4457
    %v4597 = vunpack.c.l.b16 %v4458
    %v4598 = vunpack.c.h.b16 %v4458
    %v4599 = vunpack.c.l.b16 %v4459
    %v4600 = vunpack.c.l.b16 %v4460
    %v4601 = vunpack.c.h.b16 %v4460
    %v4602 = vunpack.c.l.b16 %v4461
    %v4603 = vunpack.c.l.b16 %v4462
    %v4604 = vunpack.c.h.b16 %v4462
    %v4605 = vunpack.c.l.b16 %v4463
    %v4606 = vunpack.c.l.b16 %v4464
    %v4607 = vunpack.c.h.b16 %v4464
    %v4608 = vunpack.c.l.b16 %v4465
    %v4609 = vunpack.c.l.b16 %v4466
    %v4610 = vunpack.c.h.b16 %v4466
    %v4611 = vunpack.c.l.b16 %v4467
    %v4612 = vunpack.c.l.b16 %v4468
    %v4613 = vunpack.c.h.b16 %v4468
    %v4614 = vunpack.c.l.b16 %v4469
    %v4615 = vunpack.c.l.b16 %v4470
    %v4616 = vunpack.c.h.b16 %v4470
    %v4617 = vunpack.c.l.b16 %v4471
    %v4618 = vunpack.c.l.b16 %v4472
    %v4619 = vunpack.c.h.b16 %v4472
    %v4620 = vunpack.c.l.b16 %v4473
    %v4621 = vunpack.c.l.b16 %v4474
    %v4622 = vunpack.c.h.b16 %v4474
    %v4623 = vunpack.c.l.b16 %v4475
    %v4624 = vunpack.c.l.b16 %v4476
    %v4625 = vunpack.c.h.b16 %v4476
    %v4626 = vunpack.c.l.b16 %v4477
    %v4627 = vunpack.c.l.b16 %v4478
    %v4628 = vunpack.c.h.b16 %v4478
    %v4629 = vunpack.c.l.b16 %v4479
    %v4630 = vunpack.c.l.b16 %v4480
    %v4631 = vunpack.c.h.b16 %v4480
    %v4632 = vunpack.c.l.b16 %v4481
    %v4633 = vunpack.c.l.b16 %v4482
    %v4634 = vunpack.c.h.b16 %v4482
    %v4635 = vunpack.c.l.b16 %v4483
    %v4636 = vunpack.c.l.b16 %v4484
    %v4637 = vunpack.c.h.b16 %v4484
    %v4638 = vunpack.c.l.b16 %v4485
    %v4639 = vunpack.c.l.b16 %v4486
    %v4640 = vunpack.c.h.b16 %v4486
    %v4641 = vunpack.c.l.b16 %v4487
    %v4642 = vunpack.c.l.b16 %v4488
    %v4643 = vunpack.c.h.b16 %v4488
    %v4644 = vunpack.c.l.b16 %v4489
    %v4645 = vunpack.c.l.b16 %v4490
    %v4646 = vunpack.c.h.b16 %v4490
    %v4647 = vunpack.c.l.b16 %v4491
    %v4648 = vunpack.c.l.b16 %v4492
    %v4649 = vunpack.c.h.b16 %v4492
    %v4650 = vunpack.c.l.b16 %v4493
    %v4651 = vunpack.c.l.b16 %v4494
    %v4652 = vunpack.c.h.b16 %v4494
    %v4653 = vunpack.c.l.b16 %v4495
    %v4654 = vunpack.c.l.b16 %v4496
    %v4655 = vunpack.c.h.b16 %v4496
    %v4656 = vunpack.c.l.b16 %v4497
    %v4657 = vunpack.c.l.b16 %v4498
    %v4658 = vunpack.c.h.b16 %v4498
    %v4659 = vunpack.c.l.b16 %v4499
    %v4660 = vpack.c.b16 %v4567, %v4564
    %v4661 = vpack.c.b16 %v4568, %v4565
    %v4662 = vpack.c.b16 %v4569, %v4566
    %v4663 = vpack.c.b16 %v4573, %v4570
    %v4664 = vpack.c.b16 %v4574, %v4571
    %v4665 = vpack.c.b16 %v4575, %v4572
    %v4666 = vpack.c.b16 %v4579, %v4576
    %v4667 = vpack.c.b16 %v4580, %v4577
    %v4668 = vpack.c.b16 %v4581, %v4578
    %v4669 = vpack.c.b16 %v4585, %v4582
    %v4670 = vpack.c.b16 %v4586, %v4583
    %v4671 = vpack.c.b16 %v4587, %v4584
    %v4672 = vpack.c.b16 %v4591, %v4588
    %v4673 = vpack.c.b16 %v4592, %v4589
    %v4674 = vpack.c.b16 %v4593, %v4590
    %v4675 = vpack.c.b16 %v4597, %v4594
    %v4676 = vpack.c.b16 %v4598, %v4595
    %v4677 = vpack.c.b16 %v4599, %v4596
    %v4678 = vpack.c.b16 %v4603, %v4600
    %v4679 = vpack.c.b16 %v4604, %v4601
    %v4680 = vpack.c.b16 %v4605, %v4602
    %v4681 = vpack.c.b16 %v4609, %v4606
    %v4682 = vpack.c.b16 %v4610, %v4607
    %v4683 = vpack.c.b16 %v4611, %v4608
    %v4684 = vpack.c.b16 %v4615, %v4612
    %v4685 = vpack.c.b16 %v4616, %v4613
    %v4686 = vpack.c.b16 %v4617, %v4614
    %v4687 = vpack.c.b16 %v4621, %v4618
    %v4688 = vpack.c.b16 %v4622, %v4619
    %v4689 = vpack.c.b16 %v4623, %v4620
    %v4690 = vpack.c.b16 %v4627, %v4624
    %v4691 = vpack.c.b16 %v4628, %v4625
    %v4692 = vpack.c.b16 %v4629, %v4626
    %v4693 = vpack.c.b16 %v4633, %v4630
    %v4694 = vpack.c.b16 %v4634, %v4631
    %v4695 = vpack.c.b16 %v4635, %v4632
    %v4696 = vpack.c.b16 %v4639, %v4636
    %v4697 = vpack.c.b16 %v4640, %v4637
    %v4698 = vpack.c.b16 %v4641, %v4638
    %v4699 = vpack.c.b16 %v4645, %v4642
    %v4700 = vpack.c.b16 %v4646, %v4643
    %v4701 = vpack.c.b16 %v4647, %v4644
    %v4702 = vpack.c.b16 %v4651, %v4648
    %v4703 = vpack.c.b16 %v4652, %v4649
    %v4704 = vpack.c.b16 %v4653, %v4650
    %v4705 = vpack.c.b16 %v4657, %v4654
    %v4706 = vpack.c.b16 %v4658, %v4655
    %v4707 = vpack.c.b16 %v4659, %v4656
    %4756 = vmatprep.subr.bf16.mxu0 %v4682
    %4757 = vmatpush1.bf16.msra.mxu0 %v4681
    %4758 = vmatprep.subr.bf16.mxu0 %v4679
    %4759 = vmatpush1.bf16.msra.mxu0 %v4678
    %4760 = vmatprep.subr.bf16.mxu0 %v4676
    %4761 = vmatpush1.bf16.msra.mxu0 %v4675
    %4762 = vmatprep.subr.bf16.mxu0 %v4673
    %4763 = vmatpush1.bf16.msra.mxu0 %v4672
    %4764 = vmatprep.subr.bf16.mxu0 %v4670
    %4765 = vmatpush1.bf16.msra.mxu0 %v4669
    %4766 = vmatprep.subr.bf16.mxu0 %v4667
    %4767 = vmatpush1.bf16.msra.mxu0 %v4666
    %4768 = vmatprep.subr.bf16.mxu0 %v4664
    %4769 = vmatpush1.bf16.msra.mxu0 %v4663
    %4770 = vmatprep.subr.bf16.mxu0 %v4661
    %4771 = vmatpush1.bf16.msra.mxu0 %v4660
    %4772 = vmatprep.subr.bf16.mxu0 %v4706
    %4773 = vmatpush2.bf16.msra.mxu0 %v4705
    %4774 = vmatprep.subr.bf16.mxu0 %v4703
    %4775 = vmatpush2.bf16.msra.mxu0 %v4702
    %4776 = vmatprep.subr.bf16.mxu0 %v4700
    %4777 = vmatpush2.bf16.msra.mxu0 %v4699
    %4778 = vmatprep.subr.bf16.mxu0 %v4697
    %4779 = vmatpush2.bf16.msra.mxu0 %v4696
    %4780 = vmatprep.subr.bf16.mxu0 %v4694
    %4781 = vmatpush2.bf16.msra.mxu0 %v4693
    %4782 = vmatprep.subr.bf16.mxu0 %v4691
    %4783 = vmatpush2.bf16.msra.mxu0 %v4690
    %4784 = vmatprep.subr.bf16.mxu0 %v4688
    %4785 = vmatpush2.bf16.msra.mxu0 %v4687
    %4786 = vmatprep.subr.bf16.mxu0 %v4685
    %4787 = vmatpush2.bf16.msra.mxu0 %v4684
    %4788 = vmatprep.mubr.bf16.mxu0 %v4434
    %4789 = vmatmul.mubr.bf16.gmra.mxu0 %v4433
    %v4790 = vpop.f32.mrf.mxu0
    %v4791 = vadd.f32 0.0, %v4790
    %v4792 = vpop.f32.mrf.mxu0
    %v4793 = vadd.f32 0.0, %v4792
    %v4794 = vpop.f32.mrf.mxu0
    %v4795 = vpop.f32.mrf.mxu0
    %4796 = vdwg.mxu0
    %4797 = vmatprep.subr.bf16.mxu0 0
    %4798 = vmatpush1.bf16.msra.mxu0 %v4683
    %4799 = vmatprep.subr.bf16.mxu0 0
    %4800 = vmatpush1.bf16.msra.mxu0 %v4680
    %4801 = vmatprep.subr.bf16.mxu0 0
    %4802 = vmatpush1.bf16.msra.mxu0 %v4677
    %4803 = vmatprep.subr.bf16.mxu0 0
    %4804 = vmatpush1.bf16.msra.mxu0 %v4674
    %4805 = vmatprep.subr.bf16.mxu0 0
    %4806 = vmatpush1.bf16.msra.mxu0 %v4671
    %4807 = vmatprep.subr.bf16.mxu0 0
    %4808 = vmatpush1.bf16.msra.mxu0 %v4668
    %4809 = vmatprep.subr.bf16.mxu0 0
    %4810 = vmatpush1.bf16.msra.mxu0 %v4665
    %4811 = vmatprep.subr.bf16.mxu0 0
    %4812 = vmatpush1.bf16.msra.mxu0 %v4662
    %4813 = vmatprep.subr.bf16.mxu0 0
    %4814 = vmatpush2.bf16.msra.mxu0 %v4707
    %4815 = vmatprep.subr.bf16.mxu0 0
    %4816 = vmatpush2.bf16.msra.mxu0 %v4704
    %4817 = vmatprep.subr.bf16.mxu0 0
    %4818 = vmatpush2.bf16.msra.mxu0 %v4701
    %4819 = vmatprep.subr.bf16.mxu0 0
    %4820 = vmatpush2.bf16.msra.mxu0 %v4698
    %4821 = vmatprep.subr.bf16.mxu0 0
    %4822 = vmatpush2.bf16.msra.mxu0 %v4695
    %4823 = vmatprep.subr.bf16.mxu0 0
    %4824 = vmatpush2.bf16.msra.mxu0 %v4692
    %4825 = vmatprep.subr.bf16.mxu0 0
    %4826 = vmatpush2.bf16.msra.mxu0 %v4689
    %4827 = vmatprep.subr.bf16.mxu0 0
    %4828 = vmatpush2.bf16.msra.mxu0 %v4686
    %4829 = vmatprep.mubr.bf16.mxu0 %v4434
    %4830 = vmatmul.mubr.bf16.gmra.mxu0 %v4433
    %v4831 = vpop.f32.mrf.mxu0
    %v4832 = vadd.f32 0.0, %v4831
    %v4833 = vpop.f32.mrf.mxu0
    %v4834 = vpop.f32.mrf.mxu0
    %v4835 = vpop.f32.mrf.mxu0
    %4836 = vdwg.mxu0
    %v4901 = vunpack.c.l.b16 %v4323
    %v4902 = vunpack.c.h.b16 %v4323
    %v4903 = vunpack.c.l.b16 %v4324
    %v4904 = vunpack.c.l.b16 %v4325
    %v4905 = vunpack.c.h.b16 %v4325
    %v4906 = vunpack.c.l.b16 %v4326
    %v4907 = vunpack.c.l.b16 %v4327
    %v4908 = vunpack.c.h.b16 %v4327
    %v4909 = vunpack.c.l.b16 %v4328
    %v4910 = vunpack.c.l.b16 %v4329
    %v4911 = vunpack.c.h.b16 %v4329
    %v4912 = vunpack.c.l.b16 %v4330
    %v4913 = vunpack.c.l.b16 %v4331
    %v4914 = vunpack.c.h.b16 %v4331
    %v4915 = vunpack.c.l.b16 %v4332
    %v4916 = vunpack.c.l.b16 %v4333
    %v4917 = vunpack.c.h.b16 %v4333
    %v4918 = vunpack.c.l.b16 %v4334
    %v4919 = vunpack.c.l.b16 %v4335
    %v4920 = vunpack.c.h.b16 %v4335
    %v4921 = vunpack.c.l.b16 %v4336
    %v4922 = vunpack.c.l.b16 %v4337
    %v4923 = vunpack.c.h.b16 %v4337
    %v4924 = vunpack.c.l.b16 %v4338
    %v4925 = vunpack.c.l.b16 %v4339
    %v4926 = vunpack.c.h.b16 %v4339
    %v4927 = vunpack.c.l.b16 %v4340
    %v4928 = vunpack.c.l.b16 %v4341
    %v4929 = vunpack.c.h.b16 %v4341
    %v4930 = vunpack.c.l.b16 %v4342
    %v4931 = vunpack.c.l.b16 %v4343
    %v4932 = vunpack.c.h.b16 %v4343
    %v4933 = vunpack.c.l.b16 %v4344
    %v4934 = vunpack.c.l.b16 %v4345
    %v4935 = vunpack.c.h.b16 %v4345
    %v4936 = vunpack.c.l.b16 %v4346
    %v4937 = vunpack.c.l.b16 %v4347
    %v4938 = vunpack.c.h.b16 %v4347
    %v4939 = vunpack.c.l.b16 %v4348
    %v4940 = vunpack.c.l.b16 %v4349
    %v4941 = vunpack.c.h.b16 %v4349
    %v4942 = vunpack.c.l.b16 %v4350
    %v4943 = vunpack.c.l.b16 %v4351
    %v4944 = vunpack.c.h.b16 %v4351
    %v4945 = vunpack.c.l.b16 %v4352
    %v4946 = vunpack.c.l.b16 %v4353
    %v4947 = vunpack.c.h.b16 %v4353
    %v4948 = vunpack.c.l.b16 %v4354
    %v4949 = vunpack.c.l.b16 %v4355
    %v4950 = vunpack.c.h.b16 %v4355
    %v4951 = vunpack.c.l.b16 %v4356
    %v4952 = vunpack.c.l.b16 %v4357
    %v4953 = vunpack.c.h.b16 %v4357
    %v4954 = vunpack.c.l.b16 %v4358
    %v4955 = vunpack.c.l.b16 %v4359
    %v4956 = vunpack.c.h.b16 %v4359
    %v4957 = vunpack.c.l.b16 %v4360
    %v4958 = vunpack.c.l.b16 %v4361
    %v4959 = vunpack.c.h.b16 %v4361
    %v4960 = vunpack.c.l.b16 %v4362
    %v4961 = vunpack.c.l.b16 %v4363
    %v4962 = vunpack.c.h.b16 %v4363
    %v4963 = vunpack.c.l.b16 %v4364
    %v4964 = vunpack.c.l.b16 %v4365
    %v4965 = vunpack.c.h.b16 %v4365
    %v4966 = vunpack.c.l.b16 %v4366
    %v4967 = vunpack.c.l.b16 %v4367
    %v4968 = vunpack.c.h.b16 %v4367
    %v4969 = vunpack.c.l.b16 %v4368
    %v4970 = vunpack.c.l.b16 %v4369
    %v4971 = vunpack.c.h.b16 %v4369
    %v4972 = vunpack.c.l.b16 %v4370
    %v4973 = vunpack.c.l.b16 %v4371
    %v4974 = vunpack.c.h.b16 %v4371
    %v4975 = vunpack.c.l.b16 %v4372
    %v4976 = vunpack.c.l.b16 %v4373
    %v4977 = vunpack.c.h.b16 %v4373
    %v4978 = vunpack.c.l.b16 %v4374
    %v4979 = vunpack.c.l.b16 %v4375
    %v4980 = vunpack.c.h.b16 %v4375
    %v4981 = vunpack.c.l.b16 %v4376
    %v4982 = vunpack.c.l.b16 %v4377
    %v4983 = vunpack.c.h.b16 %v4377
    %v4984 = vunpack.c.l.b16 %v4378
    %v4985 = vunpack.c.l.b16 %v4379
    %v4986 = vunpack.c.h.b16 %v4379
    %v4987 = vunpack.c.l.b16 %v4380
    %v4988 = vunpack.c.l.b16 %v4381
    %v4989 = vunpack.c.h.b16 %v4381
    %v4990 = vunpack.c.l.b16 %v4382
    %v4991 = vunpack.c.l.b16 %v4383
    %v4992 = vunpack.c.h.b16 %v4383
    %v4993 = vunpack.c.l.b16 %v4384
    %v4994 = vunpack.c.l.b16 %v4385
    %v4995 = vunpack.c.h.b16 %v4385
    %v4996 = vunpack.c.l.b16 %v4386
    %v4997 = vpack.c.b16 %v4904, %v4901
    %v4998 = vpack.c.b16 %v4905, %v4902
    %v4999 = vpack.c.b16 %v4906, %v4903
    %v5000 = vpack.c.b16 %v4910, %v4907
    %v5001 = vpack.c.b16 %v4911, %v4908
    %v5002 = vpack.c.b16 %v4912, %v4909
    %v5003 = vpack.c.b16 %v4916, %v4913
    %v5004 = vpack.c.b16 %v4917, %v4914
    %v5005 = vpack.c.b16 %v4918, %v4915
    %v5006 = vpack.c.b16 %v4922, %v4919
    %v5007 = vpack.c.b16 %v4923, %v4920
    %v5008 = vpack.c.b16 %v4924, %v4921
    %v5009 = vpack.c.b16 %v4928, %v4925
    %v5010 = vpack.c.b16 %v4929, %v4926
    %v5011 = vpack.c.b16 %v4930, %v4927
    %v5012 = vpack.c.b16 %v4934, %v4931
    %v5013 = vpack.c.b16 %v4935, %v4932
    %v5014 = vpack.c.b16 %v4936, %v4933
    %v5015 = vpack.c.b16 %v4940, %v4937
    %v5016 = vpack.c.b16 %v4941, %v4938
    %v5017 = vpack.c.b16 %v4942, %v4939
    %v5018 = vpack.c.b16 %v4946, %v4943
    %v5019 = vpack.c.b16 %v4947, %v4944
    %v5020 = vpack.c.b16 %v4948, %v4945
    %v5021 = vpack.c.b16 %v4952, %v4949
    %v5022 = vpack.c.b16 %v4953, %v4950
    %v5023 = vpack.c.b16 %v4954, %v4951
    %v5024 = vpack.c.b16 %v4958, %v4955
    %v5025 = vpack.c.b16 %v4959, %v4956
    %v5026 = vpack.c.b16 %v4960, %v4957
    %v5027 = vpack.c.b16 %v4964, %v4961
    %v5028 = vpack.c.b16 %v4965, %v4962
    %v5029 = vpack.c.b16 %v4966, %v4963
    %v5030 = vpack.c.b16 %v4970, %v4967
    %v5031 = vpack.c.b16 %v4971, %v4968
    %v5032 = vpack.c.b16 %v4972, %v4969
    %v5033 = vpack.c.b16 %v4976, %v4973
    %v5034 = vpack.c.b16 %v4977, %v4974
    %v5035 = vpack.c.b16 %v4978, %v4975
    %v5036 = vpack.c.b16 %v4982, %v4979
    %v5037 = vpack.c.b16 %v4983, %v4980
    %v5038 = vpack.c.b16 %v4984, %v4981
    %v5039 = vpack.c.b16 %v4988, %v4985
    %v5040 = vpack.c.b16 %v4989, %v4986
    %v5041 = vpack.c.b16 %v4990, %v4987
    %v5042 = vpack.c.b16 %v4994, %v4991
    %v5043 = vpack.c.b16 %v4995, %v4992
    %v5044 = vpack.c.b16 %v4996, %v4993
    %5093 = vmatprep.subr.bf16.mxu0 %v5019
    %5094 = vmatpush1.bf16.msra.mxu0 %v5018
    %5095 = vmatprep.subr.bf16.mxu0 %v5016
    %5096 = vmatpush1.bf16.msra.mxu0 %v5015
    %5097 = vmatprep.subr.bf16.mxu0 %v5013
    %5098 = vmatpush1.bf16.msra.mxu0 %v5012
    %5099 = vmatprep.subr.bf16.mxu0 %v5010
    %5100 = vmatpush1.bf16.msra.mxu0 %v5009
    %5101 = vmatprep.subr.bf16.mxu0 %v5007
    %5102 = vmatpush1.bf16.msra.mxu0 %v5006
    %5103 = vmatprep.subr.bf16.mxu0 %v5004
    %5104 = vmatpush1.bf16.msra.mxu0 %v5003
    %5105 = vmatprep.subr.bf16.mxu0 %v5001
    %5106 = vmatpush1.bf16.msra.mxu0 %v5000
    %5107 = vmatprep.subr.bf16.mxu0 %v4998
    %5108 = vmatpush1.bf16.msra.mxu0 %v4997
    %5109 = vmatprep.subr.bf16.mxu0 %v5043
    %5110 = vmatpush2.bf16.msra.mxu0 %v5042
    %5111 = vmatprep.subr.bf16.mxu0 %v5040
    %5112 = vmatpush2.bf16.msra.mxu0 %v5039
    %5113 = vmatprep.subr.bf16.mxu0 %v5037
    %5114 = vmatpush2.bf16.msra.mxu0 %v5036
    %5115 = vmatprep.subr.bf16.mxu0 %v5034
    %5116 = vmatpush2.bf16.msra.mxu0 %v5033
    %5117 = vmatprep.subr.bf16.mxu0 %v5031
    %5118 = vmatpush2.bf16.msra.mxu0 %v5030
    %5119 = vmatprep.subr.bf16.mxu0 %v5028
    %5120 = vmatpush2.bf16.msra.mxu0 %v5027
    %5121 = vmatprep.subr.bf16.mxu0 %v5025
    %5122 = vmatpush2.bf16.msra.mxu0 %v5024
    %5123 = vmatprep.subr.bf16.mxu0 %v5022
    %5124 = vmatpush2.bf16.msra.mxu0 %v5021
    %5125 = vmatprep.mubr.bf16.mxu0 %v4322
    %5126 = vmatmul.mubr.bf16.gmra.mxu0 %v4321
    %v5127 = vpop.f32.mrf.mxu0
    %v5128 = vadd.f32 %v4791, %v5127
    %v5129 = vpop.f32.mrf.mxu0
    %v5130 = vadd.f32 %v4793, %v5129
    %v5131 = vpop.f32.mrf.mxu0
    %v5132 = vpop.f32.mrf.mxu0
    %5133 = vdwg.mxu0
    %5134 = vmatprep.subr.bf16.mxu0 0
    %5135 = vmatpush1.bf16.msra.mxu0 %v5020
    %5136 = vmatprep.subr.bf16.mxu0 0
    %5137 = vmatpush1.bf16.msra.mxu0 %v5017
    %5138 = vmatprep.subr.bf16.mxu0 0
    %5139 = vmatpush1.bf16.msra.mxu0 %v5014
    %5140 = vmatprep.subr.bf16.mxu0 0
    %5141 = vmatpush1.bf16.msra.mxu0 %v5011
    %5142 = vmatprep.subr.bf16.mxu0 0
    %5143 = vmatpush1.bf16.msra.mxu0 %v5008
    %5144 = vmatprep.subr.bf16.mxu0 0
    %5145 = vmatpush1.bf16.msra.mxu0 %v5005
    %5146 = vmatprep.subr.bf16.mxu0 0
    %5147 = vmatpush1.bf16.msra.mxu0 %v5002
    %5148 = vmatprep.subr.bf16.mxu0 0
    %5149 = vmatpush1.bf16.msra.mxu0 %v4999
    %5150 = vmatprep.subr.bf16.mxu0 0
    %5151 = vmatpush2.bf16.msra.mxu0 %v5044
    %5152 = vmatprep.subr.bf16.mxu0 0
    %5153 = vmatpush2.bf16.msra.mxu0 %v5041
    %5154 = vmatprep.subr.bf16.mxu0 0
    %5155 = vmatpush2.bf16.msra.mxu0 %v5038
    %5156 = vmatprep.subr.bf16.mxu0 0
    %5157 = vmatpush2.bf16.msra.mxu0 %v5035
    %5158 = vmatprep.subr.bf16.mxu0 0
    %5159 = vmatpush2.bf16.msra.mxu0 %v5032
    %5160 = vmatprep.subr.bf16.mxu0 0
    %5161 = vmatpush2.bf16.msra.mxu0 %v5029
    %5162 = vmatprep.subr.bf16.mxu0 0
    %5163 = vmatpush2.bf16.msra.mxu0 %v5026
    %5164 = vmatprep.subr.bf16.mxu0 0
    %5165 = vmatpush2.bf16.msra.mxu0 %v5023
    %5166 = vmatprep.mubr.bf16.mxu0 %v4322
    %5167 = vmatmul.mubr.bf16.gmra.mxu0 %v4321
    %v5168 = vpop.f32.mrf.mxu0
    %v5169 = vadd.f32 %v4832, %v5168
    %v5170 = vpop.f32.mrf.mxu0
    %v5171 = vpop.f32.mrf.mxu0
    %v5172 = vpop.f32.mrf.mxu0
    %5173 = vdwg.mxu0
    %s5174 = scalar_lea.vmem [#allocation16], 8
    %v5175 = vld [vmem:[%s5174] sm:$0x7]
    %v5177 = vsel %vm4269, %v5175, 0
    %5179 = vmatprep.subr.bf16.mxu0 0
    %5180 = vmatpush1.bf16.msra.mxu0 0
    %5181 = vmatprep.subr.bf16.mxu0 0
    %5182 = vmatpush1.bf16.msra.mxu0 0
    %5183 = vmatprep.subr.bf16.mxu0 0
    %5184 = vmatpush1.bf16.msra.mxu0 0
    %5185 = vmatprep.subr.bf16.mxu0 0
    %5186 = vmatpush1.bf16.msra.mxu0 0
    %5187 = vmatprep.subr.bf16.mxu0 0
    %5188 = vmatpush1.bf16.msra.mxu0 0
    %5189 = vmatprep.subr.bf16.mxu0 0
    %5190 = vmatpush1.bf16.msra.mxu0 0
    %5191 = vmatprep.subr.bf16.mxu0 0
    %5192 = vmatpush1.bf16.msra.mxu0 0
    %5193 = vmatprep.subr.bf16.mxu0 %v4278
    %5194 = vmatpush1.bf16.msra.mxu0 %v4275
    %5195 = vmatprep.subr.bf16.mxu0 0
    %5196 = vmatpush2.bf16.msra.mxu0 0
    %5197 = vmatprep.subr.bf16.mxu0 0
    %5198 = vmatpush2.bf16.msra.mxu0 0
    %5199 = vmatprep.subr.bf16.mxu0 0
    %5200 = vmatpush2.bf16.msra.mxu0 0
    %5201 = vmatprep.subr.bf16.mxu0 0
    %5202 = vmatpush2.bf16.msra.mxu0 0
    %5203 = vmatprep.subr.bf16.mxu0 0
    %5204 = vmatpush2.bf16.msra.mxu0 0
    %5205 = vmatprep.subr.bf16.mxu0 0
    %5206 = vmatpush2.bf16.msra.mxu0 0
    %5207 = vmatprep.subr.bf16.mxu0 0
    %5208 = vmatpush2.bf16.msra.mxu0 0
    %5209 = vmatprep.subr.bf16.mxu0 0
    %5210 = vmatpush2.bf16.msra.mxu0 0
    %5211 = vmatprep.mubr.bf16.mxu0 0
    %5212 = vmatmul.mubr.bf16.gmra.mxu0 %v5177
    %v5213 = vpop.f32.mrf.mxu0
    %v5214 = vadd.f32 0.0, %v5213
    %v5215 = vpop.f32.mrf.mxu0
    %v5216 = vadd.f32 0.0, %v5215
    %v5217 = vpop.f32.mrf.mxu0
    %v5218 = vpop.f32.mrf.mxu0
    %5219 = vdwg.mxu0
    %v5220 = vpack.c.bf16 %v5214, %v5214
    %v5221 = vpack.c.bf16 %v5216, %v5216
    %s5222 = scalar_lea.vmem [#allocation17], 768
    %v5223 = vld [vmem:[%s5222] sm:$0xff]
    %v5224 = vld [vmem:[%s5222 + $0x8] sm:$0xf]
    %v5225 = vld [vmem:[%s5222 + $0xc] sm:$0xff]
    %v5226 = vld [vmem:[%s5222 + $0x14] sm:$0xf]
    %v5227 = vld [vmem:[%s5222 + $0x18] sm:$0xff]
    %v5228 = vld [vmem:[%s5222 + $0x20] sm:$0xf]
    %v5229 = vld [vmem:[%s5222 + $0x24] sm:$0xff]
    %v5230 = vld [vmem:[%s5222 + $0x2c] sm:$0xf]
    %v5231 = vld [vmem:[%s5222 + $0x30] sm:$0xff]
    %v5232 = vld [vmem:[%s5222 + $0x38] sm:$0xf]
    %v5233 = vld [vmem:[%s5222 + $0x3c] sm:$0xff]
    %v5234 = vld [vmem:[%s5222 + $0x44] sm:$0xf]
    %v5235 = vld [vmem:[%s5222 + $0x48] sm:$0xff]
    %v5236 = vld [vmem:[%s5222 + $0x50] sm:$0xf]
    %v5237 = vld [vmem:[%s5222 + $0x54] sm:$0xff]
    %v5238 = vld [vmem:[%s5222 + $0x5c] sm:$0xf]
    %v5239 = vld [vmem:[%s5222 + $0x60] sm:$0xff]
    %v5240 = vld [vmem:[%s5222 + $0x68] sm:$0xf]
    %v5241 = vld [vmem:[%s5222 + $0x6c] sm:$0xff]
    %v5242 = vld [vmem:[%s5222 + $0x74] sm:$0xf]
    %v5243 = vld [vmem:[%s5222 + $0x78] sm:$0xff]
    %v5244 = vld [vmem:[%s5222 + $0x80] sm:$0xf]
    %v5245 = vld [vmem:[%s5222 + $0x84] sm:$0xff]
    %v5246 = vld [vmem:[%s5222 + $0x8c] sm:$0xf]
    %v5247 = vld [vmem:[%s5222 + $0x90] sm:$0xff]
    %v5248 = vld [vmem:[%s5222 + $0x98] sm:$0xf]
    %v5249 = vld [vmem:[%s5222 + $0x9c] sm:$0xff]
    %v5250 = vld [vmem:[%s5222 + $0xa4] sm:$0xf]
    %v5251 = vld [vmem:[%s5222 + $0xa8] sm:$0xff]
    %v5252 = vld [vmem:[%s5222 + $0xb0] sm:$0xf]
    %v5253 = vld [vmem:[%s5222 + $0xb4] sm:$0xff]
    %v5254 = vld [vmem:[%s5222 + $0xbc] sm:$0xf]
    %v5255 = vld [vmem:[%s5222 + $0xc0] sm:$0xff]
    %v5256 = vld [vmem:[%s5222 + $0xc8] sm:$0xf]
    %v5257 = vld [vmem:[%s5222 + $0xcc] sm:$0xff]
    %v5258 = vld [vmem:[%s5222 + $0xd4] sm:$0xf]
    %v5259 = vld [vmem:[%s5222 + $0xd8] sm:$0xff]
    %v5260 = vld [vmem:[%s5222 + $0xe0] sm:$0xf]
    %v5261 = vld [vmem:[%s5222 + $0xe4] sm:$0xff]
    %v5262 = vld [vmem:[%s5222 + $0xec] sm:$0xf]
    %v5263 = vld [vmem:[%s5222 + $0xf0] sm:$0xff]
    %v5264 = vld [vmem:[%s5222 + $0xf8] sm:$0xf]
    %v5265 = vld [vmem:[%s5222 + $0xfc] sm:$0xff]
    %v5266 = vld [vmem:[%s5222 + $0x104] sm:$0xf]
    %v5267 = vld [vmem:[%s5222 + $0x108] sm:$0xff]
    %v5268 = vld [vmem:[%s5222 + $0x110] sm:$0xf]
    %v5269 = vld [vmem:[%s5222 + $0x114] sm:$0xff]
    %v5270 = vld [vmem:[%s5222 + $0x11c] sm:$0xf]
    %v5271 = vld [vmem:[%s5222 + $0x120] sm:$0xff]
    %v5272 = vld [vmem:[%s5222 + $0x128] sm:$0xf]
    %v5273 = vld [vmem:[%s5222 + $0x12c] sm:$0xff]
    %v5274 = vld [vmem:[%s5222 + $0x134] sm:$0xf]
    %v5275 = vld [vmem:[%s5222 + $0x138] sm:$0xff]
    %v5276 = vld [vmem:[%s5222 + $0x140] sm:$0xf]
    %v5277 = vld [vmem:[%s5222 + $0x144] sm:$0xff]
    %v5278 = vld [vmem:[%s5222 + $0x14c] sm:$0xf]
    %v5279 = vld [vmem:[%s5222 + $0x150] sm:$0xff]
    %v5280 = vld [vmem:[%s5222 + $0x158] sm:$0xf]
    %v5281 = vld [vmem:[%s5222 + $0x15c] sm:$0xff]
    %v5282 = vld [vmem:[%s5222 + $0x164] sm:$0xf]
    %v5283 = vld [vmem:[%s5222 + $0x168] sm:$0xff]
    %v5284 = vld [vmem:[%s5222 + $0x170] sm:$0xf]
    %v5285 = vld [vmem:[%s5222 + $0x174] sm:$0xff]
    %v5286 = vld [vmem:[%s5222 + $0x17c] sm:$0xf]
    %v5351 = vunpack.c.l.b16 %v5223
    %v5352 = vunpack.c.h.b16 %v5223
    %v5353 = vunpack.c.l.b16 %v5224
    %v5354 = vunpack.c.l.b16 %v5225
    %v5355 = vunpack.c.h.b16 %v5225
    %v5356 = vunpack.c.l.b16 %v5226
    %v5357 = vunpack.c.l.b16 %v5227
    %v5358 = vunpack.c.h.b16 %v5227
    %v5359 = vunpack.c.l.b16 %v5228
    %v5360 = vunpack.c.l.b16 %v5229
    %v5361 = vunpack.c.h.b16 %v5229
    %v5362 = vunpack.c.l.b16 %v5230
    %v5363 = vunpack.c.l.b16 %v5231
    %v5364 = vunpack.c.h.b16 %v5231
    %v5365 = vunpack.c.l.b16 %v5232
    %v5366 = vunpack.c.l.b16 %v5233
    %v5367 = vunpack.c.h.b16 %v5233
    %v5368 = vunpack.c.l.b16 %v5234
    %v5369 = vunpack.c.l.b16 %v5235
    %v5370 = vunpack.c.h.b16 %v5235
    %v5371 = vunpack.c.l.b16 %v5236
    %v5372 = vunpack.c.l.b16 %v5237
    %v5373 = vunpack.c.h.b16 %v5237
    %v5374 = vunpack.c.l.b16 %v5238
    %v5375 = vunpack.c.l.b16 %v5239
    %v5376 = vunpack.c.h.b16 %v5239
    %v5377 = vunpack.c.l.b16 %v5240
    %v5378 = vunpack.c.l.b16 %v5241
    %v5379 = vunpack.c.h.b16 %v5241
    %v5380 = vunpack.c.l.b16 %v5242
    %v5381 = vunpack.c.l.b16 %v5243
    %v5382 = vunpack.c.h.b16 %v5243
    %v5383 = vunpack.c.l.b16 %v5244
    %v5384 = vunpack.c.l.b16 %v5245
    %v5385 = vunpack.c.h.b16 %v5245
    %v5386 = vunpack.c.l.b16 %v5246
    %v5387 = vunpack.c.l.b16 %v5247
    %v5388 = vunpack.c.h.b16 %v5247
    %v5389 = vunpack.c.l.b16 %v5248
    %v5390 = vunpack.c.l.b16 %v5249
    %v5391 = vunpack.c.h.b16 %v5249
    %v5392 = vunpack.c.l.b16 %v5250
    %v5393 = vunpack.c.l.b16 %v5251
    %v5394 = vunpack.c.h.b16 %v5251
    %v5395 = vunpack.c.l.b16 %v5252
    %v5396 = vunpack.c.l.b16 %v5253
    %v5397 = vunpack.c.h.b16 %v5253
    %v5398 = vunpack.c.l.b16 %v5254
    %v5399 = vunpack.c.l.b16 %v5255
    %v5400 = vunpack.c.h.b16 %v5255
    %v5401 = vunpack.c.l.b16 %v5256
    %v5402 = vunpack.c.l.b16 %v5257
    %v5403 = vunpack.c.h.b16 %v5257
    %v5404 = vunpack.c.l.b16 %v5258
    %v5405 = vunpack.c.l.b16 %v5259
    %v5406 = vunpack.c.h.b16 %v5259
    %v5407 = vunpack.c.l.b16 %v5260
    %v5408 = vunpack.c.l.b16 %v5261
    %v5409 = vunpack.c.h.b16 %v5261
    %v5410 = vunpack.c.l.b16 %v5262
    %v5411 = vunpack.c.l.b16 %v5263
    %v5412 = vunpack.c.h.b16 %v5263
    %v5413 = vunpack.c.l.b16 %v5264
    %v5414 = vunpack.c.l.b16 %v5265
    %v5415 = vunpack.c.h.b16 %v5265
    %v5416 = vunpack.c.l.b16 %v5266
    %v5417 = vunpack.c.l.b16 %v5267
    %v5418 = vunpack.c.h.b16 %v5267
    %v5419 = vunpack.c.l.b16 %v5268
    %v5420 = vunpack.c.l.b16 %v5269
    %v5421 = vunpack.c.h.b16 %v5269
    %v5422 = vunpack.c.l.b16 %v5270
    %v5423 = vunpack.c.l.b16 %v5271
    %v5424 = vunpack.c.h.b16 %v5271
    %v5425 = vunpack.c.l.b16 %v5272
    %v5426 = vunpack.c.l.b16 %v5273
    %v5427 = vunpack.c.h.b16 %v5273
    %v5428 = vunpack.c.l.b16 %v5274
    %v5429 = vunpack.c.l.b16 %v5275
    %v5430 = vunpack.c.h.b16 %v5275
    %v5431 = vunpack.c.l.b16 %v5276
    %v5432 = vunpack.c.l.b16 %v5277
    %v5433 = vunpack.c.h.b16 %v5277
    %v5434 = vunpack.c.l.b16 %v5278
    %v5435 = vunpack.c.l.b16 %v5279
    %v5436 = vunpack.c.h.b16 %v5279
    %v5437 = vunpack.c.l.b16 %v5280
    %v5438 = vunpack.c.l.b16 %v5281
    %v5439 = vunpack.c.h.b16 %v5281
    %v5440 = vunpack.c.l.b16 %v5282
    %v5441 = vunpack.c.l.b16 %v5283
    %v5442 = vunpack.c.h.b16 %v5283
    %v5443 = vunpack.c.l.b16 %v5284
    %v5444 = vunpack.c.l.b16 %v5285
    %v5445 = vunpack.c.h.b16 %v5285
    %v5446 = vunpack.c.l.b16 %v5286
    %v5447 = vpack.c.b16 %v5354, %v5351
    %v5448 = vpack.c.b16 %v5355, %v5352
    %v5449 = vpack.c.b16 %v5356, %v5353
    %v5450 = vpack.c.b16 %v5360, %v5357
    %v5451 = vpack.c.b16 %v5361, %v5358
    %v5452 = vpack.c.b16 %v5362, %v5359
    %v5453 = vpack.c.b16 %v5366, %v5363
    %v5454 = vpack.c.b16 %v5367, %v5364
    %v5455 = vpack.c.b16 %v5368, %v5365
    %v5456 = vpack.c.b16 %v5372, %v5369
    %v5457 = vpack.c.b16 %v5373, %v5370
    %v5458 = vpack.c.b16 %v5374, %v5371
    %v5459 = vpack.c.b16 %v5378, %v5375
    %v5460 = vpack.c.b16 %v5379, %v5376
    %v5461 = vpack.c.b16 %v5380, %v5377
    %v5462 = vpack.c.b16 %v5384, %v5381
    %v5463 = vpack.c.b16 %v5385, %v5382
    %v5464 = vpack.c.b16 %v5386, %v5383
    %v5465 = vpack.c.b16 %v5390, %v5387
    %v5466 = vpack.c.b16 %v5391, %v5388
    %v5467 = vpack.c.b16 %v5392, %v5389
    %v5468 = vpack.c.b16 %v5396, %v5393
    %v5469 = vpack.c.b16 %v5397, %v5394
    %v5470 = vpack.c.b16 %v5398, %v5395
    %v5471 = vpack.c.b16 %v5402, %v5399
    %v5472 = vpack.c.b16 %v5403, %v5400
    %v5473 = vpack.c.b16 %v5404, %v5401
    %v5474 = vpack.c.b16 %v5408, %v5405
    %v5475 = vpack.c.b16 %v5409, %v5406
    %v5476 = vpack.c.b16 %v5410, %v5407
    %v5477 = vpack.c.b16 %v5414, %v5411
    %v5478 = vpack.c.b16 %v5415, %v5412
    %v5479 = vpack.c.b16 %v5416, %v5413
    %v5480 = vpack.c.b16 %v5420, %v5417
    %v5481 = vpack.c.b16 %v5421, %v5418
    %v5482 = vpack.c.b16 %v5422, %v5419
    %v5483 = vpack.c.b16 %v5426, %v5423
    %v5484 = vpack.c.b16 %v5427, %v5424
    %v5485 = vpack.c.b16 %v5428, %v5425
    %v5486 = vpack.c.b16 %v5432, %v5429
    %v5487 = vpack.c.b16 %v5433, %v5430
    %v5488 = vpack.c.b16 %v5434, %v5431
    %v5489 = vpack.c.b16 %v5438, %v5435
    %v5490 = vpack.c.b16 %v5439, %v5436
    %v5491 = vpack.c.b16 %v5440, %v5437
    %v5492 = vpack.c.b16 %v5444, %v5441
    %v5493 = vpack.c.b16 %v5445, %v5442
    %v5494 = vpack.c.b16 %v5446, %v5443
    %5543 = vmatprep.subr.bf16.mxu0 %v5469
    %5544 = vmatpush1.bf16.msra.mxu0 %v5468
    %5545 = vmatprep.subr.bf16.mxu0 %v5466
    %5546 = vmatpush1.bf16.msra.mxu0 %v5465
    %5547 = vmatprep.subr.bf16.mxu0 %v5463
    %5548 = vmatpush1.bf16.msra.mxu0 %v5462
    %5549 = vmatprep.subr.bf16.mxu0 %v5460
    %5550 = vmatpush1.bf16.msra.mxu0 %v5459
    %5551 = vmatprep.subr.bf16.mxu0 %v5457
    %5552 = vmatpush1.bf16.msra.mxu0 %v5456
    %5553 = vmatprep.subr.bf16.mxu0 %v5454
    %5554 = vmatpush1.bf16.msra.mxu0 %v5453
    %5555 = vmatprep.subr.bf16.mxu0 %v5451
    %5556 = vmatpush1.bf16.msra.mxu0 %v5450
    %5557 = vmatprep.subr.bf16.mxu0 %v5448
    %5558 = vmatpush1.bf16.msra.mxu0 %v5447
    %5559 = vmatprep.subr.bf16.mxu0 %v5493
    %5560 = vmatpush2.bf16.msra.mxu0 %v5492
    %5561 = vmatprep.subr.bf16.mxu0 %v5490
    %5562 = vmatpush2.bf16.msra.mxu0 %v5489
    %5563 = vmatprep.subr.bf16.mxu0 %v5487
    %5564 = vmatpush2.bf16.msra.mxu0 %v5486
    %5565 = vmatprep.subr.bf16.mxu0 %v5484
    %5566 = vmatpush2.bf16.msra.mxu0 %v5483
    %5567 = vmatprep.subr.bf16.mxu0 %v5481
    %5568 = vmatpush2.bf16.msra.mxu0 %v5480
    %5569 = vmatprep.subr.bf16.mxu0 %v5478
    %5570 = vmatpush2.bf16.msra.mxu0 %v5477
    %5571 = vmatprep.subr.bf16.mxu0 %v5475
    %5572 = vmatpush2.bf16.msra.mxu0 %v5474
    %5573 = vmatprep.subr.bf16.mxu0 %v5472
    %5574 = vmatpush2.bf16.msra.mxu0 %v5471
    %5575 = vmatprep.mubr.bf16.mxu0 %v5221
    %5576 = vmatmul.mubr.bf16.gmra.mxu0 %v5220
    %v5577 = vpop.f32.mrf.mxu0
    %v5578 = vadd.f32 0.0, %v5577
    %v5579 = vpop.f32.mrf.mxu0
    %v5580 = vadd.f32 0.0, %v5579
    %v5581 = vpop.f32.mrf.mxu0
    %v5582 = vpop.f32.mrf.mxu0
    %5583 = vdwg.mxu0
    %5584 = vmatprep.subr.bf16.mxu0 0
    %5585 = vmatpush1.bf16.msra.mxu0 %v5470
    %5586 = vmatprep.subr.bf16.mxu0 0
    %5587 = vmatpush1.bf16.msra.mxu0 %v5467
    %5588 = vmatprep.subr.bf16.mxu0 0
    %5589 = vmatpush1.bf16.msra.mxu0 %v5464
    %5590 = vmatprep.subr.bf16.mxu0 0
    %5591 = vmatpush1.bf16.msra.mxu0 %v5461
    %5592 = vmatprep.subr.bf16.mxu0 0
    %5593 = vmatpush1.bf16.msra.mxu0 %v5458
    %5594 = vmatprep.subr.bf16.mxu0 0
    %5595 = vmatpush1.bf16.msra.mxu0 %v5455
    %5596 = vmatprep.subr.bf16.mxu0 0
    %5597 = vmatpush1.bf16.msra.mxu0 %v5452
    %5598 = vmatprep.subr.bf16.mxu0 0
    %5599 = vmatpush1.bf16.msra.mxu0 %v5449
    %5600 = vmatprep.subr.bf16.mxu0 0
    %5601 = vmatpush2.bf16.msra.mxu0 %v5494
    %5602 = vmatprep.subr.bf16.mxu0 0
    %5603 = vmatpush2.bf16.msra.mxu0 %v5491
    %5604 = vmatprep.subr.bf16.mxu0 0
    %5605 = vmatpush2.bf16.msra.mxu0 %v5488
    %5606 = vmatprep.subr.bf16.mxu0 0
    %5607 = vmatpush2.bf16.msra.mxu0 %v5485
    %5608 = vmatprep.subr.bf16.mxu0 0
    %5609 = vmatpush2.bf16.msra.mxu0 %v5482
    %5610 = vmatprep.subr.bf16.mxu0 0
    %5611 = vmatpush2.bf16.msra.mxu0 %v5479
    %5612 = vmatprep.subr.bf16.mxu0 0
    %5613 = vmatpush2.bf16.msra.mxu0 %v5476
    %5614 = vmatprep.subr.bf16.mxu0 0
    %5615 = vmatpush2.bf16.msra.mxu0 %v5473
    %5616 = vmatprep.mubr.bf16.mxu0 %v5221
    %5617 = vmatmul.mubr.bf16.gmra.mxu0 %v5220
    %v5618 = vpop.f32.mrf.mxu0
    %v5619 = vadd.f32 0.0, %v5618
    %v5620 = vpop.f32.mrf.mxu0
    %v5621 = vpop.f32.mrf.mxu0
    %v5622 = vpop.f32.mrf.mxu0
    %5623 = vdwg.mxu0
    %v5624 = vadd.f32 %v5128, %v5578
    %v5625 = vadd.f32 %v5130, %v5580
    %v5626 = vadd.f32 %v5169, %v5619
    %s5627 = scalar_lea.vmem [#allocation16], 12
    %v5628 = vld [vmem:[%s5627] sm:$0x7]
    %v5630 = vsel %vm4269, %v5628, 0
    %5632 = vmatprep.subr.bf16.mxu0 0
    %5633 = vmatpush1.bf16.msra.mxu0 0
    %5634 = vmatprep.subr.bf16.mxu0 0
    %5635 = vmatpush1.bf16.msra.mxu0 0
    %5636 = vmatprep.subr.bf16.mxu0 0
    %5637 = vmatpush1.bf16.msra.mxu0 0
    %5638 = vmatprep.subr.bf16.mxu0 0
    %5639 = vmatpush1.bf16.msra.mxu0 0
    %5640 = vmatprep.subr.bf16.mxu0 0
    %5641 = vmatpush1.bf16.msra.mxu0 0
    %5642 = vmatprep.subr.bf16.mxu0 0
    %5643 = vmatpush1.bf16.msra.mxu0 0
    %5644 = vmatprep.subr.bf16.mxu0 0
    %5645 = vmatpush1.bf16.msra.mxu0 0
    %5646 = vmatprep.subr.bf16.mxu0 %v4278
    %5647 = vmatpush1.bf16.msra.mxu0 %v4275
    %5648 = vmatprep.subr.bf16.mxu0 0
    %5649 = vmatpush2.bf16.msra.mxu0 0
    %5650 = vmatprep.subr.bf16.mxu0 0
    %5651 = vmatpush2.bf16.msra.mxu0 0
    %5652 = vmatprep.subr.bf16.mxu0 0
    %5653 = vmatpush2.bf16.msra.mxu0 0
    %5654 = vmatprep.subr.bf16.mxu0 0
    %5655 = vmatpush2.bf16.msra.mxu0 0
    %5656 = vmatprep.subr.bf16.mxu0 0
    %5657 = vmatpush2.bf16.msra.mxu0 0
    %5658 = vmatprep.subr.bf16.mxu0 0
    %5659 = vmatpush2.bf16.msra.mxu0 0
    %5660 = vmatprep.subr.bf16.mxu0 0
    %5661 = vmatpush2.bf16.msra.mxu0 0
    %5662 = vmatprep.subr.bf16.mxu0 0
    %5663 = vmatpush2.bf16.msra.mxu0 0
    %5664 = vmatprep.mubr.bf16.mxu0 0
    %5665 = vmatmul.mubr.bf16.gmra.mxu0 %v5630
    %v5666 = vpop.f32.mrf.mxu0
    %v5667 = vadd.f32 0.0, %v5666
    %v5668 = vpop.f32.mrf.mxu0
    %v5669 = vadd.f32 0.0, %v5668
    %v5670 = vpop.f32.mrf.mxu0
    %v5671 = vpop.f32.mrf.mxu0
    %5672 = vdwg.mxu0
    %v5673 = vpack.c.bf16 %v5667, %v5667
    %v5674 = vpack.c.bf16 %v5669, %v5669
    %s5675 = scalar_lea.vmem [#allocation17], 1152
    %v5676 = vld [vmem:[%s5675] sm:$0xff]
    %v5677 = vld [vmem:[%s5675 + $0x8] sm:$0xf]
    %v5678 = vld [vmem:[%s5675 + $0xc] sm:$0xff]
    %v5679 = vld [vmem:[%s5675 + $0x14] sm:$0xf]
    %v5680 = vld [vmem:[%s5675 + $0x18] sm:$0xff]
    %v5681 = vld [vmem:[%s5675 + $0x20] sm:$0xf]
    %v5682 = vld [vmem:[%s5675 + $0x24] sm:$0xff]
    %v5683 = vld [vmem:[%s5675 + $0x2c] sm:$0xf]
    %v5684 = vld [vmem:[%s5675 + $0x30] sm:$0xff]
    %v5685 = vld [vmem:[%s5675 + $0x38] sm:$0xf]
    %v5686 = vld [vmem:[%s5675 + $0x3c] sm:$0xff]
    %v5687 = vld [vmem:[%s5675 + $0x44] sm:$0xf]
    %v5688 = vld [vmem:[%s5675 + $0x48] sm:$0xff]
    %v5689 = vld [vmem:[%s5675 + $0x50] sm:$0xf]
    %v5690 = vld [vmem:[%s5675 + $0x54] sm:$0xff]
    %v5691 = vld [vmem:[%s5675 + $0x5c] sm:$0xf]
    %v5692 = vld [vmem:[%s5675 + $0x60] sm:$0xff]
    %v5693 = vld [vmem:[%s5675 + $0x68] sm:$0xf]
    %v5694 = vld [vmem:[%s5675 + $0x6c] sm:$0xff]
    %v5695 = vld [vmem:[%s5675 + $0x74] sm:$0xf]
    %v5696 = vld [vmem:[%s5675 + $0x78] sm:$0xff]
    %v5697 = vld [vmem:[%s5675 + $0x80] sm:$0xf]
    %v5698 = vld [vmem:[%s5675 + $0x84] sm:$0xff]
    %v5699 = vld [vmem:[%s5675 + $0x8c] sm:$0xf]
    %v5700 = vld [vmem:[%s5675 + $0x90] sm:$0xff]
    %v5701 = vld [vmem:[%s5675 + $0x98] sm:$0xf]
    %v5702 = vld [vmem:[%s5675 + $0x9c] sm:$0xff]
    %v5703 = vld [vmem:[%s5675 + $0xa4] sm:$0xf]
    %v5704 = vld [vmem:[%s5675 + $0xa8] sm:$0xff]
    %v5705 = vld [vmem:[%s5675 + $0xb0] sm:$0xf]
    %v5706 = vld [vmem:[%s5675 + $0xb4] sm:$0xff]
    %v5707 = vld [vmem:[%s5675 + $0xbc] sm:$0xf]
    %v5708 = vld [vmem:[%s5675 + $0xc0] sm:$0xff]
    %v5709 = vld [vmem:[%s5675 + $0xc8] sm:$0xf]
    %v5710 = vld [vmem:[%s5675 + $0xcc] sm:$0xff]
    %v5711 = vld [vmem:[%s5675 + $0xd4] sm:$0xf]
    %v5712 = vld [vmem:[%s5675 + $0xd8] sm:$0xff]
    %v5713 = vld [vmem:[%s5675 + $0xe0] sm:$0xf]
    %v5714 = vld [vmem:[%s5675 + $0xe4] sm:$0xff]
    %v5715 = vld [vmem:[%s5675 + $0xec] sm:$0xf]
    %v5716 = vld [vmem:[%s5675 + $0xf0] sm:$0xff]
    %v5717 = vld [vmem:[%s5675 + $0xf8] sm:$0xf]
    %v5718 = vld [vmem:[%s5675 + $0xfc] sm:$0xff]
    %v5719 = vld [vmem:[%s5675 + $0x104] sm:$0xf]
    %v5720 = vld [vmem:[%s5675 + $0x108] sm:$0xff]
    %v5721 = vld [vmem:[%s5675 + $0x110] sm:$0xf]
    %v5722 = vld [vmem:[%s5675 + $0x114] sm:$0xff]
    %v5723 = vld [vmem:[%s5675 + $0x11c] sm:$0xf]
    %v5724 = vld [vmem:[%s5675 + $0x120] sm:$0xff]
    %v5725 = vld [vmem:[%s5675 + $0x128] sm:$0xf]
    %v5726 = vld [vmem:[%s5675 + $0x12c] sm:$0xff]
    %v5727 = vld [vmem:[%s5675 + $0x134] sm:$0xf]
    %v5728 = vld [vmem:[%s5675 + $0x138] sm:$0xff]
    %v5729 = vld [vmem:[%s5675 + $0x140] sm:$0xf]
    %v5730 = vld [vmem:[%s5675 + $0x144] sm:$0xff]
    %v5731 = vld [vmem:[%s5675 + $0x14c] sm:$0xf]
    %v5732 = vld [vmem:[%s5675 + $0x150] sm:$0xff]
    %v5733 = vld [vmem:[%s5675 + $0x158] sm:$0xf]
    %v5734 = vld [vmem:[%s5675 + $0x15c] sm:$0xff]
    %v5735 = vld [vmem:[%s5675 + $0x164] sm:$0xf]
    %v5736 = vld [vmem:[%s5675 + $0x168] sm:$0xff]
    %v5737 = vld [vmem:[%s5675 + $0x170] sm:$0xf]
    %v5738 = vld [vmem:[%s5675 + $0x174] sm:$0xff]
    %v5739 = vld [vmem:[%s5675 + $0x17c] sm:$0xf]
    %v5804 = vunpack.c.l.b16 %v5676
    %v5805 = vunpack.c.h.b16 %v5676
    %v5806 = vunpack.c.l.b16 %v5677
    %v5807 = vunpack.c.l.b16 %v5678
    %v5808 = vunpack.c.h.b16 %v5678
    %v5809 = vunpack.c.l.b16 %v5679
    %v5810 = vunpack.c.l.b16 %v5680
    %v5811 = vunpack.c.h.b16 %v5680
    %v5812 = vunpack.c.l.b16 %v5681
    %v5813 = vunpack.c.l.b16 %v5682
    %v5814 = vunpack.c.h.b16 %v5682
    %v5815 = vunpack.c.l.b16 %v5683
    %v5816 = vunpack.c.l.b16 %v5684
    %v5817 = vunpack.c.h.b16 %v5684
    %v5818 = vunpack.c.l.b16 %v5685
    %v5819 = vunpack.c.l.b16 %v5686
    %v5820 = vunpack.c.h.b16 %v5686
    %v5821 = vunpack.c.l.b16 %v5687
    %v5822 = vunpack.c.l.b16 %v5688
    %v5823 = vunpack.c.h.b16 %v5688
    %v5824 = vunpack.c.l.b16 %v5689
    %v5825 = vunpack.c.l.b16 %v5690
    %v5826 = vunpack.c.h.b16 %v5690
    %v5827 = vunpack.c.l.b16 %v5691
    %v5828 = vunpack.c.l.b16 %v5692
    %v5829 = vunpack.c.h.b16 %v5692
    %v5830 = vunpack.c.l.b16 %v5693
    %v5831 = vunpack.c.l.b16 %v5694
    %v5832 = vunpack.c.h.b16 %v5694
    %v5833 = vunpack.c.l.b16 %v5695
    %v5834 = vunpack.c.l.b16 %v5696
    %v5835 = vunpack.c.h.b16 %v5696
    %v5836 = vunpack.c.l.b16 %v5697
    %v5837 = vunpack.c.l.b16 %v5698
    %v5838 = vunpack.c.h.b16 %v5698
    %v5839 = vunpack.c.l.b16 %v5699
    %v5840 = vunpack.c.l.b16 %v5700
    %v5841 = vunpack.c.h.b16 %v5700
    %v5842 = vunpack.c.l.b16 %v5701
    %v5843 = vunpack.c.l.b16 %v5702
    %v5844 = vunpack.c.h.b16 %v5702
    %v5845 = vunpack.c.l.b16 %v5703
    %v5846 = vunpack.c.l.b16 %v5704
    %v5847 = vunpack.c.h.b16 %v5704
    %v5848 = vunpack.c.l.b16 %v5705
    %v5849 = vunpack.c.l.b16 %v5706
    %v5850 = vunpack.c.h.b16 %v5706
    %v5851 = vunpack.c.l.b16 %v5707
    %v5852 = vunpack.c.l.b16 %v5708
    %v5853 = vunpack.c.h.b16 %v5708
    %v5854 = vunpack.c.l.b16 %v5709
    %v5855 = vunpack.c.l.b16 %v5710
    %v5856 = vunpack.c.h.b16 %v5710
    %v5857 = vunpack.c.l.b16 %v5711
    %v5858 = vunpack.c.l.b16 %v5712
    %v5859 = vunpack.c.h.b16 %v5712
    %v5860 = vunpack.c.l.b16 %v5713
    %v5861 = vunpack.c.l.b16 %v5714
    %v5862 = vunpack.c.h.b16 %v5714
    %v5863 = vunpack.c.l.b16 %v5715
    %v5864 = vunpack.c.l.b16 %v5716
    %v5865 = vunpack.c.h.b16 %v5716
    %v5866 = vunpack.c.l.b16 %v5717
    %v5867 = vunpack.c.l.b16 %v5718
    %v5868 = vunpack.c.h.b16 %v5718
    %v5869 = vunpack.c.l.b16 %v5719
    %v5870 = vunpack.c.l.b16 %v5720
    %v5871 = vunpack.c.h.b16 %v5720
    %v5872 = vunpack.c.l.b16 %v5721
    %v5873 = vunpack.c.l.b16 %v5722
    %v5874 = vunpack.c.h.b16 %v5722
    %v5875 = vunpack.c.l.b16 %v5723
    %v5876 = vunpack.c.l.b16 %v5724
    %v5877 = vunpack.c.h.b16 %v5724
    %v5878 = vunpack.c.l.b16 %v5725
    %v5879 = vunpack.c.l.b16 %v5726
    %v5880 = vunpack.c.h.b16 %v5726
    %v5881 = vunpack.c.l.b16 %v5727
    %v5882 = vunpack.c.l.b16 %v5728
    %v5883 = vunpack.c.h.b16 %v5728
    %v5884 = vunpack.c.l.b16 %v5729
    %v5885 = vunpack.c.l.b16 %v5730
    %v5886 = vunpack.c.h.b16 %v5730
    %v5887 = vunpack.c.l.b16 %v5731
    %v5888 = vunpack.c.l.b16 %v5732
    %v5889 = vunpack.c.h.b16 %v5732
    %v5890 = vunpack.c.l.b16 %v5733
    %v5891 = vunpack.c.l.b16 %v5734
    %v5892 = vunpack.c.h.b16 %v5734
    %v5893 = vunpack.c.l.b16 %v5735
    %v5894 = vunpack.c.l.b16 %v5736
    %v5895 = vunpack.c.h.b16 %v5736
    %v5896 = vunpack.c.l.b16 %v5737
    %v5897 = vunpack.c.l.b16 %v5738
    %v5898 = vunpack.c.h.b16 %v5738
    %v5899 = vunpack.c.l.b16 %v5739
    %v5900 = vpack.c.b16 %v5807, %v5804
    %v5901 = vpack.c.b16 %v5808, %v5805
    %v5902 = vpack.c.b16 %v5809, %v5806
    %v5903 = vpack.c.b16 %v5813, %v5810
    %v5904 = vpack.c.b16 %v5814, %v5811
    %v5905 = vpack.c.b16 %v5815, %v5812
    %v5906 = vpack.c.b16 %v5819, %v5816
    %v5907 = vpack.c.b16 %v5820, %v5817
    %v5908 = vpack.c.b16 %v5821, %v5818
    %v5909 = vpack.c.b16 %v5825, %v5822
    %v5910 = vpack.c.b16 %v5826, %v5823
    %v5911 = vpack.c.b16 %v5827, %v5824
    %v5912 = vpack.c.b16 %v5831, %v5828
    %v5913 = vpack.c.b16 %v5832, %v5829
    %v5914 = vpack.c.b16 %v5833, %v5830
    %v5915 = vpack.c.b16 %v5837, %v5834
    %v5916 = vpack.c.b16 %v5838, %v5835
    %v5917 = vpack.c.b16 %v5839, %v5836
    %v5918 = vpack.c.b16 %v5843, %v5840
    %v5919 = vpack.c.b16 %v5844, %v5841
    %v5920 = vpack.c.b16 %v5845, %v5842
    %v5921 = vpack.c.b16 %v5849, %v5846
    %v5922 = vpack.c.b16 %v5850, %v5847
    %v5923 = vpack.c.b16 %v5851, %v5848
    %v5924 = vpack.c.b16 %v5855, %v5852
    %v5925 = vpack.c.b16 %v5856, %v5853
    %v5926 = vpack.c.b16 %v5857, %v5854
    %v5927 = vpack.c.b16 %v5861, %v5858
    %v5928 = vpack.c.b16 %v5862, %v5859
    %v5929 = vpack.c.b16 %v5863, %v5860
    %v5930 = vpack.c.b16 %v5867, %v5864
    %v5931 = vpack.c.b16 %v5868, %v5865
    %v5932 = vpack.c.b16 %v5869, %v5866
    %v5933 = vpack.c.b16 %v5873, %v5870
    %v5934 = vpack.c.b16 %v5874, %v5871
    %v5935 = vpack.c.b16 %v5875, %v5872
    %v5936 = vpack.c.b16 %v5879, %v5876
    %v5937 = vpack.c.b16 %v5880, %v5877
    %v5938 = vpack.c.b16 %v5881, %v5878
    %v5939 = vpack.c.b16 %v5885, %v5882
    %v5940 = vpack.c.b16 %v5886, %v5883
    %v5941 = vpack.c.b16 %v5887, %v5884
    %v5942 = vpack.c.b16 %v5891, %v5888
    %v5943 = vpack.c.b16 %v5892, %v5889
    %v5944 = vpack.c.b16 %v5893, %v5890
    %v5945 = vpack.c.b16 %v5897, %v5894
    %v5946 = vpack.c.b16 %v5898, %v5895
    %v5947 = vpack.c.b16 %v5899, %v5896
    %5996 = vmatprep.subr.bf16.mxu0 %v5922
    %5997 = vmatpush1.bf16.msra.mxu0 %v5921
    %5998 = vmatprep.subr.bf16.mxu0 %v5919
    %5999 = vmatpush1.bf16.msra.mxu0 %v5918
    %6000 = vmatprep.subr.bf16.mxu0 %v5916
    %6001 = vmatpush1.bf16.msra.mxu0 %v5915
    %6002 = vmatprep.subr.bf16.mxu0 %v5913
    %6003 = vmatpush1.bf16.msra.mxu0 %v5912
    %6004 = vmatprep.subr.bf16.mxu0 %v5910
    %6005 = vmatpush1.bf16.msra.mxu0 %v5909
    %6006 = vmatprep.subr.bf16.mxu0 %v5907
    %6007 = vmatpush1.bf16.msra.mxu0 %v5906
    %6008 = vmatprep.subr.bf16.mxu0 %v5904
    %6009 = vmatpush1.bf16.msra.mxu0 %v5903
    %6010 = vmatprep.subr.bf16.mxu0 %v5901
    %6011 = vmatpush1.bf16.msra.mxu0 %v5900
    %6012 = vmatprep.subr.bf16.mxu0 %v5946
    %6013 = vmatpush2.bf16.msra.mxu0 %v5945
    %6014 = vmatprep.subr.bf16.mxu0 %v5943
    %6015 = vmatpush2.bf16.msra.mxu0 %v5942
    %6016 = vmatprep.subr.bf16.mxu0 %v5940
    %6017 = vmatpush2.bf16.msra.mxu0 %v5939
    %6018 = vmatprep.subr.bf16.mxu0 %v5937
    %6019 = vmatpush2.bf16.msra.mxu0 %v5936
    %6020 = vmatprep.subr.bf16.mxu0 %v5934
    %6021 = vmatpush2.bf16.msra.mxu0 %v5933
    %6022 = vmatprep.subr.bf16.mxu0 %v5931
    %6023 = vmatpush2.bf16.msra.mxu0 %v5930
    %6024 = vmatprep.subr.bf16.mxu0 %v5928
    %6025 = vmatpush2.bf16.msra.mxu0 %v5927
    %6026 = vmatprep.subr.bf16.mxu0 %v5925
    %6027 = vmatpush2.bf16.msra.mxu0 %v5924
    %6028 = vmatprep.mubr.bf16.mxu0 %v5674
    %6029 = vmatmul.mubr.bf16.gmra.mxu0 %v5673
    %v6030 = vpop.f32.mrf.mxu0
    %v6031 = vadd.f32 0.0, %v6030
    %v6032 = vpop.f32.mrf.mxu0
    %v6033 = vadd.f32 0.0, %v6032
    %v6034 = vpop.f32.mrf.mxu0
    %v6035 = vpop.f32.mrf.mxu0
    %6036 = vdwg.mxu0
    %6037 = vmatprep.subr.bf16.mxu0 0
    %6038 = vmatpush1.bf16.msra.mxu0 %v5923
    %6039 = vmatprep.subr.bf16.mxu0 0
    %6040 = vmatpush1.bf16.msra.mxu0 %v5920
    %6041 = vmatprep.subr.bf16.mxu0 0
    %6042 = vmatpush1.bf16.msra.mxu0 %v5917
    %6043 = vmatprep.subr.bf16.mxu0 0
    %6044 = vmatpush1.bf16.msra.mxu0 %v5914
    %6045 = vmatprep.subr.bf16.mxu0 0
    %6046 = vmatpush1.bf16.msra.mxu0 %v5911
    %6047 = vmatprep.subr.bf16.mxu0 0
    %6048 = vmatpush1.bf16.msra.mxu0 %v5908
    %6049 = vmatprep.subr.bf16.mxu0 0
    %6050 = vmatpush1.bf16.msra.mxu0 %v5905
    %6051 = vmatprep.subr.bf16.mxu0 0
    %6052 = vmatpush1.bf16.msra.mxu0 %v5902
    %6053 = vmatprep.subr.bf16.mxu0 0
    %6054 = vmatpush2.bf16.msra.mxu0 %v5947
    %6055 = vmatprep.subr.bf16.mxu0 0
    %6056 = vmatpush2.bf16.msra.mxu0 %v5944
    %6057 = vmatprep.subr.bf16.mxu0 0
    %6058 = vmatpush2.bf16.msra.mxu0 %v5941
    %6059 = vmatprep.subr.bf16.mxu0 0
    %6060 = vmatpush2.bf16.msra.mxu0 %v5938
    %6061 = vmatprep.subr.bf16.mxu0 0
    %6062 = vmatpush2.bf16.msra.mxu0 %v5935
    %6063 = vmatprep.subr.bf16.mxu0 0
    %6064 = vmatpush2.bf16.msra.mxu0 %v5932
    %6065 = vmatprep.subr.bf16.mxu0 0
    %6066 = vmatpush2.bf16.msra.mxu0 %v5929
    %6067 = vmatprep.subr.bf16.mxu0 0
    %6068 = vmatpush2.bf16.msra.mxu0 %v5926
    %6069 = vmatprep.mubr.bf16.mxu0 %v5674
    %6070 = vmatmul.mubr.bf16.gmra.mxu0 %v5673
    %v6071 = vpop.f32.mrf.mxu0
    %v6072 = vadd.f32 0.0, %v6071
    %v6073 = vpop.f32.mrf.mxu0
    %v6074 = vpop.f32.mrf.mxu0
    %v6075 = vpop.f32.mrf.mxu0
    %6076 = vdwg.mxu0
    %v6077 = vadd.f32 %v5624, %v6031
    %v6078 = vadd.f32 %v5625, %v6033
    %v6079 = vadd.f32 %v5626, %v6072
    %vm6080 = vcmask 1045504
    %v6081 = vsel %vm6080, %v6077, 0.0
    %v6082 = vrot.slane %v6081, 4
    %v6083 = vadd.f32 %v6081, %v6082
    %v6084 = vrot.slane %v6083, 2
    %v6085 = vadd.f32 %v6083, %v6084
    %v6086 = vrot.slane %v6085, 1
    %v6087 = vadd.f32 %v6085, %v6086
    %v6088 = vsel %vm6080, %v6078, 0.0
    %v6089 = vrot.slane %v6088, 4
    %v6090 = vadd.f32 %v6088, %v6089
    %v6091 = vrot.slane %v6090, 2
    %v6092 = vadd.f32 %v6090, %v6091
    %v6093 = vrot.slane %v6092, 1
    %v6094 = vadd.f32 %v6092, %v6093
    %v6095 = vsel %vm6080, %v6079, 0.0
    %v6096 = vrot.slane %v6095, 4
    %v6097 = vadd.f32 %v6095, %v6096
    %v6098 = vrot.slane %v6097, 2
    %v6099 = vadd.f32 %v6097, %v6098
    %v6100 = vrot.slane %v6099, 1
    %v6101 = vadd.f32 %v6099, %v6100
    %v6102 = vmul.f32 %v6077, %v6077
    %v6103 = vmul.f32 %v6078, %v6078
    %v6104 = vmul.f32 %v6079, %v6079
    %v6105 = vsel %vm6080, %v6102, 0.0
    %v6106 = vrot.slane %v6105, 4
    %v6107 = vadd.f32 %v6105, %v6106
    %v6108 = vrot.slane %v6107, 2
    %v6109 = vadd.f32 %v6107, %v6108
    %v6110 = vrot.slane %v6109, 1
    %v6111 = vadd.f32 %v6109, %v6110
    %v6112 = vsel %vm6080, %v6103, 0.0
    %v6113 = vrot.slane %v6112, 4
    %v6114 = vadd.f32 %v6112, %v6113
    %v6115 = vrot.slane %v6114, 2
    %v6116 = vadd.f32 %v6114, %v6115
    %v6117 = vrot.slane %v6116, 1
    %v6118 = vadd.f32 %v6116, %v6117
    %v6119 = vsel %vm6080, %v6104, 0.0
    %v6120 = vrot.slane %v6119, 4
    %v6121 = vadd.f32 %v6119, %v6120
    %v6122 = vrot.slane %v6121, 2
    %v6123 = vadd.f32 %v6121, %v6122
    %v6124 = vrot.slane %v6123, 1
    %v6125 = vadd.f32 %v6123, %v6124
    %v6126 = vld [vmem:[#allocation19] sm:$0xff]
    %v6127 = vld [vmem:[#allocation19 + $0x8] sm:$0xff]
    %v6128 = vld [vmem:[#allocation19 + $0x10] sm:$0xff]
    %v6129 = vld [vmem:[#allocation19 + $0x18] sm:$0xff]
    %v6130 = vld [vmem:[#allocation19 + $0x20] sm:$0xff]
    %v6131 = vld [vmem:[#allocation19 + $0x28] sm:$0xff]
    %v6132 = vld [vmem:[#allocation19 + $0x30] sm:$0xff]
    %v6133 = vld [vmem:[#allocation19 + $0x38] sm:$0xff]
    %v6134 = vld [vmem:[#allocation19 + $0x40] sm:$0xff]
    %v6135 = vld [vmem:[#allocation19 + $0x48] sm:$0xff]
    %v6136 = vld [vmem:[#allocation19 + $0x50] sm:$0xff]
    %v6137 = vld [vmem:[#allocation19 + $0x58] sm:$0xff]
    %v6138 = vld [vmem:[#allocation19 + $0x60] sm:$0xff]
    %v6139 = vld [vmem:[#allocation19 + $0x68] sm:$0xff]
    %v6140 = vld [vmem:[#allocation19 + $0x70] sm:$0xff]
    %v6141 = vld [vmem:[#allocation19 + $0x78] sm:$0xff]
    %v6142 = vld [vmem:[#allocation19 + $0x80] sm:$0xff]
    %v6143 = vld [vmem:[#allocation19 + $0x88] sm:$0xff]
    %v6144 = vld [vmem:[#allocation19 + $0x90] sm:$0xff]
    %v6145 = vld [vmem:[#allocation19 + $0x98] sm:$0xff]
    %v6146 = vld [vmem:[#allocation19 + $0xa0] sm:$0xff]
    %v6147 = vld [vmem:[#allocation19 + $0xa8] sm:$0xff]
    %v6148 = vld [vmem:[#allocation19 + $0xb0] sm:$0xff]
    %v6149 = vld [vmem:[#allocation19 + $0xb8] sm:$0xff]
    %v6150 = vld [vmem:[#allocation19 + $0xc0] sm:$0xff]
    %v6151 = vld [vmem:[#allocation19 + $0xc8] sm:$0xff]
    %v6152 = vld [vmem:[#allocation19 + $0xd0] sm:$0xff]
    %v6153 = vld [vmem:[#allocation19 + $0xd8] sm:$0xff]
    %v6154 = vld [vmem:[#allocation19 + $0xe0] sm:$0xff]
    %v6155 = vld [vmem:[#allocation19 + $0xe8] sm:$0xff]
    %v6156 = vld [vmem:[#allocation19 + $0xf0] sm:$0xff]
    %v6157 = vld [vmem:[#allocation19 + $0xf8] sm:$0xff]
    %v6158 = vld [vmem:[#allocation19 + $0x100] sm:$0xff]
    %v6159 = vld [vmem:[#allocation19 + $0x108] sm:$0xff]
    %v6160 = vld [vmem:[#allocation19 + $0x110] sm:$0xff]
    %v6161 = vld [vmem:[#allocation19 + $0x118] sm:$0xff]
    %v6162 = vld [vmem:[#allocation19 + $0x120] sm:$0xff]
    %v6163 = vld [vmem:[#allocation19 + $0x128] sm:$0xff]
    %v6164 = vld [vmem:[#allocation19 + $0x130] sm:$0xff]
    %v6165 = vld [vmem:[#allocation19 + $0x138] sm:$0xff]
    %v6166 = vld [vmem:[#allocation19 + $0x140] sm:$0xff]
    %v6167 = vld [vmem:[#allocation19 + $0x148] sm:$0xff]
    %v6168 = vld [vmem:[#allocation19 + $0x150] sm:$0xff]
    %v6169 = vld [vmem:[#allocation19 + $0x158] sm:$0xff]
    %v6170 = vld [vmem:[#allocation19 + $0x160] sm:$0xff]
    %v6171 = vld [vmem:[#allocation19 + $0x168] sm:$0xff]
    %v6172 = vld [vmem:[#allocation19 + $0x170] sm:$0xff]
    %v6173 = vld [vmem:[#allocation19 + $0x178] sm:$0xff]
    %6174 = vmatprep.subr.mxu0 0.0
    %6175 = vmatpush1.msra.mxu0 %v6141
    %6176 = vmatprep.subr.mxu0 0.0
    %6177 = vmatpush1.msra.mxu0 %v6140
    %6178 = vmatprep.subr.mxu0 0.0
    %6179 = vmatpush1.msra.mxu0 %v6139
    %6180 = vmatprep.subr.mxu0 0.0
    %6181 = vmatpush1.msra.mxu0 %v6138
    %6182 = vmatprep.subr.mxu0 0.0
    %6183 = vmatpush1.msra.mxu0 %v6137
    %6184 = vmatprep.subr.mxu0 0.0
    %6185 = vmatpush1.msra.mxu0 %v6136
    %6186 = vmatprep.subr.mxu0 0.0
    %6187 = vmatpush1.msra.mxu0 %v6135
    %6188 = vmatprep.subr.mxu0 0.0
    %6189 = vmatpush1.msra.mxu0 %v6134
    %6190 = vmatprep.subr.mxu0 0.0
    %6191 = vmatpush1.msra.mxu0 %v6133
    %6192 = vmatprep.subr.mxu0 0.0
    %6193 = vmatpush1.msra.mxu0 %v6132
    %6194 = vmatprep.subr.mxu0 0.0
    %6195 = vmatpush1.msra.mxu0 %v6131
    %6196 = vmatprep.subr.mxu0 0.0
    %6197 = vmatpush1.msra.mxu0 %v6130
    %6198 = vmatprep.subr.mxu0 0.0
    %6199 = vmatpush1.msra.mxu0 %v6129
    %6200 = vmatprep.subr.mxu0 0.0
    %6201 = vmatpush1.msra.mxu0 %v6128
    %6202 = vmatprep.subr.mxu0 0.0
    %6203 = vmatpush1.msra.mxu0 %v6127
    %6204 = vmatprep.subr.mxu0 0.0
    %6205 = vmatpush1.msra.mxu0 %v6126
    %6206 = vmatprep.subr.mxu0 0.0
    %6207 = vmatpush2.msra.mxu0 %v6157
    %6208 = vmatprep.subr.mxu0 0.0
    %6209 = vmatpush2.msra.mxu0 %v6156
    %6210 = vmatprep.subr.mxu0 0.0
    %6211 = vmatpush2.msra.mxu0 %v6155
    %6212 = vmatprep.subr.mxu0 0.0
    %6213 = vmatpush2.msra.mxu0 %v6154
    %6214 = vmatprep.subr.mxu0 0.0
    %6215 = vmatpush2.msra.mxu0 %v6153
    %6216 = vmatprep.subr.mxu0 0.0
    %6217 = vmatpush2.msra.mxu0 %v6152
    %6218 = vmatprep.subr.mxu0 0.0
    %6219 = vmatpush2.msra.mxu0 %v6151
    %6220 = vmatprep.subr.mxu0 0.0
    %6221 = vmatpush2.msra.mxu0 %v6150
    %6222 = vmatprep.subr.mxu0 0.0
    %6223 = vmatpush2.msra.mxu0 %v6149
    %6224 = vmatprep.subr.mxu0 0.0
    %6225 = vmatpush2.msra.mxu0 %v6148
    %6226 = vmatprep.subr.mxu0 0.0
    %6227 = vmatpush2.msra.mxu0 %v6147
    %6228 = vmatprep.subr.mxu0 0.0
    %6229 = vmatpush2.msra.mxu0 %v6146
    %6230 = vmatprep.subr.mxu0 0.0
    %6231 = vmatpush2.msra.mxu0 %v6145
    %6232 = vmatprep.subr.mxu0 0.0
    %6233 = vmatpush2.msra.mxu0 %v6144
    %6234 = vmatprep.subr.mxu0 0.0
    %6235 = vmatpush2.msra.mxu0 %v6143
    %6236 = vmatprep.subr.mxu0 0.0
    %6237 = vmatpush2.msra.mxu0 %v6142
    %6238 = vmatprep.mubr.f32.mxu0 %v6094
    %6239 = vmatmul.mubr.f32.gmra.mxu0 %v6087
    %v6240 = vpop.f32.mrf.mxu0
    %v6241 = vadd.f32 0.0, %v6240
    %v6242 = vpop.f32.mrf.mxu0
    %6243 = vdwg.mxu0
    %6244 = vmatprep.subr.mxu0 0.0
    %6245 = vmatpush1.msra.mxu0 %v6173
    %6246 = vmatprep.subr.mxu0 0.0
    %6247 = vmatpush1.msra.mxu0 %v6172
    %6248 = vmatprep.subr.mxu0 0.0
    %6249 = vmatpush1.msra.mxu0 %v6171
    %6250 = vmatprep.subr.mxu0 0.0
    %6251 = vmatpush1.msra.mxu0 %v6170
    %6252 = vmatprep.subr.mxu0 0.0
    %6253 = vmatpush1.msra.mxu0 %v6169
    %6254 = vmatprep.subr.mxu0 0.0
    %6255 = vmatpush1.msra.mxu0 %v6168
    %6256 = vmatprep.subr.mxu0 0.0
    %6257 = vmatpush1.msra.mxu0 %v6167
    %6258 = vmatprep.subr.mxu0 0.0
    %6259 = vmatpush1.msra.mxu0 %v6166
    %6260 = vmatprep.subr.mxu0 0.0
    %6261 = vmatpush1.msra.mxu0 %v6165
    %6262 = vmatprep.subr.mxu0 0.0
    %6263 = vmatpush1.msra.mxu0 %v6164
    %6264 = vmatprep.subr.mxu0 0.0
    %6265 = vmatpush1.msra.mxu0 %v6163
    %6266 = vmatprep.subr.mxu0 0.0
    %6267 = vmatpush1.msra.mxu0 %v6162
    %6268 = vmatprep.subr.mxu0 0.0
    %6269 = vmatpush1.msra.mxu0 %v6161
    %6270 = vmatprep.subr.mxu0 0.0
    %6271 = vmatpush1.msra.mxu0 %v6160
    %6272 = vmatprep.subr.mxu0 0.0
    %6273 = vmatpush1.msra.mxu0 %v6159
    %6274 = vmatprep.subr.mxu0 0.0
    %6275 = vmatpush1.msra.mxu0 %v6158
    %6276 = vmatprep.subr.mxu0 0.0
    %6277 = vmatpush2.msra.mxu0 0.0
    %6278 = vmatprep.subr.mxu0 0.0
    %6279 = vmatpush2.msra.mxu0 0.0
    %6280 = vmatprep.subr.mxu0 0.0
    %6281 = vmatpush2.msra.mxu0 0.0
    %6282 = vmatprep.subr.mxu0 0.0
    %6283 = vmatpush2.msra.mxu0 0.0
    %6284 = vmatprep.subr.mxu0 0.0
    %6285 = vmatpush2.msra.mxu0 0.0
    %6286 = vmatprep.subr.mxu0 0.0
    %6287 = vmatpush2.msra.mxu0 0.0
    %6288 = vmatprep.subr.mxu0 0.0
    %6289 = vmatpush2.msra.mxu0 0.0
    %6290 = vmatprep.subr.mxu0 0.0
    %6291 = vmatpush2.msra.mxu0 0.0
    %6292 = vmatprep.subr.mxu0 0.0
    %6293 = vmatpush2.msra.mxu0 0.0
    %6294 = vmatprep.subr.mxu0 0.0
    %6295 = vmatpush2.msra.mxu0 0.0
    %6296 = vmatprep.subr.mxu0 0.0
    %6297 = vmatpush2.msra.mxu0 0.0
    %6298 = vmatprep.subr.mxu0 0.0
    %6299 = vmatpush2.msra.mxu0 0.0
    %6300 = vmatprep.subr.mxu0 0.0
    %6301 = vmatpush2.msra.mxu0 0.0
    %6302 = vmatprep.subr.mxu0 0.0
    %6303 = vmatpush2.msra.mxu0 0.0
    %6304 = vmatprep.subr.mxu0 0.0
    %6305 = vmatpush2.msra.mxu0 0.0
    %6306 = vmatprep.subr.mxu0 0.0
    %6307 = vmatpush2.msra.mxu0 0.0
    %6308 = vmatprep.mubr.f32.mxu0 0.0
    %6309 = vmatmul.mubr.f32.gmra.mxu0 %v6101
    %v6310 = vpop.f32.mrf.mxu0
    %v6311 = vadd.f32 %v6241, %v6310
    %v6312 = vpop.f32.mrf.mxu0
    %6313 = vdwg.mxu0
    %6314 = vmatprep.subr.mxu0 0.0
    %6315 = vmatpush1.msra.mxu0 %v6141
    %6316 = vmatprep.subr.mxu0 0.0
    %6317 = vmatpush1.msra.mxu0 %v6140
    %6318 = vmatprep.subr.mxu0 0.0
    %6319 = vmatpush1.msra.mxu0 %v6139
    %6320 = vmatprep.subr.mxu0 0.0
    %6321 = vmatpush1.msra.mxu0 %v6138
    %6322 = vmatprep.subr.mxu0 0.0
    %6323 = vmatpush1.msra.mxu0 %v6137
    %6324 = vmatprep.subr.mxu0 0.0
    %6325 = vmatpush1.msra.mxu0 %v6136
    %6326 = vmatprep.subr.mxu0 0.0
    %6327 = vmatpush1.msra.mxu0 %v6135
    %6328 = vmatprep.subr.mxu0 0.0
    %6329 = vmatpush1.msra.mxu0 %v6134
    %6330 = vmatprep.subr.mxu0 0.0
    %6331 = vmatpush1.msra.mxu0 %v6133
    %6332 = vmatprep.subr.mxu0 0.0
    %6333 = vmatpush1.msra.mxu0 %v6132
    %6334 = vmatprep.subr.mxu0 0.0
    %6335 = vmatpush1.msra.mxu0 %v6131
    %6336 = vmatprep.subr.mxu0 0.0
    %6337 = vmatpush1.msra.mxu0 %v6130
    %6338 = vmatprep.subr.mxu0 0.0
    %6339 = vmatpush1.msra.mxu0 %v6129
    %6340 = vmatprep.subr.mxu0 0.0
    %6341 = vmatpush1.msra.mxu0 %v6128
    %6342 = vmatprep.subr.mxu0 0.0
    %6343 = vmatpush1.msra.mxu0 %v6127
    %6344 = vmatprep.subr.mxu0 0.0
    %6345 = vmatpush1.msra.mxu0 %v6126
    %6346 = vmatprep.subr.mxu0 0.0
    %6347 = vmatpush2.msra.mxu0 %v6157
    %6348 = vmatprep.subr.mxu0 0.0
    %6349 = vmatpush2.msra.mxu0 %v6156
    %6350 = vmatprep.subr.mxu0 0.0
    %6351 = vmatpush2.msra.mxu0 %v6155
    %6352 = vmatprep.subr.mxu0 0.0
    %6353 = vmatpush2.msra.mxu0 %v6154
    %6354 = vmatprep.subr.mxu0 0.0
    %6355 = vmatpush2.msra.mxu0 %v6153
    %6356 = vmatprep.subr.mxu0 0.0
    %6357 = vmatpush2.msra.mxu0 %v6152
    %6358 = vmatprep.subr.mxu0 0.0
    %6359 = vmatpush2.msra.mxu0 %v6151
    %6360 = vmatprep.subr.mxu0 0.0
    %6361 = vmatpush2.msra.mxu0 %v6150
    %6362 = vmatprep.subr.mxu0 0.0
    %6363 = vmatpush2.msra.mxu0 %v6149
    %6364 = vmatprep.subr.mxu0 0.0
    %6365 = vmatpush2.msra.mxu0 %v6148
    %6366 = vmatprep.subr.mxu0 0.0
    %6367 = vmatpush2.msra.mxu0 %v6147
    %6368 = vmatprep.subr.mxu0 0.0
    %6369 = vmatpush2.msra.mxu0 %v6146
    %6370 = vmatprep.subr.mxu0 0.0
    %6371 = vmatpush2.msra.mxu0 %v6145
    %6372 = vmatprep.subr.mxu0 0.0
    %6373 = vmatpush2.msra.mxu0 %v6144
    %6374 = vmatprep.subr.mxu0 0.0
    %6375 = vmatpush2.msra.mxu0 %v6143
    %6376 = vmatprep.subr.mxu0 0.0
    %6377 = vmatpush2.msra.mxu0 %v6142
    %6378 = vmatprep.mubr.f32.mxu0 %v6118
    %6379 = vmatmul.mubr.f32.gmra.mxu0 %v6111
    %v6380 = vpop.f32.mrf.mxu0
    %v6381 = vadd.f32 0.0, %v6380
    %v6382 = vpop.f32.mrf.mxu0
    %6383 = vdwg.mxu0
    %6384 = vmatprep.subr.mxu0 0.0
    %6385 = vmatpush1.msra.mxu0 %v6173
    %6386 = vmatprep.subr.mxu0 0.0
    %6387 = vmatpush1.msra.mxu0 %v6172
    %6388 = vmatprep.subr.mxu0 0.0
    %6389 = vmatpush1.msra.mxu0 %v6171
    %6390 = vmatprep.subr.mxu0 0.0
    %6391 = vmatpush1.msra.mxu0 %v6170
    %6392 = vmatprep.subr.mxu0 0.0
    %6393 = vmatpush1.msra.mxu0 %v6169
    %6394 = vmatprep.subr.mxu0 0.0
    %6395 = vmatpush1.msra.mxu0 %v6168
    %6396 = vmatprep.subr.mxu0 0.0
    %6397 = vmatpush1.msra.mxu0 %v6167
    %6398 = vmatprep.subr.mxu0 0.0
    %6399 = vmatpush1.msra.mxu0 %v6166
    %6400 = vmatprep.subr.mxu0 0.0
    %6401 = vmatpush1.msra.mxu0 %v6165
    %6402 = vmatprep.subr.mxu0 0.0
    %6403 = vmatpush1.msra.mxu0 %v6164
    %6404 = vmatprep.subr.mxu0 0.0
    %6405 = vmatpush1.msra.mxu0 %v6163
    %6406 = vmatprep.subr.mxu0 0.0
    %6407 = vmatpush1.msra.mxu0 %v6162
    %6408 = vmatprep.subr.mxu0 0.0
    %6409 = vmatpush1.msra.mxu0 %v6161
    %6410 = vmatprep.subr.mxu0 0.0
    %6411 = vmatpush1.msra.mxu0 %v6160
    %6412 = vmatprep.subr.mxu0 0.0
    %6413 = vmatpush1.msra.mxu0 %v6159
    %6414 = vmatprep.subr.mxu0 0.0
    %6415 = vmatpush1.msra.mxu0 %v6158
    %6416 = vmatprep.subr.mxu0 0.0
    %6417 = vmatpush2.msra.mxu0 0.0
    %6418 = vmatprep.subr.mxu0 0.0
    %6419 = vmatpush2.msra.mxu0 0.0
    %6420 = vmatprep.subr.mxu0 0.0
    %6421 = vmatpush2.msra.mxu0 0.0
    %6422 = vmatprep.subr.mxu0 0.0
    %6423 = vmatpush2.msra.mxu0 0.0
    %6424 = vmatprep.subr.mxu0 0.0
    %6425 = vmatpush2.msra.mxu0 0.0
    %6426 = vmatprep.subr.mxu0 0.0
    %6427 = vmatpush2.msra.mxu0 0.0
    %6428 = vmatprep.subr.mxu0 0.0
    %6429 = vmatpush2.msra.mxu0 0.0
    %6430 = vmatprep.subr.mxu0 0.0
    %6431 = vmatpush2.msra.mxu0 0.0
    %6432 = vmatprep.subr.mxu0 0.0
    %6433 = vmatpush2.msra.mxu0 0.0
    %6434 = vmatprep.subr.mxu0 0.0
    %6435 = vmatpush2.msra.mxu0 0.0
    %6436 = vmatprep.subr.mxu0 0.0
    %6437 = vmatpush2.msra.mxu0 0.0
    %6438 = vmatprep.subr.mxu0 0.0
    %6439 = vmatpush2.msra.mxu0 0.0
    %6440 = vmatprep.subr.mxu0 0.0
    %6441 = vmatpush2.msra.mxu0 0.0
    %6442 = vmatprep.subr.mxu0 0.0
    %6443 = vmatpush2.msra.mxu0 0.0
    %6444 = vmatprep.subr.mxu0 0.0
    %6445 = vmatpush2.msra.mxu0 0.0
    %6446 = vmatprep.subr.mxu0 0.0
    %6447 = vmatpush2.msra.mxu0 0.0
    %6448 = vmatprep.mubr.f32.mxu0 0.0
    %6449 = vmatmul.mubr.f32.gmra.mxu0 %v6125
    %v6450 = vpop.f32.mrf.mxu0
    %v6451 = vadd.f32 %v6381, %v6450
    %v6452 = vpop.f32.mrf.mxu0
    %6453 = vdwg.mxu0
    %v6454 = vmul.f32 %v6311, 0.055555556
    %v6455 = vmul.f32 %v6451, 0.055555556
    %v6456 = vmul.f32 %v6454, %v6454
    %v6457 = vsub.f32 %v6455, %v6456
    %v6458 = vmax.f32 %v6457, 0.0
    %v6459 = vld [vmem:[%s18] sm:$0x1]
    %v6460 = vadd.f32 %v6458, 1e-05
    %v6461 = vrsqrt.pop %v6460
    %v6462 = vmul.f32 %v6459, %v6461
    %v6463 = vld [vmem:[%s19] sm:$0x1]
    %v6464 = vmul.f32 %v6454, %v6462
    %v6465 = vsub.f32 %v6463, %v6464
    %v6466 = vld [vmem:[#allocation20] sm:$0xff]
    %v6467 = vld [vmem:[#allocation20 + $0x8] sm:$0xff]
    %v6468 = vld [vmem:[#allocation20 + $0x10] sm:$0xff]
    %v6469 = vld [vmem:[#allocation20 + $0x18] sm:$0xff]
    %v6470 = vld [vmem:[#allocation20 + $0x20] sm:$0xff]
    %v6471 = vld [vmem:[#allocation20 + $0x28] sm:$0xff]
    %v6472 = vld [vmem:[#allocation20 + $0x30] sm:$0xff]
    %v6473 = vld [vmem:[#allocation20 + $0x38] sm:$0xff]
    %v6474 = vld [vmem:[#allocation20 + $0x40] sm:$0xff]
    %v6475 = vld [vmem:[#allocation20 + $0x48] sm:$0xff]
    %v6476 = vld [vmem:[#allocation20 + $0x50] sm:$0xff]
    %v6477 = vld [vmem:[#allocation20 + $0x58] sm:$0xff]
    %v6478 = vld [vmem:[#allocation20 + $0x60] sm:$0xff]
    %v6479 = vld [vmem:[#allocation20 + $0x68] sm:$0xff]
    %v6480 = vld [vmem:[#allocation20 + $0x70] sm:$0xff]
    %v6481 = vld [vmem:[#allocation20 + $0x78] sm:$0xff]
    %v6482 = vld [vmem:[#allocation20 + $0x80] sm:$0xff]
    %v6483 = vld [vmem:[#allocation20 + $0x88] sm:$0xff]
    %v6484 = vld [vmem:[#allocation20 + $0x90] sm:$0xff]
    %v6485 = vld [vmem:[#allocation20 + $0x98] sm:$0xff]
    %v6486 = vld [vmem:[#allocation20 + $0xa0] sm:$0xff]
    %v6487 = vld [vmem:[#allocation20 + $0xa8] sm:$0xff]
    %v6488 = vld [vmem:[#allocation20 + $0xb0] sm:$0xff]
    %v6489 = vld [vmem:[#allocation20 + $0xb8] sm:$0xff]
    %v6490 = vld [vmem:[#allocation20 + $0xc0] sm:$0xff]
    %v6491 = vld [vmem:[#allocation20 + $0xc8] sm:$0xff]
    %v6492 = vld [vmem:[#allocation20 + $0xd0] sm:$0xff]
    %v6493 = vld [vmem:[#allocation20 + $0xd8] sm:$0xff]
    %v6494 = vld [vmem:[#allocation20 + $0xe0] sm:$0xff]
    %v6495 = vld [vmem:[#allocation20 + $0xe8] sm:$0xff]
    %v6496 = vld [vmem:[#allocation20 + $0xf0] sm:$0xff]
    %v6497 = vld [vmem:[#allocation20 + $0xf8] sm:$0xff]
    %v6498 = vld [vmem:[#allocation20 + $0x100] sm:$0xff]
    %v6499 = vld [vmem:[#allocation20 + $0x108] sm:$0xff]
    %v6500 = vld [vmem:[#allocation20 + $0x110] sm:$0xff]
    %v6501 = vld [vmem:[#allocation20 + $0x118] sm:$0xff]
    %v6502 = vld [vmem:[#allocation20 + $0x120] sm:$0xff]
    %v6503 = vld [vmem:[#allocation20 + $0x128] sm:$0xff]
    %v6504 = vld [vmem:[#allocation20 + $0x130] sm:$0xff]
    %v6505 = vld [vmem:[#allocation20 + $0x138] sm:$0xff]
    %v6506 = vld [vmem:[#allocation20 + $0x140] sm:$0xff]
    %v6507 = vld [vmem:[#allocation20 + $0x148] sm:$0xff]
    %v6508 = vld [vmem:[#allocation20 + $0x150] sm:$0xff]
    %v6509 = vld [vmem:[#allocation20 + $0x158] sm:$0xff]
    %v6510 = vld [vmem:[#allocation20 + $0x160] sm:$0xff]
    %v6511 = vld [vmem:[#allocation20 + $0x168] sm:$0xff]
    %v6512 = vld [vmem:[#allocation20 + $0x170] sm:$0xff]
    %v6513 = vld [vmem:[#allocation20 + $0x178] sm:$0xff]
    %6514 = vmatprep.subr.mxu0 %v6512
    %6515 = vmatpush1.msra.mxu0 %v6511
    %6516 = vmatprep.subr.mxu0 %v6509
    %6517 = vmatpush1.msra.mxu0 %v6508
    %6518 = vmatprep.subr.mxu0 %v6506
    %6519 = vmatpush1.msra.mxu0 %v6505
    %6520 = vmatprep.subr.mxu0 %v6503
    %6521 = vmatpush1.msra.mxu0 %v6502
    %6522 = vmatprep.subr.mxu0 %v6500
    %6523 = vmatpush1.msra.mxu0 %v6499
    %6524 = vmatprep.subr.mxu0 %v6497
    %6525 = vmatpush1.msra.mxu0 %v6496
    %6526 = vmatprep.subr.mxu0 %v6494
    %6527 = vmatpush1.msra.mxu0 %v6493
    %6528 = vmatprep.subr.mxu0 %v6491
    %6529 = vmatpush1.msra.mxu0 %v6490
    %6530 = vmatprep.subr.mxu0 %v6488
    %6531 = vmatpush1.msra.mxu0 %v6487
    %6532 = vmatprep.subr.mxu0 %v6485
    %6533 = vmatpush1.msra.mxu0 %v6484
    %6534 = vmatprep.subr.mxu0 %v6482
    %6535 = vmatpush1.msra.mxu0 %v6481
    %6536 = vmatprep.subr.mxu0 %v6479
    %6537 = vmatpush1.msra.mxu0 %v6478
    %6538 = vmatprep.subr.mxu0 %v6476
    %6539 = vmatpush1.msra.mxu0 %v6475
    %6540 = vmatprep.subr.mxu0 %v6473
    %6541 = vmatpush1.msra.mxu0 %v6472
    %6542 = vmatprep.subr.mxu0 %v6470
    %6543 = vmatpush1.msra.mxu0 %v6469
    %6544 = vmatprep.subr.mxu0 %v6467
    %6545 = vmatpush1.msra.mxu0 %v6466
    %6546 = vmatprep.subr.mxu0 0.0
    %6547 = vmatpush2.msra.mxu0 0.0
    %6548 = vmatprep.subr.mxu0 0.0
    %6549 = vmatpush2.msra.mxu0 0.0
    %6550 = vmatprep.subr.mxu0 0.0
    %6551 = vmatpush2.msra.mxu0 0.0
    %6552 = vmatprep.subr.mxu0 0.0
    %6553 = vmatpush2.msra.mxu0 0.0
    %6554 = vmatprep.subr.mxu0 0.0
    %6555 = vmatpush2.msra.mxu0 0.0
    %6556 = vmatprep.subr.mxu0 0.0
    %6557 = vmatpush2.msra.mxu0 0.0
    %6558 = vmatprep.subr.mxu0 0.0
    %6559 = vmatpush2.msra.mxu0 0.0
    %6560 = vmatprep.subr.mxu0 0.0
    %6561 = vmatpush2.msra.mxu0 0.0
    %6562 = vmatprep.subr.mxu0 0.0
    %6563 = vmatpush2.msra.mxu0 0.0
    %6564 = vmatprep.subr.mxu0 0.0
    %6565 = vmatpush2.msra.mxu0 0.0
    %6566 = vmatprep.subr.mxu0 0.0
    %6567 = vmatpush2.msra.mxu0 0.0
    %6568 = vmatprep.subr.mxu0 0.0
    %6569 = vmatpush2.msra.mxu0 0.0
    %6570 = vmatprep.subr.mxu0 0.0
    %6571 = vmatpush2.msra.mxu0 0.0
    %6572 = vmatprep.subr.mxu0 0.0
    %6573 = vmatpush2.msra.mxu0 0.0
    %6574 = vmatprep.subr.mxu0 0.0
    %6575 = vmatpush2.msra.mxu0 0.0
    %6576 = vmatprep.subr.mxu0 0.0
    %6577 = vmatpush2.msra.mxu0 0.0
    %6578 = vmatprep.mubr.f32.mxu0 0.0
    %6579 = vmatmul.mubr.f32.gmra.mxu0 %v6462
    %v6580 = vpop.f32.mrf.mxu0
    %v6581 = vadd.f32 0.0, %v6580
    %v6582 = vpop.f32.mrf.mxu0
    %v6583 = vadd.f32 0.0, %v6582
    %6584 = vdwg.mxu0
    %6585 = vmatprep.subr.mxu0 0.0
    %6586 = vmatpush1.msra.mxu0 %v6513
    %6587 = vmatprep.subr.mxu0 0.0
    %6588 = vmatpush1.msra.mxu0 %v6510
    %6589 = vmatprep.subr.mxu0 0.0
    %6590 = vmatpush1.msra.mxu0 %v6507
    %6591 = vmatprep.subr.mxu0 0.0
    %6592 = vmatpush1.msra.mxu0 %v6504
    %6593 = vmatprep.subr.mxu0 0.0
    %6594 = vmatpush1.msra.mxu0 %v6501
    %6595 = vmatprep.subr.mxu0 0.0
    %6596 = vmatpush1.msra.mxu0 %v6498
    %6597 = vmatprep.subr.mxu0 0.0
    %6598 = vmatpush1.msra.mxu0 %v6495
    %6599 = vmatprep.subr.mxu0 0.0
    %6600 = vmatpush1.msra.mxu0 %v6492
    %6601 = vmatprep.subr.mxu0 0.0
    %6602 = vmatpush1.msra.mxu0 %v6489
    %6603 = vmatprep.subr.mxu0 0.0
    %6604 = vmatpush1.msra.mxu0 %v6486
    %6605 = vmatprep.subr.mxu0 0.0
    %6606 = vmatpush1.msra.mxu0 %v6483
    %6607 = vmatprep.subr.mxu0 0.0
    %6608 = vmatpush1.msra.mxu0 %v6480
    %6609 = vmatprep.subr.mxu0 0.0
    %6610 = vmatpush1.msra.mxu0 %v6477
    %6611 = vmatprep.subr.mxu0 0.0
    %6612 = vmatpush1.msra.mxu0 %v6474
    %6613 = vmatprep.subr.mxu0 0.0
    %6614 = vmatpush1.msra.mxu0 %v6471
    %6615 = vmatprep.subr.mxu0 0.0
    %6616 = vmatpush1.msra.mxu0 %v6468
    %6617 = vmatprep.subr.mxu0 0.0
    %6618 = vmatpush2.msra.mxu0 0.0
    %6619 = vmatprep.subr.mxu0 0.0
    %6620 = vmatpush2.msra.mxu0 0.0
    %6621 = vmatprep.subr.mxu0 0.0
    %6622 = vmatpush2.msra.mxu0 0.0
    %6623 = vmatprep.subr.mxu0 0.0
    %6624 = vmatpush2.msra.mxu0 0.0
    %6625 = vmatprep.subr.mxu0 0.0
    %6626 = vmatpush2.msra.mxu0 0.0
    %6627 = vmatprep.subr.mxu0 0.0
    %6628 = vmatpush2.msra.mxu0 0.0
    %6629 = vmatprep.subr.mxu0 0.0
    %6630 = vmatpush2.msra.mxu0 0.0
    %6631 = vmatprep.subr.mxu0 0.0
    %6632 = vmatpush2.msra.mxu0 0.0
    %6633 = vmatprep.subr.mxu0 0.0
    %6634 = vmatpush2.msra.mxu0 0.0
    %6635 = vmatprep.subr.mxu0 0.0
    %6636 = vmatpush2.msra.mxu0 0.0
    %6637 = vmatprep.subr.mxu0 0.0
    %6638 = vmatpush2.msra.mxu0 0.0
    %6639 = vmatprep.subr.mxu0 0.0
    %6640 = vmatpush2.msra.mxu0 0.0
    %6641 = vmatprep.subr.mxu0 0.0
    %6642 = vmatpush2.msra.mxu0 0.0
    %6643 = vmatprep.subr.mxu0 0.0
    %6644 = vmatpush2.msra.mxu0 0.0
    %6645 = vmatprep.subr.mxu0 0.0
    %6646 = vmatpush2.msra.mxu0 0.0
    %6647 = vmatprep.subr.mxu0 0.0
    %6648 = vmatpush2.msra.mxu0 0.0
    %6649 = vmatprep.mubr.f32.mxu0 0.0
    %6650 = vmatmul.mubr.f32.gmra.mxu0 %v6462
    %v6651 = vpop.f32.mrf.mxu0
    %v6652 = vadd.f32 0.0, %v6651
    %v6653 = vpop.f32.mrf.mxu0
    %6654 = vdwg.mxu0
    %6655 = vmatprep.subr.mxu0 %v6512
    %6656 = vmatpush1.msra.mxu0 %v6511
    %6657 = vmatprep.subr.mxu0 %v6509
    %6658 = vmatpush1.msra.mxu0 %v6508
    %6659 = vmatprep.subr.mxu0 %v6506
    %6660 = vmatpush1.msra.mxu0 %v6505
    %6661 = vmatprep.subr.mxu0 %v6503
    %6662 = vmatpush1.msra.mxu0 %v6502
    %6663 = vmatprep.subr.mxu0 %v6500
    %6664 = vmatpush1.msra.mxu0 %v6499
    %6665 = vmatprep.subr.mxu0 %v6497
    %6666 = vmatpush1.msra.mxu0 %v6496
    %6667 = vmatprep.subr.mxu0 %v6494
    %6668 = vmatpush1.msra.mxu0 %v6493
    %6669 = vmatprep.subr.mxu0 %v6491
    %6670 = vmatpush1.msra.mxu0 %v6490
    %6671 = vmatprep.subr.mxu0 %v6488
    %6672 = vmatpush1.msra.mxu0 %v6487
    %6673 = vmatprep.subr.mxu0 %v6485
    %6674 = vmatpush1.msra.mxu0 %v6484
    %6675 = vmatprep.subr.mxu0 %v6482
    %6676 = vmatpush1.msra.mxu0 %v6481
    %6677 = vmatprep.subr.mxu0 %v6479
    %6678 = vmatpush1.msra.mxu0 %v6478
    %6679 = vmatprep.subr.mxu0 %v6476
    %6680 = vmatpush1.msra.mxu0 %v6475
    %6681 = vmatprep.subr.mxu0 %v6473
    %6682 = vmatpush1.msra.mxu0 %v6472
    %6683 = vmatprep.subr.mxu0 %v6470
    %6684 = vmatpush1.msra.mxu0 %v6469
    %6685 = vmatprep.subr.mxu0 %v6467
    %6686 = vmatpush1.msra.mxu0 %v6466
    %6687 = vmatprep.subr.mxu0 0.0
    %6688 = vmatpush2.msra.mxu0 0.0
    %6689 = vmatprep.subr.mxu0 0.0
    %6690 = vmatpush2.msra.mxu0 0.0
    %6691 = vmatprep.subr.mxu0 0.0
    %6692 = vmatpush2.msra.mxu0 0.0
    %6693 = vmatprep.subr.mxu0 0.0
    %6694 = vmatpush2.msra.mxu0 0.0
    %6695 = vmatprep.subr.mxu0 0.0
    %6696 = vmatpush2.msra.mxu0 0.0
    %6697 = vmatprep.subr.mxu0 0.0
    %6698 = vmatpush2.msra.mxu0 0.0
    %6699 = vmatprep.subr.mxu0 0.0
    %6700 = vmatpush2.msra.mxu0 0.0
    %6701 = vmatprep.subr.mxu0 0.0
    %6702 = vmatpush2.msra.mxu0 0.0
    %6703 = vmatprep.subr.mxu0 0.0
    %6704 = vmatpush2.msra.mxu0 0.0
    %6705 = vmatprep.subr.mxu0 0.0
    %6706 = vmatpush2.msra.mxu0 0.0
    %6707 = vmatprep.subr.mxu0 0.0
    %6708 = vmatpush2.msra.mxu0 0.0
    %6709 = vmatprep.subr.mxu0 0.0
    %6710 = vmatpush2.msra.mxu0 0.0
    %6711 = vmatprep.subr.mxu0 0.0
    %6712 = vmatpush2.msra.mxu0 0.0
    %6713 = vmatprep.subr.mxu0 0.0
    %6714 = vmatpush2.msra.mxu0 0.0
    %6715 = vmatprep.subr.mxu0 0.0
    %6716 = vmatpush2.msra.mxu0 0.0
    %6717 = vmatprep.subr.mxu0 0.0
    %6718 = vmatpush2.msra.mxu0 0.0
    %6719 = vmatprep.mubr.f32.mxu0 0.0
    %6720 = vmatmul.mubr.f32.gmra.mxu0 %v6465
    %v6721 = vpop.f32.mrf.mxu0
    %v6722 = vadd.f32 0.0, %v6721
    %v6723 = vpop.f32.mrf.mxu0
    %v6724 = vadd.f32 0.0, %v6723
    %6725 = vdwg.mxu0
    %6726 = vmatprep.subr.mxu0 0.0
    %6727 = vmatpush1.msra.mxu0 %v6513
    %6728 = vmatprep.subr.mxu0 0.0
    %6729 = vmatpush1.msra.mxu0 %v6510
    %6730 = vmatprep.subr.mxu0 0.0
    %6731 = vmatpush1.msra.mxu0 %v6507
    %6732 = vmatprep.subr.mxu0 0.0
    %6733 = vmatpush1.msra.mxu0 %v6504
    %6734 = vmatprep.subr.mxu0 0.0
    %6735 = vmatpush1.msra.mxu0 %v6501
    %6736 = vmatprep.subr.mxu0 0.0
    %6737 = vmatpush1.msra.mxu0 %v6498
    %6738 = vmatprep.subr.mxu0 0.0
    %6739 = vmatpush1.msra.mxu0 %v6495
    %6740 = vmatprep.subr.mxu0 0.0
    %6741 = vmatpush1.msra.mxu0 %v6492
    %6742 = vmatprep.subr.mxu0 0.0
    %6743 = vmatpush1.msra.mxu0 %v6489
    %6744 = vmatprep.subr.mxu0 0.0
    %6745 = vmatpush1.msra.mxu0 %v6486
    %6746 = vmatprep.subr.mxu0 0.0
    %6747 = vmatpush1.msra.mxu0 %v6483
    %6748 = vmatprep.subr.mxu0 0.0
    %6749 = vmatpush1.msra.mxu0 %v6480
    %6750 = vmatprep.subr.mxu0 0.0
    %6751 = vmatpush1.msra.mxu0 %v6477
    %6752 = vmatprep.subr.mxu0 0.0
    %6753 = vmatpush1.msra.mxu0 %v6474
    %6754 = vmatprep.subr.mxu0 0.0
    %6755 = vmatpush1.msra.mxu0 %v6471
    %6756 = vmatprep.subr.mxu0 0.0
    %6757 = vmatpush1.msra.mxu0 %v6468
    %6758 = vmatprep.subr.mxu0 0.0
    %6759 = vmatpush2.msra.mxu0 0.0
    %6760 = vmatprep.subr.mxu0 0.0
    %6761 = vmatpush2.msra.mxu0 0.0
    %6762 = vmatprep.subr.mxu0 0.0
    %6763 = vmatpush2.msra.mxu0 0.0
    %6764 = vmatprep.subr.mxu0 0.0
    %6765 = vmatpush2.msra.mxu0 0.0
    %6766 = vmatprep.subr.mxu0 0.0
    %6767 = vmatpush2.msra.mxu0 0.0
    %6768 = vmatprep.subr.mxu0 0.0
    %6769 = vmatpush2.msra.mxu0 0.0
    %6770 = vmatprep.subr.mxu0 0.0
    %6771 = vmatpush2.msra.mxu0 0.0
    %6772 = vmatprep.subr.mxu0 0.0
    %6773 = vmatpush2.msra.mxu0 0.0
    %6774 = vmatprep.subr.mxu0 0.0
    %6775 = vmatpush2.msra.mxu0 0.0
    %6776 = vmatprep.subr.mxu0 0.0
    %6777 = vmatpush2.msra.mxu0 0.0
    %6778 = vmatprep.subr.mxu0 0.0
    %6779 = vmatpush2.msra.mxu0 0.0
    %6780 = vmatprep.subr.mxu0 0.0
    %6781 = vmatpush2.msra.mxu0 0.0
    %6782 = vmatprep.subr.mxu0 0.0
    %6783 = vmatpush2.msra.mxu0 0.0
    %6784 = vmatprep.subr.mxu0 0.0
    %6785 = vmatpush2.msra.mxu0 0.0
    %6786 = vmatprep.subr.mxu0 0.0
    %6787 = vmatpush2.msra.mxu0 0.0
    %6788 = vmatprep.subr.mxu0 0.0
    %6789 = vmatpush2.msra.mxu0 0.0
    %6790 = vmatprep.mubr.f32.mxu0 0.0
    %6791 = vmatmul.mubr.f32.gmra.mxu0 %v6465
    %v6792 = vpop.f32.mrf.mxu0
    %v6793 = vadd.f32 0.0, %v6792
    %v6794 = vpop.f32.mrf.mxu0
    %6795 = vdwg.mxu0
    %v6796 = vlaneseq
    %v6797 = vshrl.u32 %v6796, 7
    %v6798 = vsub.s32 0, %v6797
    %v6799 = vrot.slane %v6581, %v6798
    %v6800 = vlaneseq
    %v6801 = vshrl.u32 %v6800, 7
    %v6802 = vsub.s32 0, %v6801
    %v6803 = vrot.slane %v6583, %v6802
    %v6804 = vlaneseq
    %v6805 = vshrl.u32 %v6804, 7
    %v6806 = vsub.s32 0, %v6805
    %v6807 = vrot.slane %v6652, %v6806
    %v6808 = vmul.f32 %v6077, %v6799
    %v6809 = vmul.f32 %v6078, %v6803
    %v6810 = vmul.f32 %v6079, %v6807
    %v6811 = vlaneseq
    %v6812 = vshrl.u32 %v6811, 7
    %v6813 = vsub.s32 0, %v6812
    %v6814 = vrot.slane %v6722, %v6813
    %v6815 = vlaneseq
    %v6816 = vshrl.u32 %v6815, 7
    %v6817 = vsub.s32 0, %v6816
    %v6818 = vrot.slane %v6724, %v6817
    %v6819 = vlaneseq
    %v6820 = vshrl.u32 %v6819, 7
    %v6821 = vsub.s32 0, %v6820
    %v6822 = vrot.slane %v6793, %v6821
    %v6823 = vadd.f32 %v6808, %v6814
    %v6824 = vadd.f32 %v6809, %v6818
    %v6825 = vadd.f32 %v6810, %v6822
    %vm6826 = vcmp.ge.f32.partialorder %v6823, 0.0
    %vm6827 = vcmp.ge.f32.partialorder %v6824, 0.0
    %vm6828 = vcmp.ge.f32.partialorder %v6825, 0.0
    %v6829 = vmul.f32 %v6823, 0.2
    %v6830 = vmul.f32 %v6824, 0.2
    %v6831 = vmul.f32 %v6825, 0.2
    %v6832 = vsel %vm6826, %v6823, %v6829
    %v6833 = vsel %vm6827, %v6824, %v6830
    %v6834 = vsel %vm6828, %v6825, %v6831
    %v6835 = vpack.c.bf16 %v6832, %v6832
    %v6836 = vpack.c.bf16 %v6833, %v6833
    %v6837 = vpack.c.bf16 %v6834, %v6834
    %v6838 = vld [vmem:[#allocation22] sm:$0x3]
    %vm6839 = vcmask 48128
    %v6841 = vsel %vm6839, %v6838, 0
    %vm6843 = vcmask 1042432
    %v6845 = vsel %vm6843, %v6835, 0
    %v6848 = vsel %vm6843, %v6836, 0
    %v6851 = vsel %vm6843, %v6837, 0
    %6853 = vmatprep.subr.bf16.mxu0 0
    %6854 = vmatpush1.bf16.msra.mxu0 0
    %6855 = vmatprep.subr.bf16.mxu0 0
    %6856 = vmatpush1.bf16.msra.mxu0 0
    %6857 = vmatprep.subr.bf16.mxu0 0
    %6858 = vmatpush1.bf16.msra.mxu0 0
    %6859 = vmatprep.subr.bf16.mxu0 0
    %6860 = vmatpush1.bf16.msra.mxu0 0
    %6861 = vmatprep.subr.bf16.mxu0 0
    %6862 = vmatpush1.bf16.msra.mxu0 0
    %6863 = vmatprep.subr.bf16.mxu0 0
    %6864 = vmatpush1.bf16.msra.mxu0 0
    %6865 = vmatprep.subr.bf16.mxu0 0
    %6866 = vmatpush1.bf16.msra.mxu0 0
    %6867 = vmatprep.subr.bf16.mxu0 %v6848
    %6868 = vmatpush1.bf16.msra.mxu0 %v6845
    %6869 = vmatprep.subr.bf16.mxu0 0
    %6870 = vmatpush2.bf16.msra.mxu0 0
    %6871 = vmatprep.subr.bf16.mxu0 0
    %6872 = vmatpush2.bf16.msra.mxu0 0
    %6873 = vmatprep.subr.bf16.mxu0 0
    %6874 = vmatpush2.bf16.msra.mxu0 0
    %6875 = vmatprep.subr.bf16.mxu0 0
    %6876 = vmatpush2.bf16.msra.mxu0 0
    %6877 = vmatprep.subr.bf16.mxu0 0
    %6878 = vmatpush2.bf16.msra.mxu0 0
    %6879 = vmatprep.subr.bf16.mxu0 0
    %6880 = vmatpush2.bf16.msra.mxu0 0
    %6881 = vmatprep.subr.bf16.mxu0 0
    %6882 = vmatpush2.bf16.msra.mxu0 0
    %6883 = vmatprep.subr.bf16.mxu0 0
    %6884 = vmatpush2.bf16.msra.mxu0 0
    %6885 = vmatprep.mubr.bf16.mxu0 0
    %6886 = vmatmul.mubr.bf16.gmra.mxu0 %v6841
    %v6887 = vpop.f32.mrf.mxu0
    %v6888 = vadd.f32 0.0, %v6887
    %v6889 = vpop.f32.mrf.mxu0
    %v6890 = vadd.f32 0.0, %v6889
    %v6891 = vpop.f32.mrf.mxu0
    %v6892 = vpop.f32.mrf.mxu0
    %6893 = vdwg.mxu0
    %6894 = vmatprep.subr.bf16.mxu0 0
    %6895 = vmatpush1.bf16.msra.mxu0 0
    %6896 = vmatprep.subr.bf16.mxu0 0
    %6897 = vmatpush1.bf16.msra.mxu0 0
    %6898 = vmatprep.subr.bf16.mxu0 0
    %6899 = vmatpush1.bf16.msra.mxu0 0
    %6900 = vmatprep.subr.bf16.mxu0 0
    %6901 = vmatpush1.bf16.msra.mxu0 0
    %6902 = vmatprep.subr.bf16.mxu0 0
    %6903 = vmatpush1.bf16.msra.mxu0 0
    %6904 = vmatprep.subr.bf16.mxu0 0
    %6905 = vmatpush1.bf16.msra.mxu0 0
    %6906 = vmatprep.subr.bf16.mxu0 0
    %6907 = vmatpush1.bf16.msra.mxu0 0
    %6908 = vmatprep.subr.bf16.mxu0 0
    %6909 = vmatpush1.bf16.msra.mxu0 %v6851
    %6910 = vmatprep.subr.bf16.mxu0 0
    %6911 = vmatpush2.bf16.msra.mxu0 0
    %6912 = vmatprep.subr.bf16.mxu0 0
    %6913 = vmatpush2.bf16.msra.mxu0 0
    %6914 = vmatprep.subr.bf16.mxu0 0
    %6915 = vmatpush2.bf16.msra.mxu0 0
    %6916 = vmatprep.subr.bf16.mxu0 0
    %6917 = vmatpush2.bf16.msra.mxu0 0
    %6918 = vmatprep.subr.bf16.mxu0 0
    %6919 = vmatpush2.bf16.msra.mxu0 0
    %6920 = vmatprep.subr.bf16.mxu0 0
    %6921 = vmatpush2.bf16.msra.mxu0 0
    %6922 = vmatprep.subr.bf16.mxu0 0
    %6923 = vmatpush2.bf16.msra.mxu0 0
    %6924 = vmatprep.subr.bf16.mxu0 0
    %6925 = vmatpush2.bf16.msra.mxu0 0
    %6926 = vmatprep.mubr.bf16.mxu0 0
    %6927 = vmatmul.mubr.bf16.gmra.mxu0 %v6841
    %v6928 = vpop.f32.mrf.mxu0
    %v6929 = vadd.f32 0.0, %v6928
    %v6930 = vpop.f32.mrf.mxu0
    %v6931 = vpop.f32.mrf.mxu0
    %v6932 = vpop.f32.mrf.mxu0
    %6933 = vdwg.mxu0
    %v6934 = vpack.c.bf16 %v6888, %v6888
    %v6935 = vpack.c.bf16 %v6890, %v6890
    %v6936 = vpack.c.bf16 %v6929, %v6929
    %v6937 = vld [vmem:[%s23] sm:$0xf]
    %v6938 = vld [vmem:[%s23 + $0x4] sm:$0xf]
    %v6939 = vld [vmem:[%s23 + $0x8] sm:$0xf]
    %v6940 = vld [vmem:[%s23 + $0xc] sm:$0xf]
    %v6941 = vld [vmem:[%s23 + $0x10] sm:$0xf]
    %v6942 = vld [vmem:[%s23 + $0x14] sm:$0xf]
    %v6943 = vld [vmem:[%s23 + $0x18] sm:$0xf]
    %v6944 = vld [vmem:[%s23 + $0x1c] sm:$0xf]
    %v6945 = vld [vmem:[%s23 + $0x20] sm:$0xf]
    %v6946 = vld [vmem:[%s23 + $0x24] sm:$0xf]
    %v6947 = vld [vmem:[%s23 + $0x28] sm:$0xf]
    %v6948 = vld [vmem:[%s23 + $0x2c] sm:$0xf]
    %v6949 = vld [vmem:[%s23 + $0x30] sm:$0xf]
    %v6950 = vld [vmem:[%s23 + $0x34] sm:$0xf]
    %v6951 = vld [vmem:[%s23 + $0x38] sm:$0xf]
    %v6952 = vld [vmem:[%s23 + $0x3c] sm:$0xf]
    %v6953 = vld [vmem:[%s23 + $0x40] sm:$0xf]
    %v6954 = vld [vmem:[%s23 + $0x44] sm:$0xf]
    %v6955 = vld [vmem:[%s23 + $0x48] sm:$0xf]
    %v6956 = vld [vmem:[%s23 + $0x4c] sm:$0xf]
    %v6957 = vld [vmem:[%s23 + $0x50] sm:$0xf]
    %v6958 = vld [vmem:[%s23 + $0x54] sm:$0xf]
    %v6959 = vld [vmem:[%s23 + $0x58] sm:$0xf]
    %v6960 = vld [vmem:[%s23 + $0x5c] sm:$0xf]
    %v6961 = vld [vmem:[%s23 + $0x60] sm:$0xf]
    %v6962 = vld [vmem:[%s23 + $0x64] sm:$0xf]
    %v6963 = vld [vmem:[%s23 + $0x68] sm:$0xf]
    %v6964 = vld [vmem:[%s23 + $0x6c] sm:$0xf]
    %v6965 = vld [vmem:[%s23 + $0x70] sm:$0xf]
    %v6966 = vld [vmem:[%s23 + $0x74] sm:$0xf]
    %v6967 = vld [vmem:[%s23 + $0x78] sm:$0xf]
    %v6968 = vld [vmem:[%s23 + $0x7c] sm:$0xf]
    %v6969 = vld [vmem:[%s23 + $0x80] sm:$0xf]
    %v6970 = vld [vmem:[%s23 + $0x84] sm:$0xf]
    %v6971 = vld [vmem:[%s23 + $0x88] sm:$0xf]
    %v6972 = vld [vmem:[%s23 + $0x8c] sm:$0xf]
    %v6973 = vld [vmem:[%s23 + $0x90] sm:$0xf]
    %v6974 = vld [vmem:[%s23 + $0x94] sm:$0xf]
    %v6975 = vld [vmem:[%s23 + $0x98] sm:$0xf]
    %v6976 = vld [vmem:[%s23 + $0x9c] sm:$0xf]
    %v6977 = vld [vmem:[%s23 + $0xa0] sm:$0xf]
    %v6978 = vld [vmem:[%s23 + $0xa4] sm:$0xf]
    %v6979 = vld [vmem:[%s23 + $0xa8] sm:$0xf]
    %v6980 = vld [vmem:[%s23 + $0xac] sm:$0xf]
    %v6981 = vld [vmem:[%s23 + $0xb0] sm:$0xf]
    %v6982 = vld [vmem:[%s23 + $0xb4] sm:$0xf]
    %v6983 = vld [vmem:[%s23 + $0xb8] sm:$0xf]
    %v6984 = vld [vmem:[%s23 + $0xbc] sm:$0xf]
    %s6985 = scalar_lea.vmem [#allocation22], 2
    %v6986 = vld [vmem:[%s6985] sm:$0x3]
    %v6988 = vsel %vm6839, %v6986, 0
    %6990 = vmatprep.subr.bf16.mxu0 0
    %6991 = vmatpush1.bf16.msra.mxu0 0
    %6992 = vmatprep.subr.bf16.mxu0 0
    %6993 = vmatpush1.bf16.msra.mxu0 0
    %6994 = vmatprep.subr.bf16.mxu0 0
    %6995 = vmatpush1.bf16.msra.mxu0 0
    %6996 = vmatprep.subr.bf16.mxu0 0
    %6997 = vmatpush1.bf16.msra.mxu0 0
    %6998 = vmatprep.subr.bf16.mxu0 0
    %6999 = vmatpush1.bf16.msra.mxu0 0
    %7000 = vmatprep.subr.bf16.mxu0 0
    %7001 = vmatpush1.bf16.msra.mxu0 0
    %7002 = vmatprep.subr.bf16.mxu0 0
    %7003 = vmatpush1.bf16.msra.mxu0 0
    %7004 = vmatprep.subr.bf16.mxu0 %v6848
    %7005 = vmatpush1.bf16.msra.mxu0 %v6845
    %7006 = vmatprep.subr.bf16.mxu0 0
    %7007 = vmatpush2.bf16.msra.mxu0 0
    %7008 = vmatprep.subr.bf16.mxu0 0
    %7009 = vmatpush2.bf16.msra.mxu0 0
    %7010 = vmatprep.subr.bf16.mxu0 0
    %7011 = vmatpush2.bf16.msra.mxu0 0
    %7012 = vmatprep.subr.bf16.mxu0 0
    %7013 = vmatpush2.bf16.msra.mxu0 0
    %7014 = vmatprep.subr.bf16.mxu0 0
    %7015 = vmatpush2.bf16.msra.mxu0 0
    %7016 = vmatprep.subr.bf16.mxu0 0
    %7017 = vmatpush2.bf16.msra.mxu0 0
    %7018 = vmatprep.subr.bf16.mxu0 0
    %7019 = vmatpush2.bf16.msra.mxu0 0
    %7020 = vmatprep.subr.bf16.mxu0 0
    %7021 = vmatpush2.bf16.msra.mxu0 0
    %7022 = vmatprep.mubr.bf16.mxu0 0
    %7023 = vmatmul.mubr.bf16.gmra.mxu0 %v6988
    %v7024 = vpop.f32.mrf.mxu0
    %v7025 = vadd.f32 0.0, %v7024
    %v7026 = vpop.f32.mrf.mxu0
    %v7027 = vadd.f32 0.0, %v7026
    %v7028 = vpop.f32.mrf.mxu0
    %v7029 = vpop.f32.mrf.mxu0
    %7030 = vdwg.mxu0
    %7031 = vmatprep.subr.bf16.mxu0 0
    %7032 = vmatpush1.bf16.msra.mxu0 0
    %7033 = vmatprep.subr.bf16.mxu0 0
    %7034 = vmatpush1.bf16.msra.mxu0 0
    %7035 = vmatprep.subr.bf16.mxu0 0
    %7036 = vmatpush1.bf16.msra.mxu0 0
    %7037 = vmatprep.subr.bf16.mxu0 0
    %7038 = vmatpush1.bf16.msra.mxu0 0
    %7039 = vmatprep.subr.bf16.mxu0 0
    %7040 = vmatpush1.bf16.msra.mxu0 0
    %7041 = vmatprep.subr.bf16.mxu0 0
    %7042 = vmatpush1.bf16.msra.mxu0 0
    %7043 = vmatprep.subr.bf16.mxu0 0
    %7044 = vmatpush1.bf16.msra.mxu0 0
    %7045 = vmatprep.subr.bf16.mxu0 0
    %7046 = vmatpush1.bf16.msra.mxu0 %v6851
    %7047 = vmatprep.subr.bf16.mxu0 0
    %7048 = vmatpush2.bf16.msra.mxu0 0
    %7049 = vmatprep.subr.bf16.mxu0 0
    %7050 = vmatpush2.bf16.msra.mxu0 0
    %7051 = vmatprep.subr.bf16.mxu0 0
    %7052 = vmatpush2.bf16.msra.mxu0 0
    %7053 = vmatprep.subr.bf16.mxu0 0
    %7054 = vmatpush2.bf16.msra.mxu0 0
    %7055 = vmatprep.subr.bf16.mxu0 0
    %7056 = vmatpush2.bf16.msra.mxu0 0
    %7057 = vmatprep.subr.bf16.mxu0 0
    %7058 = vmatpush2.bf16.msra.mxu0 0
    %7059 = vmatprep.subr.bf16.mxu0 0
    %7060 = vmatpush2.bf16.msra.mxu0 0
    %7061 = vmatprep.subr.bf16.mxu0 0
    %7062 = vmatpush2.bf16.msra.mxu0 0
    %7063 = vmatprep.mubr.bf16.mxu0 0
    %7064 = vmatmul.mubr.bf16.gmra.mxu0 %v6988
    %v7065 = vpop.f32.mrf.mxu0
    %v7066 = vadd.f32 0.0, %v7065
    %v7067 = vpop.f32.mrf.mxu0
    %v7068 = vpop.f32.mrf.mxu0
    %v7069 = vpop.f32.mrf.mxu0
    %7070 = vdwg.mxu0
    %v7071 = vpack.c.bf16 %v7025, %v7025
    %v7072 = vpack.c.bf16 %v7027, %v7027
    %v7073 = vpack.c.bf16 %v7066, %v7066
    %s7074 = scalar_lea.vmem %s23, 192
    %v7075 = vld [vmem:[%s7074] sm:$0xf]
    %v7076 = vld [vmem:[%s7074 + $0x4] sm:$0xf]
    %v7077 = vld [vmem:[%s7074 + $0x8] sm:$0xf]
    %v7078 = vld [vmem:[%s7074 + $0xc] sm:$0xf]
    %v7079 = vld [vmem:[%s7074 + $0x10] sm:$0xf]
    %v7080 = vld [vmem:[%s7074 + $0x14] sm:$0xf]
    %v7081 = vld [vmem:[%s7074 + $0x18] sm:$0xf]
    %v7082 = vld [vmem:[%s7074 + $0x1c] sm:$0xf]
    %v7083 = vld [vmem:[%s7074 + $0x20] sm:$0xf]
    %v7084 = vld [vmem:[%s7074 + $0x24] sm:$0xf]
    %v7085 = vld [vmem:[%s7074 + $0x28] sm:$0xf]
    %v7086 = vld [vmem:[%s7074 + $0x2c] sm:$0xf]
    %v7087 = vld [vmem:[%s7074 + $0x30] sm:$0xf]
    %v7088 = vld [vmem:[%s7074 + $0x34] sm:$0xf]
    %v7089 = vld [vmem:[%s7074 + $0x38] sm:$0xf]
    %v7090 = vld [vmem:[%s7074 + $0x3c] sm:$0xf]
    %v7091 = vld [vmem:[%s7074 + $0x40] sm:$0xf]
    %v7092 = vld [vmem:[%s7074 + $0x44] sm:$0xf]
    %v7093 = vld [vmem:[%s7074 + $0x48] sm:$0xf]
    %v7094 = vld [vmem:[%s7074 + $0x4c] sm:$0xf]
    %v7095 = vld [vmem:[%s7074 + $0x50] sm:$0xf]
    %v7096 = vld [vmem:[%s7074 + $0x54] sm:$0xf]
    %v7097 = vld [vmem:[%s7074 + $0x58] sm:$0xf]
    %v7098 = vld [vmem:[%s7074 + $0x5c] sm:$0xf]
    %v7099 = vld [vmem:[%s7074 + $0x60] sm:$0xf]
    %v7100 = vld [vmem:[%s7074 + $0x64] sm:$0xf]
    %v7101 = vld [vmem:[%s7074 + $0x68] sm:$0xf]
    %v7102 = vld [vmem:[%s7074 + $0x6c] sm:$0xf]
    %v7103 = vld [vmem:[%s7074 + $0x70] sm:$0xf]
    %v7104 = vld [vmem:[%s7074 + $0x74] sm:$0xf]
    %v7105 = vld [vmem:[%s7074 + $0x78] sm:$0xf]
    %v7106 = vld [vmem:[%s7074 + $0x7c] sm:$0xf]
    %v7107 = vld [vmem:[%s7074 + $0x80] sm:$0xf]
    %v7108 = vld [vmem:[%s7074 + $0x84] sm:$0xf]
    %v7109 = vld [vmem:[%s7074 + $0x88] sm:$0xf]
    %v7110 = vld [vmem:[%s7074 + $0x8c] sm:$0xf]
    %v7111 = vld [vmem:[%s7074 + $0x90] sm:$0xf]
    %v7112 = vld [vmem:[%s7074 + $0x94] sm:$0xf]
    %v7113 = vld [vmem:[%s7074 + $0x98] sm:$0xf]
    %v7114 = vld [vmem:[%s7074 + $0x9c] sm:$0xf]
    %v7115 = vld [vmem:[%s7074 + $0xa0] sm:$0xf]
    %v7116 = vld [vmem:[%s7074 + $0xa4] sm:$0xf]
    %v7117 = vld [vmem:[%s7074 + $0xa8] sm:$0xf]
    %v7118 = vld [vmem:[%s7074 + $0xac] sm:$0xf]
    %v7119 = vld [vmem:[%s7074 + $0xb0] sm:$0xf]
    %v7120 = vld [vmem:[%s7074 + $0xb4] sm:$0xf]
    %v7121 = vld [vmem:[%s7074 + $0xb8] sm:$0xf]
    %v7122 = vld [vmem:[%s7074 + $0xbc] sm:$0xf]
    %v7171 = vunpack.c.l.b16 %v7075
    %v7172 = vunpack.c.l.b16 %v7076
    %v7173 = vunpack.c.l.b16 %v7077
    %v7174 = vunpack.c.l.b16 %v7078
    %v7175 = vunpack.c.l.b16 %v7079
    %v7176 = vunpack.c.l.b16 %v7080
    %v7177 = vunpack.c.l.b16 %v7081
    %v7178 = vunpack.c.l.b16 %v7082
    %v7179 = vunpack.c.l.b16 %v7083
    %v7180 = vunpack.c.l.b16 %v7084
    %v7181 = vunpack.c.l.b16 %v7085
    %v7182 = vunpack.c.l.b16 %v7086
    %v7183 = vunpack.c.l.b16 %v7087
    %v7184 = vunpack.c.l.b16 %v7088
    %v7185 = vunpack.c.l.b16 %v7089
    %v7186 = vunpack.c.l.b16 %v7090
    %v7187 = vunpack.c.l.b16 %v7091
    %v7188 = vunpack.c.l.b16 %v7092
    %v7189 = vunpack.c.l.b16 %v7093
    %v7190 = vunpack.c.l.b16 %v7094
    %v7191 = vunpack.c.l.b16 %v7095
    %v7192 = vunpack.c.l.b16 %v7096
    %v7193 = vunpack.c.l.b16 %v7097
    %v7194 = vunpack.c.l.b16 %v7098
    %v7195 = vunpack.c.l.b16 %v7099
    %v7196 = vunpack.c.l.b16 %v7100
    %v7197 = vunpack.c.l.b16 %v7101
    %v7198 = vunpack.c.l.b16 %v7102
    %v7199 = vunpack.c.l.b16 %v7103
    %v7200 = vunpack.c.l.b16 %v7104
    %v7201 = vunpack.c.l.b16 %v7105
    %v7202 = vunpack.c.l.b16 %v7106
    %v7203 = vunpack.c.l.b16 %v7107
    %v7204 = vunpack.c.l.b16 %v7108
    %v7205 = vunpack.c.l.b16 %v7109
    %v7206 = vunpack.c.l.b16 %v7110
    %v7207 = vunpack.c.l.b16 %v7111
    %v7208 = vunpack.c.l.b16 %v7112
    %v7209 = vunpack.c.l.b16 %v7113
    %v7210 = vunpack.c.l.b16 %v7114
    %v7211 = vunpack.c.l.b16 %v7115
    %v7212 = vunpack.c.l.b16 %v7116
    %v7213 = vunpack.c.l.b16 %v7117
    %v7214 = vunpack.c.l.b16 %v7118
    %v7215 = vunpack.c.l.b16 %v7119
    %v7216 = vunpack.c.l.b16 %v7120
    %v7217 = vunpack.c.l.b16 %v7121
    %v7218 = vunpack.c.l.b16 %v7122
    %v7219 = vpack.c.b16 %v7172, %v7171
    %v7220 = vpack.c.b16 %v7174, %v7173
    %v7221 = vpack.c.b16 %v7176, %v7175
    %v7222 = vpack.c.b16 %v7178, %v7177
    %v7223 = vpack.c.b16 %v7180, %v7179
    %v7224 = vpack.c.b16 %v7182, %v7181
    %v7225 = vpack.c.b16 %v7184, %v7183
    %v7226 = vpack.c.b16 %v7186, %v7185
    %v7227 = vpack.c.b16 %v7188, %v7187
    %v7228 = vpack.c.b16 %v7190, %v7189
    %v7229 = vpack.c.b16 %v7192, %v7191
    %v7230 = vpack.c.b16 %v7194, %v7193
    %v7231 = vpack.c.b16 %v7196, %v7195
    %v7232 = vpack.c.b16 %v7198, %v7197
    %v7233 = vpack.c.b16 %v7200, %v7199
    %v7234 = vpack.c.b16 %v7202, %v7201
    %v7235 = vpack.c.b16 %v7204, %v7203
    %v7236 = vpack.c.b16 %v7206, %v7205
    %v7237 = vpack.c.b16 %v7208, %v7207
    %v7238 = vpack.c.b16 %v7210, %v7209
    %v7239 = vpack.c.b16 %v7212, %v7211
    %v7240 = vpack.c.b16 %v7214, %v7213
    %v7241 = vpack.c.b16 %v7216, %v7215
    %v7242 = vpack.c.b16 %v7218, %v7217
    %7267 = vmatprep.subr.bf16.mxu0 0
    %7268 = vmatpush1.bf16.msra.mxu0 %v7226
    %7269 = vmatprep.subr.bf16.mxu0 0
    %7270 = vmatpush1.bf16.msra.mxu0 %v7225
    %7271 = vmatprep.subr.bf16.mxu0 0
    %7272 = vmatpush1.bf16.msra.mxu0 %v7224
    %7273 = vmatprep.subr.bf16.mxu0 0
    %7274 = vmatpush1.bf16.msra.mxu0 %v7223
    %7275 = vmatprep.subr.bf16.mxu0 0
    %7276 = vmatpush1.bf16.msra.mxu0 %v7222
    %7277 = vmatprep.subr.bf16.mxu0 0
    %7278 = vmatpush1.bf16.msra.mxu0 %v7221
    %7279 = vmatprep.subr.bf16.mxu0 0
    %7280 = vmatpush1.bf16.msra.mxu0 %v7220
    %7281 = vmatprep.subr.bf16.mxu0 0
    %7282 = vmatpush1.bf16.msra.mxu0 %v7219
    %7283 = vmatprep.subr.bf16.mxu0 0
    %7284 = vmatpush2.bf16.msra.mxu0 %v7234
    %7285 = vmatprep.subr.bf16.mxu0 0
    %7286 = vmatpush2.bf16.msra.mxu0 %v7233
    %7287 = vmatprep.subr.bf16.mxu0 0
    %7288 = vmatpush2.bf16.msra.mxu0 %v7232
    %7289 = vmatprep.subr.bf16.mxu0 0
    %7290 = vmatpush2.bf16.msra.mxu0 %v7231
    %7291 = vmatprep.subr.bf16.mxu0 0
    %7292 = vmatpush2.bf16.msra.mxu0 %v7230
    %7293 = vmatprep.subr.bf16.mxu0 0
    %7294 = vmatpush2.bf16.msra.mxu0 %v7229
    %7295 = vmatprep.subr.bf16.mxu0 0
    %7296 = vmatpush2.bf16.msra.mxu0 %v7228
    %7297 = vmatprep.subr.bf16.mxu0 0
    %7298 = vmatpush2.bf16.msra.mxu0 %v7227
    %7299 = vmatprep.mubr.bf16.mxu0 %v7072
    %7300 = vmatmul.mubr.bf16.gmra.mxu0 %v7071
    %v7301 = vpop.f32.mrf.mxu0
    %v7302 = vadd.f32 0.0, %v7301
    %v7303 = vpop.f32.mrf.mxu0
    %v7304 = vpop.f32.mrf.mxu0
    %v7305 = vpop.f32.mrf.mxu0
    %7306 = vdwg.mxu0
    %7307 = vmatprep.subr.bf16.mxu0 0
    %7308 = vmatpush1.bf16.msra.mxu0 %v7242
    %7309 = vmatprep.subr.bf16.mxu0 0
    %7310 = vmatpush1.bf16.msra.mxu0 %v7241
    %7311 = vmatprep.subr.bf16.mxu0 0
    %7312 = vmatpush1.bf16.msra.mxu0 %v7240
    %7313 = vmatprep.subr.bf16.mxu0 0
    %7314 = vmatpush1.bf16.msra.mxu0 %v7239
    %7315 = vmatprep.subr.bf16.mxu0 0
    %7316 = vmatpush1.bf16.msra.mxu0 %v7238
    %7317 = vmatprep.subr.bf16.mxu0 0
    %7318 = vmatpush1.bf16.msra.mxu0 %v7237
    %7319 = vmatprep.subr.bf16.mxu0 0
    %7320 = vmatpush1.bf16.msra.mxu0 %v7236
    %7321 = vmatprep.subr.bf16.mxu0 0
    %7322 = vmatpush1.bf16.msra.mxu0 %v7235
    %7323 = vmatprep.subr.bf16.mxu0 0
    %7324 = vmatpush2.bf16.msra.mxu0 0
    %7325 = vmatprep.subr.bf16.mxu0 0
    %7326 = vmatpush2.bf16.msra.mxu0 0
    %7327 = vmatprep.subr.bf16.mxu0 0
    %7328 = vmatpush2.bf16.msra.mxu0 0
    %7329 = vmatprep.subr.bf16.mxu0 0
    %7330 = vmatpush2.bf16.msra.mxu0 0
    %7331 = vmatprep.subr.bf16.mxu0 0
    %7332 = vmatpush2.bf16.msra.mxu0 0
    %7333 = vmatprep.subr.bf16.mxu0 0
    %7334 = vmatpush2.bf16.msra.mxu0 0
    %7335 = vmatprep.subr.bf16.mxu0 0
    %7336 = vmatpush2.bf16.msra.mxu0 0
    %7337 = vmatprep.subr.bf16.mxu0 0
    %7338 = vmatpush2.bf16.msra.mxu0 0
    %7339 = vmatprep.mubr.bf16.mxu0 0
    %7340 = vmatmul.mubr.bf16.gmra.mxu0 %v7073
    %v7341 = vpop.f32.mrf.mxu0
    %v7342 = vadd.f32 %v7302, %v7341
    %v7343 = vpop.f32.mrf.mxu0
    %v7344 = vpop.f32.mrf.mxu0
    %v7345 = vpop.f32.mrf.mxu0
    %7346 = vdwg.mxu0
    %v7395 = vunpack.c.l.b16 %v6937
    %v7396 = vunpack.c.l.b16 %v6938
    %v7397 = vunpack.c.l.b16 %v6939
    %v7398 = vunpack.c.l.b16 %v6940
    %v7399 = vunpack.c.l.b16 %v6941
    %v7400 = vunpack.c.l.b16 %v6942
    %v7401 = vunpack.c.l.b16 %v6943
    %v7402 = vunpack.c.l.b16 %v6944
    %v7403 = vunpack.c.l.b16 %v6945
    %v7404 = vunpack.c.l.b16 %v6946
    %v7405 = vunpack.c.l.b16 %v6947
    %v7406 = vunpack.c.l.b16 %v6948
    %v7407 = vunpack.c.l.b16 %v6949
    %v7408 = vunpack.c.l.b16 %v6950
    %v7409 = vunpack.c.l.b16 %v6951
    %v7410 = vunpack.c.l.b16 %v6952
    %v7411 = vunpack.c.l.b16 %v6953
    %v7412 = vunpack.c.l.b16 %v6954
    %v7413 = vunpack.c.l.b16 %v6955
    %v7414 = vunpack.c.l.b16 %v6956
    %v7415 = vunpack.c.l.b16 %v6957
    %v7416 = vunpack.c.l.b16 %v6958
    %v7417 = vunpack.c.l.b16 %v6959
    %v7418 = vunpack.c.l.b16 %v6960
    %v7419 = vunpack.c.l.b16 %v6961
    %v7420 = vunpack.c.l.b16 %v6962
    %v7421 = vunpack.c.l.b16 %v6963
    %v7422 = vunpack.c.l.b16 %v6964
    %v7423 = vunpack.c.l.b16 %v6965
    %v7424 = vunpack.c.l.b16 %v6966
    %v7425 = vunpack.c.l.b16 %v6967
    %v7426 = vunpack.c.l.b16 %v6968
    %v7427 = vunpack.c.l.b16 %v6969
    %v7428 = vunpack.c.l.b16 %v6970
    %v7429 = vunpack.c.l.b16 %v6971
    %v7430 = vunpack.c.l.b16 %v6972
    %v7431 = vunpack.c.l.b16 %v6973
    %v7432 = vunpack.c.l.b16 %v6974
    %v7433 = vunpack.c.l.b16 %v6975
    %v7434 = vunpack.c.l.b16 %v6976
    %v7435 = vunpack.c.l.b16 %v6977
    %v7436 = vunpack.c.l.b16 %v6978
    %v7437 = vunpack.c.l.b16 %v6979
    %v7438 = vunpack.c.l.b16 %v6980
    %v7439 = vunpack.c.l.b16 %v6981
    %v7440 = vunpack.c.l.b16 %v6982
    %v7441 = vunpack.c.l.b16 %v6983
    %v7442 = vunpack.c.l.b16 %v6984
    %v7443 = vpack.c.b16 %v7396, %v7395
    %v7444 = vpack.c.b16 %v7398, %v7397
    %v7445 = vpack.c.b16 %v7400, %v7399
    %v7446 = vpack.c.b16 %v7402, %v7401
    %v7447 = vpack.c.b16 %v7404, %v7403
    %v7448 = vpack.c.b16 %v7406, %v7405
    %v7449 = vpack.c.b16 %v7408, %v7407
    %v7450 = vpack.c.b16 %v7410, %v7409
    %v7451 = vpack.c.b16 %v7412, %v7411
    %v7452 = vpack.c.b16 %v7414, %v7413
    %v7453 = vpack.c.b16 %v7416, %v7415
    %v7454 = vpack.c.b16 %v7418, %v7417
    %v7455 = vpack.c.b16 %v7420, %v7419
    %v7456 = vpack.c.b16 %v7422, %v7421
    %v7457 = vpack.c.b16 %v7424, %v7423
    %v7458 = vpack.c.b16 %v7426, %v7425
    %v7459 = vpack.c.b16 %v7428, %v7427
    %v7460 = vpack.c.b16 %v7430, %v7429
    %v7461 = vpack.c.b16 %v7432, %v7431
    %v7462 = vpack.c.b16 %v7434, %v7433
    %v7463 = vpack.c.b16 %v7436, %v7435
    %v7464 = vpack.c.b16 %v7438, %v7437
    %v7465 = vpack.c.b16 %v7440, %v7439
    %v7466 = vpack.c.b16 %v7442, %v7441
    %7491 = vmatprep.subr.bf16.mxu0 0
    %7492 = vmatpush1.bf16.msra.mxu0 %v7450
    %7493 = vmatprep.subr.bf16.mxu0 0
    %7494 = vmatpush1.bf16.msra.mxu0 %v7449
    %7495 = vmatprep.subr.bf16.mxu0 0
    %7496 = vmatpush1.bf16.msra.mxu0 %v7448
    %7497 = vmatprep.subr.bf16.mxu0 0
    %7498 = vmatpush1.bf16.msra.mxu0 %v7447
    %7499 = vmatprep.subr.bf16.mxu0 0
    %7500 = vmatpush1.bf16.msra.mxu0 %v7446
    %7501 = vmatprep.subr.bf16.mxu0 0
    %7502 = vmatpush1.bf16.msra.mxu0 %v7445
    %7503 = vmatprep.subr.bf16.mxu0 0
    %7504 = vmatpush1.bf16.msra.mxu0 %v7444
    %7505 = vmatprep.subr.bf16.mxu0 0
    %7506 = vmatpush1.bf16.msra.mxu0 %v7443
    %7507 = vmatprep.subr.bf16.mxu0 0
    %7508 = vmatpush2.bf16.msra.mxu0 %v7458
    %7509 = vmatprep.subr.bf16.mxu0 0
    %7510 = vmatpush2.bf16.msra.mxu0 %v7457
    %7511 = vmatprep.subr.bf16.mxu0 0
    %7512 = vmatpush2.bf16.msra.mxu0 %v7456
    %7513 = vmatprep.subr.bf16.mxu0 0
    %7514 = vmatpush2.bf16.msra.mxu0 %v7455
    %7515 = vmatprep.subr.bf16.mxu0 0
    %7516 = vmatpush2.bf16.msra.mxu0 %v7454
    %7517 = vmatprep.subr.bf16.mxu0 0
    %7518 = vmatpush2.bf16.msra.mxu0 %v7453
    %7519 = vmatprep.subr.bf16.mxu0 0
    %7520 = vmatpush2.bf16.msra.mxu0 %v7452
    %7521 = vmatprep.subr.bf16.mxu0 0
    %7522 = vmatpush2.bf16.msra.mxu0 %v7451
    %7523 = vmatprep.mubr.bf16.mxu0 %v6935
    %7524 = vmatmul.mubr.bf16.gmra.mxu0 %v6934
    %v7525 = vpop.f32.mrf.mxu0
    %v7526 = vadd.f32 %v7342, %v7525
    %v7527 = vpop.f32.mrf.mxu0
    %v7528 = vpop.f32.mrf.mxu0
    %v7529 = vpop.f32.mrf.mxu0
    %7530 = vdwg.mxu0
    %7531 = vmatprep.subr.bf16.mxu0 0
    %7532 = vmatpush1.bf16.msra.mxu0 %v7466
    %7533 = vmatprep.subr.bf16.mxu0 0
    %7534 = vmatpush1.bf16.msra.mxu0 %v7465
    %7535 = vmatprep.subr.bf16.mxu0 0
    %7536 = vmatpush1.bf16.msra.mxu0 %v7464
    %7537 = vmatprep.subr.bf16.mxu0 0
    %7538 = vmatpush1.bf16.msra.mxu0 %v7463
    %7539 = vmatprep.subr.bf16.mxu0 0
    %7540 = vmatpush1.bf16.msra.mxu0 %v7462
    %7541 = vmatprep.subr.bf16.mxu0 0
    %7542 = vmatpush1.bf16.msra.mxu0 %v7461
    %7543 = vmatprep.subr.bf16.mxu0 0
    %7544 = vmatpush1.bf16.msra.mxu0 %v7460
    %7545 = vmatprep.subr.bf16.mxu0 0
    %7546 = vmatpush1.bf16.msra.mxu0 %v7459
    %7547 = vmatprep.subr.bf16.mxu0 0
    %7548 = vmatpush2.bf16.msra.mxu0 0
    %7549 = vmatprep.subr.bf16.mxu0 0
    %7550 = vmatpush2.bf16.msra.mxu0 0
    %7551 = vmatprep.subr.bf16.mxu0 0
    %7552 = vmatpush2.bf16.msra.mxu0 0
    %7553 = vmatprep.subr.bf16.mxu0 0
    %7554 = vmatpush2.bf16.msra.mxu0 0
    %7555 = vmatprep.subr.bf16.mxu0 0
    %7556 = vmatpush2.bf16.msra.mxu0 0
    %7557 = vmatprep.subr.bf16.mxu0 0
    %7558 = vmatpush2.bf16.msra.mxu0 0
    %7559 = vmatprep.subr.bf16.mxu0 0
    %7560 = vmatpush2.bf16.msra.mxu0 0
    %7561 = vmatprep.subr.bf16.mxu0 0
    %7562 = vmatpush2.bf16.msra.mxu0 0
    %7563 = vmatprep.mubr.bf16.mxu0 0
    %7564 = vmatmul.mubr.bf16.gmra.mxu0 %v6936
    %v7565 = vpop.f32.mrf.mxu0
    %v7566 = vadd.f32 %v7526, %v7565
    %v7567 = vpop.f32.mrf.mxu0
    %v7568 = vpop.f32.mrf.mxu0
    %v7569 = vpop.f32.mrf.mxu0
    %7570 = vdwg.mxu0
    %s7571 = scalar_lea.vmem [#allocation22], 4
    %v7572 = vld [vmem:[%s7571] sm:$0x3]
    %v7574 = vsel %vm6839, %v7572, 0
    %7576 = vmatprep.subr.bf16.mxu0 0
    %7577 = vmatpush1.bf16.msra.mxu0 0
    %7578 = vmatprep.subr.bf16.mxu0 0
    %7579 = vmatpush1.bf16.msra.mxu0 0
    %7580 = vmatprep.subr.bf16.mxu0 0
    %7581 = vmatpush1.bf16.msra.mxu0 0
    %7582 = vmatprep.subr.bf16.mxu0 0
    %7583 = vmatpush1.bf16.msra.mxu0 0
    %7584 = vmatprep.subr.bf16.mxu0 0
    %7585 = vmatpush1.bf16.msra.mxu0 0
    %7586 = vmatprep.subr.bf16.mxu0 0
    %7587 = vmatpush1.bf16.msra.mxu0 0
    %7588 = vmatprep.subr.bf16.mxu0 0
    %7589 = vmatpush1.bf16.msra.mxu0 0
    %7590 = vmatprep.subr.bf16.mxu0 %v6848
    %7591 = vmatpush1.bf16.msra.mxu0 %v6845
    %7592 = vmatprep.subr.bf16.mxu0 0
    %7593 = vmatpush2.bf16.msra.mxu0 0
    %7594 = vmatprep.subr.bf16.mxu0 0
    %7595 = vmatpush2.bf16.msra.mxu0 0
    %7596 = vmatprep.subr.bf16.mxu0 0
    %7597 = vmatpush2.bf16.msra.mxu0 0
    %7598 = vmatprep.subr.bf16.mxu0 0
    %7599 = vmatpush2.bf16.msra.mxu0 0
    %7600 = vmatprep.subr.bf16.mxu0 0
    %7601 = vmatpush2.bf16.msra.mxu0 0
    %7602 = vmatprep.subr.bf16.mxu0 0
    %7603 = vmatpush2.bf16.msra.mxu0 0
    %7604 = vmatprep.subr.bf16.mxu0 0
    %7605 = vmatpush2.bf16.msra.mxu0 0
    %7606 = vmatprep.subr.bf16.mxu0 0
    %7607 = vmatpush2.bf16.msra.mxu0 0
    %7608 = vmatprep.mubr.bf16.mxu0 0
    %7609 = vmatmul.mubr.bf16.gmra.mxu0 %v7574
    %v7610 = vpop.f32.mrf.mxu0
    %v7611 = vadd.f32 0.0, %v7610
    %v7612 = vpop.f32.mrf.mxu0
    %v7613 = vadd.f32 0.0, %v7612
    %v7614 = vpop.f32.mrf.mxu0
    %v7615 = vpop.f32.mrf.mxu0
    %7616 = vdwg.mxu0
    %7617 = vmatprep.subr.bf16.mxu0 0
    %7618 = vmatpush1.bf16.msra.mxu0 0
    %7619 = vmatprep.subr.bf16.mxu0 0
    %7620 = vmatpush1.bf16.msra.mxu0 0
    %7621 = vmatprep.subr.bf16.mxu0 0
    %7622 = vmatpush1.bf16.msra.mxu0 0
    %7623 = vmatprep.subr.bf16.mxu0 0
    %7624 = vmatpush1.bf16.msra.mxu0 0
    %7625 = vmatprep.subr.bf16.mxu0 0
    %7626 = vmatpush1.bf16.msra.mxu0 0
    %7627 = vmatprep.subr.bf16.mxu0 0
    %7628 = vmatpush1.bf16.msra.mxu0 0
    %7629 = vmatprep.subr.bf16.mxu0 0
    %7630 = vmatpush1.bf16.msra.mxu0 0
    %7631 = vmatprep.subr.bf16.mxu0 0
    %7632 = vmatpush1.bf16.msra.mxu0 %v6851
    %7633 = vmatprep.subr.bf16.mxu0 0
    %7634 = vmatpush2.bf16.msra.mxu0 0
    %7635 = vmatprep.subr.bf16.mxu0 0
    %7636 = vmatpush2.bf16.msra.mxu0 0
    %7637 = vmatprep.subr.bf16.mxu0 0
    %7638 = vmatpush2.bf16.msra.mxu0 0
    %7639 = vmatprep.subr.bf16.mxu0 0
    %7640 = vmatpush2.bf16.msra.mxu0 0
    %7641 = vmatprep.subr.bf16.mxu0 0
    %7642 = vmatpush2.bf16.msra.mxu0 0
    %7643 = vmatprep.subr.bf16.mxu0 0
    %7644 = vmatpush2.bf16.msra.mxu0 0
    %7645 = vmatprep.subr.bf16.mxu0 0
    %7646 = vmatpush2.bf16.msra.mxu0 0
    %7647 = vmatprep.subr.bf16.mxu0 0
    %7648 = vmatpush2.bf16.msra.mxu0 0
    %7649 = vmatprep.mubr.bf16.mxu0 0
    %7650 = vmatmul.mubr.bf16.gmra.mxu0 %v7574
    %v7651 = vpop.f32.mrf.mxu0
    %v7652 = vadd.f32 0.0, %v7651
    %v7653 = vpop.f32.mrf.mxu0
    %v7654 = vpop.f32.mrf.mxu0
    %v7655 = vpop.f32.mrf.mxu0
    %7656 = vdwg.mxu0
    %v7657 = vpack.c.bf16 %v7611, %v7611
    %v7658 = vpack.c.bf16 %v7613, %v7613
    %v7659 = vpack.c.bf16 %v7652, %v7652
    %s7660 = scalar_lea.vmem %s23, 384
    %v7661 = vld [vmem:[%s7660] sm:$0xf]
    %v7662 = vld [vmem:[%s7660 + $0x4] sm:$0xf]
    %v7663 = vld [vmem:[%s7660 + $0x8] sm:$0xf]
    %v7664 = vld [vmem:[%s7660 + $0xc] sm:$0xf]
    %v7665 = vld [vmem:[%s7660 + $0x10] sm:$0xf]
    %v7666 = vld [vmem:[%s7660 + $0x14] sm:$0xf]
    %v7667 = vld [vmem:[%s7660 + $0x18] sm:$0xf]
    %v7668 = vld [vmem:[%s7660 + $0x1c] sm:$0xf]
    %v7669 = vld [vmem:[%s7660 + $0x20] sm:$0xf]
    %v7670 = vld [vmem:[%s7660 + $0x24] sm:$0xf]
    %v7671 = vld [vmem:[%s7660 + $0x28] sm:$0xf]
    %v7672 = vld [vmem:[%s7660 + $0x2c] sm:$0xf]
    %v7673 = vld [vmem:[%s7660 + $0x30] sm:$0xf]
    %v7674 = vld [vmem:[%s7660 + $0x34] sm:$0xf]
    %v7675 = vld [vmem:[%s7660 + $0x38] sm:$0xf]
    %v7676 = vld [vmem:[%s7660 + $0x3c] sm:$0xf]
    %v7677 = vld [vmem:[%s7660 + $0x40] sm:$0xf]
    %v7678 = vld [vmem:[%s7660 + $0x44] sm:$0xf]
    %v7679 = vld [vmem:[%s7660 + $0x48] sm:$0xf]
    %v7680 = vld [vmem:[%s7660 + $0x4c] sm:$0xf]
    %v7681 = vld [vmem:[%s7660 + $0x50] sm:$0xf]
    %v7682 = vld [vmem:[%s7660 + $0x54] sm:$0xf]
    %v7683 = vld [vmem:[%s7660 + $0x58] sm:$0xf]
    %v7684 = vld [vmem:[%s7660 + $0x5c] sm:$0xf]
    %v7685 = vld [vmem:[%s7660 + $0x60] sm:$0xf]
    %v7686 = vld [vmem:[%s7660 + $0x64] sm:$0xf]
    %v7687 = vld [vmem:[%s7660 + $0x68] sm:$0xf]
    %v7688 = vld [vmem:[%s7660 + $0x6c] sm:$0xf]
    %v7689 = vld [vmem:[%s7660 + $0x70] sm:$0xf]
    %v7690 = vld [vmem:[%s7660 + $0x74] sm:$0xf]
    %v7691 = vld [vmem:[%s7660 + $0x78] sm:$0xf]
    %v7692 = vld [vmem:[%s7660 + $0x7c] sm:$0xf]
    %v7693 = vld [vmem:[%s7660 + $0x80] sm:$0xf]
    %v7694 = vld [vmem:[%s7660 + $0x84] sm:$0xf]
    %v7695 = vld [vmem:[%s7660 + $0x88] sm:$0xf]
    %v7696 = vld [vmem:[%s7660 + $0x8c] sm:$0xf]
    %v7697 = vld [vmem:[%s7660 + $0x90] sm:$0xf]
    %v7698 = vld [vmem:[%s7660 + $0x94] sm:$0xf]
    %v7699 = vld [vmem:[%s7660 + $0x98] sm:$0xf]
    %v7700 = vld [vmem:[%s7660 + $0x9c] sm:$0xf]
    %v7701 = vld [vmem:[%s7660 + $0xa0] sm:$0xf]
    %v7702 = vld [vmem:[%s7660 + $0xa4] sm:$0xf]
    %v7703 = vld [vmem:[%s7660 + $0xa8] sm:$0xf]
    %v7704 = vld [vmem:[%s7660 + $0xac] sm:$0xf]
    %v7705 = vld [vmem:[%s7660 + $0xb0] sm:$0xf]
    %v7706 = vld [vmem:[%s7660 + $0xb4] sm:$0xf]
    %v7707 = vld [vmem:[%s7660 + $0xb8] sm:$0xf]
    %v7708 = vld [vmem:[%s7660 + $0xbc] sm:$0xf]
    %v7757 = vunpack.c.l.b16 %v7661
    %v7758 = vunpack.c.l.b16 %v7662
    %v7759 = vunpack.c.l.b16 %v7663
    %v7760 = vunpack.c.l.b16 %v7664
    %v7761 = vunpack.c.l.b16 %v7665
    %v7762 = vunpack.c.l.b16 %v7666
    %v7763 = vunpack.c.l.b16 %v7667
    %v7764 = vunpack.c.l.b16 %v7668
    %v7765 = vunpack.c.l.b16 %v7669
    %v7766 = vunpack.c.l.b16 %v7670
    %v7767 = vunpack.c.l.b16 %v7671
    %v7768 = vunpack.c.l.b16 %v7672
    %v7769 = vunpack.c.l.b16 %v7673
    %v7770 = vunpack.c.l.b16 %v7674
    %v7771 = vunpack.c.l.b16 %v7675
    %v7772 = vunpack.c.l.b16 %v7676
    %v7773 = vunpack.c.l.b16 %v7677
    %v7774 = vunpack.c.l.b16 %v7678
    %v7775 = vunpack.c.l.b16 %v7679
    %v7776 = vunpack.c.l.b16 %v7680
    %v7777 = vunpack.c.l.b16 %v7681
    %v7778 = vunpack.c.l.b16 %v7682
    %v7779 = vunpack.c.l.b16 %v7683
    %v7780 = vunpack.c.l.b16 %v7684
    %v7781 = vunpack.c.l.b16 %v7685
    %v7782 = vunpack.c.l.b16 %v7686
    %v7783 = vunpack.c.l.b16 %v7687
    %v7784 = vunpack.c.l.b16 %v7688
    %v7785 = vunpack.c.l.b16 %v7689
    %v7786 = vunpack.c.l.b16 %v7690
    %v7787 = vunpack.c.l.b16 %v7691
    %v7788 = vunpack.c.l.b16 %v7692
    %v7789 = vunpack.c.l.b16 %v7693
    %v7790 = vunpack.c.l.b16 %v7694
    %v7791 = vunpack.c.l.b16 %v7695
    %v7792 = vunpack.c.l.b16 %v7696
    %v7793 = vunpack.c.l.b16 %v7697
    %v7794 = vunpack.c.l.b16 %v7698
    %v7795 = vunpack.c.l.b16 %v7699
    %v7796 = vunpack.c.l.b16 %v7700
    %v7797 = vunpack.c.l.b16 %v7701
    %v7798 = vunpack.c.l.b16 %v7702
    %v7799 = vunpack.c.l.b16 %v7703
    %v7800 = vunpack.c.l.b16 %v7704
    %v7801 = vunpack.c.l.b16 %v7705
    %v7802 = vunpack.c.l.b16 %v7706
    %v7803 = vunpack.c.l.b16 %v7707
    %v7804 = vunpack.c.l.b16 %v7708
    %v7805 = vpack.c.b16 %v7758, %v7757
    %v7806 = vpack.c.b16 %v7760, %v7759
    %v7807 = vpack.c.b16 %v7762, %v7761
    %v7808 = vpack.c.b16 %v7764, %v7763
    %v7809 = vpack.c.b16 %v7766, %v7765
    %v7810 = vpack.c.b16 %v7768, %v7767
    %v7811 = vpack.c.b16 %v7770, %v7769
    %v7812 = vpack.c.b16 %v7772, %v7771
    %v7813 = vpack.c.b16 %v7774, %v7773
    %v7814 = vpack.c.b16 %v7776, %v7775
    %v7815 = vpack.c.b16 %v7778, %v7777
    %v7816 = vpack.c.b16 %v7780, %v7779
    %v7817 = vpack.c.b16 %v7782, %v7781
    %v7818 = vpack.c.b16 %v7784, %v7783
    %v7819 = vpack.c.b16 %v7786, %v7785
    %v7820 = vpack.c.b16 %v7788, %v7787
    %v7821 = vpack.c.b16 %v7790, %v7789
    %v7822 = vpack.c.b16 %v7792, %v7791
    %v7823 = vpack.c.b16 %v7794, %v7793
    %v7824 = vpack.c.b16 %v7796, %v7795
    %v7825 = vpack.c.b16 %v7798, %v7797
    %v7826 = vpack.c.b16 %v7800, %v7799
    %v7827 = vpack.c.b16 %v7802, %v7801
    %v7828 = vpack.c.b16 %v7804, %v7803
    %7853 = vmatprep.subr.bf16.mxu0 0
    %7854 = vmatpush1.bf16.msra.mxu0 %v7812
    %7855 = vmatprep.subr.bf16.mxu0 0
    %7856 = vmatpush1.bf16.msra.mxu0 %v7811
    %7857 = vmatprep.subr.bf16.mxu0 0
    %7858 = vmatpush1.bf16.msra.mxu0 %v7810
    %7859 = vmatprep.subr.bf16.mxu0 0
    %7860 = vmatpush1.bf16.msra.mxu0 %v7809
    %7861 = vmatprep.subr.bf16.mxu0 0
    %7862 = vmatpush1.bf16.msra.mxu0 %v7808
    %7863 = vmatprep.subr.bf16.mxu0 0
    %7864 = vmatpush1.bf16.msra.mxu0 %v7807
    %7865 = vmatprep.subr.bf16.mxu0 0
    %7866 = vmatpush1.bf16.msra.mxu0 %v7806
    %7867 = vmatprep.subr.bf16.mxu0 0
    %7868 = vmatpush1.bf16.msra.mxu0 %v7805
    %7869 = vmatprep.subr.bf16.mxu0 0
    %7870 = vmatpush2.bf16.msra.mxu0 %v7820
    %7871 = vmatprep.subr.bf16.mxu0 0
    %7872 = vmatpush2.bf16.msra.mxu0 %v7819
    %7873 = vmatprep.subr.bf16.mxu0 0
    %7874 = vmatpush2.bf16.msra.mxu0 %v7818
    %7875 = vmatprep.subr.bf16.mxu0 0
    %7876 = vmatpush2.bf16.msra.mxu0 %v7817
    %7877 = vmatprep.subr.bf16.mxu0 0
    %7878 = vmatpush2.bf16.msra.mxu0 %v7816
    %7879 = vmatprep.subr.bf16.mxu0 0
    %7880 = vmatpush2.bf16.msra.mxu0 %v7815
    %7881 = vmatprep.subr.bf16.mxu0 0
    %7882 = vmatpush2.bf16.msra.mxu0 %v7814
    %7883 = vmatprep.subr.bf16.mxu0 0
    %7884 = vmatpush2.bf16.msra.mxu0 %v7813
    %7885 = vmatprep.mubr.bf16.mxu0 %v7658
    %7886 = vmatmul.mubr.bf16.gmra.mxu0 %v7657
    %v7887 = vpop.f32.mrf.mxu0
    %v7888 = vadd.f32 0.0, %v7887
    %v7889 = vpop.f32.mrf.mxu0
    %v7890 = vpop.f32.mrf.mxu0
    %v7891 = vpop.f32.mrf.mxu0
    %7892 = vdwg.mxu0
    %7893 = vmatprep.subr.bf16.mxu0 0
    %7894 = vmatpush1.bf16.msra.mxu0 %v7828
    %7895 = vmatprep.subr.bf16.mxu0 0
    %7896 = vmatpush1.bf16.msra.mxu0 %v7827
    %7897 = vmatprep.subr.bf16.mxu0 0
    %7898 = vmatpush1.bf16.msra.mxu0 %v7826
    %7899 = vmatprep.subr.bf16.mxu0 0
    %7900 = vmatpush1.bf16.msra.mxu0 %v7825
    %7901 = vmatprep.subr.bf16.mxu0 0
    %7902 = vmatpush1.bf16.msra.mxu0 %v7824
    %7903 = vmatprep.subr.bf16.mxu0 0
    %7904 = vmatpush1.bf16.msra.mxu0 %v7823
    %7905 = vmatprep.subr.bf16.mxu0 0
    %7906 = vmatpush1.bf16.msra.mxu0 %v7822
    %7907 = vmatprep.subr.bf16.mxu0 0
    %7908 = vmatpush1.bf16.msra.mxu0 %v7821
    %7909 = vmatprep.subr.bf16.mxu0 0
    %7910 = vmatpush2.bf16.msra.mxu0 0
    %7911 = vmatprep.subr.bf16.mxu0 0
    %7912 = vmatpush2.bf16.msra.mxu0 0
    %7913 = vmatprep.subr.bf16.mxu0 0
    %7914 = vmatpush2.bf16.msra.mxu0 0
    %7915 = vmatprep.subr.bf16.mxu0 0
    %7916 = vmatpush2.bf16.msra.mxu0 0
    %7917 = vmatprep.subr.bf16.mxu0 0
    %7918 = vmatpush2.bf16.msra.mxu0 0
    %7919 = vmatprep.subr.bf16.mxu0 0
    %7920 = vmatpush2.bf16.msra.mxu0 0
    %7921 = vmatprep.subr.bf16.mxu0 0
    %7922 = vmatpush2.bf16.msra.mxu0 0
    %7923 = vmatprep.subr.bf16.mxu0 0
    %7924 = vmatpush2.bf16.msra.mxu0 0
    %7925 = vmatprep.mubr.bf16.mxu0 0
    %7926 = vmatmul.mubr.bf16.gmra.mxu0 %v7659
    %v7927 = vpop.f32.mrf.mxu0
    %v7928 = vadd.f32 %v7888, %v7927
    %v7929 = vpop.f32.mrf.mxu0
    %v7930 = vpop.f32.mrf.mxu0
    %v7931 = vpop.f32.mrf.mxu0
    %7932 = vdwg.mxu0
    %v7933 = vadd.f32 %v7566, %v7928
    %s7934 = scalar_lea.vmem [#allocation22], 6
    %v7935 = vld [vmem:[%s7934] sm:$0x3]
    %v7937 = vsel %vm6839, %v7935, 0
    %7939 = vmatprep.subr.bf16.mxu0 0
    %7940 = vmatpush1.bf16.msra.mxu0 0
    %7941 = vmatprep.subr.bf16.mxu0 0
    %7942 = vmatpush1.bf16.msra.mxu0 0
    %7943 = vmatprep.subr.bf16.mxu0 0
    %7944 = vmatpush1.bf16.msra.mxu0 0
    %7945 = vmatprep.subr.bf16.mxu0 0
    %7946 = vmatpush1.bf16.msra.mxu0 0
    %7947 = vmatprep.subr.bf16.mxu0 0
    %7948 = vmatpush1.bf16.msra.mxu0 0
    %7949 = vmatprep.subr.bf16.mxu0 0
    %7950 = vmatpush1.bf16.msra.mxu0 0
    %7951 = vmatprep.subr.bf16.mxu0 0
    %7952 = vmatpush1.bf16.msra.mxu0 0
    %7953 = vmatprep.subr.bf16.mxu0 %v6848
    %7954 = vmatpush1.bf16.msra.mxu0 %v6845
    %7955 = vmatprep.subr.bf16.mxu0 0
    %7956 = vmatpush2.bf16.msra.mxu0 0
    %7957 = vmatprep.subr.bf16.mxu0 0
    %7958 = vmatpush2.bf16.msra.mxu0 0
    %7959 = vmatprep.subr.bf16.mxu0 0
    %7960 = vmatpush2.bf16.msra.mxu0 0
    %7961 = vmatprep.subr.bf16.mxu0 0
    %7962 = vmatpush2.bf16.msra.mxu0 0
    %7963 = vmatprep.subr.bf16.mxu0 0
    %7964 = vmatpush2.bf16.msra.mxu0 0
    %7965 = vmatprep.subr.bf16.mxu0 0
    %7966 = vmatpush2.bf16.msra.mxu0 0
    %7967 = vmatprep.subr.bf16.mxu0 0
    %7968 = vmatpush2.bf16.msra.mxu0 0
    %7969 = vmatprep.subr.bf16.mxu0 0
    %7970 = vmatpush2.bf16.msra.mxu0 0
    %7971 = vmatprep.mubr.bf16.mxu0 0
    %7972 = vmatmul.mubr.bf16.gmra.mxu0 %v7937
    %v7973 = vpop.f32.mrf.mxu0
    %v7974 = vadd.f32 0.0, %v7973
    %v7975 = vpop.f32.mrf.mxu0
    %v7976 = vadd.f32 0.0, %v7975
    %v7977 = vpop.f32.mrf.mxu0
    %v7978 = vpop.f32.mrf.mxu0
    %7979 = vdwg.mxu0
    %7980 = vmatprep.subr.bf16.mxu0 0
    %7981 = vmatpush1.bf16.msra.mxu0 0
    %7982 = vmatprep.subr.bf16.mxu0 0
    %7983 = vmatpush1.bf16.msra.mxu0 0
    %7984 = vmatprep.subr.bf16.mxu0 0
    %7985 = vmatpush1.bf16.msra.mxu0 0
    %7986 = vmatprep.subr.bf16.mxu0 0
    %7987 = vmatpush1.bf16.msra.mxu0 0
    %7988 = vmatprep.subr.bf16.mxu0 0
    %7989 = vmatpush1.bf16.msra.mxu0 0
    %7990 = vmatprep.subr.bf16.mxu0 0
    %7991 = vmatpush1.bf16.msra.mxu0 0
    %7992 = vmatprep.subr.bf16.mxu0 0
    %7993 = vmatpush1.bf16.msra.mxu0 0
    %7994 = vmatprep.subr.bf16.mxu0 0
    %7995 = vmatpush1.bf16.msra.mxu0 %v6851
    %7996 = vmatprep.subr.bf16.mxu0 0
    %7997 = vmatpush2.bf16.msra.mxu0 0
    %7998 = vmatprep.subr.bf16.mxu0 0
    %7999 = vmatpush2.bf16.msra.mxu0 0
    %8000 = vmatprep.subr.bf16.mxu0 0
    %8001 = vmatpush2.bf16.msra.mxu0 0
    %8002 = vmatprep.subr.bf16.mxu0 0
    %8003 = vmatpush2.bf16.msra.mxu0 0
    %8004 = vmatprep.subr.bf16.mxu0 0
    %8005 = vmatpush2.bf16.msra.mxu0 0
    %8006 = vmatprep.subr.bf16.mxu0 0
    %8007 = vmatpush2.bf16.msra.mxu0 0
    %8008 = vmatprep.subr.bf16.mxu0 0
    %8009 = vmatpush2.bf16.msra.mxu0 0
    %8010 = vmatprep.subr.bf16.mxu0 0
    %8011 = vmatpush2.bf16.msra.mxu0 0
    %8012 = vmatprep.mubr.bf16.mxu0 0
    %8013 = vmatmul.mubr.bf16.gmra.mxu0 %v7937
    %v8014 = vpop.f32.mrf.mxu0
    %v8015 = vadd.f32 0.0, %v8014
    %v8016 = vpop.f32.mrf.mxu0
    %v8017 = vpop.f32.mrf.mxu0
    %v8018 = vpop.f32.mrf.mxu0
    %8019 = vdwg.mxu0
    %v8020 = vpack.c.bf16 %v7974, %v7974
    %v8021 = vpack.c.bf16 %v7976, %v7976
    %v8022 = vpack.c.bf16 %v8015, %v8015
    %s8023 = scalar_lea.vmem %s23, 576
    %v8024 = vld [vmem:[%s8023] sm:$0xf]
    %v8025 = vld [vmem:[%s8023 + $0x4] sm:$0xf]
    %v8026 = vld [vmem:[%s8023 + $0x8] sm:$0xf]
    %v8027 = vld [vmem:[%s8023 + $0xc] sm:$0xf]
    %v8028 = vld [vmem:[%s8023 + $0x10] sm:$0xf]
    %v8029 = vld [vmem:[%s8023 + $0x14] sm:$0xf]
    %v8030 = vld [vmem:[%s8023 + $0x18] sm:$0xf]
    %v8031 = vld [vmem:[%s8023 + $0x1c] sm:$0xf]
    %v8032 = vld [vmem:[%s8023 + $0x20] sm:$0xf]
    %v8033 = vld [vmem:[%s8023 + $0x24] sm:$0xf]
    %v8034 = vld [vmem:[%s8023 + $0x28] sm:$0xf]
    %v8035 = vld [vmem:[%s8023 + $0x2c] sm:$0xf]
    %v8036 = vld [vmem:[%s8023 + $0x30] sm:$0xf]
    %v8037 = vld [vmem:[%s8023 + $0x34] sm:$0xf]
    %v8038 = vld [vmem:[%s8023 + $0x38] sm:$0xf]
    %v8039 = vld [vmem:[%s8023 + $0x3c] sm:$0xf]
    %v8040 = vld [vmem:[%s8023 + $0x40] sm:$0xf]
    %v8041 = vld [vmem:[%s8023 + $0x44] sm:$0xf]
    %v8042 = vld [vmem:[%s8023 + $0x48] sm:$0xf]
    %v8043 = vld [vmem:[%s8023 + $0x4c] sm:$0xf]
    %v8044 = vld [vmem:[%s8023 + $0x50] sm:$0xf]
    %v8045 = vld [vmem:[%s8023 + $0x54] sm:$0xf]
    %v8046 = vld [vmem:[%s8023 + $0x58] sm:$0xf]
    %v8047 = vld [vmem:[%s8023 + $0x5c] sm:$0xf]
    %v8048 = vld [vmem:[%s8023 + $0x60] sm:$0xf]
    %v8049 = vld [vmem:[%s8023 + $0x64] sm:$0xf]
    %v8050 = vld [vmem:[%s8023 + $0x68] sm:$0xf]
    %v8051 = vld [vmem:[%s8023 + $0x6c] sm:$0xf]
    %v8052 = vld [vmem:[%s8023 + $0x70] sm:$0xf]
    %v8053 = vld [vmem:[%s8023 + $0x74] sm:$0xf]
    %v8054 = vld [vmem:[%s8023 + $0x78] sm:$0xf]
    %v8055 = vld [vmem:[%s8023 + $0x7c] sm:$0xf]
    %v8056 = vld [vmem:[%s8023 + $0x80] sm:$0xf]
    %v8057 = vld [vmem:[%s8023 + $0x84] sm:$0xf]
    %v8058 = vld [vmem:[%s8023 + $0x88] sm:$0xf]
    %v8059 = vld [vmem:[%s8023 + $0x8c] sm:$0xf]
    %v8060 = vld [vmem:[%s8023 + $0x90] sm:$0xf]
    %v8061 = vld [vmem:[%s8023 + $0x94] sm:$0xf]
    %v8062 = vld [vmem:[%s8023 + $0x98] sm:$0xf]
    %v8063 = vld [vmem:[%s8023 + $0x9c] sm:$0xf]
    %v8064 = vld [vmem:[%s8023 + $0xa0] sm:$0xf]
    %v8065 = vld [vmem:[%s8023 + $0xa4] sm:$0xf]
    %v8066 = vld [vmem:[%s8023 + $0xa8] sm:$0xf]
    %v8067 = vld [vmem:[%s8023 + $0xac] sm:$0xf]
    %v8068 = vld [vmem:[%s8023 + $0xb0] sm:$0xf]
    %v8069 = vld [vmem:[%s8023 + $0xb4] sm:$0xf]
    %v8070 = vld [vmem:[%s8023 + $0xb8] sm:$0xf]
    %v8071 = vld [vmem:[%s8023 + $0xbc] sm:$0xf]
    %v8120 = vunpack.c.l.b16 %v8024
    %v8121 = vunpack.c.l.b16 %v8025
    %v8122 = vunpack.c.l.b16 %v8026
    %v8123 = vunpack.c.l.b16 %v8027
    %v8124 = vunpack.c.l.b16 %v8028
    %v8125 = vunpack.c.l.b16 %v8029
    %v8126 = vunpack.c.l.b16 %v8030
    %v8127 = vunpack.c.l.b16 %v8031
    %v8128 = vunpack.c.l.b16 %v8032
    %v8129 = vunpack.c.l.b16 %v8033
    %v8130 = vunpack.c.l.b16 %v8034
    %v8131 = vunpack.c.l.b16 %v8035
    %v8132 = vunpack.c.l.b16 %v8036
    %v8133 = vunpack.c.l.b16 %v8037
    %v8134 = vunpack.c.l.b16 %v8038
    %v8135 = vunpack.c.l.b16 %v8039
    %v8136 = vunpack.c.l.b16 %v8040
    %v8137 = vunpack.c.l.b16 %v8041
    %v8138 = vunpack.c.l.b16 %v8042
    %v8139 = vunpack.c.l.b16 %v8043
    %v8140 = vunpack.c.l.b16 %v8044
    %v8141 = vunpack.c.l.b16 %v8045
    %v8142 = vunpack.c.l.b16 %v8046
    %v8143 = vunpack.c.l.b16 %v8047
    %v8144 = vunpack.c.l.b16 %v8048
    %v8145 = vunpack.c.l.b16 %v8049
    %v8146 = vunpack.c.l.b16 %v8050
    %v8147 = vunpack.c.l.b16 %v8051
    %v8148 = vunpack.c.l.b16 %v8052
    %v8149 = vunpack.c.l.b16 %v8053
    %v8150 = vunpack.c.l.b16 %v8054
    %v8151 = vunpack.c.l.b16 %v8055
    %v8152 = vunpack.c.l.b16 %v8056
    %v8153 = vunpack.c.l.b16 %v8057
    %v8154 = vunpack.c.l.b16 %v8058
    %v8155 = vunpack.c.l.b16 %v8059
    %v8156 = vunpack.c.l.b16 %v8060
    %v8157 = vunpack.c.l.b16 %v8061
    %v8158 = vunpack.c.l.b16 %v8062
    %v8159 = vunpack.c.l.b16 %v8063
    %v8160 = vunpack.c.l.b16 %v8064
    %v8161 = vunpack.c.l.b16 %v8065
    %v8162 = vunpack.c.l.b16 %v8066
    %v8163 = vunpack.c.l.b16 %v8067
    %v8164 = vunpack.c.l.b16 %v8068
    %v8165 = vunpack.c.l.b16 %v8069
    %v8166 = vunpack.c.l.b16 %v8070
    %v8167 = vunpack.c.l.b16 %v8071
    %v8168 = vpack.c.b16 %v8121, %v8120
    %v8169 = vpack.c.b16 %v8123, %v8122
    %v8170 = vpack.c.b16 %v8125, %v8124
    %v8171 = vpack.c.b16 %v8127, %v8126
    %v8172 = vpack.c.b16 %v8129, %v8128
    %v8173 = vpack.c.b16 %v8131, %v8130
    %v8174 = vpack.c.b16 %v8133, %v8132
    %v8175 = vpack.c.b16 %v8135, %v8134
    %v8176 = vpack.c.b16 %v8137, %v8136
    %v8177 = vpack.c.b16 %v8139, %v8138
    %v8178 = vpack.c.b16 %v8141, %v8140
    %v8179 = vpack.c.b16 %v8143, %v8142
    %v8180 = vpack.c.b16 %v8145, %v8144
    %v8181 = vpack.c.b16 %v8147, %v8146
    %v8182 = vpack.c.b16 %v8149, %v8148
    %v8183 = vpack.c.b16 %v8151, %v8150
    %v8184 = vpack.c.b16 %v8153, %v8152
    %v8185 = vpack.c.b16 %v8155, %v8154
    %v8186 = vpack.c.b16 %v8157, %v8156
    %v8187 = vpack.c.b16 %v8159, %v8158
    %v8188 = vpack.c.b16 %v8161, %v8160
    %v8189 = vpack.c.b16 %v8163, %v8162
    %v8190 = vpack.c.b16 %v8165, %v8164
    %v8191 = vpack.c.b16 %v8167, %v8166
    %8216 = vmatprep.subr.bf16.mxu0 0
    %8217 = vmatpush1.bf16.msra.mxu0 %v8175
    %8218 = vmatprep.subr.bf16.mxu0 0
    %8219 = vmatpush1.bf16.msra.mxu0 %v8174
    %8220 = vmatprep.subr.bf16.mxu0 0
    %8221 = vmatpush1.bf16.msra.mxu0 %v8173
    %8222 = vmatprep.subr.bf16.mxu0 0
    %8223 = vmatpush1.bf16.msra.mxu0 %v8172
    %8224 = vmatprep.subr.bf16.mxu0 0
    %8225 = vmatpush1.bf16.msra.mxu0 %v8171
    %8226 = vmatprep.subr.bf16.mxu0 0
    %8227 = vmatpush1.bf16.msra.mxu0 %v8170
    %8228 = vmatprep.subr.bf16.mxu0 0
    %8229 = vmatpush1.bf16.msra.mxu0 %v8169
    %8230 = vmatprep.subr.bf16.mxu0 0
    %8231 = vmatpush1.bf16.msra.mxu0 %v8168
    %8232 = vmatprep.subr.bf16.mxu0 0
    %8233 = vmatpush2.bf16.msra.mxu0 %v8183
    %8234 = vmatprep.subr.bf16.mxu0 0
    %8235 = vmatpush2.bf16.msra.mxu0 %v8182
    %8236 = vmatprep.subr.bf16.mxu0 0
    %8237 = vmatpush2.bf16.msra.mxu0 %v8181
    %8238 = vmatprep.subr.bf16.mxu0 0
    %8239 = vmatpush2.bf16.msra.mxu0 %v8180
    %8240 = vmatprep.subr.bf16.mxu0 0
    %8241 = vmatpush2.bf16.msra.mxu0 %v8179
    %8242 = vmatprep.subr.bf16.mxu0 0
    %8243 = vmatpush2.bf16.msra.mxu0 %v8178
    %8244 = vmatprep.subr.bf16.mxu0 0
    %8245 = vmatpush2.bf16.msra.mxu0 %v8177
    %8246 = vmatprep.subr.bf16.mxu0 0
    %8247 = vmatpush2.bf16.msra.mxu0 %v8176
    %8248 = vmatprep.mubr.bf16.mxu0 %v8021
    %8249 = vmatmul.mubr.bf16.gmra.mxu0 %v8020
    %v8250 = vpop.f32.mrf.mxu0
    %v8251 = vadd.f32 0.0, %v8250
    %v8252 = vpop.f32.mrf.mxu0
    %v8253 = vpop.f32.mrf.mxu0
    %v8254 = vpop.f32.mrf.mxu0
    %8255 = vdwg.mxu0
    %8256 = vmatprep.subr.bf16.mxu0 0
    %8257 = vmatpush1.bf16.msra.mxu0 %v8191
    %8258 = vmatprep.subr.bf16.mxu0 0
    %8259 = vmatpush1.bf16.msra.mxu0 %v8190
    %8260 = vmatprep.subr.bf16.mxu0 0
    %8261 = vmatpush1.bf16.msra.mxu0 %v8189
    %8262 = vmatprep.subr.bf16.mxu0 0
    %8263 = vmatpush1.bf16.msra.mxu0 %v8188
    %8264 = vmatprep.subr.bf16.mxu0 0
    %8265 = vmatpush1.bf16.msra.mxu0 %v8187
    %8266 = vmatprep.subr.bf16.mxu0 0
    %8267 = vmatpush1.bf16.msra.mxu0 %v8186
    %8268 = vmatprep.subr.bf16.mxu0 0
    %8269 = vmatpush1.bf16.msra.mxu0 %v8185
    %8270 = vmatprep.subr.bf16.mxu0 0
    %8271 = vmatpush1.bf16.msra.mxu0 %v8184
    %8272 = vmatprep.subr.bf16.mxu0 0
    %8273 = vmatpush2.bf16.msra.mxu0 0
    %8274 = vmatprep.subr.bf16.mxu0 0
    %8275 = vmatpush2.bf16.msra.mxu0 0
    %8276 = vmatprep.subr.bf16.mxu0 0
    %8277 = vmatpush2.bf16.msra.mxu0 0
    %8278 = vmatprep.subr.bf16.mxu0 0
    %8279 = vmatpush2.bf16.msra.mxu0 0
    %8280 = vmatprep.subr.bf16.mxu0 0
    %8281 = vmatpush2.bf16.msra.mxu0 0
    %8282 = vmatprep.subr.bf16.mxu0 0
    %8283 = vmatpush2.bf16.msra.mxu0 0
    %8284 = vmatprep.subr.bf16.mxu0 0
    %8285 = vmatpush2.bf16.msra.mxu0 0
    %8286 = vmatprep.subr.bf16.mxu0 0
    %8287 = vmatpush2.bf16.msra.mxu0 0
    %8288 = vmatprep.mubr.bf16.mxu0 0
    %8289 = vmatmul.mubr.bf16.gmra.mxu0 %v8022
    %v8290 = vpop.f32.mrf.mxu0
    %v8291 = vadd.f32 %v8251, %v8290
    %v8292 = vpop.f32.mrf.mxu0
    %v8293 = vpop.f32.mrf.mxu0
    %v8294 = vpop.f32.mrf.mxu0
    %8295 = vdwg.mxu0
    %v8296 = vadd.f32 %v7933, %v8291
    %v8297 = vld [vmem:[%s24] sm:$0x1]
    %v8299 = vlaneseq
    %v8300 = vshrl.u32 %v8299, 7
    %v8301 = vsub.s32 0, %v8300
    %v8302 = vrot.slane %v8297, %v8301
    %v8304 = vadd.f32 %v8296, %v8302
    %vm8305 = vcmask 11264
    %8306 = vst.msk [vmem:[#allocation23] sm:$0xf] %vm8305, %v8304
    // Predicated region
    $region154: #{forward.1} parent=1 // pred_check
      _
    $region155: #{forward.1} parent=1 // pred_check_branch
      %8308 = sbr.rel (0) target = $region157
    $region156: #{forward.1} parent=1 // pred_region
      %s8310 = ssub.s32 64, 64
      %8311 = vsyncadd [#allocation4], %s8310
      %s8313 = sshll.u32 [#allocation23], 4
      %s8314 = int_to_ptr.vmem [resolvable:$true] %s8313
      %8316 = dma.vmem_to_hbm [thread:$0]  %s8314, 64, %s25, [#allocation4]
    $region157: #{forward.1} parent=1 // pred_fallthru
      _
    // Predicated region
    $region158: #{forward.1} parent=1 // pred_check
      _
    $region159: #{forward.1} parent=1 // pred_check_branch
      %8318 = sbr.rel (0) target = $region161
    $region160: #{forward.1} parent=1 // pred_region
      %8319 = dma.done [#allocation4], 64
    $region161: #{forward.1} parent=1 // pred_fallthru
      _
    %8320 = vsyncpa [#allocation3], 1
    %8321 = vsyncpa [#allocation6], 1
    %8322 = vsyncpa [#allocation9], 1
    %8323 = vsyncpa [#allocation12], 1
    %8324 = vsyncpa [#allocation15], 1
    %8325 = vsyncpa [#allocation18], 1
    %8326 = vsyncpa [#allocation21], 1
    %8327 = vsyncpa [#allocation4], 1

</llo_original>
